<compile_context>
chip_gen: v7x
topology: tpu7x:2x2x1
jax: 0.10.0
libtpu: 0.0.40
codegen_flags: <defaults>
</compile_context>

<pallas_src>
import math

import jax
import jax.numpy as jnp
from jax.experimental import pallas as pl
from jax.experimental.pallas import tpu as pltpu

# ---------------- model hyper-params (small, synthetic) ----------------
C_IN = 3        # input channels
IMG = 16        # image resolution
PATCH = 8       # patch size -> 2x2 grid -> 4 patches
WIDTH = 32      # transformer width
HEADS = 4       # attention heads
DH = WIDTH // HEADS
LAYERS = 2      # transformer blocks
EMBED = 16      # CLIP visual embedding dim
N_CLASS = 10    # number of class prompts
N_PAD = 128     # lane-padded classifier output width (unmasked vst)
SEQ = (IMG // PATCH) ** 2 + 1          # 4 patches + class token = 5
K0 = C_IN * PATCH * PATCH              # flattened patch dim = 192
MLP = 4 * WIDTH
LN_EPS = 1e-5

_WEIGHT_ORDER = (
    "conv_w", "embed", "ln_pre", "ln1", "wq", "wk", "wv", "bq", "bk", "bv",
    "wo", "bo", "ln2", "wfc", "bfc", "wpr", "bpr", "ln_post", "proj", "clsw",
)


# ---------------- fused Pallas kernel ----------------
def _ln(x, g, b):
    mu = jnp.mean(x, axis=-1, keepdims=True)
    xc = x - mu
    var = jnp.mean(xc * xc, axis=-1, keepdims=True)
    return xc * jax.lax.rsqrt(var + LN_EPS) * g + b


def _clip_fused_kernel(
    patches_ref,              # (1, SEQ, K0)  per-batch flattened patches, row 0 = 0
    conv_w_ref,               # (K0, WIDTH)
    embed_ref,                # (SEQ, WIDTH)  row0 = class_emb + pos[0], rows 1.. = pos[1:]
    ln_pre_ref,               # (2, WIDTH)
    ln1_ref,                  # (L, 2, WIDTH)
    wq_ref, wk_ref, wv_ref,   # (L, H, WIDTH, DH)
    bq_ref, bk_ref, bv_ref,   # (L, H, 1, DH)
    wo_ref,                   # (L, H, DH, WIDTH)
    bo_ref,                   # (L, 1, WIDTH)
    ln2_ref,                  # (L, 2, WIDTH)
    wfc_ref,                  # (L, WIDTH, MLP)
    bfc_ref,                  # (L, 1, MLP)
    wpr_ref,                  # (L, MLP, WIDTH)
    bpr_ref,                  # (L, 1, WIDTH)
    ln_post_ref,              # (2, WIDTH)
    proj_ref,                 # (WIDTH, EMBED)
    clsw_ref,                 # (EMBED, N_PAD)  logit_scale.exp() * normalized text feats (padded)
    out_ref,                  # (1, 1, N_PAD)
):
    f32 = jnp.float32
    scale = 1.0 / math.sqrt(DH)

    # patch embedding (conv1 as matmul) + class token + positional embedding.
    # Row 0 of `patches` is zero, so the class-token row falls out of the same
    # matmul; `embed` row 0 supplies class_emb + pos[0].
    patches = patches_ref[0]                                             # (SEQ, K0)
    x = jnp.dot(patches, conv_w_ref[...], preferred_element_type=f32) + embed_ref[...]

    ln_pre = ln_pre_ref[...]
    x = _ln(x, ln_pre[0:1], ln_pre[1:2])

    for l in range(LAYERS):                      # static unroll; weights stay resident
        # ---- multi-head self-attention block ----
        ln1 = ln1_ref[l]
        h = _ln(x, ln1[0:1], ln1[1:2])
        attn = jnp.zeros((SEQ, WIDTH), f32)
        for hd in range(HEADS):                  # per-head weight slabs pre-split at init
            q = jnp.dot(h, wq_ref[l, hd], preferred_element_type=f32) + bq_ref[l, hd]
            k = jnp.dot(h, wk_ref[l, hd], preferred_element_type=f32) + bk_ref[l, hd]
            v = jnp.dot(h, wv_ref[l, hd], preferred_element_type=f32) + bv_ref[l, hd]
            s = jax.lax.dot_general(q, k, (((1,), (1,)), ((), ())),
                                    preferred_element_type=f32) * scale  # (SEQ, SEQ)
            m = jnp.max(s, axis=-1, keepdims=True)
            p = jnp.exp(s - m)
            p = p * pl.reciprocal(jnp.sum(p, axis=-1, keepdims=True), approx=True)
            o = jnp.dot(p, v, preferred_element_type=f32)                # (SEQ, DH)
            attn = attn + jnp.dot(o, wo_ref[l, hd], preferred_element_type=f32)
        x = x + attn + bo_ref[l]                 # residual carried in-kernel

        # ---- MLP block (Linear -> QuickGELU -> Linear) ----
        ln2 = ln2_ref[l]
        h = _ln(x, ln2[0:1], ln2[1:2])
        h = jnp.dot(h, wfc_ref[l], preferred_element_type=f32) + bfc_ref[l]
        h = h * jax.nn.sigmoid(1.702 * h)        # QuickGELU
        h = jnp.dot(h, wpr_ref[l], preferred_element_type=f32) + bpr_ref[l]
        x = x + h

    # ---- ln_post on class token, visual projection, normalize, classify ----
    ln_post = ln_post_ref[...]
    feat = _ln(x[0:1, :], ln_post[0:1], ln_post[1:2])                    # (1, WIDTH)
    feat = jnp.dot(feat, proj_ref[...], preferred_element_type=f32)      # (1, EMBED)
    # image_features / image_features.norm(dim=-1, keepdim=True)
    inv_norm = jax.lax.rsqrt(jnp.sum(feat * feat, axis=-1, keepdims=True) + 1e-12)
    feat = feat * inv_norm
    # logit_scale.exp() is folded into clsw at pack time (hoisted).
    logits = jnp.dot(feat, clsw_ref[...], preferred_element_type=f32)    # (1, N_PAD)
    out_ref[0] = logits                                                  # lane-dense store


# ---------------- wrapper ----------------
def _const_spec(arr):
    """Full-array block at a fixed position (fetched once, VMEM-resident)."""
    ndim = arr.ndim
    return pl.BlockSpec(arr.shape, lambda b, _n=ndim: (0,) * _n)


def clip_forward(image, kp):
    """image: (B, C_IN, IMG, IMG) NCHW float -> logits (B, N_CLASS)."""
    B = image.shape[0]
    gh = gw = IMG // PATCH
    x = image.astype(jnp.float32)
    # Patch extraction is pure layout plumbing; the conv itself is a matmul in-kernel.
    p = x.reshape(B, C_IN, gh, PATCH, gw, PATCH).transpose(0, 2, 4, 1, 3, 5)
    p = p.reshape(B, gh * gw, K0)
    patches = jnp.concatenate([jnp.zeros((B, 1, K0), jnp.float32), p], axis=1)  # (B, SEQ, K0)

    weights = [kp[k] for k in _WEIGHT_ORDER]
    out = pl.pallas_call(
        _clip_fused_kernel,
        out_shape=jax.ShapeDtypeStruct((B, 1, N_PAD), jnp.float32),
        grid=(B,),
        in_specs=[pl.BlockSpec((1, SEQ, K0), lambda b: (b, 0, 0))]
        + [_const_spec(w) for w in weights],
        out_specs=pl.BlockSpec((1, 1, N_PAD), lambda b: (b, 0, 0)),
        compiler_params=pltpu.CompilerParams(
            dimension_semantics=("parallel",),   # v7x: shard batch over both TCs
        ),
    )(patches, *weights)
    return out[:, 0, :N_CLASS]


# ---------------- parameters ----------------
def init_params(key):
    """Parameters in the PyTorch layouts the reference module stores them in."""
    kit = iter(jax.random.split(key, 64))

    def nrm(shape, scale=0.02):
        return scale * jax.random.normal(next(kit), shape, dtype=jnp.float32)

    params = {
        "conv_w": nrm((WIDTH, C_IN, PATCH, PATCH)),   # conv1 (bias=False in CLIP)
        "class_emb": nrm((WIDTH,)),
        "pos_emb": nrm((SEQ, WIDTH)),
        "ln_pre_g": jnp.ones((WIDTH,), jnp.float32),
        "ln_pre_b": jnp.zeros((WIDTH,), jnp.float32),
        "ln_post_g": jnp.ones((WIDTH,), jnp.float32),
        "ln_post_b": jnp.zeros((WIDTH,), jnp.float32),
        "visual_proj": nrm((WIDTH, EMBED)),           # CLIP visual.proj (no bias)
        "text_feat": nrm((N_CLASS, EMBED)),           # stand-in for text_features
        "logit_scale": jnp.float32(math.log(1.0 / 0.07)),
        "layers": [],
    }
    for _ in range(LAYERS):
        params["layers"].append({
            "ln1_g": jnp.ones((WIDTH,), jnp.float32),
            "ln1_b": jnp.zeros((WIDTH,), jnp.float32),
            "in_w": nrm((3 * WIDTH, WIDTH)),          # MHA in_proj (out, in)
            "in_b": nrm((3 * WIDTH,)),
            "out_w": nrm((WIDTH, WIDTH)),             # MHA out_proj (out, in)
            "out_b": nrm((WIDTH,)),
            "ln2_g": jnp.ones((WIDTH,), jnp.float32),
            "ln2_b": jnp.zeros((WIDTH,), jnp.float32),
            "fc_w": nrm((4 * WIDTH, WIDTH)),          # mlp c_fc (out, in)
            "fc_b": nrm((4 * WIDTH,)),
            "pr_w": nrm((WIDTH, 4 * WIDTH)),          # mlp c_proj (out, in)
            "pr_b": nrm((WIDTH,)),
        })
    return params


def pack_params(p):
    """Hoist every transpose / reshape / head-split / padding / scaling out of the forward."""
    L, W, H, D = LAYERS, WIDTH, HEADS, DH

    def stack(name):
        return jnp.stack([lp[name] for lp in p["layers"]], axis=0)

    in_w = stack("in_w")                          # (L, 3W, W) PyTorch (out, in)
    in_b = stack("in_b")                          # (L, 3W)

    def heads_w(w_out_in):                        # (L, W_out, W_in) -> (L, H, W_in, D)
        wt = jnp.transpose(w_out_in, (0, 2, 1)).reshape(L, W, H, D)
        return jnp.transpose(wt, (0, 2, 1, 3))

    def heads_b(b_part):                          # (L, W) -> (L, H, 1, D)
        return b_part.reshape(L, H, 1, D)

    # Normalized "text features" times logit_scale.exp(), transposed and lane-padded.
    tf = p["text_feat"]
    tf = tf / jnp.linalg.norm(tf, axis=-1, keepdims=True)
    scale = jnp.exp(p["logit_scale"])
    cls_w = jnp.zeros((EMBED, N_PAD), jnp.float32).at[:, :N_CLASS].set(scale * tf.T)

    return {
        "conv_w": p["conv_w"].reshape(W, K0).T,                               # (K0, W)
        "embed": jnp.concatenate(
            [(p["class_emb"] + p["pos_emb"][0])[None, :], p["pos_emb"][1:]], axis=0),
        "ln_pre": jnp.stack([p["ln_pre_g"], p["ln_pre_b"]], axis=0),
        "ln1": jnp.stack(
            [jnp.stack([lp["ln1_g"], lp["ln1_b"]], 0) for lp in p["layers"]], 0),
        "wq": heads_w(in_w[:, 0:W, :]),
        "wk": heads_w(in_w[:, W:2 * W, :]),
        "wv": heads_w(in_w[:, 2 * W:3 * W, :]),
        "bq": heads_b(in_b[:, 0:W]),
        "bk": heads_b(in_b[:, W:2 * W]),
        "bv": heads_b(in_b[:, 2 * W:3 * W]),
        "wo": jnp.transpose(stack("out_w"), (0, 2, 1)).reshape(L, H, D, W),
        "bo": stack("out_b").reshape(L, 1, W),
        "ln2": jnp.stack(
            [jnp.stack([lp["ln2_g"], lp["ln2_b"]], 0) for lp in p["layers"]], 0),
        "wfc": jnp.transpose(stack("fc_w"), (0, 2, 1)),                       # (L, W, 4W)
        "bfc": stack("fc_b").reshape(L, 1, MLP),
        "wpr": jnp.transpose(stack("pr_w"), (0, 2, 1)),                       # (L, 4W, W)
        "bpr": stack("pr_b").reshape(L, 1, W),
        "ln_post": jnp.stack([p["ln_post_g"], p["ln_post_b"]], axis=0),
        "proj": p["visual_proj"],                                             # (W, EMBED)
        "clsw": cls_w,                                                        # (EMBED, N_PAD)
    }


if __name__ == "__main__":
    key = jax.random.PRNGKey(0)
    pkey, xkey = jax.random.split(key)
    kp = pack_params(init_params(pkey))
    image = jax.random.normal(xkey, (2, C_IN, IMG, IMG), dtype=jnp.float32)  # NCHW

    forward = jax.jit(clip_forward)
    out = jax.block_until_ready(forward(image, kp))
    assert out.shape == (2, N_CLASS), out.shape
    assert bool(jnp.all(jnp.isfinite(out)))
    print("KERNEL_OK")
</pallas_src>

<mosaic_0001>
module attributes {stable_mosaic.version = 11 : i64} {
  func.func @_clip_fused_kernel(%arg0: i32, %arg1: memref<1x5x192xf32, #tpu.memory_space<vmem>>, %arg2: memref<192x32xf32, #tpu.memory_space<vmem>>, %arg3: memref<5x32xf32, #tpu.memory_space<vmem>>, %arg4: memref<2x32xf32, #tpu.memory_space<vmem>>, %arg5: memref<2x2x32xf32, #tpu.memory_space<vmem>>, %arg6: memref<2x4x32x8xf32, #tpu.memory_space<vmem>>, %arg7: memref<2x4x32x8xf32, #tpu.memory_space<vmem>>, %arg8: memref<2x4x32x8xf32, #tpu.memory_space<vmem>>, %arg9: memref<2x4x1x8xf32, #tpu.memory_space<vmem>>, %arg10: memref<2x4x1x8xf32, #tpu.memory_space<vmem>>, %arg11: memref<2x4x1x8xf32, #tpu.memory_space<vmem>>, %arg12: memref<2x4x8x32xf32, #tpu.memory_space<vmem>>, %arg13: memref<2x1x32xf32, #tpu.memory_space<vmem>>, %arg14: memref<2x2x32xf32, #tpu.memory_space<vmem>>, %arg15: memref<2x32x128xf32, #tpu.memory_space<vmem>>, %arg16: memref<2x1x128xf32, #tpu.memory_space<vmem>>, %arg17: memref<2x128x32xf32, #tpu.memory_space<vmem>>, %arg18: memref<2x1x32xf32, #tpu.memory_space<vmem>>, %arg19: memref<2x32xf32, #tpu.memory_space<vmem>>, %arg20: memref<32x16xf32, #tpu.memory_space<vmem>>, %arg21: memref<16x128xf32, #tpu.memory_space<vmem>>, %arg22: memref<1x1x128xf32, #tpu.memory_space<vmem>>) attributes {dimension_semantics = [#tpu.dimension_semantics<parallel>], iteration_bounds = array<i64: 2>, scalar_prefetch = 0 : i64, scratch_operands = 0 : i64, tpu.core_type = #tpu.core_type<tc>, window_params = [{transform_indices = @transform_0, window_bounds = array<i64: 1, 5, 192>}, {pipeline_mode = #tpu.pipeline_mode<synchronous>, transform_indices = @transform_1, window_bounds = array<i64: 192, 32>}, {pipeline_mode = #tpu.pipeline_mode<synchronous>, transform_indices = @transform_2, window_bounds = array<i64: 5, 32>}, {pipeline_mode = #tpu.pipeline_mode<synchronous>, transform_indices = @transform_3, window_bounds = array<i64: 2, 32>}, {pipeline_mode = #tpu.pipeline_mode<synchronous>, transform_indices = @transform_4, window_bounds = array<i64: 2, 2, 32>}, {pipeline_mode = #tpu.pipeline_mode<synchronous>, transform_indices = @transform_5, window_bounds = array<i64: 2, 4, 32, 8>}, {pipeline_mode = #tpu.pipeline_mode<synchronous>, transform_indices = @transform_6, window_bounds = array<i64: 2, 4, 32, 8>}, {pipeline_mode = #tpu.pipeline_mode<synchronous>, transform_indices = @transform_7, window_bounds = array<i64: 2, 4, 32, 8>}, {pipeline_mode = #tpu.pipeline_mode<synchronous>, transform_indices = @transform_8, window_bounds = array<i64: 2, 4, 1, 8>}, {pipeline_mode = #tpu.pipeline_mode<synchronous>, transform_indices = @transform_9, window_bounds = array<i64: 2, 4, 1, 8>}, {pipeline_mode = #tpu.pipeline_mode<synchronous>, transform_indices = @transform_10, window_bounds = array<i64: 2, 4, 1, 8>}, {pipeline_mode = #tpu.pipeline_mode<synchronous>, transform_indices = @transform_11, window_bounds = array<i64: 2, 4, 8, 32>}, {pipeline_mode = #tpu.pipeline_mode<synchronous>, transform_indices = @transform_12, window_bounds = array<i64: 2, 1, 32>}, {pipeline_mode = #tpu.pipeline_mode<synchronous>, transform_indices = @transform_13, window_bounds = array<i64: 2, 2, 32>}, {pipeline_mode = #tpu.pipeline_mode<synchronous>, transform_indices = @transform_14, window_bounds = array<i64: 2, 32, 128>}, {pipeline_mode = #tpu.pipeline_mode<synchronous>, transform_indices = @transform_15, window_bounds = array<i64: 2, 1, 128>}, {pipeline_mode = #tpu.pipeline_mode<synchronous>, transform_indices = @transform_16, window_bounds = array<i64: 2, 128, 32>}, {pipeline_mode = #tpu.pipeline_mode<synchronous>, transform_indices = @transform_17, window_bounds = array<i64: 2, 1, 32>}, {pipeline_mode = #tpu.pipeline_mode<synchronous>, transform_indices = @transform_18, window_bounds = array<i64: 2, 32>}, {pipeline_mode = #tpu.pipeline_mode<synchronous>, transform_indices = @transform_19, window_bounds = array<i64: 32, 16>}, {pipeline_mode = #tpu.pipeline_mode<synchronous>, transform_indices = @transform_20, window_bounds = array<i64: 16, 128>}, {transform_indices = @transform_21, window_bounds = array<i64: 1, 1, 128>}]} {
    %c0 = arith.constant 0 : index
    %c0_0 = arith.constant 0 : index
    %c0_1 = arith.constant 0 : index
    %0 = vector.load %arg1[%c0, %c0_0, %c0_1] : memref<1x5x192xf32, #tpu.memory_space<vmem>>, vector<1x5x192xf32>
    %1 = vector.shape_cast %0 : vector<1x5x192xf32> to vector<5x192xf32>
    %c0_2 = arith.constant 0 : index
    %c0_3 = arith.constant 0 : index
    %2 = vector.load %arg2[%c0_2, %c0_3] : memref<192x32xf32, #tpu.memory_space<vmem>>, vector<192x32xf32>
    %cst = arith.constant dense<0.000000e+00> : vector<5x32xf32>
    %3 = tpu.matmul %1, %2, %cst {dimension_numbers = #tpu.dot_dimension_numbers<[1], [0], [0], [1], [0, 0, 1, 1], [], []>} : vector<5x192xf32>, vector<192x32xf32>, vector<5x32xf32> -> vector<5x32xf32>
    %c0_4 = arith.constant 0 : index
    %c0_5 = arith.constant 0 : index
    %4 = vector.load %arg3[%c0_4, %c0_5] : memref<5x32xf32, #tpu.memory_space<vmem>>, vector<5x32xf32>
    %5 = arith.addf %3, %4 : vector<5x32xf32>
    %c0_6 = arith.constant 0 : index
    %c0_7 = arith.constant 0 : index
    %6 = vector.load %arg4[%c0_6, %c0_7] : memref<2x32xf32, #tpu.memory_space<vmem>>, vector<2x32xf32>
    %7 = vector.extract_strided_slice %6 {offsets = [0, 0], sizes = [1, 32], strides = [1, 1]} : vector<2x32xf32> to vector<1x32xf32>
    %8 = vector.extract_strided_slice %6 {offsets = [1, 0], sizes = [1, 32], strides = [1, 1]} : vector<2x32xf32> to vector<1x32xf32>
    %cst_8 = arith.constant dense<0.000000e+00> : vector<5xf32>
    %9 = vector.multi_reduction <add>, %5, %cst_8 [1] : vector<5x32xf32> to vector<5xf32>
    %10 = vector.shape_cast %9 : vector<5xf32> to vector<5x1xf32>
    %cst_9 = arith.constant 3.200000e+01 : f32
    %11 = vector.broadcast %cst_9 : f32 to vector<5x1xf32>
    %12 = arith.divf %10, %11 : vector<5x1xf32>
    %13 = vector.broadcast %12 : vector<5x1xf32> to vector<5x32xf32>
    %14 = arith.subf %5, %13 : vector<5x32xf32>
    %15 = arith.mulf %14, %14 : vector<5x32xf32>
    %cst_10 = arith.constant dense<0.000000e+00> : vector<5xf32>
    %16 = vector.multi_reduction <add>, %15, %cst_10 [1] : vector<5x32xf32> to vector<5xf32>
    %17 = vector.shape_cast %16 : vector<5xf32> to vector<5x1xf32>
    %cst_11 = arith.constant 3.200000e+01 : f32
    %18 = vector.broadcast %cst_11 : f32 to vector<5x1xf32>
    %19 = arith.divf %17, %18 : vector<5x1xf32>
    %cst_12 = arith.constant 9.99999974E-6 : f32
    %20 = vector.broadcast %cst_12 : f32 to vector<5x1xf32>
    %21 = arith.addf %19, %20 : vector<5x1xf32>
    %22 = math.rsqrt %21 : vector<5x1xf32>
    %23 = vector.broadcast %22 : vector<5x1xf32> to vector<5x32xf32>
    %24 = arith.mulf %14, %23 : vector<5x32xf32>
    %25 = vector.broadcast %7 : vector<1x32xf32> to vector<5x32xf32>
    %26 = arith.mulf %24, %25 : vector<5x32xf32>
    %27 = vector.broadcast %8 : vector<1x32xf32> to vector<5x32xf32>
    %28 = arith.addf %26, %27 : vector<5x32xf32>
    %c0_13 = arith.constant 0 : index
    %c0_14 = arith.constant 0 : index
    %c0_15 = arith.constant 0 : index
    %29 = vector.load %arg5[%c0_13, %c0_14, %c0_15] : memref<2x2x32xf32, #tpu.memory_space<vmem>>, vector<1x2x32xf32>
    %30 = vector.shape_cast %29 : vector<1x2x32xf32> to vector<2x32xf32>
    %31 = vector.extract_strided_slice %30 {offsets = [0, 0], sizes = [1, 32], strides = [1, 1]} : vector<2x32xf32> to vector<1x32xf32>
    %32 = vector.extract_strided_slice %30 {offsets = [1, 0], sizes = [1, 32], strides = [1, 1]} : vector<2x32xf32> to vector<1x32xf32>
    %cst_16 = arith.constant dense<0.000000e+00> : vector<5xf32>
    %33 = vector.multi_reduction <add>, %28, %cst_16 [1] : vector<5x32xf32> to vector<5xf32>
    %34 = vector.shape_cast %33 : vector<5xf32> to vector<5x1xf32>
    %cst_17 = arith.constant 3.200000e+01 : f32
    %35 = vector.broadcast %cst_17 : f32 to vector<5x1xf32>
    %36 = arith.divf %34, %35 : vector<5x1xf32>
    %37 = vector.broadcast %36 : vector<5x1xf32> to vector<5x32xf32>
    %38 = arith.subf %28, %37 : vector<5x32xf32>
    %39 = arith.mulf %38, %38 : vector<5x32xf32>
    %cst_18 = arith.constant dense<0.000000e+00> : vector<5xf32>
    %40 = vector.multi_reduction <add>, %39, %cst_18 [1] : vector<5x32xf32> to vector<5xf32>
    %41 = vector.shape_cast %40 : vector<5xf32> to vector<5x1xf32>
    %cst_19 = arith.constant 3.200000e+01 : f32
    %42 = vector.broadcast %cst_19 : f32 to vector<5x1xf32>
    %43 = arith.divf %41, %42 : vector<5x1xf32>
    %cst_20 = arith.constant 9.99999974E-6 : f32
    %44 = vector.broadcast %cst_20 : f32 to vector<5x1xf32>
    %45 = arith.addf %43, %44 : vector<5x1xf32>
    %46 = math.rsqrt %45 : vector<5x1xf32>
    %47 = vector.broadcast %46 : vector<5x1xf32> to vector<5x32xf32>
    %48 = arith.mulf %38, %47 : vector<5x32xf32>
    %49 = vector.broadcast %31 : vector<1x32xf32> to vector<5x32xf32>
    %50 = arith.mulf %48, %49 : vector<5x32xf32>
    %51 = vector.broadcast %32 : vector<1x32xf32> to vector<5x32xf32>
    %52 = arith.addf %50, %51 : vector<5x32xf32>
    %cst_21 = arith.constant 0.000000e+00 : f32
    %53 = vector.broadcast %cst_21 : f32 to vector<5x32xf32>
    %c0_22 = arith.constant 0 : index
    %c0_23 = arith.constant 0 : index
    %c0_24 = arith.constant 0 : index
    %c0_25 = arith.constant 0 : index
    %54 = vector.load %arg6[%c0_22, %c0_23, %c0_24, %c0_25] : memref<2x4x32x8xf32, #tpu.memory_space<vmem>>, vector<1x1x32x8xf32>
    %55 = vector.shape_cast %54 : vector<1x1x32x8xf32> to vector<32x8xf32>
    %cst_26 = arith.constant dense<0.000000e+00> : vector<5x8xf32>
    %56 = tpu.matmul %52, %55, %cst_26 {dimension_numbers = #tpu.dot_dimension_numbers<[1], [0], [0], [1], [0, 0, 1, 1], [], []>} : vector<5x32xf32>, vector<32x8xf32>, vector<5x8xf32> -> vector<5x8xf32>
    %c0_27 = arith.constant 0 : index
    %c0_28 = arith.constant 0 : index
    %c0_29 = arith.constant 0 : index
    %c0_30 = arith.constant 0 : index
    %57 = vector.load %arg9[%c0_27, %c0_28, %c0_29, %c0_30] : memref<2x4x1x8xf32, #tpu.memory_space<vmem>>, vector<1x1x1x8xf32>
    %58 = vector.shape_cast %57 : vector<1x1x1x8xf32> to vector<1x8xf32>
    %59 = vector.broadcast %58 : vector<1x8xf32> to vector<5x8xf32>
    %60 = arith.addf %56, %59 : vector<5x8xf32>
    %c0_31 = arith.constant 0 : index
    %c0_32 = arith.constant 0 : index
    %c0_33 = arith.constant 0 : index
    %c0_34 = arith.constant 0 : index
    %61 = vector.load %arg7[%c0_31, %c0_32, %c0_33, %c0_34] : memref<2x4x32x8xf32, #tpu.memory_space<vmem>>, vector<1x1x32x8xf32>
    %62 = vector.shape_cast %61 : vector<1x1x32x8xf32> to vector<32x8xf32>
    %cst_35 = arith.constant dense<0.000000e+00> : vector<5x8xf32>
    %63 = tpu.matmul %52, %62, %cst_35 {dimension_numbers = #tpu.dot_dimension_numbers<[1], [0], [0], [1], [0, 0, 1, 1], [], []>} : vector<5x32xf32>, vector<32x8xf32>, vector<5x8xf32> -> vector<5x8xf32>
    %c0_36 = arith.constant 0 : index
    %c0_37 = arith.constant 0 : index
    %c0_38 = arith.constant 0 : index
    %c0_39 = arith.constant 0 : index
    %64 = vector.load %arg10[%c0_36, %c0_37, %c0_38, %c0_39] : memref<2x4x1x8xf32, #tpu.memory_space<vmem>>, vector<1x1x1x8xf32>
    %65 = vector.shape_cast %64 : vector<1x1x1x8xf32> to vector<1x8xf32>
    %66 = vector.broadcast %65 : vector<1x8xf32> to vector<5x8xf32>
    %67 = arith.addf %63, %66 : vector<5x8xf32>
    %c0_40 = arith.constant 0 : index
    %c0_41 = arith.constant 0 : index
    %c0_42 = arith.constant 0 : index
    %c0_43 = arith.constant 0 : index
    %68 = vector.load %arg8[%c0_40, %c0_41, %c0_42, %c0_43] : memref<2x4x32x8xf32, #tpu.memory_space<vmem>>, vector<1x1x32x8xf32>
    %69 = vector.shape_cast %68 : vector<1x1x32x8xf32> to vector<32x8xf32>
    %cst_44 = arith.constant dense<0.000000e+00> : vector<5x8xf32>
    %70 = tpu.matmul %52, %69, %cst_44 {dimension_numbers = #tpu.dot_dimension_numbers<[1], [0], [0], [1], [0, 0, 1, 1], [], []>} : vector<5x32xf32>, vector<32x8xf32>, vector<5x8xf32> -> vector<5x8xf32>
    %c0_45 = arith.constant 0 : index
    %c0_46 = arith.constant 0 : index
    %c0_47 = arith.constant 0 : index
    %c0_48 = arith.constant 0 : index
    %71 = vector.load %arg11[%c0_45, %c0_46, %c0_47, %c0_48] : memref<2x4x1x8xf32, #tpu.memory_space<vmem>>, vector<1x1x1x8xf32>
    %72 = vector.shape_cast %71 : vector<1x1x1x8xf32> to vector<1x8xf32>
    %73 = vector.broadcast %72 : vector<1x8xf32> to vector<5x8xf32>
    %74 = arith.addf %70, %73 : vector<5x8xf32>
    %cst_49 = arith.constant dense<0.000000e+00> : vector<5x5xf32>
    %75 = tpu.matmul %60, %67, %cst_49 {dimension_numbers = #tpu.dot_dimension_numbers<[1], [1], [0], [0], [0, 0, 1, 0], [], []>} : vector<5x8xf32>, vector<5x8xf32>, vector<5x5xf32> -> vector<5x5xf32>
    %cst_50 = arith.constant 0.353553385 : f32
    %76 = vector.broadcast %cst_50 : f32 to vector<5x5xf32>
    %77 = arith.mulf %75, %76 : vector<5x5xf32>
    %cst_51 = arith.constant dense<0xFF800000> : vector<5xf32>
    %78 = vector.multi_reduction <maximumf>, %77, %cst_51 [1] : vector<5x5xf32> to vector<5xf32>
    %79 = vector.shape_cast %78 : vector<5xf32> to vector<5x1xf32>
    %80 = vector.broadcast %79 : vector<5x1xf32> to vector<5x5xf32>
    %81 = arith.subf %77, %80 : vector<5x5xf32>
    %82 = math.exp %81 : vector<5x5xf32>
    %cst_52 = arith.constant dense<0.000000e+00> : vector<5xf32>
    %83 = vector.multi_reduction <add>, %82, %cst_52 [1] : vector<5x5xf32> to vector<5xf32>
    %84 = vector.shape_cast %83 : vector<5xf32> to vector<5x1xf32>
    %85 = tpu.reciprocal %84 {approx = true} : vector<5x1xf32> -> vector<5x1xf32>
    %86 = vector.broadcast %85 : vector<5x1xf32> to vector<5x5xf32>
    %87 = arith.mulf %82, %86 : vector<5x5xf32>
    %cst_53 = arith.constant dense<0.000000e+00> : vector<5x8xf32>
    %88 = tpu.matmul %87, %74, %cst_53 {dimension_numbers = #tpu.dot_dimension_numbers<[1], [0], [0], [1], [0, 0, 1, 1], [], []>} : vector<5x5xf32>, vector<5x8xf32>, vector<5x8xf32> -> vector<5x8xf32>
    %c0_54 = arith.constant 0 : index
    %c0_55 = arith.constant 0 : index
    %c0_56 = arith.constant 0 : index
    %c0_57 = arith.constant 0 : index
    %89 = vector.load %arg12[%c0_54, %c0_55, %c0_56, %c0_57] : memref<2x4x8x32xf32, #tpu.memory_space<vmem>>, vector<1x1x8x32xf32>
    %90 = vector.shape_cast %89 : vector<1x1x8x32xf32> to vector<8x32xf32>
    %cst_58 = arith.constant dense<0.000000e+00> : vector<5x32xf32>
    %91 = tpu.matmul %88, %90, %cst_58 {dimension_numbers = #tpu.dot_dimension_numbers<[1], [0], [0], [1], [0, 0, 1, 1], [], []>} : vector<5x8xf32>, vector<8x32xf32>, vector<5x32xf32> -> vector<5x32xf32>
    %92 = arith.addf %53, %91 : vector<5x32xf32>
    %c0_59 = arith.constant 0 : index
    %c1 = arith.constant 1 : index
    %c0_60 = arith.constant 0 : index
    %c0_61 = arith.constant 0 : index
    %93 = vector.load %arg6[%c0_59, %c1, %c0_60, %c0_61] : memref<2x4x32x8xf32, #tpu.memory_space<vmem>>, vector<1x1x32x8xf32>
    %94 = vector.shape_cast %93 : vector<1x1x32x8xf32> to vector<32x8xf32>
    %cst_62 = arith.constant dense<0.000000e+00> : vector<5x8xf32>
    %95 = tpu.matmul %52, %94, %cst_62 {dimension_numbers = #tpu.dot_dimension_numbers<[1], [0], [0], [1], [0, 0, 1, 1], [], []>} : vector<5x32xf32>, vector<32x8xf32>, vector<5x8xf32> -> vector<5x8xf32>
    %c0_63 = arith.constant 0 : index
    %c1_64 = arith.constant 1 : index
    %c0_65 = arith.constant 0 : index
    %c0_66 = arith.constant 0 : index
    %96 = vector.load %arg9[%c0_63, %c1_64, %c0_65, %c0_66] : memref<2x4x1x8xf32, #tpu.memory_space<vmem>>, vector<1x1x1x8xf32>
    %97 = vector.shape_cast %96 : vector<1x1x1x8xf32> to vector<1x8xf32>
    %98 = vector.broadcast %97 : vector<1x8xf32> to vector<5x8xf32>
    %99 = arith.addf %95, %98 : vector<5x8xf32>
    %c0_67 = arith.constant 0 : index
    %c1_68 = arith.constant 1 : index
    %c0_69 = arith.constant 0 : index
    %c0_70 = arith.constant 0 : index
    %100 = vector.load %arg7[%c0_67, %c1_68, %c0_69, %c0_70] : memref<2x4x32x8xf32, #tpu.memory_space<vmem>>, vector<1x1x32x8xf32>
    %101 = vector.shape_cast %100 : vector<1x1x32x8xf32> to vector<32x8xf32>
    %cst_71 = arith.constant dense<0.000000e+00> : vector<5x8xf32>
    %102 = tpu.matmul %52, %101, %cst_71 {dimension_numbers = #tpu.dot_dimension_numbers<[1], [0], [0], [1], [0, 0, 1, 1], [], []>} : vector<5x32xf32>, vector<32x8xf32>, vector<5x8xf32> -> vector<5x8xf32>
    %c0_72 = arith.constant 0 : index
    %c1_73 = arith.constant 1 : index
    %c0_74 = arith.constant 0 : index
    %c0_75 = arith.constant 0 : index
    %103 = vector.load %arg10[%c0_72, %c1_73, %c0_74, %c0_75] : memref<2x4x1x8xf32, #tpu.memory_space<vmem>>, vector<1x1x1x8xf32>
    %104 = vector.shape_cast %103 : vector<1x1x1x8xf32> to vector<1x8xf32>
    %105 = vector.broadcast %104 : vector<1x8xf32> to vector<5x8xf32>
    %106 = arith.addf %102, %105 : vector<5x8xf32>
    %c0_76 = arith.constant 0 : index
    %c1_77 = arith.constant 1 : index
    %c0_78 = arith.constant 0 : index
    %c0_79 = arith.constant 0 : index
    %107 = vector.load %arg8[%c0_76, %c1_77, %c0_78, %c0_79] : memref<2x4x32x8xf32, #tpu.memory_space<vmem>>, vector<1x1x32x8xf32>
    %108 = vector.shape_cast %107 : vector<1x1x32x8xf32> to vector<32x8xf32>
    %cst_80 = arith.constant dense<0.000000e+00> : vector<5x8xf32>
    %109 = tpu.matmul %52, %108, %cst_80 {dimension_numbers = #tpu.dot_dimension_numbers<[1], [0], [0], [1], [0, 0, 1, 1], [], []>} : vector<5x32xf32>, vector<32x8xf32>, vector<5x8xf32> -> vector<5x8xf32>
    %c0_81 = arith.constant 0 : index
    %c1_82 = arith.constant 1 : index
    %c0_83 = arith.constant 0 : index
    %c0_84 = arith.constant 0 : index
    %110 = vector.load %arg11[%c0_81, %c1_82, %c0_83, %c0_84] : memref<2x4x1x8xf32, #tpu.memory_space<vmem>>, vector<1x1x1x8xf32>
    %111 = vector.shape_cast %110 : vector<1x1x1x8xf32> to vector<1x8xf32>
    %112 = vector.broadcast %111 : vector<1x8xf32> to vector<5x8xf32>
    %113 = arith.addf %109, %112 : vector<5x8xf32>
    %cst_85 = arith.constant dense<0.000000e+00> : vector<5x5xf32>
    %114 = tpu.matmul %99, %106, %cst_85 {dimension_numbers = #tpu.dot_dimension_numbers<[1], [1], [0], [0], [0, 0, 1, 0], [], []>} : vector<5x8xf32>, vector<5x8xf32>, vector<5x5xf32> -> vector<5x5xf32>
    %cst_86 = arith.constant 0.353553385 : f32
    %115 = vector.broadcast %cst_86 : f32 to vector<5x5xf32>
    %116 = arith.mulf %114, %115 : vector<5x5xf32>
    %cst_87 = arith.constant dense<0xFF800000> : vector<5xf32>
    %117 = vector.multi_reduction <maximumf>, %116, %cst_87 [1] : vector<5x5xf32> to vector<5xf32>
    %118 = vector.shape_cast %117 : vector<5xf32> to vector<5x1xf32>
    %119 = vector.broadcast %118 : vector<5x1xf32> to vector<5x5xf32>
    %120 = arith.subf %116, %119 : vector<5x5xf32>
    %121 = math.exp %120 : vector<5x5xf32>
    %cst_88 = arith.constant dense<0.000000e+00> : vector<5xf32>
    %122 = vector.multi_reduction <add>, %121, %cst_88 [1] : vector<5x5xf32> to vector<5xf32>
    %123 = vector.shape_cast %122 : vector<5xf32> to vector<5x1xf32>
    %124 = tpu.reciprocal %123 {approx = true} : vector<5x1xf32> -> vector<5x1xf32>
    %125 = vector.broadcast %124 : vector<5x1xf32> to vector<5x5xf32>
    %126 = arith.mulf %121, %125 : vector<5x5xf32>
    %cst_89 = arith.constant dense<0.000000e+00> : vector<5x8xf32>
    %127 = tpu.matmul %126, %113, %cst_89 {dimension_numbers = #tpu.dot_dimension_numbers<[1], [0], [0], [1], [0, 0, 1, 1], [], []>} : vector<5x5xf32>, vector<5x8xf32>, vector<5x8xf32> -> vector<5x8xf32>
    %c0_90 = arith.constant 0 : index
    %c1_91 = arith.constant 1 : index
    %c0_92 = arith.constant 0 : index
    %c0_93 = arith.constant 0 : index
    %128 = vector.load %arg12[%c0_90, %c1_91, %c0_92, %c0_93] : memref<2x4x8x32xf32, #tpu.memory_space<vmem>>, vector<1x1x8x32xf32>
    %129 = vector.shape_cast %128 : vector<1x1x8x32xf32> to vector<8x32xf32>
    %cst_94 = arith.constant dense<0.000000e+00> : vector<5x32xf32>
    %130 = tpu.matmul %127, %129, %cst_94 {dimension_numbers = #tpu.dot_dimension_numbers<[1], [0], [0], [1], [0, 0, 1, 1], [], []>} : vector<5x8xf32>, vector<8x32xf32>, vector<5x32xf32> -> vector<5x32xf32>
    %131 = arith.addf %92, %130 : vector<5x32xf32>
    %c0_95 = arith.constant 0 : index
    %c2 = arith.constant 2 : index
    %c0_96 = arith.constant 0 : index
    %c0_97 = arith.constant 0 : index
    %132 = vector.load %arg6[%c0_95, %c2, %c0_96, %c0_97] : memref<2x4x32x8xf32, #tpu.memory_space<vmem>>, vector<1x1x32x8xf32>
    %133 = vector.shape_cast %132 : vector<1x1x32x8xf32> to vector<32x8xf32>
    %cst_98 = arith.constant dense<0.000000e+00> : vector<5x8xf32>
    %134 = tpu.matmul %52, %133, %cst_98 {dimension_numbers = #tpu.dot_dimension_numbers<[1], [0], [0], [1], [0, 0, 1, 1], [], []>} : vector<5x32xf32>, vector<32x8xf32>, vector<5x8xf32> -> vector<5x8xf32>
    %c0_99 = arith.constant 0 : index
    %c2_100 = arith.constant 2 : index
    %c0_101 = arith.constant 0 : index
    %c0_102 = arith.constant 0 : index
    %135 = vector.load %arg9[%c0_99, %c2_100, %c0_101, %c0_102] : memref<2x4x1x8xf32, #tpu.memory_space<vmem>>, vector<1x1x1x8xf32>
    %136 = vector.shape_cast %135 : vector<1x1x1x8xf32> to vector<1x8xf32>
    %137 = vector.broadcast %136 : vector<1x8xf32> to vector<5x8xf32>
    %138 = arith.addf %134, %137 : vector<5x8xf32>
    %c0_103 = arith.constant 0 : index
    %c2_104 = arith.constant 2 : index
    %c0_105 = arith.constant 0 : index
    %c0_106 = arith.constant 0 : index
    %139 = vector.load %arg7[%c0_103, %c2_104, %c0_105, %c0_106] : memref<2x4x32x8xf32, #tpu.memory_space<vmem>>, vector<1x1x32x8xf32>
    %140 = vector.shape_cast %139 : vector<1x1x32x8xf32> to vector<32x8xf32>
    %cst_107 = arith.constant dense<0.000000e+00> : vector<5x8xf32>
    %141 = tpu.matmul %52, %140, %cst_107 {dimension_numbers = #tpu.dot_dimension_numbers<[1], [0], [0], [1], [0, 0, 1, 1], [], []>} : vector<5x32xf32>, vector<32x8xf32>, vector<5x8xf32> -> vector<5x8xf32>
    %c0_108 = arith.constant 0 : index
    %c2_109 = arith.constant 2 : index
    %c0_110 = arith.constant 0 : index
    %c0_111 = arith.constant 0 : index
    %142 = vector.load %arg10[%c0_108, %c2_109, %c0_110, %c0_111] : memref<2x4x1x8xf32, #tpu.memory_space<vmem>>, vector<1x1x1x8xf32>
    %143 = vector.shape_cast %142 : vector<1x1x1x8xf32> to vector<1x8xf32>
    %144 = vector.broadcast %143 : vector<1x8xf32> to vector<5x8xf32>
    %145 = arith.addf %141, %144 : vector<5x8xf32>
    %c0_112 = arith.constant 0 : index
    %c2_113 = arith.constant 2 : index
    %c0_114 = arith.constant 0 : index
    %c0_115 = arith.constant 0 : index
    %146 = vector.load %arg8[%c0_112, %c2_113, %c0_114, %c0_115] : memref<2x4x32x8xf32, #tpu.memory_space<vmem>>, vector<1x1x32x8xf32>
    %147 = vector.shape_cast %146 : vector<1x1x32x8xf32> to vector<32x8xf32>
    %cst_116 = arith.constant dense<0.000000e+00> : vector<5x8xf32>
    %148 = tpu.matmul %52, %147, %cst_116 {dimension_numbers = #tpu.dot_dimension_numbers<[1], [0], [0], [1], [0, 0, 1, 1], [], []>} : vector<5x32xf32>, vector<32x8xf32>, vector<5x8xf32> -> vector<5x8xf32>
    %c0_117 = arith.constant 0 : index
    %c2_118 = arith.constant 2 : index
    %c0_119 = arith.constant 0 : index
    %c0_120 = arith.constant 0 : index
    %149 = vector.load %arg11[%c0_117, %c2_118, %c0_119, %c0_120] : memref<2x4x1x8xf32, #tpu.memory_space<vmem>>, vector<1x1x1x8xf32>
    %150 = vector.shape_cast %149 : vector<1x1x1x8xf32> to vector<1x8xf32>
    %151 = vector.broadcast %150 : vector<1x8xf32> to vector<5x8xf32>
    %152 = arith.addf %148, %151 : vector<5x8xf32>
    %cst_121 = arith.constant dense<0.000000e+00> : vector<5x5xf32>
    %153 = tpu.matmul %138, %145, %cst_121 {dimension_numbers = #tpu.dot_dimension_numbers<[1], [1], [0], [0], [0, 0, 1, 0], [], []>} : vector<5x8xf32>, vector<5x8xf32>, vector<5x5xf32> -> vector<5x5xf32>
    %cst_122 = arith.constant 0.353553385 : f32
    %154 = vector.broadcast %cst_122 : f32 to vector<5x5xf32>
    %155 = arith.mulf %153, %154 : vector<5x5xf32>
    %cst_123 = arith.constant dense<0xFF800000> : vector<5xf32>
    %156 = vector.multi_reduction <maximumf>, %155, %cst_123 [1] : vector<5x5xf32> to vector<5xf32>
    %157 = vector.shape_cast %156 : vector<5xf32> to vector<5x1xf32>
    %158 = vector.broadcast %157 : vector<5x1xf32> to vector<5x5xf32>
    %159 = arith.subf %155, %158 : vector<5x5xf32>
    %160 = math.exp %159 : vector<5x5xf32>
    %cst_124 = arith.constant dense<0.000000e+00> : vector<5xf32>
    %161 = vector.multi_reduction <add>, %160, %cst_124 [1] : vector<5x5xf32> to vector<5xf32>
    %162 = vector.shape_cast %161 : vector<5xf32> to vector<5x1xf32>
    %163 = tpu.reciprocal %162 {approx = true} : vector<5x1xf32> -> vector<5x1xf32>
    %164 = vector.broadcast %163 : vector<5x1xf32> to vector<5x5xf32>
    %165 = arith.mulf %160, %164 : vector<5x5xf32>
    %cst_125 = arith.constant dense<0.000000e+00> : vector<5x8xf32>
    %166 = tpu.matmul %165, %152, %cst_125 {dimension_numbers = #tpu.dot_dimension_numbers<[1], [0], [0], [1], [0, 0, 1, 1], [], []>} : vector<5x5xf32>, vector<5x8xf32>, vector<5x8xf32> -> vector<5x8xf32>
    %c0_126 = arith.constant 0 : index
    %c2_127 = arith.constant 2 : index
    %c0_128 = arith.constant 0 : index
    %c0_129 = arith.constant 0 : index
    %167 = vector.load %arg12[%c0_126, %c2_127, %c0_128, %c0_129] : memref<2x4x8x32xf32, #tpu.memory_space<vmem>>, vector<1x1x8x32xf32>
    %168 = vector.shape_cast %167 : vector<1x1x8x32xf32> to vector<8x32xf32>
    %cst_130 = arith.constant dense<0.000000e+00> : vector<5x32xf32>
    %169 = tpu.matmul %166, %168, %cst_130 {dimension_numbers = #tpu.dot_dimension_numbers<[1], [0], [0], [1], [0, 0, 1, 1], [], []>} : vector<5x8xf32>, vector<8x32xf32>, vector<5x32xf32> -> vector<5x32xf32>
    %170 = arith.addf %131, %169 : vector<5x32xf32>
    %c0_131 = arith.constant 0 : index
    %c3 = arith.constant 3 : index
    %c0_132 = arith.constant 0 : index
    %c0_133 = arith.constant 0 : index
    %171 = vector.load %arg6[%c0_131, %c3, %c0_132, %c0_133] : memref<2x4x32x8xf32, #tpu.memory_space<vmem>>, vector<1x1x32x8xf32>
    %172 = vector.shape_cast %171 : vector<1x1x32x8xf32> to vector<32x8xf32>
    %cst_134 = arith.constant dense<0.000000e+00> : vector<5x8xf32>
    %173 = tpu.matmul %52, %172, %cst_134 {dimension_numbers = #tpu.dot_dimension_numbers<[1], [0], [0], [1], [0, 0, 1, 1], [], []>} : vector<5x32xf32>, vector<32x8xf32>, vector<5x8xf32> -> vector<5x8xf32>
    %c0_135 = arith.constant 0 : index
    %c3_136 = arith.constant 3 : index
    %c0_137 = arith.constant 0 : index
    %c0_138 = arith.constant 0 : index
    %174 = vector.load %arg9[%c0_135, %c3_136, %c0_137, %c0_138] : memref<2x4x1x8xf32, #tpu.memory_space<vmem>>, vector<1x1x1x8xf32>
    %175 = vector.shape_cast %174 : vector<1x1x1x8xf32> to vector<1x8xf32>
    %176 = vector.broadcast %175 : vector<1x8xf32> to vector<5x8xf32>
    %177 = arith.addf %173, %176 : vector<5x8xf32>
    %c0_139 = arith.constant 0 : index
    %c3_140 = arith.constant 3 : index
    %c0_141 = arith.constant 0 : index
    %c0_142 = arith.constant 0 : index
    %178 = vector.load %arg7[%c0_139, %c3_140, %c0_141, %c0_142] : memref<2x4x32x8xf32, #tpu.memory_space<vmem>>, vector<1x1x32x8xf32>
    %179 = vector.shape_cast %178 : vector<1x1x32x8xf32> to vector<32x8xf32>
    %cst_143 = arith.constant dense<0.000000e+00> : vector<5x8xf32>
    %180 = tpu.matmul %52, %179, %cst_143 {dimension_numbers = #tpu.dot_dimension_numbers<[1], [0], [0], [1], [0, 0, 1, 1], [], []>} : vector<5x32xf32>, vector<32x8xf32>, vector<5x8xf32> -> vector<5x8xf32>
    %c0_144 = arith.constant 0 : index
    %c3_145 = arith.constant 3 : index
    %c0_146 = arith.constant 0 : index
    %c0_147 = arith.constant 0 : index
    %181 = vector.load %arg10[%c0_144, %c3_145, %c0_146, %c0_147] : memref<2x4x1x8xf32, #tpu.memory_space<vmem>>, vector<1x1x1x8xf32>
    %182 = vector.shape_cast %181 : vector<1x1x1x8xf32> to vector<1x8xf32>
    %183 = vector.broadcast %182 : vector<1x8xf32> to vector<5x8xf32>
    %184 = arith.addf %180, %183 : vector<5x8xf32>
    %c0_148 = arith.constant 0 : index
    %c3_149 = arith.constant 3 : index
    %c0_150 = arith.constant 0 : index
    %c0_151 = arith.constant 0 : index
    %185 = vector.load %arg8[%c0_148, %c3_149, %c0_150, %c0_151] : memref<2x4x32x8xf32, #tpu.memory_space<vmem>>, vector<1x1x32x8xf32>
    %186 = vector.shape_cast %185 : vector<1x1x32x8xf32> to vector<32x8xf32>
    %cst_152 = arith.constant dense<0.000000e+00> : vector<5x8xf32>
    %187 = tpu.matmul %52, %186, %cst_152 {dimension_numbers = #tpu.dot_dimension_numbers<[1], [0], [0], [1], [0, 0, 1, 1], [], []>} : vector<5x32xf32>, vector<32x8xf32>, vector<5x8xf32> -> vector<5x8xf32>
    %c0_153 = arith.constant 0 : index
    %c3_154 = arith.constant 3 : index
    %c0_155 = arith.constant 0 : index
    %c0_156 = arith.constant 0 : index
    %188 = vector.load %arg11[%c0_153, %c3_154, %c0_155, %c0_156] : memref<2x4x1x8xf32, #tpu.memory_space<vmem>>, vector<1x1x1x8xf32>
    %189 = vector.shape_cast %188 : vector<1x1x1x8xf32> to vector<1x8xf32>
    %190 = vector.broadcast %189 : vector<1x8xf32> to vector<5x8xf32>
    %191 = arith.addf %187, %190 : vector<5x8xf32>
    %cst_157 = arith.constant dense<0.000000e+00> : vector<5x5xf32>
    %192 = tpu.matmul %177, %184, %cst_157 {dimension_numbers = #tpu.dot_dimension_numbers<[1], [1], [0], [0], [0, 0, 1, 0], [], []>} : vector<5x8xf32>, vector<5x8xf32>, vector<5x5xf32> -> vector<5x5xf32>
    %cst_158 = arith.constant 0.353553385 : f32
    %193 = vector.broadcast %cst_158 : f32 to vector<5x5xf32>
    %194 = arith.mulf %192, %193 : vector<5x5xf32>
    %cst_159 = arith.constant dense<0xFF800000> : vector<5xf32>
    %195 = vector.multi_reduction <maximumf>, %194, %cst_159 [1] : vector<5x5xf32> to vector<5xf32>
    %196 = vector.shape_cast %195 : vector<5xf32> to vector<5x1xf32>
    %197 = vector.broadcast %196 : vector<5x1xf32> to vector<5x5xf32>
    %198 = arith.subf %194, %197 : vector<5x5xf32>
    %199 = math.exp %198 : vector<5x5xf32>
    %cst_160 = arith.constant dense<0.000000e+00> : vector<5xf32>
    %200 = vector.multi_reduction <add>, %199, %cst_160 [1] : vector<5x5xf32> to vector<5xf32>
    %201 = vector.shape_cast %200 : vector<5xf32> to vector<5x1xf32>
    %202 = tpu.reciprocal %201 {approx = true} : vector<5x1xf32> -> vector<5x1xf32>
    %203 = vector.broadcast %202 : vector<5x1xf32> to vector<5x5xf32>
    %204 = arith.mulf %199, %203 : vector<5x5xf32>
    %cst_161 = arith.constant dense<0.000000e+00> : vector<5x8xf32>
    %205 = tpu.matmul %204, %191, %cst_161 {dimension_numbers = #tpu.dot_dimension_numbers<[1], [0], [0], [1], [0, 0, 1, 1], [], []>} : vector<5x5xf32>, vector<5x8xf32>, vector<5x8xf32> -> vector<5x8xf32>
    %c0_162 = arith.constant 0 : index
    %c3_163 = arith.constant 3 : index
    %c0_164 = arith.constant 0 : index
    %c0_165 = arith.constant 0 : index
    %206 = vector.load %arg12[%c0_162, %c3_163, %c0_164, %c0_165] : memref<2x4x8x32xf32, #tpu.memory_space<vmem>>, vector<1x1x8x32xf32>
    %207 = vector.shape_cast %206 : vector<1x1x8x32xf32> to vector<8x32xf32>
    %cst_166 = arith.constant dense<0.000000e+00> : vector<5x32xf32>
    %208 = tpu.matmul %205, %207, %cst_166 {dimension_numbers = #tpu.dot_dimension_numbers<[1], [0], [0], [1], [0, 0, 1, 1], [], []>} : vector<5x8xf32>, vector<8x32xf32>, vector<5x32xf32> -> vector<5x32xf32>
    %209 = arith.addf %170, %208 : vector<5x32xf32>
    %210 = arith.addf %28, %209 : vector<5x32xf32>
    %c0_167 = arith.constant 0 : index
    %c0_168 = arith.constant 0 : index
    %c0_169 = arith.constant 0 : index
    %211 = vector.load %arg13[%c0_167, %c0_168, %c0_169] : memref<2x1x32xf32, #tpu.memory_space<vmem>>, vector<1x1x32xf32>
    %212 = vector.shape_cast %211 : vector<1x1x32xf32> to vector<1x32xf32>
    %213 = vector.broadcast %212 : vector<1x32xf32> to vector<5x32xf32>
    %214 = arith.addf %210, %213 : vector<5x32xf32>
    %c0_170 = arith.constant 0 : index
    %c0_171 = arith.constant 0 : index
    %c0_172 = arith.constant 0 : index
    %215 = vector.load %arg14[%c0_170, %c0_171, %c0_172] : memref<2x2x32xf32, #tpu.memory_space<vmem>>, vector<1x2x32xf32>
    %216 = vector.shape_cast %215 : vector<1x2x32xf32> to vector<2x32xf32>
    %217 = vector.extract_strided_slice %216 {offsets = [0, 0], sizes = [1, 32], strides = [1, 1]} : vector<2x32xf32> to vector<1x32xf32>
    %218 = vector.extract_strided_slice %216 {offsets = [1, 0], sizes = [1, 32], strides = [1, 1]} : vector<2x32xf32> to vector<1x32xf32>
    %cst_173 = arith.constant dense<0.000000e+00> : vector<5xf32>
    %219 = vector.multi_reduction <add>, %214, %cst_173 [1] : vector<5x32xf32> to vector<5xf32>
    %220 = vector.shape_cast %219 : vector<5xf32> to vector<5x1xf32>
    %cst_174 = arith.constant 3.200000e+01 : f32
    %221 = vector.broadcast %cst_174 : f32 to vector<5x1xf32>
    %222 = arith.divf %220, %221 : vector<5x1xf32>
    %223 = vector.broadcast %222 : vector<5x1xf32> to vector<5x32xf32>
    %224 = arith.subf %214, %223 : vector<5x32xf32>
    %225 = arith.mulf %224, %224 : vector<5x32xf32>
    %cst_175 = arith.constant dense<0.000000e+00> : vector<5xf32>
    %226 = vector.multi_reduction <add>, %225, %cst_175 [1] : vector<5x32xf32> to vector<5xf32>
    %227 = vector.shape_cast %226 : vector<5xf32> to vector<5x1xf32>
    %cst_176 = arith.constant 3.200000e+01 : f32
    %228 = vector.broadcast %cst_176 : f32 to vector<5x1xf32>
    %229 = arith.divf %227, %228 : vector<5x1xf32>
    %cst_177 = arith.constant 9.99999974E-6 : f32
    %230 = vector.broadcast %cst_177 : f32 to vector<5x1xf32>
    %231 = arith.addf %229, %230 : vector<5x1xf32>
    %232 = math.rsqrt %231 : vector<5x1xf32>
    %233 = vector.broadcast %232 : vector<5x1xf32> to vector<5x32xf32>
    %234 = arith.mulf %224, %233 : vector<5x32xf32>
    %235 = vector.broadcast %217 : vector<1x32xf32> to vector<5x32xf32>
    %236 = arith.mulf %234, %235 : vector<5x32xf32>
    %237 = vector.broadcast %218 : vector<1x32xf32> to vector<5x32xf32>
    %238 = arith.addf %236, %237 : vector<5x32xf32>
    %c0_178 = arith.constant 0 : index
    %c0_179 = arith.constant 0 : index
    %c0_180 = arith.constant 0 : index
    %239 = vector.load %arg15[%c0_178, %c0_179, %c0_180] : memref<2x32x128xf32, #tpu.memory_space<vmem>>, vector<1x32x128xf32>
    %240 = vector.shape_cast %239 : vector<1x32x128xf32> to vector<32x128xf32>
    %cst_181 = arith.constant dense<0.000000e+00> : vector<5x128xf32>
    %241 = tpu.matmul %238, %240, %cst_181 {dimension_numbers = #tpu.dot_dimension_numbers<[1], [0], [0], [1], [0, 0, 1, 1], [], []>} : vector<5x32xf32>, vector<32x128xf32>, vector<5x128xf32> -> vector<5x128xf32>
    %c0_182 = arith.constant 0 : index
    %c0_183 = arith.constant 0 : index
    %c0_184 = arith.constant 0 : index
    %242 = vector.load %arg16[%c0_182, %c0_183, %c0_184] : memref<2x1x128xf32, #tpu.memory_space<vmem>>, vector<1x1x128xf32>
    %243 = vector.shape_cast %242 : vector<1x1x128xf32> to vector<1x128xf32>
    %244 = vector.broadcast %243 : vector<1x128xf32> to vector<5x128xf32>
    %245 = arith.addf %241, %244 : vector<5x128xf32>
    %cst_185 = arith.constant 1.702000e+00 : f32
    %246 = vector.broadcast %cst_185 : f32 to vector<5x128xf32>
    %247 = arith.mulf %246, %245 : vector<5x128xf32>
    %248 = arith.negf %247 : vector<5x128xf32>
    %249 = math.exp %248 : vector<5x128xf32>
    %cst_186 = arith.constant 1.000000e+00 : f32
    %250 = vector.broadcast %cst_186 : f32 to vector<5x128xf32>
    %251 = arith.addf %250, %249 : vector<5x128xf32>
    %252 = arith.divf %250, %251 : vector<5x128xf32>
    %253 = arith.mulf %245, %252 : vector<5x128xf32>
    %c0_187 = arith.constant 0 : index
    %c0_188 = arith.constant 0 : index
    %c0_189 = arith.constant 0 : index
    %254 = vector.load %arg17[%c0_187, %c0_188, %c0_189] : memref<2x128x32xf32, #tpu.memory_space<vmem>>, vector<1x128x32xf32>
    %255 = vector.shape_cast %254 : vector<1x128x32xf32> to vector<128x32xf32>
    %cst_190 = arith.constant dense<0.000000e+00> : vector<5x32xf32>
    %256 = tpu.matmul %253, %255, %cst_190 {dimension_numbers = #tpu.dot_dimension_numbers<[1], [0], [0], [1], [0, 0, 1, 1], [], []>} : vector<5x128xf32>, vector<128x32xf32>, vector<5x32xf32> -> vector<5x32xf32>
    %c0_191 = arith.constant 0 : index
    %c0_192 = arith.constant 0 : index
    %c0_193 = arith.constant 0 : index
    %257 = vector.load %arg18[%c0_191, %c0_192, %c0_193] : memref<2x1x32xf32, #tpu.memory_space<vmem>>, vector<1x1x32xf32>
    %258 = vector.shape_cast %257 : vector<1x1x32xf32> to vector<1x32xf32>
    %259 = vector.broadcast %258 : vector<1x32xf32> to vector<5x32xf32>
    %260 = arith.addf %256, %259 : vector<5x32xf32>
    %261 = arith.addf %214, %260 : vector<5x32xf32>
    %c1_194 = arith.constant 1 : index
    %c0_195 = arith.constant 0 : index
    %c0_196 = arith.constant 0 : index
    %262 = vector.load %arg5[%c1_194, %c0_195, %c0_196] : memref<2x2x32xf32, #tpu.memory_space<vmem>>, vector<1x2x32xf32>
    %263 = vector.shape_cast %262 : vector<1x2x32xf32> to vector<2x32xf32>
    %264 = vector.extract_strided_slice %263 {offsets = [0, 0], sizes = [1, 32], strides = [1, 1]} : vector<2x32xf32> to vector<1x32xf32>
    %265 = vector.extract_strided_slice %263 {offsets = [1, 0], sizes = [1, 32], strides = [1, 1]} : vector<2x32xf32> to vector<1x32xf32>
    %cst_197 = arith.constant dense<0.000000e+00> : vector<5xf32>
    %266 = vector.multi_reduction <add>, %261, %cst_197 [1] : vector<5x32xf32> to vector<5xf32>
    %267 = vector.shape_cast %266 : vector<5xf32> to vector<5x1xf32>
    %cst_198 = arith.constant 3.200000e+01 : f32
    %268 = vector.broadcast %cst_198 : f32 to vector<5x1xf32>
    %269 = arith.divf %267, %268 : vector<5x1xf32>
    %270 = vector.broadcast %269 : vector<5x1xf32> to vector<5x32xf32>
    %271 = arith.subf %261, %270 : vector<5x32xf32>
    %272 = arith.mulf %271, %271 : vector<5x32xf32>
    %cst_199 = arith.constant dense<0.000000e+00> : vector<5xf32>
    %273 = vector.multi_reduction <add>, %272, %cst_199 [1] : vector<5x32xf32> to vector<5xf32>
    %274 = vector.shape_cast %273 : vector<5xf32> to vector<5x1xf32>
    %cst_200 = arith.constant 3.200000e+01 : f32
    %275 = vector.broadcast %cst_200 : f32 to vector<5x1xf32>
    %276 = arith.divf %274, %275 : vector<5x1xf32>
    %cst_201 = arith.constant 9.99999974E-6 : f32
    %277 = vector.broadcast %cst_201 : f32 to vector<5x1xf32>
    %278 = arith.addf %276, %277 : vector<5x1xf32>
    %279 = math.rsqrt %278 : vector<5x1xf32>
    %280 = vector.broadcast %279 : vector<5x1xf32> to vector<5x32xf32>
    %281 = arith.mulf %271, %280 : vector<5x32xf32>
    %282 = vector.broadcast %264 : vector<1x32xf32> to vector<5x32xf32>
    %283 = arith.mulf %281, %282 : vector<5x32xf32>
    %284 = vector.broadcast %265 : vector<1x32xf32> to vector<5x32xf32>
    %285 = arith.addf %283, %284 : vector<5x32xf32>
    %cst_202 = arith.constant 0.000000e+00 : f32
    %286 = vector.broadcast %cst_202 : f32 to vector<5x32xf32>
    %c1_203 = arith.constant 1 : index
    %c0_204 = arith.constant 0 : index
    %c0_205 = arith.constant 0 : index
    %c0_206 = arith.constant 0 : index
    %287 = vector.load %arg6[%c1_203, %c0_204, %c0_205, %c0_206] : memref<2x4x32x8xf32, #tpu.memory_space<vmem>>, vector<1x1x32x8xf32>
    %288 = vector.shape_cast %287 : vector<1x1x32x8xf32> to vector<32x8xf32>
    %cst_207 = arith.constant dense<0.000000e+00> : vector<5x8xf32>
    %289 = tpu.matmul %285, %288, %cst_207 {dimension_numbers = #tpu.dot_dimension_numbers<[1], [0], [0], [1], [0, 0, 1, 1], [], []>} : vector<5x32xf32>, vector<32x8xf32>, vector<5x8xf32> -> vector<5x8xf32>
    %c1_208 = arith.constant 1 : index
    %c0_209 = arith.constant 0 : index
    %c0_210 = arith.constant 0 : index
    %c0_211 = arith.constant 0 : index
    %290 = vector.load %arg9[%c1_208, %c0_209, %c0_210, %c0_211] : memref<2x4x1x8xf32, #tpu.memory_space<vmem>>, vector<1x1x1x8xf32>
    %291 = vector.shape_cast %290 : vector<1x1x1x8xf32> to vector<1x8xf32>
    %292 = vector.broadcast %291 : vector<1x8xf32> to vector<5x8xf32>
    %293 = arith.addf %289, %292 : vector<5x8xf32>
    %c1_212 = arith.constant 1 : index
    %c0_213 = arith.constant 0 : index
    %c0_214 = arith.constant 0 : index
    %c0_215 = arith.constant 0 : index
    %294 = vector.load %arg7[%c1_212, %c0_213, %c0_214, %c0_215] : memref<2x4x32x8xf32, #tpu.memory_space<vmem>>, vector<1x1x32x8xf32>
    %295 = vector.shape_cast %294 : vector<1x1x32x8xf32> to vector<32x8xf32>
    %cst_216 = arith.constant dense<0.000000e+00> : vector<5x8xf32>
    %296 = tpu.matmul %285, %295, %cst_216 {dimension_numbers = #tpu.dot_dimension_numbers<[1], [0], [0], [1], [0, 0, 1, 1], [], []>} : vector<5x32xf32>, vector<32x8xf32>, vector<5x8xf32> -> vector<5x8xf32>
    %c1_217 = arith.constant 1 : index
    %c0_218 = arith.constant 0 : index
    %c0_219 = arith.constant 0 : index
    %c0_220 = arith.constant 0 : index
    %297 = vector.load %arg10[%c1_217, %c0_218, %c0_219, %c0_220] : memref<2x4x1x8xf32, #tpu.memory_space<vmem>>, vector<1x1x1x8xf32>
    %298 = vector.shape_cast %297 : vector<1x1x1x8xf32> to vector<1x8xf32>
    %299 = vector.broadcast %298 : vector<1x8xf32> to vector<5x8xf32>
    %300 = arith.addf %296, %299 : vector<5x8xf32>
    %c1_221 = arith.constant 1 : index
    %c0_222 = arith.constant 0 : index
    %c0_223 = arith.constant 0 : index
    %c0_224 = arith.constant 0 : index
    %301 = vector.load %arg8[%c1_221, %c0_222, %c0_223, %c0_224] : memref<2x4x32x8xf32, #tpu.memory_space<vmem>>, vector<1x1x32x8xf32>
    %302 = vector.shape_cast %301 : vector<1x1x32x8xf32> to vector<32x8xf32>
    %cst_225 = arith.constant dense<0.000000e+00> : vector<5x8xf32>
    %303 = tpu.matmul %285, %302, %cst_225 {dimension_numbers = #tpu.dot_dimension_numbers<[1], [0], [0], [1], [0, 0, 1, 1], [], []>} : vector<5x32xf32>, vector<32x8xf32>, vector<5x8xf32> -> vector<5x8xf32>
    %c1_226 = arith.constant 1 : index
    %c0_227 = arith.constant 0 : index
    %c0_228 = arith.constant 0 : index
    %c0_229 = arith.constant 0 : index
    %304 = vector.load %arg11[%c1_226, %c0_227, %c0_228, %c0_229] : memref<2x4x1x8xf32, #tpu.memory_space<vmem>>, vector<1x1x1x8xf32>
    %305 = vector.shape_cast %304 : vector<1x1x1x8xf32> to vector<1x8xf32>
    %306 = vector.broadcast %305 : vector<1x8xf32> to vector<5x8xf32>
    %307 = arith.addf %303, %306 : vector<5x8xf32>
    %cst_230 = arith.constant dense<0.000000e+00> : vector<5x5xf32>
    %308 = tpu.matmul %293, %300, %cst_230 {dimension_numbers = #tpu.dot_dimension_numbers<[1], [1], [0], [0], [0, 0, 1, 0], [], []>} : vector<5x8xf32>, vector<5x8xf32>, vector<5x5xf32> -> vector<5x5xf32>
    %cst_231 = arith.constant 0.353553385 : f32
    %309 = vector.broadcast %cst_231 : f32 to vector<5x5xf32>
    %310 = arith.mulf %308, %309 : vector<5x5xf32>
    %cst_232 = arith.constant dense<0xFF800000> : vector<5xf32>
    %311 = vector.multi_reduction <maximumf>, %310, %cst_232 [1] : vector<5x5xf32> to vector<5xf32>
    %312 = vector.shape_cast %311 : vector<5xf32> to vector<5x1xf32>
    %313 = vector.broadcast %312 : vector<5x1xf32> to vector<5x5xf32>
    %314 = arith.subf %310, %313 : vector<5x5xf32>
    %315 = math.exp %314 : vector<5x5xf32>
    %cst_233 = arith.constant dense<0.000000e+00> : vector<5xf32>
    %316 = vector.multi_reduction <add>, %315, %cst_233 [1] : vector<5x5xf32> to vector<5xf32>
    %317 = vector.shape_cast %316 : vector<5xf32> to vector<5x1xf32>
    %318 = tpu.reciprocal %317 {approx = true} : vector<5x1xf32> -> vector<5x1xf32>
    %319 = vector.broadcast %318 : vector<5x1xf32> to vector<5x5xf32>
    %320 = arith.mulf %315, %319 : vector<5x5xf32>
    %cst_234 = arith.constant dense<0.000000e+00> : vector<5x8xf32>
    %321 = tpu.matmul %320, %307, %cst_234 {dimension_numbers = #tpu.dot_dimension_numbers<[1], [0], [0], [1], [0, 0, 1, 1], [], []>} : vector<5x5xf32>, vector<5x8xf32>, vector<5x8xf32> -> vector<5x8xf32>
    %c1_235 = arith.constant 1 : index
    %c0_236 = arith.constant 0 : index
    %c0_237 = arith.constant 0 : index
    %c0_238 = arith.constant 0 : index
    %322 = vector.load %arg12[%c1_235, %c0_236, %c0_237, %c0_238] : memref<2x4x8x32xf32, #tpu.memory_space<vmem>>, vector<1x1x8x32xf32>
    %323 = vector.shape_cast %322 : vector<1x1x8x32xf32> to vector<8x32xf32>
    %cst_239 = arith.constant dense<0.000000e+00> : vector<5x32xf32>
    %324 = tpu.matmul %321, %323, %cst_239 {dimension_numbers = #tpu.dot_dimension_numbers<[1], [0], [0], [1], [0, 0, 1, 1], [], []>} : vector<5x8xf32>, vector<8x32xf32>, vector<5x32xf32> -> vector<5x32xf32>
    %325 = arith.addf %286, %324 : vector<5x32xf32>
    %c1_240 = arith.constant 1 : index
    %c1_241 = arith.constant 1 : index
    %c0_242 = arith.constant 0 : index
    %c0_243 = arith.constant 0 : index
    %326 = vector.load %arg6[%c1_240, %c1_241, %c0_242, %c0_243] : memref<2x4x32x8xf32, #tpu.memory_space<vmem>>, vector<1x1x32x8xf32>
    %327 = vector.shape_cast %326 : vector<1x1x32x8xf32> to vector<32x8xf32>
    %cst_244 = arith.constant dense<0.000000e+00> : vector<5x8xf32>
    %328 = tpu.matmul %285, %327, %cst_244 {dimension_numbers = #tpu.dot_dimension_numbers<[1], [0], [0], [1], [0, 0, 1, 1], [], []>} : vector<5x32xf32>, vector<32x8xf32>, vector<5x8xf32> -> vector<5x8xf32>
    %c1_245 = arith.constant 1 : index
    %c1_246 = arith.constant 1 : index
    %c0_247 = arith.constant 0 : index
    %c0_248 = arith.constant 0 : index
    %329 = vector.load %arg9[%c1_245, %c1_246, %c0_247, %c0_248] : memref<2x4x1x8xf32, #tpu.memory_space<vmem>>, vector<1x1x1x8xf32>
    %330 = vector.shape_cast %329 : vector<1x1x1x8xf32> to vector<1x8xf32>
    %331 = vector.broadcast %330 : vector<1x8xf32> to vector<5x8xf32>
    %332 = arith.addf %328, %331 : vector<5x8xf32>
    %c1_249 = arith.constant 1 : index
    %c1_250 = arith.constant 1 : index
    %c0_251 = arith.constant 0 : index
    %c0_252 = arith.constant 0 : index
    %333 = vector.load %arg7[%c1_249, %c1_250, %c0_251, %c0_252] : memref<2x4x32x8xf32, #tpu.memory_space<vmem>>, vector<1x1x32x8xf32>
    %334 = vector.shape_cast %333 : vector<1x1x32x8xf32> to vector<32x8xf32>
    %cst_253 = arith.constant dense<0.000000e+00> : vector<5x8xf32>
    %335 = tpu.matmul %285, %334, %cst_253 {dimension_numbers = #tpu.dot_dimension_numbers<[1], [0], [0], [1], [0, 0, 1, 1], [], []>} : vector<5x32xf32>, vector<32x8xf32>, vector<5x8xf32> -> vector<5x8xf32>
    %c1_254 = arith.constant 1 : index
    %c1_255 = arith.constant 1 : index
    %c0_256 = arith.constant 0 : index
    %c0_257 = arith.constant 0 : index
    %336 = vector.load %arg10[%c1_254, %c1_255, %c0_256, %c0_257] : memref<2x4x1x8xf32, #tpu.memory_space<vmem>>, vector<1x1x1x8xf32>
    %337 = vector.shape_cast %336 : vector<1x1x1x8xf32> to vector<1x8xf32>
    %338 = vector.broadcast %337 : vector<1x8xf32> to vector<5x8xf32>
    %339 = arith.addf %335, %338 : vector<5x8xf32>
    %c1_258 = arith.constant 1 : index
    %c1_259 = arith.constant 1 : index
    %c0_260 = arith.constant 0 : index
    %c0_261 = arith.constant 0 : index
    %340 = vector.load %arg8[%c1_258, %c1_259, %c0_260, %c0_261] : memref<2x4x32x8xf32, #tpu.memory_space<vmem>>, vector<1x1x32x8xf32>
    %341 = vector.shape_cast %340 : vector<1x1x32x8xf32> to vector<32x8xf32>
    %cst_262 = arith.constant dense<0.000000e+00> : vector<5x8xf32>
    %342 = tpu.matmul %285, %341, %cst_262 {dimension_numbers = #tpu.dot_dimension_numbers<[1], [0], [0], [1], [0, 0, 1, 1], [], []>} : vector<5x32xf32>, vector<32x8xf32>, vector<5x8xf32> -> vector<5x8xf32>
    %c1_263 = arith.constant 1 : index
    %c1_264 = arith.constant 1 : index
    %c0_265 = arith.constant 0 : index
    %c0_266 = arith.constant 0 : index
    %343 = vector.load %arg11[%c1_263, %c1_264, %c0_265, %c0_266] : memref<2x4x1x8xf32, #tpu.memory_space<vmem>>, vector<1x1x1x8xf32>
    %344 = vector.shape_cast %343 : vector<1x1x1x8xf32> to vector<1x8xf32>
    %345 = vector.broadcast %344 : vector<1x8xf32> to vector<5x8xf32>
    %346 = arith.addf %342, %345 : vector<5x8xf32>
    %cst_267 = arith.constant dense<0.000000e+00> : vector<5x5xf32>
    %347 = tpu.matmul %332, %339, %cst_267 {dimension_numbers = #tpu.dot_dimension_numbers<[1], [1], [0], [0], [0, 0, 1, 0], [], []>} : vector<5x8xf32>, vector<5x8xf32>, vector<5x5xf32> -> vector<5x5xf32>
    %cst_268 = arith.constant 0.353553385 : f32
    %348 = vector.broadcast %cst_268 : f32 to vector<5x5xf32>
    %349 = arith.mulf %347, %348 : vector<5x5xf32>
    %cst_269 = arith.constant dense<0xFF800000> : vector<5xf32>
    %350 = vector.multi_reduction <maximumf>, %349, %cst_269 [1] : vector<5x5xf32> to vector<5xf32>
    %351 = vector.shape_cast %350 : vector<5xf32> to vector<5x1xf32>
    %352 = vector.broadcast %351 : vector<5x1xf32> to vector<5x5xf32>
    %353 = arith.subf %349, %352 : vector<5x5xf32>
    %354 = math.exp %353 : vector<5x5xf32>
    %cst_270 = arith.constant dense<0.000000e+00> : vector<5xf32>
    %355 = vector.multi_reduction <add>, %354, %cst_270 [1] : vector<5x5xf32> to vector<5xf32>
    %356 = vector.shape_cast %355 : vector<5xf32> to vector<5x1xf32>
    %357 = tpu.reciprocal %356 {approx = true} : vector<5x1xf32> -> vector<5x1xf32>
    %358 = vector.broadcast %357 : vector<5x1xf32> to vector<5x5xf32>
    %359 = arith.mulf %354, %358 : vector<5x5xf32>
    %cst_271 = arith.constant dense<0.000000e+00> : vector<5x8xf32>
    %360 = tpu.matmul %359, %346, %cst_271 {dimension_numbers = #tpu.dot_dimension_numbers<[1], [0], [0], [1], [0, 0, 1, 1], [], []>} : vector<5x5xf32>, vector<5x8xf32>, vector<5x8xf32> -> vector<5x8xf32>
    %c1_272 = arith.constant 1 : index
    %c1_273 = arith.constant 1 : index
    %c0_274 = arith.constant 0 : index
    %c0_275 = arith.constant 0 : index
    %361 = vector.load %arg12[%c1_272, %c1_273, %c0_274, %c0_275] : memref<2x4x8x32xf32, #tpu.memory_space<vmem>>, vector<1x1x8x32xf32>
    %362 = vector.shape_cast %361 : vector<1x1x8x32xf32> to vector<8x32xf32>
    %cst_276 = arith.constant dense<0.000000e+00> : vector<5x32xf32>
    %363 = tpu.matmul %360, %362, %cst_276 {dimension_numbers = #tpu.dot_dimension_numbers<[1], [0], [0], [1], [0, 0, 1, 1], [], []>} : vector<5x8xf32>, vector<8x32xf32>, vector<5x32xf32> -> vector<5x32xf32>
    %364 = arith.addf %325, %363 : vector<5x32xf32>
    %c1_277 = arith.constant 1 : index
    %c2_278 = arith.constant 2 : index
    %c0_279 = arith.constant 0 : index
    %c0_280 = arith.constant 0 : index
    %365 = vector.load %arg6[%c1_277, %c2_278, %c0_279, %c0_280] : memref<2x4x32x8xf32, #tpu.memory_space<vmem>>, vector<1x1x32x8xf32>
    %366 = vector.shape_cast %365 : vector<1x1x32x8xf32> to vector<32x8xf32>
    %cst_281 = arith.constant dense<0.000000e+00> : vector<5x8xf32>
    %367 = tpu.matmul %285, %366, %cst_281 {dimension_numbers = #tpu.dot_dimension_numbers<[1], [0], [0], [1], [0, 0, 1, 1], [], []>} : vector<5x32xf32>, vector<32x8xf32>, vector<5x8xf32> -> vector<5x8xf32>
    %c1_282 = arith.constant 1 : index
    %c2_283 = arith.constant 2 : index
    %c0_284 = arith.constant 0 : index
    %c0_285 = arith.constant 0 : index
    %368 = vector.load %arg9[%c1_282, %c2_283, %c0_284, %c0_285] : memref<2x4x1x8xf32, #tpu.memory_space<vmem>>, vector<1x1x1x8xf32>
    %369 = vector.shape_cast %368 : vector<1x1x1x8xf32> to vector<1x8xf32>
    %370 = vector.broadcast %369 : vector<1x8xf32> to vector<5x8xf32>
    %371 = arith.addf %367, %370 : vector<5x8xf32>
    %c1_286 = arith.constant 1 : index
    %c2_287 = arith.constant 2 : index
    %c0_288 = arith.constant 0 : index
    %c0_289 = arith.constant 0 : index
    %372 = vector.load %arg7[%c1_286, %c2_287, %c0_288, %c0_289] : memref<2x4x32x8xf32, #tpu.memory_space<vmem>>, vector<1x1x32x8xf32>
    %373 = vector.shape_cast %372 : vector<1x1x32x8xf32> to vector<32x8xf32>
    %cst_290 = arith.constant dense<0.000000e+00> : vector<5x8xf32>
    %374 = tpu.matmul %285, %373, %cst_290 {dimension_numbers = #tpu.dot_dimension_numbers<[1], [0], [0], [1], [0, 0, 1, 1], [], []>} : vector<5x32xf32>, vector<32x8xf32>, vector<5x8xf32> -> vector<5x8xf32>
    %c1_291 = arith.constant 1 : index
    %c2_292 = arith.constant 2 : index
    %c0_293 = arith.constant 0 : index
    %c0_294 = arith.constant 0 : index
    %375 = vector.load %arg10[%c1_291, %c2_292, %c0_293, %c0_294] : memref<2x4x1x8xf32, #tpu.memory_space<vmem>>, vector<1x1x1x8xf32>
    %376 = vector.shape_cast %375 : vector<1x1x1x8xf32> to vector<1x8xf32>
    %377 = vector.broadcast %376 : vector<1x8xf32> to vector<5x8xf32>
    %378 = arith.addf %374, %377 : vector<5x8xf32>
    %c1_295 = arith.constant 1 : index
    %c2_296 = arith.constant 2 : index
    %c0_297 = arith.constant 0 : index
    %c0_298 = arith.constant 0 : index
    %379 = vector.load %arg8[%c1_295, %c2_296, %c0_297, %c0_298] : memref<2x4x32x8xf32, #tpu.memory_space<vmem>>, vector<1x1x32x8xf32>
    %380 = vector.shape_cast %379 : vector<1x1x32x8xf32> to vector<32x8xf32>
    %cst_299 = arith.constant dense<0.000000e+00> : vector<5x8xf32>
    %381 = tpu.matmul %285, %380, %cst_299 {dimension_numbers = #tpu.dot_dimension_numbers<[1], [0], [0], [1], [0, 0, 1, 1], [], []>} : vector<5x32xf32>, vector<32x8xf32>, vector<5x8xf32> -> vector<5x8xf32>
    %c1_300 = arith.constant 1 : index
    %c2_301 = arith.constant 2 : index
    %c0_302 = arith.constant 0 : index
    %c0_303 = arith.constant 0 : index
    %382 = vector.load %arg11[%c1_300, %c2_301, %c0_302, %c0_303] : memref<2x4x1x8xf32, #tpu.memory_space<vmem>>, vector<1x1x1x8xf32>
    %383 = vector.shape_cast %382 : vector<1x1x1x8xf32> to vector<1x8xf32>
    %384 = vector.broadcast %383 : vector<1x8xf32> to vector<5x8xf32>
    %385 = arith.addf %381, %384 : vector<5x8xf32>
    %cst_304 = arith.constant dense<0.000000e+00> : vector<5x5xf32>
    %386 = tpu.matmul %371, %378, %cst_304 {dimension_numbers = #tpu.dot_dimension_numbers<[1], [1], [0], [0], [0, 0, 1, 0], [], []>} : vector<5x8xf32>, vector<5x8xf32>, vector<5x5xf32> -> vector<5x5xf32>
    %cst_305 = arith.constant 0.353553385 : f32
    %387 = vector.broadcast %cst_305 : f32 to vector<5x5xf32>
    %388 = arith.mulf %386, %387 : vector<5x5xf32>
    %cst_306 = arith.constant dense<0xFF800000> : vector<5xf32>
    %389 = vector.multi_reduction <maximumf>, %388, %cst_306 [1] : vector<5x5xf32> to vector<5xf32>
    %390 = vector.shape_cast %389 : vector<5xf32> to vector<5x1xf32>
    %391 = vector.broadcast %390 : vector<5x1xf32> to vector<5x5xf32>
    %392 = arith.subf %388, %391 : vector<5x5xf32>
    %393 = math.exp %392 : vector<5x5xf32>
    %cst_307 = arith.constant dense<0.000000e+00> : vector<5xf32>
    %394 = vector.multi_reduction <add>, %393, %cst_307 [1] : vector<5x5xf32> to vector<5xf32>
    %395 = vector.shape_cast %394 : vector<5xf32> to vector<5x1xf32>
    %396 = tpu.reciprocal %395 {approx = true} : vector<5x1xf32> -> vector<5x1xf32>
    %397 = vector.broadcast %396 : vector<5x1xf32> to vector<5x5xf32>
    %398 = arith.mulf %393, %397 : vector<5x5xf32>
    %cst_308 = arith.constant dense<0.000000e+00> : vector<5x8xf32>
    %399 = tpu.matmul %398, %385, %cst_308 {dimension_numbers = #tpu.dot_dimension_numbers<[1], [0], [0], [1], [0, 0, 1, 1], [], []>} : vector<5x5xf32>, vector<5x8xf32>, vector<5x8xf32> -> vector<5x8xf32>
    %c1_309 = arith.constant 1 : index
    %c2_310 = arith.constant 2 : index
    %c0_311 = arith.constant 0 : index
    %c0_312 = arith.constant 0 : index
    %400 = vector.load %arg12[%c1_309, %c2_310, %c0_311, %c0_312] : memref<2x4x8x32xf32, #tpu.memory_space<vmem>>, vector<1x1x8x32xf32>
    %401 = vector.shape_cast %400 : vector<1x1x8x32xf32> to vector<8x32xf32>
    %cst_313 = arith.constant dense<0.000000e+00> : vector<5x32xf32>
    %402 = tpu.matmul %399, %401, %cst_313 {dimension_numbers = #tpu.dot_dimension_numbers<[1], [0], [0], [1], [0, 0, 1, 1], [], []>} : vector<5x8xf32>, vector<8x32xf32>, vector<5x32xf32> -> vector<5x32xf32>
    %403 = arith.addf %364, %402 : vector<5x32xf32>
    %c1_314 = arith.constant 1 : index
    %c3_315 = arith.constant 3 : index
    %c0_316 = arith.constant 0 : index
    %c0_317 = arith.constant 0 : index
    %404 = vector.load %arg6[%c1_314, %c3_315, %c0_316, %c0_317] : memref<2x4x32x8xf32, #tpu.memory_space<vmem>>, vector<1x1x32x8xf32>
    %405 = vector.shape_cast %404 : vector<1x1x32x8xf32> to vector<32x8xf32>
    %cst_318 = arith.constant dense<0.000000e+00> : vector<5x8xf32>
    %406 = tpu.matmul %285, %405, %cst_318 {dimension_numbers = #tpu.dot_dimension_numbers<[1], [0], [0], [1], [0, 0, 1, 1], [], []>} : vector<5x32xf32>, vector<32x8xf32>, vector<5x8xf32> -> vector<5x8xf32>
    %c1_319 = arith.constant 1 : index
    %c3_320 = arith.constant 3 : index
    %c0_321 = arith.constant 0 : index
    %c0_322 = arith.constant 0 : index
    %407 = vector.load %arg9[%c1_319, %c3_320, %c0_321, %c0_322] : memref<2x4x1x8xf32, #tpu.memory_space<vmem>>, vector<1x1x1x8xf32>
    %408 = vector.shape_cast %407 : vector<1x1x1x8xf32> to vector<1x8xf32>
    %409 = vector.broadcast %408 : vector<1x8xf32> to vector<5x8xf32>
    %410 = arith.addf %406, %409 : vector<5x8xf32>
    %c1_323 = arith.constant 1 : index
    %c3_324 = arith.constant 3 : index
    %c0_325 = arith.constant 0 : index
    %c0_326 = arith.constant 0 : index
    %411 = vector.load %arg7[%c1_323, %c3_324, %c0_325, %c0_326] : memref<2x4x32x8xf32, #tpu.memory_space<vmem>>, vector<1x1x32x8xf32>
    %412 = vector.shape_cast %411 : vector<1x1x32x8xf32> to vector<32x8xf32>
    %cst_327 = arith.constant dense<0.000000e+00> : vector<5x8xf32>
    %413 = tpu.matmul %285, %412, %cst_327 {dimension_numbers = #tpu.dot_dimension_numbers<[1], [0], [0], [1], [0, 0, 1, 1], [], []>} : vector<5x32xf32>, vector<32x8xf32>, vector<5x8xf32> -> vector<5x8xf32>
    %c1_328 = arith.constant 1 : index
    %c3_329 = arith.constant 3 : index
    %c0_330 = arith.constant 0 : index
    %c0_331 = arith.constant 0 : index
    %414 = vector.load %arg10[%c1_328, %c3_329, %c0_330, %c0_331] : memref<2x4x1x8xf32, #tpu.memory_space<vmem>>, vector<1x1x1x8xf32>
    %415 = vector.shape_cast %414 : vector<1x1x1x8xf32> to vector<1x8xf32>
    %416 = vector.broadcast %415 : vector<1x8xf32> to vector<5x8xf32>
    %417 = arith.addf %413, %416 : vector<5x8xf32>
    %c1_332 = arith.constant 1 : index
    %c3_333 = arith.constant 3 : index
    %c0_334 = arith.constant 0 : index
    %c0_335 = arith.constant 0 : index
    %418 = vector.load %arg8[%c1_332, %c3_333, %c0_334, %c0_335] : memref<2x4x32x8xf32, #tpu.memory_space<vmem>>, vector<1x1x32x8xf32>
    %419 = vector.shape_cast %418 : vector<1x1x32x8xf32> to vector<32x8xf32>
    %cst_336 = arith.constant dense<0.000000e+00> : vector<5x8xf32>
    %420 = tpu.matmul %285, %419, %cst_336 {dimension_numbers = #tpu.dot_dimension_numbers<[1], [0], [0], [1], [0, 0, 1, 1], [], []>} : vector<5x32xf32>, vector<32x8xf32>, vector<5x8xf32> -> vector<5x8xf32>
    %c1_337 = arith.constant 1 : index
    %c3_338 = arith.constant 3 : index
    %c0_339 = arith.constant 0 : index
    %c0_340 = arith.constant 0 : index
    %421 = vector.load %arg11[%c1_337, %c3_338, %c0_339, %c0_340] : memref<2x4x1x8xf32, #tpu.memory_space<vmem>>, vector<1x1x1x8xf32>
    %422 = vector.shape_cast %421 : vector<1x1x1x8xf32> to vector<1x8xf32>
    %423 = vector.broadcast %422 : vector<1x8xf32> to vector<5x8xf32>
    %424 = arith.addf %420, %423 : vector<5x8xf32>
    %cst_341 = arith.constant dense<0.000000e+00> : vector<5x5xf32>
    %425 = tpu.matmul %410, %417, %cst_341 {dimension_numbers = #tpu.dot_dimension_numbers<[1], [1], [0], [0], [0, 0, 1, 0], [], []>} : vector<5x8xf32>, vector<5x8xf32>, vector<5x5xf32> -> vector<5x5xf32>
    %cst_342 = arith.constant 0.353553385 : f32
    %426 = vector.broadcast %cst_342 : f32 to vector<5x5xf32>
    %427 = arith.mulf %425, %426 : vector<5x5xf32>
    %cst_343 = arith.constant dense<0xFF800000> : vector<5xf32>
    %428 = vector.multi_reduction <maximumf>, %427, %cst_343 [1] : vector<5x5xf32> to vector<5xf32>
    %429 = vector.shape_cast %428 : vector<5xf32> to vector<5x1xf32>
    %430 = vector.broadcast %429 : vector<5x1xf32> to vector<5x5xf32>
    %431 = arith.subf %427, %430 : vector<5x5xf32>
    %432 = math.exp %431 : vector<5x5xf32>
    %cst_344 = arith.constant dense<0.000000e+00> : vector<5xf32>
    %433 = vector.multi_reduction <add>, %432, %cst_344 [1] : vector<5x5xf32> to vector<5xf32>
    %434 = vector.shape_cast %433 : vector<5xf32> to vector<5x1xf32>
    %435 = tpu.reciprocal %434 {approx = true} : vector<5x1xf32> -> vector<5x1xf32>
    %436 = vector.broadcast %435 : vector<5x1xf32> to vector<5x5xf32>
    %437 = arith.mulf %432, %436 : vector<5x5xf32>
    %cst_345 = arith.constant dense<0.000000e+00> : vector<5x8xf32>
    %438 = tpu.matmul %437, %424, %cst_345 {dimension_numbers = #tpu.dot_dimension_numbers<[1], [0], [0], [1], [0, 0, 1, 1], [], []>} : vector<5x5xf32>, vector<5x8xf32>, vector<5x8xf32> -> vector<5x8xf32>
    %c1_346 = arith.constant 1 : index
    %c3_347 = arith.constant 3 : index
    %c0_348 = arith.constant 0 : index
    %c0_349 = arith.constant 0 : index
    %439 = vector.load %arg12[%c1_346, %c3_347, %c0_348, %c0_349] : memref<2x4x8x32xf32, #tpu.memory_space<vmem>>, vector<1x1x8x32xf32>
    %440 = vector.shape_cast %439 : vector<1x1x8x32xf32> to vector<8x32xf32>
    %cst_350 = arith.constant dense<0.000000e+00> : vector<5x32xf32>
    %441 = tpu.matmul %438, %440, %cst_350 {dimension_numbers = #tpu.dot_dimension_numbers<[1], [0], [0], [1], [0, 0, 1, 1], [], []>} : vector<5x8xf32>, vector<8x32xf32>, vector<5x32xf32> -> vector<5x32xf32>
    %442 = arith.addf %403, %441 : vector<5x32xf32>
    %443 = arith.addf %261, %442 : vector<5x32xf32>
    %c1_351 = arith.constant 1 : index
    %c0_352 = arith.constant 0 : index
    %c0_353 = arith.constant 0 : index
    %444 = vector.load %arg13[%c1_351, %c0_352, %c0_353] : memref<2x1x32xf32, #tpu.memory_space<vmem>>, vector<1x1x32xf32>
    %445 = vector.shape_cast %444 : vector<1x1x32xf32> to vector<1x32xf32>
    %446 = vector.broadcast %445 : vector<1x32xf32> to vector<5x32xf32>
    %447 = arith.addf %443, %446 : vector<5x32xf32>
    %c1_354 = arith.constant 1 : index
    %c0_355 = arith.constant 0 : index
    %c0_356 = arith.constant 0 : index
    %448 = vector.load %arg14[%c1_354, %c0_355, %c0_356] : memref<2x2x32xf32, #tpu.memory_space<vmem>>, vector<1x2x32xf32>
    %449 = vector.shape_cast %448 : vector<1x2x32xf32> to vector<2x32xf32>
    %450 = vector.extract_strided_slice %449 {offsets = [0, 0], sizes = [1, 32], strides = [1, 1]} : vector<2x32xf32> to vector<1x32xf32>
    %451 = vector.extract_strided_slice %449 {offsets = [1, 0], sizes = [1, 32], strides = [1, 1]} : vector<2x32xf32> to vector<1x32xf32>
    %cst_357 = arith.constant dense<0.000000e+00> : vector<5xf32>
    %452 = vector.multi_reduction <add>, %447, %cst_357 [1] : vector<5x32xf32> to vector<5xf32>
    %453 = vector.shape_cast %452 : vector<5xf32> to vector<5x1xf32>
    %cst_358 = arith.constant 3.200000e+01 : f32
    %454 = vector.broadcast %cst_358 : f32 to vector<5x1xf32>
    %455 = arith.divf %453, %454 : vector<5x1xf32>
    %456 = vector.broadcast %455 : vector<5x1xf32> to vector<5x32xf32>
    %457 = arith.subf %447, %456 : vector<5x32xf32>
    %458 = arith.mulf %457, %457 : vector<5x32xf32>
    %cst_359 = arith.constant dense<0.000000e+00> : vector<5xf32>
    %459 = vector.multi_reduction <add>, %458, %cst_359 [1] : vector<5x32xf32> to vector<5xf32>
    %460 = vector.shape_cast %459 : vector<5xf32> to vector<5x1xf32>
    %cst_360 = arith.constant 3.200000e+01 : f32
    %461 = vector.broadcast %cst_360 : f32 to vector<5x1xf32>
    %462 = arith.divf %460, %461 : vector<5x1xf32>
    %cst_361 = arith.constant 9.99999974E-6 : f32
    %463 = vector.broadcast %cst_361 : f32 to vector<5x1xf32>
    %464 = arith.addf %462, %463 : vector<5x1xf32>
    %465 = math.rsqrt %464 : vector<5x1xf32>
    %466 = vector.broadcast %465 : vector<5x1xf32> to vector<5x32xf32>
    %467 = arith.mulf %457, %466 : vector<5x32xf32>
    %468 = vector.broadcast %450 : vector<1x32xf32> to vector<5x32xf32>
    %469 = arith.mulf %467, %468 : vector<5x32xf32>
    %470 = vector.broadcast %451 : vector<1x32xf32> to vector<5x32xf32>
    %471 = arith.addf %469, %470 : vector<5x32xf32>
    %c1_362 = arith.constant 1 : index
    %c0_363 = arith.constant 0 : index
    %c0_364 = arith.constant 0 : index
    %472 = vector.load %arg15[%c1_362, %c0_363, %c0_364] : memref<2x32x128xf32, #tpu.memory_space<vmem>>, vector<1x32x128xf32>
    %473 = vector.shape_cast %472 : vector<1x32x128xf32> to vector<32x128xf32>
    %cst_365 = arith.constant dense<0.000000e+00> : vector<5x128xf32>
    %474 = tpu.matmul %471, %473, %cst_365 {dimension_numbers = #tpu.dot_dimension_numbers<[1], [0], [0], [1], [0, 0, 1, 1], [], []>} : vector<5x32xf32>, vector<32x128xf32>, vector<5x128xf32> -> vector<5x128xf32>
    %c1_366 = arith.constant 1 : index
    %c0_367 = arith.constant 0 : index
    %c0_368 = arith.constant 0 : index
    %475 = vector.load %arg16[%c1_366, %c0_367, %c0_368] : memref<2x1x128xf32, #tpu.memory_space<vmem>>, vector<1x1x128xf32>
    %476 = vector.shape_cast %475 : vector<1x1x128xf32> to vector<1x128xf32>
    %477 = vector.broadcast %476 : vector<1x128xf32> to vector<5x128xf32>
    %478 = arith.addf %474, %477 : vector<5x128xf32>
    %cst_369 = arith.constant 1.702000e+00 : f32
    %479 = vector.broadcast %cst_369 : f32 to vector<5x128xf32>
    %480 = arith.mulf %479, %478 : vector<5x128xf32>
    %481 = arith.negf %480 : vector<5x128xf32>
    %482 = math.exp %481 : vector<5x128xf32>
    %cst_370 = arith.constant 1.000000e+00 : f32
    %483 = vector.broadcast %cst_370 : f32 to vector<5x128xf32>
    %484 = arith.addf %483, %482 : vector<5x128xf32>
    %485 = arith.divf %483, %484 : vector<5x128xf32>
    %486 = arith.mulf %478, %485 : vector<5x128xf32>
    %c1_371 = arith.constant 1 : index
    %c0_372 = arith.constant 0 : index
    %c0_373 = arith.constant 0 : index
    %487 = vector.load %arg17[%c1_371, %c0_372, %c0_373] : memref<2x128x32xf32, #tpu.memory_space<vmem>>, vector<1x128x32xf32>
    %488 = vector.shape_cast %487 : vector<1x128x32xf32> to vector<128x32xf32>
    %cst_374 = arith.constant dense<0.000000e+00> : vector<5x32xf32>
    %489 = tpu.matmul %486, %488, %cst_374 {dimension_numbers = #tpu.dot_dimension_numbers<[1], [0], [0], [1], [0, 0, 1, 1], [], []>} : vector<5x128xf32>, vector<128x32xf32>, vector<5x32xf32> -> vector<5x32xf32>
    %c1_375 = arith.constant 1 : index
    %c0_376 = arith.constant 0 : index
    %c0_377 = arith.constant 0 : index
    %490 = vector.load %arg18[%c1_375, %c0_376, %c0_377] : memref<2x1x32xf32, #tpu.memory_space<vmem>>, vector<1x1x32xf32>
    %491 = vector.shape_cast %490 : vector<1x1x32xf32> to vector<1x32xf32>
    %492 = vector.broadcast %491 : vector<1x32xf32> to vector<5x32xf32>
    %493 = arith.addf %489, %492 : vector<5x32xf32>
    %494 = arith.addf %447, %493 : vector<5x32xf32>
    %c0_378 = arith.constant 0 : index
    %c0_379 = arith.constant 0 : index
    %495 = vector.load %arg19[%c0_378, %c0_379] : memref<2x32xf32, #tpu.memory_space<vmem>>, vector<2x32xf32>
    %496 = vector.extract_strided_slice %494 {offsets = [0, 0], sizes = [1, 32], strides = [1, 1]} : vector<5x32xf32> to vector<1x32xf32>
    %497 = vector.extract_strided_slice %495 {offsets = [0, 0], sizes = [1, 32], strides = [1, 1]} : vector<2x32xf32> to vector<1x32xf32>
    %498 = vector.extract_strided_slice %495 {offsets = [1, 0], sizes = [1, 32], strides = [1, 1]} : vector<2x32xf32> to vector<1x32xf32>
    %cst_380 = arith.constant dense<0.000000e+00> : vector<1xf32>
    %499 = vector.multi_reduction <add>, %496, %cst_380 [1] : vector<1x32xf32> to vector<1xf32>
    %500 = vector.shape_cast %499 : vector<1xf32> to vector<1x1xf32>
    %cst_381 = arith.constant 3.200000e+01 : f32
    %501 = vector.broadcast %cst_381 : f32 to vector<1x1xf32>
    %502 = arith.divf %500, %501 : vector<1x1xf32>
    %503 = vector.broadcast %502 : vector<1x1xf32> to vector<1x32xf32>
    %504 = arith.subf %496, %503 : vector<1x32xf32>
    %505 = arith.mulf %504, %504 : vector<1x32xf32>
    %cst_382 = arith.constant dense<0.000000e+00> : vector<1xf32>
    %506 = vector.multi_reduction <add>, %505, %cst_382 [1] : vector<1x32xf32> to vector<1xf32>
    %507 = vector.shape_cast %506 : vector<1xf32> to vector<1x1xf32>
    %cst_383 = arith.constant 3.200000e+01 : f32
    %508 = vector.broadcast %cst_383 : f32 to vector<1x1xf32>
    %509 = arith.divf %507, %508 : vector<1x1xf32>
    %cst_384 = arith.constant 9.99999974E-6 : f32
    %510 = vector.broadcast %cst_384 : f32 to vector<1x1xf32>
    %511 = arith.addf %509, %510 : vector<1x1xf32>
    %512 = math.rsqrt %511 : vector<1x1xf32>
    %513 = vector.broadcast %512 : vector<1x1xf32> to vector<1x32xf32>
    %514 = arith.mulf %504, %513 : vector<1x32xf32>
    %515 = arith.mulf %514, %497 : vector<1x32xf32>
    %516 = arith.addf %515, %498 : vector<1x32xf32>
    %c0_385 = arith.constant 0 : index
    %c0_386 = arith.constant 0 : index
    %517 = vector.load %arg20[%c0_385, %c0_386] : memref<32x16xf32, #tpu.memory_space<vmem>>, vector<32x16xf32>
    %cst_387 = arith.constant dense<0.000000e+00> : vector<1x16xf32>
    %518 = tpu.matmul %516, %517, %cst_387 {dimension_numbers = #tpu.dot_dimension_numbers<[1], [0], [0], [1], [0, 0, 1, 1], [], []>} : vector<1x32xf32>, vector<32x16xf32>, vector<1x16xf32> -> vector<1x16xf32>
    %519 = arith.mulf %518, %518 : vector<1x16xf32>
    %cst_388 = arith.constant dense<0.000000e+00> : vector<1xf32>
    %520 = vector.multi_reduction <add>, %519, %cst_388 [1] : vector<1x16xf32> to vector<1xf32>
    %521 = vector.shape_cast %520 : vector<1xf32> to vector<1x1xf32>
    %cst_389 = arith.constant 9.99999996E-13 : f32
    %522 = vector.broadcast %cst_389 : f32 to vector<1x1xf32>
    %523 = arith.addf %521, %522 : vector<1x1xf32>
    %524 = math.rsqrt %523 : vector<1x1xf32>
    %525 = vector.broadcast %524 : vector<1x1xf32> to vector<1x16xf32>
    %526 = arith.mulf %518, %525 : vector<1x16xf32>
    %c0_390 = arith.constant 0 : index
    %c0_391 = arith.constant 0 : index
    %527 = vector.load %arg21[%c0_390, %c0_391] : memref<16x128xf32, #tpu.memory_space<vmem>>, vector<16x128xf32>
    %cst_392 = arith.constant dense<0.000000e+00> : vector<1x128xf32>
    %528 = tpu.matmul %526, %527, %cst_392 {dimension_numbers = #tpu.dot_dimension_numbers<[1], [0], [0], [1], [0, 0, 1, 1], [], []>} : vector<1x16xf32>, vector<16x128xf32>, vector<1x128xf32> -> vector<1x128xf32>
    %c0_393 = arith.constant 0 : index
    %c0_394 = arith.constant 0 : index
    %c0_395 = arith.constant 0 : index
    %529 = vector.load %arg22[%c0_393, %c0_394, %c0_395] : memref<1x1x128xf32, #tpu.memory_space<vmem>>, vector<1x1x128xf32>
    %530 = vector.shape_cast %529 : vector<1x1x128xf32> to vector<1x128xf32>
    %531 = vector.shape_cast %528 : vector<1x128xf32> to vector<1x1x128xf32>
    tpu.vector_store %arg22[%c0_393, %c0_394, %c0_395], %531 {strides = array<i32>} : memref<1x1x128xf32, #tpu.memory_space<vmem>>, vector<1x1x128xf32>,
    return
  }
  func.func @transform_0(%arg0: i32) -> (i32, i32, i32) {
    %c0_i32 = arith.constant 0 : i32
    %c0_i32_0 = arith.constant 0 : i32
    %c0_i32_1 = arith.constant 0 : i32
    return %arg0, %c0_i32, %c0_i32_0 : i32, i32, i32
  }
  func.func @transform_1(%arg0: i32) -> (i32, i32) {
    %c0_i32 = arith.constant 0 : i32
    %c0_i32_0 = arith.constant 0 : i32
    %c0_i32_1 = arith.constant 0 : i32
    return %c0_i32, %c0_i32_0 : i32, i32
  }
  func.func @transform_2(%arg0: i32) -> (i32, i32) {
    %c0_i32 = arith.constant 0 : i32
    %c0_i32_0 = arith.constant 0 : i32
    %c0_i32_1 = arith.constant 0 : i32
    return %c0_i32, %c0_i32_0 : i32, i32
  }
  func.func @transform_3(%arg0: i32) -> (i32, i32) {
    %c0_i32 = arith.constant 0 : i32
    %c0_i32_0 = arith.constant 0 : i32
    %c0_i32_1 = arith.constant 0 : i32
    return %c0_i32, %c0_i32_0 : i32, i32
  }
  func.func @transform_4(%arg0: i32) -> (i32, i32, i32) {
    %c0_i32 = arith.constant 0 : i32
    %c0_i32_0 = arith.constant 0 : i32
    %c0_i32_1 = arith.constant 0 : i32
    %c0_i32_2 = arith.constant 0 : i32
    return %c0_i32, %c0_i32_0, %c0_i32_1 : i32, i32, i32
  }
  func.func @transform_5(%arg0: i32) -> (i32, i32, i32, i32) {
    %c0_i32 = arith.constant 0 : i32
    %c0_i32_0 = arith.constant 0 : i32
    %c0_i32_1 = arith.constant 0 : i32
    %c0_i32_2 = arith.constant 0 : i32
    %c0_i32_3 = arith.constant 0 : i32
    return %c0_i32, %c0_i32_0, %c0_i32_1, %c0_i32_2 : i32, i32, i32, i32
  }
  func.func @transform_6(%arg0: i32) -> (i32, i32, i32, i32) {
    %c0_i32 = arith.constant 0 : i32
    %c0_i32_0 = arith.constant 0 : i32
    %c0_i32_1 = arith.constant 0 : i32
    %c0_i32_2 = arith.constant 0 : i32
    %c0_i32_3 = arith.constant 0 : i32
    return %c0_i32, %c0_i32_0, %c0_i32_1, %c0_i32_2 : i32, i32, i32, i32
  }
  func.func @transform_7(%arg0: i32) -> (i32, i32, i32, i32) {
    %c0_i32 = arith.constant 0 : i32
    %c0_i32_0 = arith.constant 0 : i32
    %c0_i32_1 = arith.constant 0 : i32
    %c0_i32_2 = arith.constant 0 : i32
    %c0_i32_3 = arith.constant 0 : i32
    return %c0_i32, %c0_i32_0, %c0_i32_1, %c0_i32_2 : i32, i32, i32, i32
  }
  func.func @transform_8(%arg0: i32) -> (i32, i32, i32, i32) {
    %c0_i32 = arith.constant 0 : i32
    %c0_i32_0 = arith.constant 0 : i32
    %c0_i32_1 = arith.constant 0 : i32
    %c0_i32_2 = arith.constant 0 : i32
    %c0_i32_3 = arith.constant 0 : i32
    return %c0_i32, %c0_i32_0, %c0_i32_1, %c0_i32_2 : i32, i32, i32, i32
  }
  func.func @transform_9(%arg0: i32) -> (i32, i32, i32, i32) {
    %c0_i32 = arith.constant 0 : i32
    %c0_i32_0 = arith.constant 0 : i32
    %c0_i32_1 = arith.constant 0 : i32
    %c0_i32_2 = arith.constant 0 : i32
    %c0_i32_3 = arith.constant 0 : i32
    return %c0_i32, %c0_i32_0, %c0_i32_1, %c0_i32_2 : i32, i32, i32, i32
  }
  func.func @transform_10(%arg0: i32) -> (i32, i32, i32, i32) {
    %c0_i32 = arith.constant 0 : i32
    %c0_i32_0 = arith.constant 0 : i32
    %c0_i32_1 = arith.constant 0 : i32
    %c0_i32_2 = arith.constant 0 : i32
    %c0_i32_3 = arith.constant 0 : i32
    return %c0_i32, %c0_i32_0, %c0_i32_1, %c0_i32_2 : i32, i32, i32, i32
  }
  func.func @transform_11(%arg0: i32) -> (i32, i32, i32, i32) {
    %c0_i32 = arith.constant 0 : i32
    %c0_i32_0 = arith.constant 0 : i32
    %c0_i32_1 = arith.constant 0 : i32
    %c0_i32_2 = arith.constant 0 : i32
    %c0_i32_3 = arith.constant 0 : i32
    return %c0_i32, %c0_i32_0, %c0_i32_1, %c0_i32_2 : i32, i32, i32, i32
  }
  func.func @transform_12(%arg0: i32) -> (i32, i32, i32) {
    %c0_i32 = arith.constant 0 : i32
    %c0_i32_0 = arith.constant 0 : i32
    %c0_i32_1 = arith.constant 0 : i32
    %c0_i32_2 = arith.constant 0 : i32
    return %c0_i32, %c0_i32_0, %c0_i32_1 : i32, i32, i32
  }
  func.func @transform_13(%arg0: i32) -> (i32, i32, i32) {
    %c0_i32 = arith.constant 0 : i32
    %c0_i32_0 = arith.constant 0 : i32
    %c0_i32_1 = arith.constant 0 : i32
    %c0_i32_2 = arith.constant 0 : i32
    return %c0_i32, %c0_i32_0, %c0_i32_1 : i32, i32, i32
  }
  func.func @transform_14(%arg0: i32) -> (i32, i32, i32) {
    %c0_i32 = arith.constant 0 : i32
    %c0_i32_0 = arith.constant 0 : i32
    %c0_i32_1 = arith.constant 0 : i32
    %c0_i32_2 = arith.constant 0 : i32
    return %c0_i32, %c0_i32_0, %c0_i32_1 : i32, i32, i32
  }
  func.func @transform_15(%arg0: i32) -> (i32, i32, i32) {
    %c0_i32 = arith.constant 0 : i32
    %c0_i32_0 = arith.constant 0 : i32
    %c0_i32_1 = arith.constant 0 : i32
    %c0_i32_2 = arith.constant 0 : i32
    return %c0_i32, %c0_i32_0, %c0_i32_1 : i32, i32, i32
  }
  func.func @transform_16(%arg0: i32) -> (i32, i32, i32) {
    %c0_i32 = arith.constant 0 : i32
    %c0_i32_0 = arith.constant 0 : i32
    %c0_i32_1 = arith.constant 0 : i32
    %c0_i32_2 = arith.constant 0 : i32
    return %c0_i32, %c0_i32_0, %c0_i32_1 : i32, i32, i32
  }
  func.func @transform_17(%arg0: i32) -> (i32, i32, i32) {
    %c0_i32 = arith.constant 0 : i32
    %c0_i32_0 = arith.constant 0 : i32
    %c0_i32_1 = arith.constant 0 : i32
    %c0_i32_2 = arith.constant 0 : i32
    return %c0_i32, %c0_i32_0, %c0_i32_1 : i32, i32, i32
  }
  func.func @transform_18(%arg0: i32) -> (i32, i32) {
    %c0_i32 = arith.constant 0 : i32
    %c0_i32_0 = arith.constant 0 : i32
    %c0_i32_1 = arith.constant 0 : i32
    return %c0_i32, %c0_i32_0 : i32, i32
  }
  func.func @transform_19(%arg0: i32) -> (i32, i32) {
    %c0_i32 = arith.constant 0 : i32
    %c0_i32_0 = arith.constant 0 : i32
    %c0_i32_1 = arith.constant 0 : i32
    return %c0_i32, %c0_i32_0 : i32, i32
  }
  func.func @transform_20(%arg0: i32) -> (i32, i32) {
    %c0_i32 = arith.constant 0 : i32
    %c0_i32_0 = arith.constant 0 : i32
    %c0_i32_1 = arith.constant 0 : i32
    return %c0_i32, %c0_i32_0 : i32, i32
  }
  func.func @transform_21(%arg0: i32) -> (i32, i32, i32) {
    %c0_i32 = arith.constant 0 : i32
    %c0_i32_0 = arith.constant 0 : i32
    %c0_i32_1 = arith.constant 0 : i32
    return %arg0, %c0_i32, %c0_i32_0 : i32, i32, i32
  }
}

</mosaic_0001>

<llo_original>
// kernel: clip_forward.1
$region0: #{clip_forward.1}
  #allocation0 [shape = 'u32[]', space=smem, size = 0x4, offset = 0x4, fixed_abs, tag = 'smem constant byte address 0x4 - core index']
  #allocation1 [shape = 'u32[144,128]{1,0:T(1,128)}', space=vmem, size = 0x12000, scoped, tag = 'internal scratch']
  %s0 = inlined_call_operand.vmem [shape: f32[2,5,192], index: 0, kind: input, shape index: {}]
  %s1 = inlined_call_operand.vmem [shape: f32[192,32], index: 1, kind: input, shape index: {}]
  %s2 = inlined_call_operand.vmem [shape: f32[5,32], index: 2, kind: input, shape index: {}]
  %s3 = inlined_call_operand.vmem [shape: f32[2,32], index: 3, kind: input, shape index: {}]
  %s4 = inlined_call_operand.vmem [shape: f32[2,2,32], index: 4, kind: input, shape index: {}]
  %s5 = inlined_call_operand.vmem [shape: f32[2,4,32,8], index: 5, kind: input, shape index: {}]
  %s6 = inlined_call_operand.vmem [shape: f32[2,4,32,8], index: 6, kind: input, shape index: {}]
  %s7 = inlined_call_operand.vmem [shape: f32[2,4,32,8], index: 7, kind: input, shape index: {}]
  %s8 = inlined_call_operand.vmem [shape: f32[2,4,1,8], index: 8, kind: input, shape index: {}]
  %s9 = inlined_call_operand.vmem [shape: f32[2,4,1,8], index: 9, kind: input, shape index: {}]
  %s10 = inlined_call_operand.vmem [shape: f32[2,4,1,8], index: 10, kind: input, shape index: {}]
  %s11 = inlined_call_operand.vmem [shape: f32[2,4,8,32], index: 11, kind: input, shape index: {}]
  %s12 = inlined_call_operand.vmem [shape: f32[2,1,32], index: 12, kind: input, shape index: {}]
  %s13 = inlined_call_operand.vmem [shape: f32[2,2,32], index: 13, kind: input, shape index: {}]
  %s14 = inlined_call_operand.vmem [shape: f32[2,32,128], index: 14, kind: input, shape index: {}]
  %s15 = inlined_call_operand.vmem [shape: f32[2,1,128], index: 15, kind: input, shape index: {}]
  %s16 = inlined_call_operand.vmem [shape: f32[2,128,32], index: 16, kind: input, shape index: {}]
  %s17 = inlined_call_operand.vmem [shape: f32[2,1,32], index: 17, kind: input, shape index: {}]
  %s18 = inlined_call_operand.vmem [shape: f32[2,32], index: 18, kind: input, shape index: {}]
  %s19 = inlined_call_operand.vmem [shape: f32[32,16], index: 19, kind: input, shape index: {}]
  %s20 = inlined_call_operand.vmem [shape: f32[16,128], index: 20, kind: input, shape index: {}]
  %s21 = inlined_call_operand.hbm [shape: f32[2,1,128], index: 21, kind: output, shape index: {}]
  %s22 = sld [smem:[#allocation0]]
  $region117: #{clip_forward.1} parent=0
    _
  %s24 = ssub.s32 1, %s22
  %s25 = scalar_select 0, %s24, %s22
  $region1: #{clip_forward.1} parent=0
    #allocation2 [shape = 'u8[1024]{0}', space=vmem, size = 0x400, scoped, tag = 'output window, operand 0']
    #allocation3 [shape = 's32[2]{0}', space=sflag, size = 0x8, scoped, tag = 'scoped memory for clip_forward.1']
    %26 = vsyncpa [#allocation3], 0
    %s27 = scalar_lea.sflag [#allocation3], 1
    %28 = vsyncpa %s27, 0
    loop: start=0, step=1, limit=4
    $region2: #{clip_forward.1} parent=1 // loop_pre_header
      _
    $region3: #{clip_forward.1} parent=1 // loop_header
      %s30 = sphi 0, %s34
      %p31 = scmp.ge.s32.totalorder %s30, 4
      %s40 = sphi 0, %s42
      %s43 = sphi 0, %s40
      %s44 = sphi 0, %s43
      %s60 = sphi 0, %s44
      %s64 = sphi 0, %s64
      %s66 = sphi 0, %s64
      %s67 = sphi 0, %s66
      %s81 = sphi 0, %s67
      %s85 = sphi 0, %s85
      %s87 = sphi 0, %s85
      %s88 = sphi 0, %s87
      %s102 = sphi 0, %s88
      %s106 = sphi 0, %s106
      %s108 = sphi 0, %s106
      %s109 = sphi 0, %s108
      %s123 = sphi 0, %s109
      %s127 = sphi 0, %s127
      %s129 = sphi 0, %s127
      %s130 = sphi 0, %s129
      %s144 = sphi 0, %s130
      %s148 = sphi 0, %s148
      %s150 = sphi 0, %s148
      %s151 = sphi 0, %s150
      %s165 = sphi 0, %s151
      %s169 = sphi 0, %s169
      %s171 = sphi 0, %s169
      %s172 = sphi 0, %s171
      %s186 = sphi 0, %s172
      %s190 = sphi 0, %s190
      %s192 = sphi 0, %s190
      %s193 = sphi 0, %s192
      %s207 = sphi 0, %s193
      %s211 = sphi 0, %s211
      %s213 = sphi 0, %s211
      %s214 = sphi 0, %s213
      %s228 = sphi 0, %s214
      %s232 = sphi 0, %s232
      %s234 = sphi 0, %s232
      %s235 = sphi 0, %s234
      %s249 = sphi 0, %s235
      %s253 = sphi 0, %s253
      %s255 = sphi 0, %s253
      %s256 = sphi 0, %s255
      %s270 = sphi 0, %s256
      %s274 = sphi 0, %s274
      %s276 = sphi 0, %s274
      %s277 = sphi 0, %s276
      %s291 = sphi 0, %s277
      %s295 = sphi 0, %s295
      %s297 = sphi 0, %s295
      %s298 = sphi 0, %s297
      %s312 = sphi 0, %s298
      %s316 = sphi 0, %s316
      %s318 = sphi 0, %s316
      %s319 = sphi 0, %s318
      %s333 = sphi 0, %s319
      %s337 = sphi 0, %s337
      %s339 = sphi 0, %s337
      %s340 = sphi 0, %s339
      %s354 = sphi 0, %s340
      %s358 = sphi 0, %s358
      %s360 = sphi 0, %s358
      %s361 = sphi 0, %s360
      %s375 = sphi 0, %s361
      %s379 = sphi 0, %s379
      %s381 = sphi 0, %s379
      %s382 = sphi 0, %s381
      %s396 = sphi 0, %s382
      %s400 = sphi 0, %s400
      %s402 = sphi 0, %s400
      %s403 = sphi 0, %s402
      %s417 = sphi 0, %s403
      %s421 = sphi 0, %s421
      %s423 = sphi 0, %s421
      %s424 = sphi 0, %s423
      %s438 = sphi 0, %s424
      %s442 = sphi 0, %s442
      %s444 = sphi 0, %s442
      %s445 = sphi 0, %s444
      %s459 = sphi 0, %s445
      %s463 = sphi 0, %s463
      %s465 = sphi 0, %s463
      %s466 = sphi 0, %s465
      %s480 = sphi 0, %s466
      %s486 = sphi 0, %s488
      %s489 = sphi 0, %s486
      %s490 = sphi 0, %s489
      %s506 = sphi 0, %s490
    $region4: #{clip_forward.1} parent=1 // loop_header_branch
      %33 = sbr.rel (%p31) target = $region8
    $region5: #{clip_forward.1} parent=1 // loop_body
      %s35 = ssub.s32 %s30, 1
      %s36 = ssub.s32 %s30, 2
      %s37 = sadd.s32 %s30, 1
      %s38 = ssub.s32 %s30, %s37
      %p39 = scmp.eq.s32.totalorder %s38, 0
      %s41 = sadd.s32 %s40, 1
      %s42 = scalar_select %p39, %s40, %s41
      %p45 = pneg %p39
      %p46 = scmp.eq.s32.totalorder %s30, 1
      %p47 = por %p45, %p46
      %p48 = scmp.ne.s32.totalorder %s40, %s43
      %p49 = scmp.eq.s32.totalorder %s30, 0
      %p50 = por %p48, %p49
      %p51 = scmp.ne.s32.totalorder %s40, %s43
      %p52 = scmp.eq.s32.totalorder %s35, 1
      %p53 = por %p51, %p52
      %p54 = scmp.ne.s32.totalorder %s43, %s44
      %p55 = scmp.eq.s32.totalorder %s35, 0
      %p56 = por %p54, %p55
      %p57 = scmp.ne.s32.totalorder %s43, %s44
      %p58 = scmp.eq.s32.totalorder %s36, 1
      %p59 = por %p57, %p58
      %p61 = scmp.ne.s32.totalorder %s44, %s60
      %p62 = scmp.eq.s32.totalorder %s36, 0
      %p63 = por %p61, %p62
      %s65 = sadd.s32 %s64, 1
      %p68 = scmp.eq.s32.totalorder %s30, 1
      %p69 = scmp.ne.s32.totalorder %s64, %s66
      %p70 = scmp.eq.s32.totalorder %s30, 0
      %p71 = por %p69, %p70
      %p72 = scmp.ne.s32.totalorder %s64, %s66
      %p73 = scmp.eq.s32.totalorder %s35, 1
      %p74 = por %p72, %p73
      %p75 = scmp.ne.s32.totalorder %s66, %s67
      %p76 = scmp.eq.s32.totalorder %s35, 0
      %p77 = por %p75, %p76
      %p78 = scmp.ne.s32.totalorder %s66, %s67
      %p79 = scmp.eq.s32.totalorder %s36, 1
      %p80 = por %p78, %p79
      %p82 = scmp.ne.s32.totalorder %s67, %s81
      %p83 = scmp.eq.s32.totalorder %s36, 0
      %p84 = por %p82, %p83
      %s86 = sadd.s32 %s85, 1
      %p89 = scmp.eq.s32.totalorder %s30, 1
      %p90 = scmp.ne.s32.totalorder %s85, %s87
      %p91 = scmp.eq.s32.totalorder %s30, 0
      %p92 = por %p90, %p91
      %p93 = scmp.ne.s32.totalorder %s85, %s87
      %p94 = scmp.eq.s32.totalorder %s35, 1
      %p95 = por %p93, %p94
      %p96 = scmp.ne.s32.totalorder %s87, %s88
      %p97 = scmp.eq.s32.totalorder %s35, 0
      %p98 = por %p96, %p97
      %p99 = scmp.ne.s32.totalorder %s87, %s88
      %p100 = scmp.eq.s32.totalorder %s36, 1
      %p101 = por %p99, %p100
      %p103 = scmp.ne.s32.totalorder %s88, %s102
      %p104 = scmp.eq.s32.totalorder %s36, 0
      %p105 = por %p103, %p104
      %s107 = sadd.s32 %s106, 1
      %p110 = scmp.eq.s32.totalorder %s30, 1
      %p111 = scmp.ne.s32.totalorder %s106, %s108
      %p112 = scmp.eq.s32.totalorder %s30, 0
      %p113 = por %p111, %p112
      %p114 = scmp.ne.s32.totalorder %s106, %s108
      %p115 = scmp.eq.s32.totalorder %s35, 1
      %p116 = por %p114, %p115
      %p117 = scmp.ne.s32.totalorder %s108, %s109
      %p118 = scmp.eq.s32.totalorder %s35, 0
      %p119 = por %p117, %p118
      %p120 = scmp.ne.s32.totalorder %s108, %s109
      %p121 = scmp.eq.s32.totalorder %s36, 1
      %p122 = por %p120, %p121
      %p124 = scmp.ne.s32.totalorder %s109, %s123
      %p125 = scmp.eq.s32.totalorder %s36, 0
      %p126 = por %p124, %p125
      %s128 = sadd.s32 %s127, 1
      %p131 = scmp.eq.s32.totalorder %s30, 1
      %p132 = scmp.ne.s32.totalorder %s127, %s129
      %p133 = scmp.eq.s32.totalorder %s30, 0
      %p134 = por %p132, %p133
      %p135 = scmp.ne.s32.totalorder %s127, %s129
      %p136 = scmp.eq.s32.totalorder %s35, 1
      %p137 = por %p135, %p136
      %p138 = scmp.ne.s32.totalorder %s129, %s130
      %p139 = scmp.eq.s32.totalorder %s35, 0
      %p140 = por %p138, %p139
      %p141 = scmp.ne.s32.totalorder %s129, %s130
      %p142 = scmp.eq.s32.totalorder %s36, 1
      %p143 = por %p141, %p142
      %p145 = scmp.ne.s32.totalorder %s130, %s144
      %p146 = scmp.eq.s32.totalorder %s36, 0
      %p147 = por %p145, %p146
      %s149 = sadd.s32 %s148, 1
      %p152 = scmp.eq.s32.totalorder %s30, 1
      %p153 = scmp.ne.s32.totalorder %s148, %s150
      %p154 = scmp.eq.s32.totalorder %s30, 0
      %p155 = por %p153, %p154
      %p156 = scmp.ne.s32.totalorder %s148, %s150
      %p157 = scmp.eq.s32.totalorder %s35, 1
      %p158 = por %p156, %p157
      %p159 = scmp.ne.s32.totalorder %s150, %s151
      %p160 = scmp.eq.s32.totalorder %s35, 0
      %p161 = por %p159, %p160
      %p162 = scmp.ne.s32.totalorder %s150, %s151
      %p163 = scmp.eq.s32.totalorder %s36, 1
      %p164 = por %p162, %p163
      %p166 = scmp.ne.s32.totalorder %s151, %s165
      %p167 = scmp.eq.s32.totalorder %s36, 0
      %p168 = por %p166, %p167
      %s170 = sadd.s32 %s169, 1
      %p173 = scmp.eq.s32.totalorder %s30, 1
      %p174 = scmp.ne.s32.totalorder %s169, %s171
      %p175 = scmp.eq.s32.totalorder %s30, 0
      %p176 = por %p174, %p175
      %p177 = scmp.ne.s32.totalorder %s169, %s171
      %p178 = scmp.eq.s32.totalorder %s35, 1
      %p179 = por %p177, %p178
      %p180 = scmp.ne.s32.totalorder %s171, %s172
      %p181 = scmp.eq.s32.totalorder %s35, 0
      %p182 = por %p180, %p181
      %p183 = scmp.ne.s32.totalorder %s171, %s172
      %p184 = scmp.eq.s32.totalorder %s36, 1
      %p185 = por %p183, %p184
      %p187 = scmp.ne.s32.totalorder %s172, %s186
      %p188 = scmp.eq.s32.totalorder %s36, 0
      %p189 = por %p187, %p188
      %s191 = sadd.s32 %s190, 1
      %p194 = scmp.eq.s32.totalorder %s30, 1
      %p195 = scmp.ne.s32.totalorder %s190, %s192
      %p196 = scmp.eq.s32.totalorder %s30, 0
      %p197 = por %p195, %p196
      %p198 = scmp.ne.s32.totalorder %s190, %s192
      %p199 = scmp.eq.s32.totalorder %s35, 1
      %p200 = por %p198, %p199
      %p201 = scmp.ne.s32.totalorder %s192, %s193
      %p202 = scmp.eq.s32.totalorder %s35, 0
      %p203 = por %p201, %p202
      %p204 = scmp.ne.s32.totalorder %s192, %s193
      %p205 = scmp.eq.s32.totalorder %s36, 1
      %p206 = por %p204, %p205
      %p208 = scmp.ne.s32.totalorder %s193, %s207
      %p209 = scmp.eq.s32.totalorder %s36, 0
      %p210 = por %p208, %p209
      %s212 = sadd.s32 %s211, 1
      %p215 = scmp.eq.s32.totalorder %s30, 1
      %p216 = scmp.ne.s32.totalorder %s211, %s213
      %p217 = scmp.eq.s32.totalorder %s30, 0
      %p218 = por %p216, %p217
      %p219 = scmp.ne.s32.totalorder %s211, %s213
      %p220 = scmp.eq.s32.totalorder %s35, 1
      %p221 = por %p219, %p220
      %p222 = scmp.ne.s32.totalorder %s213, %s214
      %p223 = scmp.eq.s32.totalorder %s35, 0
      %p224 = por %p222, %p223
      %p225 = scmp.ne.s32.totalorder %s213, %s214
      %p226 = scmp.eq.s32.totalorder %s36, 1
      %p227 = por %p225, %p226
      %p229 = scmp.ne.s32.totalorder %s214, %s228
      %p230 = scmp.eq.s32.totalorder %s36, 0
      %p231 = por %p229, %p230
      %s233 = sadd.s32 %s232, 1
      %p236 = scmp.eq.s32.totalorder %s30, 1
      %p237 = scmp.ne.s32.totalorder %s232, %s234
      %p238 = scmp.eq.s32.totalorder %s30, 0
      %p239 = por %p237, %p238
      %p240 = scmp.ne.s32.totalorder %s232, %s234
      %p241 = scmp.eq.s32.totalorder %s35, 1
      %p242 = por %p240, %p241
      %p243 = scmp.ne.s32.totalorder %s234, %s235
      %p244 = scmp.eq.s32.totalorder %s35, 0
      %p245 = por %p243, %p244
      %p246 = scmp.ne.s32.totalorder %s234, %s235
      %p247 = scmp.eq.s32.totalorder %s36, 1
      %p248 = por %p246, %p247
      %p250 = scmp.ne.s32.totalorder %s235, %s249
      %p251 = scmp.eq.s32.totalorder %s36, 0
      %p252 = por %p250, %p251
      %s254 = sadd.s32 %s253, 1
      %p257 = scmp.eq.s32.totalorder %s30, 1
      %p258 = scmp.ne.s32.totalorder %s253, %s255
      %p259 = scmp.eq.s32.totalorder %s30, 0
      %p260 = por %p258, %p259
      %p261 = scmp.ne.s32.totalorder %s253, %s255
      %p262 = scmp.eq.s32.totalorder %s35, 1
      %p263 = por %p261, %p262
      %p264 = scmp.ne.s32.totalorder %s255, %s256
      %p265 = scmp.eq.s32.totalorder %s35, 0
      %p266 = por %p264, %p265
      %p267 = scmp.ne.s32.totalorder %s255, %s256
      %p268 = scmp.eq.s32.totalorder %s36, 1
      %p269 = por %p267, %p268
      %p271 = scmp.ne.s32.totalorder %s256, %s270
      %p272 = scmp.eq.s32.totalorder %s36, 0
      %p273 = por %p271, %p272
      %s275 = sadd.s32 %s274, 1
      %p278 = scmp.eq.s32.totalorder %s30, 1
      %p279 = scmp.ne.s32.totalorder %s274, %s276
      %p280 = scmp.eq.s32.totalorder %s30, 0
      %p281 = por %p279, %p280
      %p282 = scmp.ne.s32.totalorder %s274, %s276
      %p283 = scmp.eq.s32.totalorder %s35, 1
      %p284 = por %p282, %p283
      %p285 = scmp.ne.s32.totalorder %s276, %s277
      %p286 = scmp.eq.s32.totalorder %s35, 0
      %p287 = por %p285, %p286
      %p288 = scmp.ne.s32.totalorder %s276, %s277
      %p289 = scmp.eq.s32.totalorder %s36, 1
      %p290 = por %p288, %p289
      %p292 = scmp.ne.s32.totalorder %s277, %s291
      %p293 = scmp.eq.s32.totalorder %s36, 0
      %p294 = por %p292, %p293
      %s296 = sadd.s32 %s295, 1
      %p299 = scmp.eq.s32.totalorder %s30, 1
      %p300 = scmp.ne.s32.totalorder %s295, %s297
      %p301 = scmp.eq.s32.totalorder %s30, 0
      %p302 = por %p300, %p301
      %p303 = scmp.ne.s32.totalorder %s295, %s297
      %p304 = scmp.eq.s32.totalorder %s35, 1
      %p305 = por %p303, %p304
      %p306 = scmp.ne.s32.totalorder %s297, %s298
      %p307 = scmp.eq.s32.totalorder %s35, 0
      %p308 = por %p306, %p307
      %p309 = scmp.ne.s32.totalorder %s297, %s298
      %p310 = scmp.eq.s32.totalorder %s36, 1
      %p311 = por %p309, %p310
      %p313 = scmp.ne.s32.totalorder %s298, %s312
      %p314 = scmp.eq.s32.totalorder %s36, 0
      %p315 = por %p313, %p314
      %s317 = sadd.s32 %s316, 1
      %p320 = scmp.eq.s32.totalorder %s30, 1
      %p321 = scmp.ne.s32.totalorder %s316, %s318
      %p322 = scmp.eq.s32.totalorder %s30, 0
      %p323 = por %p321, %p322
      %p324 = scmp.ne.s32.totalorder %s316, %s318
      %p325 = scmp.eq.s32.totalorder %s35, 1
      %p326 = por %p324, %p325
      %p327 = scmp.ne.s32.totalorder %s318, %s319
      %p328 = scmp.eq.s32.totalorder %s35, 0
      %p329 = por %p327, %p328
      %p330 = scmp.ne.s32.totalorder %s318, %s319
      %p331 = scmp.eq.s32.totalorder %s36, 1
      %p332 = por %p330, %p331
      %p334 = scmp.ne.s32.totalorder %s319, %s333
      %p335 = scmp.eq.s32.totalorder %s36, 0
      %p336 = por %p334, %p335
      %s338 = sadd.s32 %s337, 1
      %p341 = scmp.eq.s32.totalorder %s30, 1
      %p342 = scmp.ne.s32.totalorder %s337, %s339
      %p343 = scmp.eq.s32.totalorder %s30, 0
      %p344 = por %p342, %p343
      %p345 = scmp.ne.s32.totalorder %s337, %s339
      %p346 = scmp.eq.s32.totalorder %s35, 1
      %p347 = por %p345, %p346
      %p348 = scmp.ne.s32.totalorder %s339, %s340
      %p349 = scmp.eq.s32.totalorder %s35, 0
      %p350 = por %p348, %p349
      %p351 = scmp.ne.s32.totalorder %s339, %s340
      %p352 = scmp.eq.s32.totalorder %s36, 1
      %p353 = por %p351, %p352
      %p355 = scmp.ne.s32.totalorder %s340, %s354
      %p356 = scmp.eq.s32.totalorder %s36, 0
      %p357 = por %p355, %p356
      %s359 = sadd.s32 %s358, 1
      %p362 = scmp.eq.s32.totalorder %s30, 1
      %p363 = scmp.ne.s32.totalorder %s358, %s360
      %p364 = scmp.eq.s32.totalorder %s30, 0
      %p365 = por %p363, %p364
      %p366 = scmp.ne.s32.totalorder %s358, %s360
      %p367 = scmp.eq.s32.totalorder %s35, 1
      %p368 = por %p366, %p367
      %p369 = scmp.ne.s32.totalorder %s360, %s361
      %p370 = scmp.eq.s32.totalorder %s35, 0
      %p371 = por %p369, %p370
      %p372 = scmp.ne.s32.totalorder %s360, %s361
      %p373 = scmp.eq.s32.totalorder %s36, 1
      %p374 = por %p372, %p373
      %p376 = scmp.ne.s32.totalorder %s361, %s375
      %p377 = scmp.eq.s32.totalorder %s36, 0
      %p378 = por %p376, %p377
      %s380 = sadd.s32 %s379, 1
      %p383 = scmp.eq.s32.totalorder %s30, 1
      %p384 = scmp.ne.s32.totalorder %s379, %s381
      %p385 = scmp.eq.s32.totalorder %s30, 0
      %p386 = por %p384, %p385
      %p387 = scmp.ne.s32.totalorder %s379, %s381
      %p388 = scmp.eq.s32.totalorder %s35, 1
      %p389 = por %p387, %p388
      %p390 = scmp.ne.s32.totalorder %s381, %s382
      %p391 = scmp.eq.s32.totalorder %s35, 0
      %p392 = por %p390, %p391
      %p393 = scmp.ne.s32.totalorder %s381, %s382
      %p394 = scmp.eq.s32.totalorder %s36, 1
      %p395 = por %p393, %p394
      %p397 = scmp.ne.s32.totalorder %s382, %s396
      %p398 = scmp.eq.s32.totalorder %s36, 0
      %p399 = por %p397, %p398
      %s401 = sadd.s32 %s400, 1
      %p404 = scmp.eq.s32.totalorder %s30, 1
      %p405 = scmp.ne.s32.totalorder %s400, %s402
      %p406 = scmp.eq.s32.totalorder %s30, 0
      %p407 = por %p405, %p406
      %p408 = scmp.ne.s32.totalorder %s400, %s402
      %p409 = scmp.eq.s32.totalorder %s35, 1
      %p410 = por %p408, %p409
      %p411 = scmp.ne.s32.totalorder %s402, %s403
      %p412 = scmp.eq.s32.totalorder %s35, 0
      %p413 = por %p411, %p412
      %p414 = scmp.ne.s32.totalorder %s402, %s403
      %p415 = scmp.eq.s32.totalorder %s36, 1
      %p416 = por %p414, %p415
      %p418 = scmp.ne.s32.totalorder %s403, %s417
      %p419 = scmp.eq.s32.totalorder %s36, 0
      %p420 = por %p418, %p419
      %s422 = sadd.s32 %s421, 1
      %p425 = scmp.eq.s32.totalorder %s30, 1
      %p426 = scmp.ne.s32.totalorder %s421, %s423
      %p427 = scmp.eq.s32.totalorder %s30, 0
      %p428 = por %p426, %p427
      %p429 = scmp.ne.s32.totalorder %s421, %s423
      %p430 = scmp.eq.s32.totalorder %s35, 1
      %p431 = por %p429, %p430
      %p432 = scmp.ne.s32.totalorder %s423, %s424
      %p433 = scmp.eq.s32.totalorder %s35, 0
      %p434 = por %p432, %p433
      %p435 = scmp.ne.s32.totalorder %s423, %s424
      %p436 = scmp.eq.s32.totalorder %s36, 1
      %p437 = por %p435, %p436
      %p439 = scmp.ne.s32.totalorder %s424, %s438
      %p440 = scmp.eq.s32.totalorder %s36, 0
      %p441 = por %p439, %p440
      %s443 = sadd.s32 %s442, 1
      %p446 = scmp.eq.s32.totalorder %s30, 1
      %p447 = scmp.ne.s32.totalorder %s442, %s444
      %p448 = scmp.eq.s32.totalorder %s30, 0
      %p449 = por %p447, %p448
      %p450 = scmp.ne.s32.totalorder %s442, %s444
      %p451 = scmp.eq.s32.totalorder %s35, 1
      %p452 = por %p450, %p451
      %p453 = scmp.ne.s32.totalorder %s444, %s445
      %p454 = scmp.eq.s32.totalorder %s35, 0
      %p455 = por %p453, %p454
      %p456 = scmp.ne.s32.totalorder %s444, %s445
      %p457 = scmp.eq.s32.totalorder %s36, 1
      %p458 = por %p456, %p457
      %p460 = scmp.ne.s32.totalorder %s445, %s459
      %p461 = scmp.eq.s32.totalorder %s36, 0
      %p462 = por %p460, %p461
      %s464 = sadd.s32 %s463, 1
      %p467 = scmp.eq.s32.totalorder %s30, 1
      %p468 = scmp.ne.s32.totalorder %s463, %s465
      %p469 = scmp.eq.s32.totalorder %s30, 0
      %p470 = por %p468, %p469
      %p471 = scmp.ne.s32.totalorder %s463, %s465
      %p472 = scmp.eq.s32.totalorder %s35, 1
      %p473 = por %p471, %p472
      %p474 = scmp.ne.s32.totalorder %s465, %s466
      %p475 = scmp.eq.s32.totalorder %s35, 0
      %p476 = por %p474, %p475
      %p477 = scmp.ne.s32.totalorder %s465, %s466
      %p478 = scmp.eq.s32.totalorder %s36, 1
      %p479 = por %p477, %p478
      %p481 = scmp.ne.s32.totalorder %s466, %s480
      %p482 = scmp.eq.s32.totalorder %s36, 0
      %p483 = por %p481, %p482
      %s484 = ssub.s32 %s30, %s37
      %p485 = scmp.eq.s32.totalorder %s484, 0
      %s487 = sadd.s32 %s486, 1
      %s488 = scalar_select %p485, %s486, %s487
      %p491 = pneg %p485
      %p492 = scmp.eq.s32.totalorder %s30, 1
      %p493 = por %p491, %p492
      %p494 = scmp.ne.s32.totalorder %s486, %s489
      %p495 = scmp.eq.s32.totalorder %s30, 0
      %p496 = por %p494, %p495
      %p497 = scmp.ne.s32.totalorder %s486, %s489
      %p498 = scmp.eq.s32.totalorder %s35, 1
      %p499 = por %p497, %p498
      %p500 = scmp.ne.s32.totalorder %s489, %s490
      %p501 = scmp.eq.s32.totalorder %s35, 0
      %p502 = por %p500, %p501
      %p503 = scmp.ne.s32.totalorder %s489, %s490
      %p504 = scmp.eq.s32.totalorder %s36, 1
      %p505 = por %p503, %p504
      %p507 = scmp.ne.s32.totalorder %s490, %s506
      %p508 = scmp.eq.s32.totalorder %s36, 0
      %p509 = por %p507, %p508
      %p510 = scmp.le.s32.totalorder 1, %s30
      %p511 = scmp.lt.s32.totalorder %s30, 3
      %p512 = pnand %p510, %p511
      %p513 = pneg %p512
      // Predicated region
      $region9: #{clip_forward.1} parent=5 // pred_check
        _
      $region10: #{clip_forward.1} parent=5 // pred_check_branch
        %515 = sbr.rel (%p512) target = $region12
      $region11: #{clip_forward.1} parent=5 // pred_region
        %s516 = ssub.s32 %s30, 1
        // Predicated region
        $region13: #{clip_forward.1} parent=11 // pred_check
          %p517 = pneg %p77
        $region14: #{clip_forward.1} parent=11 // pred_check_branch
          %519 = sbr.rel (%p517) target = $region16
        $region15: #{clip_forward.1} parent=11 // pred_region
          _
        $region16: #{clip_forward.1} parent=11 // pred_fallthru
          _
        // Predicated region
        $region17: #{clip_forward.1} parent=11 // pred_check
          %p520 = pneg %p98
        $region18: #{clip_forward.1} parent=11 // pred_check_branch
          %522 = sbr.rel (%p520) target = $region20
        $region19: #{clip_forward.1} parent=11 // pred_region
          _
        $region20: #{clip_forward.1} parent=11 // pred_fallthru
          _
        // Predicated region
        $region21: #{clip_forward.1} parent=11 // pred_check
          %p523 = pneg %p119
        $region22: #{clip_forward.1} parent=11 // pred_check_branch
          %525 = sbr.rel (%p523) target = $region24
        $region23: #{clip_forward.1} parent=11 // pred_region
          _
        $region24: #{clip_forward.1} parent=11 // pred_fallthru
          _
        // Predicated region
        $region25: #{clip_forward.1} parent=11 // pred_check
          %p526 = pneg %p140
        $region26: #{clip_forward.1} parent=11 // pred_check_branch
          %528 = sbr.rel (%p526) target = $region28
        $region27: #{clip_forward.1} parent=11 // pred_region
          _
        $region28: #{clip_forward.1} parent=11 // pred_fallthru
          _
        // Predicated region
        $region29: #{clip_forward.1} parent=11 // pred_check
          %p529 = pneg %p161
        $region30: #{clip_forward.1} parent=11 // pred_check_branch
          %531 = sbr.rel (%p529) target = $region32
        $region31: #{clip_forward.1} parent=11 // pred_region
          _
        $region32: #{clip_forward.1} parent=11 // pred_fallthru
          _
        // Predicated region
        $region33: #{clip_forward.1} parent=11 // pred_check
          %p532 = pneg %p182
        $region34: #{clip_forward.1} parent=11 // pred_check_branch
          %534 = sbr.rel (%p532) target = $region36
        $region35: #{clip_forward.1} parent=11 // pred_region
          _
        $region36: #{clip_forward.1} parent=11 // pred_fallthru
          _
        // Predicated region
        $region37: #{clip_forward.1} parent=11 // pred_check
          %p535 = pneg %p203
        $region38: #{clip_forward.1} parent=11 // pred_check_branch
          %537 = sbr.rel (%p535) target = $region40
        $region39: #{clip_forward.1} parent=11 // pred_region
          _
        $region40: #{clip_forward.1} parent=11 // pred_fallthru
          _
        // Predicated region
        $region41: #{clip_forward.1} parent=11 // pred_check
          %p538 = pneg %p224
        $region42: #{clip_forward.1} parent=11 // pred_check_branch
          %540 = sbr.rel (%p538) target = $region44
        $region43: #{clip_forward.1} parent=11 // pred_region
          _
        $region44: #{clip_forward.1} parent=11 // pred_fallthru
          _
        // Predicated region
        $region45: #{clip_forward.1} parent=11 // pred_check
          %p541 = pneg %p245
        $region46: #{clip_forward.1} parent=11 // pred_check_branch
          %543 = sbr.rel (%p541) target = $region48
        $region47: #{clip_forward.1} parent=11 // pred_region
          _
        $region48: #{clip_forward.1} parent=11 // pred_fallthru
          _
        // Predicated region
        $region49: #{clip_forward.1} parent=11 // pred_check
          %p544 = pneg %p266
        $region50: #{clip_forward.1} parent=11 // pred_check_branch
          %546 = sbr.rel (%p544) target = $region52
        $region51: #{clip_forward.1} parent=11 // pred_region
          _
        $region52: #{clip_forward.1} parent=11 // pred_fallthru
          _
        // Predicated region
        $region53: #{clip_forward.1} parent=11 // pred_check
          %p547 = pneg %p287
        $region54: #{clip_forward.1} parent=11 // pred_check_branch
          %549 = sbr.rel (%p547) target = $region56
        $region55: #{clip_forward.1} parent=11 // pred_region
          _
        $region56: #{clip_forward.1} parent=11 // pred_fallthru
          _
        // Predicated region
        $region57: #{clip_forward.1} parent=11 // pred_check
          %p550 = pneg %p308
        $region58: #{clip_forward.1} parent=11 // pred_check_branch
          %552 = sbr.rel (%p550) target = $region60
        $region59: #{clip_forward.1} parent=11 // pred_region
          _
        $region60: #{clip_forward.1} parent=11 // pred_fallthru
          _
        // Predicated region
        $region61: #{clip_forward.1} parent=11 // pred_check
          %p553 = pneg %p329
        $region62: #{clip_forward.1} parent=11 // pred_check_branch
          %555 = sbr.rel (%p553) target = $region64
        $region63: #{clip_forward.1} parent=11 // pred_region
          _
        $region64: #{clip_forward.1} parent=11 // pred_fallthru
          _
        // Predicated region
        $region65: #{clip_forward.1} parent=11 // pred_check
          %p556 = pneg %p350
        $region66: #{clip_forward.1} parent=11 // pred_check_branch
          %558 = sbr.rel (%p556) target = $region68
        $region67: #{clip_forward.1} parent=11 // pred_region
          _
        $region68: #{clip_forward.1} parent=11 // pred_fallthru
          _
        // Predicated region
        $region69: #{clip_forward.1} parent=11 // pred_check
          %p559 = pneg %p371
        $region70: #{clip_forward.1} parent=11 // pred_check_branch
          %561 = sbr.rel (%p559) target = $region72
        $region71: #{clip_forward.1} parent=11 // pred_region
          _
        $region72: #{clip_forward.1} parent=11 // pred_fallthru
          _
        // Predicated region
        $region73: #{clip_forward.1} parent=11 // pred_check
          %p562 = pneg %p392
        $region74: #{clip_forward.1} parent=11 // pred_check_branch
          %564 = sbr.rel (%p562) target = $region76
        $region75: #{clip_forward.1} parent=11 // pred_region
          _
        $region76: #{clip_forward.1} parent=11 // pred_fallthru
          _
        // Predicated region
        $region77: #{clip_forward.1} parent=11 // pred_check
          %p565 = pneg %p413
        $region78: #{clip_forward.1} parent=11 // pred_check_branch
          %567 = sbr.rel (%p565) target = $region80
        $region79: #{clip_forward.1} parent=11 // pred_region
          _
        $region80: #{clip_forward.1} parent=11 // pred_fallthru
          _
        // Predicated region
        $region81: #{clip_forward.1} parent=11 // pred_check
          %p568 = pneg %p434
        $region82: #{clip_forward.1} parent=11 // pred_check_branch
          %570 = sbr.rel (%p568) target = $region84
        $region83: #{clip_forward.1} parent=11 // pred_region
          _
        $region84: #{clip_forward.1} parent=11 // pred_fallthru
          _
        // Predicated region
        $region85: #{clip_forward.1} parent=11 // pred_check
          %p571 = pneg %p455
        $region86: #{clip_forward.1} parent=11 // pred_check_branch
          %573 = sbr.rel (%p571) target = $region88
        $region87: #{clip_forward.1} parent=11 // pred_region
          _
        $region88: #{clip_forward.1} parent=11 // pred_fallthru
          _
        // Predicated region
        $region89: #{clip_forward.1} parent=11 // pred_check
          %p574 = pneg %p476
        $region90: #{clip_forward.1} parent=11 // pred_check_branch
          %576 = sbr.rel (%p574) target = $region92
        $region91: #{clip_forward.1} parent=11 // pred_region
          _
        $region92: #{clip_forward.1} parent=11 // pred_fallthru
          _
      $region12: #{clip_forward.1} parent=5 // pred_fallthru
        _
      %p577 = scmp.lt.s32.totalorder %s30, 2
      // Predicated region
      $region93: #{clip_forward.1} parent=5 // pred_check
        %p578 = pneg %p577
      $region94: #{clip_forward.1} parent=5 // pred_check_branch
        %580 = sbr.rel (%p578) target = $region96
      $region95: #{clip_forward.1} parent=5 // pred_region
        // Predicated region
        $region97: #{clip_forward.1} parent=95 // pred_check
          %p581 = pneg %p50
        $region98: #{clip_forward.1} parent=95 // pred_check_branch
          %583 = sbr.rel (%p581) target = $region100
        $region99: #{clip_forward.1} parent=95 // pred_region
          %p584 = scmp.lt.s32.totalorder %s30, 1
          %s585 = scalar_select %p584, %s30, 1
          %s586 = smul.addr %s585, 2
          %s587 = smul.addr %s586, 8
          %s588 = scalar_lea.vmem %s0, %s587
        $region100: #{clip_forward.1} parent=95 // pred_fallthru
          _
      $region96: #{clip_forward.1} parent=5 // pred_fallthru
        _
      %p589 = scmp.le.s32.totalorder 1, %s30
      %p590 = scmp.lt.s32.totalorder %s30, 3
      %p591 = pnand %p589, %p590
      %p592 = pneg %p591
      // Predicated region
      $region101: #{clip_forward.1} parent=5 // pred_check
        _
      $region102: #{clip_forward.1} parent=5 // pred_check_branch
        %594 = sbr.rel (%p591) target = $region104
      $region103: #{clip_forward.1} parent=5 // pred_region
        %s595 = ssub.s32 %s30, 1
        %p596 = scmp.lt.s32.totalorder %s35, 1
        %s597 = scalar_select %p596, %s35, 1
        %s598 = smul.addr %s597, 2
        %s599 = smul.addr %s598, 8
        %s600 = scalar_lea.vmem %s0, %s599
        %p601 = pneg %p56
        %p602 = pneg %p53
        %p603 = pneg %p77
        %p604 = pneg %p74
        %p605 = pneg %p98
        %p606 = pneg %p95
        %p607 = pneg %p119
        %p608 = pneg %p116
        %p609 = pneg %p140
        %p610 = pneg %p137
        %p611 = pneg %p161
        %p612 = pneg %p158
        %p613 = pneg %p182
        %p614 = pneg %p179
        %p615 = pneg %p203
        %p616 = pneg %p200
        %p617 = pneg %p224
        %p618 = pneg %p221
        %p619 = pneg %p245
        %p620 = pneg %p242
        %p621 = pneg %p266
        %p622 = pneg %p263
        %p623 = pneg %p287
        %p624 = pneg %p284
        %p625 = pneg %p308
        %p626 = pneg %p305
        %p627 = pneg %p329
        %p628 = pneg %p326
        %p629 = pneg %p350
        %p630 = pneg %p347
        %p631 = pneg %p371
        %p632 = pneg %p368
        %p633 = pneg %p392
        %p634 = pneg %p389
        %p635 = pneg %p413
        %p636 = pneg %p410
        %p637 = pneg %p434
        %p638 = pneg %p431
        %p639 = pneg %p455
        %p640 = pneg %p452
        %p641 = pneg %p476
        %p642 = pneg %p473
        %p643 = pneg %p502
        %p644 = pneg %p499
        %s645 = sand.u32 %s489, 1
        %s646 = scalar_lea.sflag [#allocation3], %s645
        %s647 = sand.u32 %s489, 1
        %s648 = scalar_lea.vmem [#allocation2], %s647
        %p649 = scmp.lt.s32.totalorder %s35, 1
        %s650 = scalar_select %p649, %s35, 1
        %s651 = smul.addr %s650, 2
        %s652 = smul.addr %s651, 8
        %s653 = scalar_lea.vmem %s0, %s652
        %v654 = vld [vmem:[%s653] sm:$0x1f]
        %v655 = vld [vmem:[%s653 + $0x8] sm:$0x1f]
        %v656 = vld [vmem:[%s1] sm:$0xff]
        %v657 = vld [vmem:[%s1 + $0x8] sm:$0xff]
        %v658 = vld [vmem:[%s1 + $0x10] sm:$0xff]
        %v659 = vld [vmem:[%s1 + $0x18] sm:$0xff]
        %v660 = vld [vmem:[%s1 + $0x20] sm:$0xff]
        %v661 = vld [vmem:[%s1 + $0x28] sm:$0xff]
        %v662 = vld [vmem:[%s1 + $0x30] sm:$0xff]
        %v663 = vld [vmem:[%s1 + $0x38] sm:$0xff]
        %v664 = vld [vmem:[%s1 + $0x40] sm:$0xff]
        %v665 = vld [vmem:[%s1 + $0x48] sm:$0xff]
        %v666 = vld [vmem:[%s1 + $0x50] sm:$0xff]
        %v667 = vld [vmem:[%s1 + $0x58] sm:$0xff]
        %v668 = vld [vmem:[%s1 + $0x60] sm:$0xff]
        %v669 = vld [vmem:[%s1 + $0x68] sm:$0xff]
        %v670 = vld [vmem:[%s1 + $0x70] sm:$0xff]
        %v671 = vld [vmem:[%s1 + $0x78] sm:$0xff]
        %v672 = vld [vmem:[%s1 + $0x80] sm:$0xff]
        %v673 = vld [vmem:[%s1 + $0x88] sm:$0xff]
        %v674 = vld [vmem:[%s1 + $0x90] sm:$0xff]
        %v675 = vld [vmem:[%s1 + $0x98] sm:$0xff]
        %v676 = vld [vmem:[%s1 + $0xa0] sm:$0xff]
        %v677 = vld [vmem:[%s1 + $0xa8] sm:$0xff]
        %v678 = vld [vmem:[%s1 + $0xb0] sm:$0xff]
        %v679 = vld [vmem:[%s1 + $0xb8] sm:$0xff]
        %v680 = vld [vmem:[%s2] sm:$0x1f]
        %vm681 = vcmask 523264
        %v683 = vsel %vm681, %v655, 0
        %685 = vmatprep.subr.mxu0 0.0
        %686 = vmatpush1.msra.mxu0 %v656
        %687 = vmatprep.subr.mxu0 0.0
        %688 = vmatpush1.msra.mxu0 %v657
        %689 = vmatprep.subr.mxu0 0.0
        %690 = vmatpush1.msra.mxu0 %v658
        %691 = vmatprep.subr.mxu0 0.0
        %692 = vmatpush1.msra.mxu0 %v659
        %693 = vmatprep.subr.mxu0 0.0
        %694 = vmatpush1.msra.mxu0 %v660
        %695 = vmatprep.subr.mxu0 0.0
        %696 = vmatpush1.msra.mxu0 %v661
        %697 = vmatprep.subr.mxu0 0.0
        %698 = vmatpush1.msra.mxu0 %v662
        %699 = vmatprep.subr.mxu0 0.0
        %700 = vmatpush1.msra.mxu0 %v663
        %701 = vmatprep.subr.mxu0 0.0
        %702 = vmatpush1.msra.mxu0 %v664
        %703 = vmatprep.subr.mxu0 0.0
        %704 = vmatpush1.msra.mxu0 %v665
        %705 = vmatprep.subr.mxu0 0.0
        %706 = vmatpush1.msra.mxu0 %v666
        %707 = vmatprep.subr.mxu0 0.0
        %708 = vmatpush1.msra.mxu0 %v667
        %709 = vmatprep.subr.mxu0 0.0
        %710 = vmatpush1.msra.mxu0 %v668
        %711 = vmatprep.subr.mxu0 0.0
        %712 = vmatpush1.msra.mxu0 %v669
        %713 = vmatprep.subr.mxu0 0.0
        %714 = vmatpush1.msra.mxu0 %v670
        %715 = vmatprep.subr.mxu0 0.0
        %716 = vmatpush1.msra.mxu0 %v671
        %717 = vmatprep.subr.mxu0 0.0
        %718 = vmatpush1.msra.mxu0 %v672
        %719 = vmatprep.subr.mxu0 0.0
        %720 = vmatpush1.msra.mxu0 %v673
        %721 = vmatprep.subr.mxu0 0.0
        %722 = vmatpush1.msra.mxu0 %v674
        %723 = vmatprep.subr.mxu0 0.0
        %724 = vmatpush1.msra.mxu0 %v675
        %725 = vmatprep.subr.mxu0 0.0
        %726 = vmatpush1.msra.mxu0 %v676
        %727 = vmatprep.subr.mxu0 0.0
        %728 = vmatpush1.msra.mxu0 %v677
        %729 = vmatprep.subr.mxu0 0.0
        %730 = vmatpush1.msra.mxu0 %v678
        %731 = vmatprep.subr.mxu0 0.0
        %732 = vmatpush1.msra.mxu0 %v679
        %733 = vmatprep.subr.mxu0 0.0
        %734 = vmatpush1.msra.mxu0 0.0
        %735 = vmatprep.subr.mxu0 0.0
        %736 = vmatpush1.msra.mxu0 0.0
        %737 = vmatprep.subr.mxu0 0.0
        %738 = vmatpush1.msra.mxu0 0.0
        %739 = vmatprep.subr.mxu0 0.0
        %740 = vmatpush1.msra.mxu0 0.0
        %741 = vmatprep.subr.mxu0 0.0
        %742 = vmatpush1.msra.mxu0 0.0
        %743 = vmatprep.subr.mxu0 0.0
        %744 = vmatpush1.msra.mxu0 0.0
        %745 = vmatprep.subr.mxu0 0.0
        %746 = vmatpush1.msra.mxu0 0.0
        %747 = vmatprep.subr.mxu0 0.0
        %748 = vmatpush1.msra.mxu0 0.0
        %749 = vmatprep.mubr.f32.mxu0 %v683
        %750 = vmatmul.mubr.f32.gmra.mrb[0].mxu0 %v654
        %v751 = vpop.f32.mrb[0].mxu0
        %v752 = vadd.f32 %v680, %v751
        %v753 = vpop.f32.mrb[0].mxu0
        %754 = vdwg.mxu0
        %v755 = vld [vmem:[%s3] sm:$0x3]
        %vm756 = vcmask 258048
        %v757 = vsel %vm756, %v752, 0.0
        %758 = vadd.xlane.f32.xlu0 %v757
        %v759 = vpop.xlane.xlu0 %758
        %v760 = vrcp.pop 32.0
        %v761 = vmul.f32 %v759, %v760
        %v762 = vsub.f32 %v752, %v761
        %v763 = vmul.f32 %v762, %v762
        %v764 = vsel %vm756, %v763, 0.0
        %765 = vadd.xlane.f32.xlu0 %v764
        %v766 = vpop.xlane.xlu0 %765
        %v767 = vmul.f32 %v766, %v760
        %v768 = vadd.f32 %v767, 1e-05
        %v769 = vrsqrt.pop %v768
        %v770 = vmul.f32 %v762, %v769
        %v771 = vlaneseq
        %v772 = vshrl.u32 %v771, 7
        %v773 = vsub.s32 0, %v772
        %v774 = vrot.slane %v755, %v773
        %v775 = vmul.f32 %v770, %v774
        %v776 = vlaneseq
        %v777 = vshrl.u32 %v776, 7
        %v778 = vsub.s32 1, %v777
        %v779 = vrot.slane %v755, %v778
        %v780 = vadd.f32 %v775, %v779
        %v781 = vld [vmem:[%s4] sm:$0x3]
        %v782 = vsel %vm756, %v780, 0.0
        %783 = vadd.xlane.f32.xlu0 %v782
        %v784 = vpop.xlane.xlu0 %783
        %v785 = vmul.f32 %v784, %v760
        %v786 = vsub.f32 %v780, %v785
        %v787 = vmul.f32 %v786, %v786
        %v788 = vsel %vm756, %v787, 0.0
        %789 = vadd.xlane.f32.xlu0 %v788
        %v790 = vpop.xlane.xlu0 %789
        %v791 = vmul.f32 %v790, %v760
        %v792 = vadd.f32 %v791, 1e-05
        %v793 = vrsqrt.pop %v792
        %v794 = vmul.f32 %v786, %v793
        %v795 = vlaneseq
        %v796 = vshrl.u32 %v795, 7
        %v797 = vsub.s32 0, %v796
        %v798 = vrot.slane %v781, %v797
        %v799 = vmul.f32 %v794, %v798
        %v800 = vlaneseq
        %v801 = vshrl.u32 %v800, 7
        %v802 = vsub.s32 1, %v801
        %v803 = vrot.slane %v781, %v802
        %v804 = vadd.f32 %v799, %v803
        %v805 = vld [vmem:[%s5] sm:$0xff]
        %v806 = vld [vmem:[%s5 + $0x8] sm:$0xff]
        %v807 = vld [vmem:[%s5 + $0x10] sm:$0xff]
        %v808 = vld [vmem:[%s5 + $0x18] sm:$0xff]
        %v809 = vld [vmem:[%s8] sm:$0x1]
        %v811 = vlaneseq
        %v812 = vshrl.u32 %v811, 7
        %v813 = vsub.s32 0, %v812
        %v814 = vrot.slane %v809, %v813
        %vm816 = vcmask 261120
        %v818 = vsel %vm816, %v804, 0
        %820 = vmatprep.subr.mxu0 0.0
        %821 = vmatpush1.msra.mxu0 %v805
        %822 = vmatprep.subr.mxu0 0.0
        %823 = vmatpush1.msra.mxu0 %v806
        %824 = vmatprep.subr.mxu0 0.0
        %825 = vmatpush1.msra.mxu0 %v807
        %826 = vmatprep.subr.mxu0 0.0
        %827 = vmatpush1.msra.mxu0 %v808
        %828 = vmatprep.subr.mxu0 0.0
        %829 = vmatpush1.msra.mxu0 0.0
        %830 = vmatprep.subr.mxu0 0.0
        %831 = vmatpush1.msra.mxu0 0.0
        %832 = vmatprep.subr.mxu0 0.0
        %833 = vmatpush1.msra.mxu0 0.0
        %834 = vmatprep.subr.mxu0 0.0
        %835 = vmatpush1.msra.mxu0 0.0
        %836 = vmatprep.subr.mxu0 0.0
        %837 = vmatpush1.msra.mxu0 0.0
        %838 = vmatprep.subr.mxu0 0.0
        %839 = vmatpush1.msra.mxu0 0.0
        %840 = vmatprep.subr.mxu0 0.0
        %841 = vmatpush1.msra.mxu0 0.0
        %842 = vmatprep.subr.mxu0 0.0
        %843 = vmatpush1.msra.mxu0 0.0
        %844 = vmatprep.subr.mxu0 0.0
        %845 = vmatpush1.msra.mxu0 0.0
        %846 = vmatprep.subr.mxu0 0.0
        %847 = vmatpush1.msra.mxu0 0.0
        %848 = vmatprep.subr.mxu0 0.0
        %849 = vmatpush1.msra.mxu0 0.0
        %850 = vmatprep.subr.mxu0 0.0
        %851 = vmatpush1.msra.mxu0 0.0
        %852 = vmatprep.subr.mxu0 0.0
        %853 = vmatpush1.msra.mxu0 0.0
        %854 = vmatprep.subr.mxu0 0.0
        %855 = vmatpush1.msra.mxu0 0.0
        %856 = vmatprep.subr.mxu0 0.0
        %857 = vmatpush1.msra.mxu0 0.0
        %858 = vmatprep.subr.mxu0 0.0
        %859 = vmatpush1.msra.mxu0 0.0
        %860 = vmatprep.subr.mxu0 0.0
        %861 = vmatpush1.msra.mxu0 0.0
        %862 = vmatprep.subr.mxu0 0.0
        %863 = vmatpush1.msra.mxu0 0.0
        %864 = vmatprep.subr.mxu0 0.0
        %865 = vmatpush1.msra.mxu0 0.0
        %866 = vmatprep.subr.mxu0 0.0
        %867 = vmatpush1.msra.mxu0 0.0
        %868 = vmatprep.subr.mxu0 0.0
        %869 = vmatpush1.msra.mxu0 0.0
        %870 = vmatprep.subr.mxu0 0.0
        %871 = vmatpush1.msra.mxu0 0.0
        %872 = vmatprep.subr.mxu0 0.0
        %873 = vmatpush1.msra.mxu0 0.0
        %874 = vmatprep.subr.mxu0 0.0
        %875 = vmatpush1.msra.mxu0 0.0
        %876 = vmatprep.subr.mxu0 0.0
        %877 = vmatpush1.msra.mxu0 0.0
        %878 = vmatprep.subr.mxu0 0.0
        %879 = vmatpush1.msra.mxu0 0.0
        %880 = vmatprep.subr.mxu0 0.0
        %881 = vmatpush1.msra.mxu0 0.0
        %882 = vmatprep.subr.mxu0 0.0
        %883 = vmatpush1.msra.mxu0 0.0
        %884 = vmatprep.mubr.f32.mxu0 0.0
        %885 = vmatmul.mubr.f32.gmra.mrb[0].mxu0 %v818
        %v886 = vpop.f32.mrb[0].mxu0
        %v887 = vadd.f32 %v814, %v886
        %v888 = vpop.f32.mrb[0].mxu0
        %889 = vdwg.mxu0
        %v890 = vld [vmem:[%s6] sm:$0xff]
        %v891 = vld [vmem:[%s6 + $0x8] sm:$0xff]
        %v892 = vld [vmem:[%s6 + $0x10] sm:$0xff]
        %v893 = vld [vmem:[%s6 + $0x18] sm:$0xff]
        %v894 = vld [vmem:[%s9] sm:$0x1]
        %v896 = vlaneseq
        %v897 = vshrl.u32 %v896, 7
        %v898 = vsub.s32 0, %v897
        %v899 = vrot.slane %v894, %v898
        %901 = vmatprep.subr.mxu0 0.0
        %902 = vmatpush1.msra.mxu0 %v890
        %903 = vmatprep.subr.mxu0 0.0
        %904 = vmatpush1.msra.mxu0 %v891
        %905 = vmatprep.subr.mxu0 0.0
        %906 = vmatpush1.msra.mxu0 %v892
        %907 = vmatprep.subr.mxu0 0.0
        %908 = vmatpush1.msra.mxu0 %v893
        %909 = vmatprep.subr.mxu0 0.0
        %910 = vmatpush1.msra.mxu0 0.0
        %911 = vmatprep.subr.mxu0 0.0
        %912 = vmatpush1.msra.mxu0 0.0
        %913 = vmatprep.subr.mxu0 0.0
        %914 = vmatpush1.msra.mxu0 0.0
        %915 = vmatprep.subr.mxu0 0.0
        %916 = vmatpush1.msra.mxu0 0.0
        %917 = vmatprep.subr.mxu0 0.0
        %918 = vmatpush1.msra.mxu0 0.0
        %919 = vmatprep.subr.mxu0 0.0
        %920 = vmatpush1.msra.mxu0 0.0
        %921 = vmatprep.subr.mxu0 0.0
        %922 = vmatpush1.msra.mxu0 0.0
        %923 = vmatprep.subr.mxu0 0.0
        %924 = vmatpush1.msra.mxu0 0.0
        %925 = vmatprep.subr.mxu0 0.0
        %926 = vmatpush1.msra.mxu0 0.0
        %927 = vmatprep.subr.mxu0 0.0
        %928 = vmatpush1.msra.mxu0 0.0
        %929 = vmatprep.subr.mxu0 0.0
        %930 = vmatpush1.msra.mxu0 0.0
        %931 = vmatprep.subr.mxu0 0.0
        %932 = vmatpush1.msra.mxu0 0.0
        %933 = vmatprep.subr.mxu0 0.0
        %934 = vmatpush1.msra.mxu0 0.0
        %935 = vmatprep.subr.mxu0 0.0
        %936 = vmatpush1.msra.mxu0 0.0
        %937 = vmatprep.subr.mxu0 0.0
        %938 = vmatpush1.msra.mxu0 0.0
        %939 = vmatprep.subr.mxu0 0.0
        %940 = vmatpush1.msra.mxu0 0.0
        %941 = vmatprep.subr.mxu0 0.0
        %942 = vmatpush1.msra.mxu0 0.0
        %943 = vmatprep.subr.mxu0 0.0
        %944 = vmatpush1.msra.mxu0 0.0
        %945 = vmatprep.subr.mxu0 0.0
        %946 = vmatpush1.msra.mxu0 0.0
        %947 = vmatprep.subr.mxu0 0.0
        %948 = vmatpush1.msra.mxu0 0.0
        %949 = vmatprep.subr.mxu0 0.0
        %950 = vmatpush1.msra.mxu0 0.0
        %951 = vmatprep.subr.mxu0 0.0
        %952 = vmatpush1.msra.mxu0 0.0
        %953 = vmatprep.subr.mxu0 0.0
        %954 = vmatpush1.msra.mxu0 0.0
        %955 = vmatprep.subr.mxu0 0.0
        %956 = vmatpush1.msra.mxu0 0.0
        %957 = vmatprep.subr.mxu0 0.0
        %958 = vmatpush1.msra.mxu0 0.0
        %959 = vmatprep.subr.mxu0 0.0
        %960 = vmatpush1.msra.mxu0 0.0
        %961 = vmatprep.subr.mxu0 0.0
        %962 = vmatpush1.msra.mxu0 0.0
        %963 = vmatprep.subr.mxu0 0.0
        %964 = vmatpush1.msra.mxu0 0.0
        %965 = vmatprep.mubr.f32.mxu0 0.0
        %966 = vmatmul.mubr.f32.gmra.mrb[0].mxu0 %v818
        %v967 = vpop.f32.mrb[0].mxu0
        %v968 = vadd.f32 %v899, %v967
        %v969 = vpop.f32.mrb[0].mxu0
        %970 = vdwg.mxu0
        %v971 = vld [vmem:[%s7] sm:$0xff]
        %v972 = vld [vmem:[%s7 + $0x8] sm:$0xff]
        %v973 = vld [vmem:[%s7 + $0x10] sm:$0xff]
        %v974 = vld [vmem:[%s7 + $0x18] sm:$0xff]
        %v975 = vld [vmem:[%s10] sm:$0x1]
        %v977 = vlaneseq
        %v978 = vshrl.u32 %v977, 7
        %v979 = vsub.s32 0, %v978
        %v980 = vrot.slane %v975, %v979
        %982 = vmatprep.subr.mxu0 0.0
        %983 = vmatpush1.msra.mxu0 %v971
        %984 = vmatprep.subr.mxu0 0.0
        %985 = vmatpush1.msra.mxu0 %v972
        %986 = vmatprep.subr.mxu0 0.0
        %987 = vmatpush1.msra.mxu0 %v973
        %988 = vmatprep.subr.mxu0 0.0
        %989 = vmatpush1.msra.mxu0 %v974
        %990 = vmatprep.subr.mxu0 0.0
        %991 = vmatpush1.msra.mxu0 0.0
        %992 = vmatprep.subr.mxu0 0.0
        %993 = vmatpush1.msra.mxu0 0.0
        %994 = vmatprep.subr.mxu0 0.0
        %995 = vmatpush1.msra.mxu0 0.0
        %996 = vmatprep.subr.mxu0 0.0
        %997 = vmatpush1.msra.mxu0 0.0
        %998 = vmatprep.subr.mxu0 0.0
        %999 = vmatpush1.msra.mxu0 0.0
        %1000 = vmatprep.subr.mxu0 0.0
        %1001 = vmatpush1.msra.mxu0 0.0
        %1002 = vmatprep.subr.mxu0 0.0
        %1003 = vmatpush1.msra.mxu0 0.0
        %1004 = vmatprep.subr.mxu0 0.0
        %1005 = vmatpush1.msra.mxu0 0.0
        %1006 = vmatprep.subr.mxu0 0.0
        %1007 = vmatpush1.msra.mxu0 0.0
        %1008 = vmatprep.subr.mxu0 0.0
        %1009 = vmatpush1.msra.mxu0 0.0
        %1010 = vmatprep.subr.mxu0 0.0
        %1011 = vmatpush1.msra.mxu0 0.0
        %1012 = vmatprep.subr.mxu0 0.0
        %1013 = vmatpush1.msra.mxu0 0.0
        %1014 = vmatprep.subr.mxu0 0.0
        %1015 = vmatpush1.msra.mxu0 0.0
        %1016 = vmatprep.subr.mxu0 0.0
        %1017 = vmatpush1.msra.mxu0 0.0
        %1018 = vmatprep.subr.mxu0 0.0
        %1019 = vmatpush1.msra.mxu0 0.0
        %1020 = vmatprep.subr.mxu0 0.0
        %1021 = vmatpush1.msra.mxu0 0.0
        %1022 = vmatprep.subr.mxu0 0.0
        %1023 = vmatpush1.msra.mxu0 0.0
        %1024 = vmatprep.subr.mxu0 0.0
        %1025 = vmatpush1.msra.mxu0 0.0
        %1026 = vmatprep.subr.mxu0 0.0
        %1027 = vmatpush1.msra.mxu0 0.0
        %1028 = vmatprep.subr.mxu0 0.0
        %1029 = vmatpush1.msra.mxu0 0.0
        %1030 = vmatprep.subr.mxu0 0.0
        %1031 = vmatpush1.msra.mxu0 0.0
        %1032 = vmatprep.subr.mxu0 0.0
        %1033 = vmatpush1.msra.mxu0 0.0
        %1034 = vmatprep.subr.mxu0 0.0
        %1035 = vmatpush1.msra.mxu0 0.0
        %1036 = vmatprep.subr.mxu0 0.0
        %1037 = vmatpush1.msra.mxu0 0.0
        %1038 = vmatprep.subr.mxu0 0.0
        %1039 = vmatpush1.msra.mxu0 0.0
        %1040 = vmatprep.subr.mxu0 0.0
        %1041 = vmatpush1.msra.mxu0 0.0
        %1042 = vmatprep.subr.mxu0 0.0
        %1043 = vmatpush1.msra.mxu0 0.0
        %1044 = vmatprep.subr.mxu0 0.0
        %1045 = vmatpush1.msra.mxu0 0.0
        %1046 = vmatprep.mubr.f32.mxu0 0.0
        %1047 = vmatmul.mubr.f32.gmra.mrb[0].mxu0 %v818
        %v1048 = vpop.f32.mrb[0].mxu0
        %v1049 = vadd.f32 %v980, %v1048
        %v1050 = vpop.f32.mrb[0].mxu0
        %1051 = vdwg.mxu0
        %vm1052 = vcmask 64512
        %v1054 = vsel %vm1052, %v887, 0
        %v1057 = vsel %vm1052, %v968, 0
        %1059 = vmatprep.subr.mxu0 0.0
        %1060 = vmatpush1.xpose.msra.mxu0 %v1057
        %1061 = vmatprep.subr.mxu0 0.0
        %1062 = vmatpush1.xpose.msra.mxu0 0.0
        %1063 = vmatprep.subr.mxu0 0.0
        %1064 = vmatpush1.xpose.msra.mxu0 0.0
        %1065 = vmatprep.subr.mxu0 0.0
        %1066 = vmatpush1.xpose.msra.mxu0 0.0
        %1067 = vmatprep.subr.mxu0 0.0
        %1068 = vmatpush1.xpose.msra.mxu0 0.0
        %1069 = vmatprep.subr.mxu0 0.0
        %1070 = vmatpush1.xpose.msra.mxu0 0.0
        %1071 = vmatprep.subr.mxu0 0.0
        %1072 = vmatpush1.xpose.msra.mxu0 0.0
        %1073 = vmatprep.subr.mxu0 0.0
        %1074 = vmatpush1.xpose.msra.mxu0 0.0
        %1075 = vmatprep.subr.mxu0 0.0
        %1076 = vmatpush1.xpose.msra.mxu0 0.0
        %1077 = vmatprep.subr.mxu0 0.0
        %1078 = vmatpush1.xpose.msra.mxu0 0.0
        %1079 = vmatprep.subr.mxu0 0.0
        %1080 = vmatpush1.xpose.msra.mxu0 0.0
        %1081 = vmatprep.subr.mxu0 0.0
        %1082 = vmatpush1.xpose.msra.mxu0 0.0
        %1083 = vmatprep.subr.mxu0 0.0
        %1084 = vmatpush1.xpose.msra.mxu0 0.0
        %1085 = vmatprep.subr.mxu0 0.0
        %1086 = vmatpush1.xpose.msra.mxu0 0.0
        %1087 = vmatprep.subr.mxu0 0.0
        %1088 = vmatpush1.xpose.msra.mxu0 0.0
        %1089 = vmatprep.subr.mxu0 0.0
        %1090 = vmatpush1.xpose.msra.mxu0 0.0
        %1091 = vmatprep.subr.mxu0 0.0
        %1092 = vmatpush1.xpose.msra.mxu0 0.0
        %1093 = vmatprep.subr.mxu0 0.0
        %1094 = vmatpush1.xpose.msra.mxu0 0.0
        %1095 = vmatprep.subr.mxu0 0.0
        %1096 = vmatpush1.xpose.msra.mxu0 0.0
        %1097 = vmatprep.subr.mxu0 0.0
        %1098 = vmatpush1.xpose.msra.mxu0 0.0
        %1099 = vmatprep.subr.mxu0 0.0
        %1100 = vmatpush1.xpose.msra.mxu0 0.0
        %1101 = vmatprep.subr.mxu0 0.0
        %1102 = vmatpush1.xpose.msra.mxu0 0.0
        %1103 = vmatprep.subr.mxu0 0.0
        %1104 = vmatpush1.xpose.msra.mxu0 0.0
        %1105 = vmatprep.subr.mxu0 0.0
        %1106 = vmatpush1.xpose.msra.mxu0 0.0
        %1107 = vmatprep.subr.mxu0 0.0
        %1108 = vmatpush1.xpose.msra.mxu0 0.0
        %1109 = vmatprep.subr.mxu0 0.0
        %1110 = vmatpush1.xpose.msra.mxu0 0.0
        %1111 = vmatprep.subr.mxu0 0.0
        %1112 = vmatpush1.xpose.msra.mxu0 0.0
        %1113 = vmatprep.subr.mxu0 0.0
        %1114 = vmatpush1.xpose.msra.mxu0 0.0
        %1115 = vmatprep.subr.mxu0 0.0
        %1116 = vmatpush1.xpose.msra.mxu0 0.0
        %1117 = vmatprep.subr.mxu0 0.0
        %1118 = vmatpush1.xpose.msra.mxu0 0.0
        %1119 = vmatprep.subr.mxu0 0.0
        %1120 = vmatpush1.xpose.msra.mxu0 0.0
        %1121 = vmatprep.subr.mxu0 0.0
        %1122 = vmatpush1.xpose.msra.mxu0 0.0
        %1123 = vmatprep.mubr.f32.mxu0 0.0
        %1124 = vmatmul.mubr.f32.gmra.mrb[0].mxu0 %v1054
        %v1125 = vpop.f32.mrb[0].mxu0
        %v1126 = vadd.f32 0.0, %v1125
        %v1127 = vpop.f32.mrb[0].mxu0
        %1128 = vdwg.mxu0
        %v1129 = vmul.f32 %v1126, 0.35355338
        %vm1130 = vcmask 36864
        %v1131 = vsel %vm1130, %v1129, -inf
        %1132 = vmax.xlane.f32.xlu0 %v1131
        %v1133 = vpop.xlane.xlu0 %1132
        %v1134 = vsub.f32 %v1129, %v1133
        %v1135 = vmul.f32 %v1134, 1.442695
        %v1136 = vpow.pop %v1135
        %v1137 = vsel %vm1130, %v1136, 0.0
        %1138 = vadd.xlane.f32.xlu0 %v1137
        %v1139 = vpop.xlane.xlu0 %1138
        %v1140 = vrcp.pop %v1139
        %v1141 = vmul.f32 %v1136, %v1140
        %vm1142 = vcmask 39936
        %v1144 = vsel %vm1142, %v1141, 0
        %vm1146 = vcmask 1044480
        %v1148 = vsel %vm1146, %v1049, 0
        %1150 = vmatprep.subr.mxu0 0.0
        %1151 = vmatpush1.msra.mxu0 %v1148
        %1152 = vmatprep.subr.mxu0 0.0
        %1153 = vmatpush1.msra.mxu0 0.0
        %1154 = vmatprep.subr.mxu0 0.0
        %1155 = vmatpush1.msra.mxu0 0.0
        %1156 = vmatprep.subr.mxu0 0.0
        %1157 = vmatpush1.msra.mxu0 0.0
        %1158 = vmatprep.subr.mxu0 0.0
        %1159 = vmatpush1.msra.mxu0 0.0
        %1160 = vmatprep.subr.mxu0 0.0
        %1161 = vmatpush1.msra.mxu0 0.0
        %1162 = vmatprep.subr.mxu0 0.0
        %1163 = vmatpush1.msra.mxu0 0.0
        %1164 = vmatprep.subr.mxu0 0.0
        %1165 = vmatpush1.msra.mxu0 0.0
        %1166 = vmatprep.subr.mxu0 0.0
        %1167 = vmatpush1.msra.mxu0 0.0
        %1168 = vmatprep.subr.mxu0 0.0
        %1169 = vmatpush1.msra.mxu0 0.0
        %1170 = vmatprep.subr.mxu0 0.0
        %1171 = vmatpush1.msra.mxu0 0.0
        %1172 = vmatprep.subr.mxu0 0.0
        %1173 = vmatpush1.msra.mxu0 0.0
        %1174 = vmatprep.subr.mxu0 0.0
        %1175 = vmatpush1.msra.mxu0 0.0
        %1176 = vmatprep.subr.mxu0 0.0
        %1177 = vmatpush1.msra.mxu0 0.0
        %1178 = vmatprep.subr.mxu0 0.0
        %1179 = vmatpush1.msra.mxu0 0.0
        %1180 = vmatprep.subr.mxu0 0.0
        %1181 = vmatpush1.msra.mxu0 0.0
        %1182 = vmatprep.subr.mxu0 0.0
        %1183 = vmatpush1.msra.mxu0 0.0
        %1184 = vmatprep.subr.mxu0 0.0
        %1185 = vmatpush1.msra.mxu0 0.0
        %1186 = vmatprep.subr.mxu0 0.0
        %1187 = vmatpush1.msra.mxu0 0.0
        %1188 = vmatprep.subr.mxu0 0.0
        %1189 = vmatpush1.msra.mxu0 0.0
        %1190 = vmatprep.subr.mxu0 0.0
        %1191 = vmatpush1.msra.mxu0 0.0
        %1192 = vmatprep.subr.mxu0 0.0
        %1193 = vmatpush1.msra.mxu0 0.0
        %1194 = vmatprep.subr.mxu0 0.0
        %1195 = vmatpush1.msra.mxu0 0.0
        %1196 = vmatprep.subr.mxu0 0.0
        %1197 = vmatpush1.msra.mxu0 0.0
        %1198 = vmatprep.subr.mxu0 0.0
        %1199 = vmatpush1.msra.mxu0 0.0
        %1200 = vmatprep.subr.mxu0 0.0
        %1201 = vmatpush1.msra.mxu0 0.0
        %1202 = vmatprep.subr.mxu0 0.0
        %1203 = vmatpush1.msra.mxu0 0.0
        %1204 = vmatprep.subr.mxu0 0.0
        %1205 = vmatpush1.msra.mxu0 0.0
        %1206 = vmatprep.subr.mxu0 0.0
        %1207 = vmatpush1.msra.mxu0 0.0
        %1208 = vmatprep.subr.mxu0 0.0
        %1209 = vmatpush1.msra.mxu0 0.0
        %1210 = vmatprep.subr.mxu0 0.0
        %1211 = vmatpush1.msra.mxu0 0.0
        %1212 = vmatprep.subr.mxu0 0.0
        %1213 = vmatpush1.msra.mxu0 0.0
        %1214 = vmatprep.mubr.f32.mxu0 0.0
        %1215 = vmatmul.mubr.f32.gmra.mrb[0].mxu0 %v1144
        %v1216 = vpop.f32.mrb[0].mxu0
        %v1217 = vadd.f32 0.0, %v1216
        %v1218 = vpop.f32.mrb[0].mxu0
        %1219 = vdwg.mxu0
        %v1220 = vld [vmem:[%s11] sm:$0xff]
        %s1221 = scalar_lea.vmem %s5, 32
        %v1222 = vld [vmem:[%s1221] sm:$0xff]
        %v1223 = vld [vmem:[%s1221 + $0x8] sm:$0xff]
        %v1224 = vld [vmem:[%s1221 + $0x10] sm:$0xff]
        %v1225 = vld [vmem:[%s1221 + $0x18] sm:$0xff]
        %s1226 = scalar_lea.vmem %s8, 1
        %v1227 = vld [vmem:[%s1226] sm:$0x1]
        %v1229 = vlaneseq
        %v1230 = vshrl.u32 %v1229, 7
        %v1231 = vsub.s32 0, %v1230
        %v1232 = vrot.slane %v1227, %v1231
        %1234 = vmatprep.subr.mxu0 0.0
        %1235 = vmatpush1.msra.mxu0 %v1222
        %1236 = vmatprep.subr.mxu0 0.0
        %1237 = vmatpush1.msra.mxu0 %v1223
        %1238 = vmatprep.subr.mxu0 0.0
        %1239 = vmatpush1.msra.mxu0 %v1224
        %1240 = vmatprep.subr.mxu0 0.0
        %1241 = vmatpush1.msra.mxu0 %v1225
        %1242 = vmatprep.subr.mxu0 0.0
        %1243 = vmatpush1.msra.mxu0 0.0
        %1244 = vmatprep.subr.mxu0 0.0
        %1245 = vmatpush1.msra.mxu0 0.0
        %1246 = vmatprep.subr.mxu0 0.0
        %1247 = vmatpush1.msra.mxu0 0.0
        %1248 = vmatprep.subr.mxu0 0.0
        %1249 = vmatpush1.msra.mxu0 0.0
        %1250 = vmatprep.subr.mxu0 0.0
        %1251 = vmatpush1.msra.mxu0 0.0
        %1252 = vmatprep.subr.mxu0 0.0
        %1253 = vmatpush1.msra.mxu0 0.0
        %1254 = vmatprep.subr.mxu0 0.0
        %1255 = vmatpush1.msra.mxu0 0.0
        %1256 = vmatprep.subr.mxu0 0.0
        %1257 = vmatpush1.msra.mxu0 0.0
        %1258 = vmatprep.subr.mxu0 0.0
        %1259 = vmatpush1.msra.mxu0 0.0
        %1260 = vmatprep.subr.mxu0 0.0
        %1261 = vmatpush1.msra.mxu0 0.0
        %1262 = vmatprep.subr.mxu0 0.0
        %1263 = vmatpush1.msra.mxu0 0.0
        %1264 = vmatprep.subr.mxu0 0.0
        %1265 = vmatpush1.msra.mxu0 0.0
        %1266 = vmatprep.subr.mxu0 0.0
        %1267 = vmatpush1.msra.mxu0 0.0
        %1268 = vmatprep.subr.mxu0 0.0
        %1269 = vmatpush1.msra.mxu0 0.0
        %1270 = vmatprep.subr.mxu0 0.0
        %1271 = vmatpush1.msra.mxu0 0.0
        %1272 = vmatprep.subr.mxu0 0.0
        %1273 = vmatpush1.msra.mxu0 0.0
        %1274 = vmatprep.subr.mxu0 0.0
        %1275 = vmatpush1.msra.mxu0 0.0
        %1276 = vmatprep.subr.mxu0 0.0
        %1277 = vmatpush1.msra.mxu0 0.0
        %1278 = vmatprep.subr.mxu0 0.0
        %1279 = vmatpush1.msra.mxu0 0.0
        %1280 = vmatprep.subr.mxu0 0.0
        %1281 = vmatpush1.msra.mxu0 0.0
        %1282 = vmatprep.subr.mxu0 0.0
        %1283 = vmatpush1.msra.mxu0 0.0
        %1284 = vmatprep.subr.mxu0 0.0
        %1285 = vmatpush1.msra.mxu0 0.0
        %1286 = vmatprep.subr.mxu0 0.0
        %1287 = vmatpush1.msra.mxu0 0.0
        %1288 = vmatprep.subr.mxu0 0.0
        %1289 = vmatpush1.msra.mxu0 0.0
        %1290 = vmatprep.subr.mxu0 0.0
        %1291 = vmatpush1.msra.mxu0 0.0
        %1292 = vmatprep.subr.mxu0 0.0
        %1293 = vmatpush1.msra.mxu0 0.0
        %1294 = vmatprep.subr.mxu0 0.0
        %1295 = vmatpush1.msra.mxu0 0.0
        %1296 = vmatprep.subr.mxu0 0.0
        %1297 = vmatpush1.msra.mxu0 0.0
        %1298 = vmatprep.mubr.f32.mxu0 0.0
        %1299 = vmatmul.mubr.f32.gmra.mrb[0].mxu0 %v818
        %v1300 = vpop.f32.mrb[0].mxu0
        %v1301 = vadd.f32 %v1232, %v1300
        %v1302 = vpop.f32.mrb[0].mxu0
        %1303 = vdwg.mxu0
        %s1304 = scalar_lea.vmem %s6, 32
        %v1305 = vld [vmem:[%s1304] sm:$0xff]
        %v1306 = vld [vmem:[%s1304 + $0x8] sm:$0xff]
        %v1307 = vld [vmem:[%s1304 + $0x10] sm:$0xff]
        %v1308 = vld [vmem:[%s1304 + $0x18] sm:$0xff]
        %s1309 = scalar_lea.vmem %s9, 1
        %v1310 = vld [vmem:[%s1309] sm:$0x1]
        %v1312 = vlaneseq
        %v1313 = vshrl.u32 %v1312, 7
        %v1314 = vsub.s32 0, %v1313
        %v1315 = vrot.slane %v1310, %v1314
        %1317 = vmatprep.subr.mxu0 0.0
        %1318 = vmatpush1.msra.mxu0 %v1305
        %1319 = vmatprep.subr.mxu0 0.0
        %1320 = vmatpush1.msra.mxu0 %v1306
        %1321 = vmatprep.subr.mxu0 0.0
        %1322 = vmatpush1.msra.mxu0 %v1307
        %1323 = vmatprep.subr.mxu0 0.0
        %1324 = vmatpush1.msra.mxu0 %v1308
        %1325 = vmatprep.subr.mxu0 0.0
        %1326 = vmatpush1.msra.mxu0 0.0
        %1327 = vmatprep.subr.mxu0 0.0
        %1328 = vmatpush1.msra.mxu0 0.0
        %1329 = vmatprep.subr.mxu0 0.0
        %1330 = vmatpush1.msra.mxu0 0.0
        %1331 = vmatprep.subr.mxu0 0.0
        %1332 = vmatpush1.msra.mxu0 0.0
        %1333 = vmatprep.subr.mxu0 0.0
        %1334 = vmatpush1.msra.mxu0 0.0
        %1335 = vmatprep.subr.mxu0 0.0
        %1336 = vmatpush1.msra.mxu0 0.0
        %1337 = vmatprep.subr.mxu0 0.0
        %1338 = vmatpush1.msra.mxu0 0.0
        %1339 = vmatprep.subr.mxu0 0.0
        %1340 = vmatpush1.msra.mxu0 0.0
        %1341 = vmatprep.subr.mxu0 0.0
        %1342 = vmatpush1.msra.mxu0 0.0
        %1343 = vmatprep.subr.mxu0 0.0
        %1344 = vmatpush1.msra.mxu0 0.0
        %1345 = vmatprep.subr.mxu0 0.0
        %1346 = vmatpush1.msra.mxu0 0.0
        %1347 = vmatprep.subr.mxu0 0.0
        %1348 = vmatpush1.msra.mxu0 0.0
        %1349 = vmatprep.subr.mxu0 0.0
        %1350 = vmatpush1.msra.mxu0 0.0
        %1351 = vmatprep.subr.mxu0 0.0
        %1352 = vmatpush1.msra.mxu0 0.0
        %1353 = vmatprep.subr.mxu0 0.0
        %1354 = vmatpush1.msra.mxu0 0.0
        %1355 = vmatprep.subr.mxu0 0.0
        %1356 = vmatpush1.msra.mxu0 0.0
        %1357 = vmatprep.subr.mxu0 0.0
        %1358 = vmatpush1.msra.mxu0 0.0
        %1359 = vmatprep.subr.mxu0 0.0
        %1360 = vmatpush1.msra.mxu0 0.0
        %1361 = vmatprep.subr.mxu0 0.0
        %1362 = vmatpush1.msra.mxu0 0.0
        %1363 = vmatprep.subr.mxu0 0.0
        %1364 = vmatpush1.msra.mxu0 0.0
        %1365 = vmatprep.subr.mxu0 0.0
        %1366 = vmatpush1.msra.mxu0 0.0
        %1367 = vmatprep.subr.mxu0 0.0
        %1368 = vmatpush1.msra.mxu0 0.0
        %1369 = vmatprep.subr.mxu0 0.0
        %1370 = vmatpush1.msra.mxu0 0.0
        %1371 = vmatprep.subr.mxu0 0.0
        %1372 = vmatpush1.msra.mxu0 0.0
        %1373 = vmatprep.subr.mxu0 0.0
        %1374 = vmatpush1.msra.mxu0 0.0
        %1375 = vmatprep.subr.mxu0 0.0
        %1376 = vmatpush1.msra.mxu0 0.0
        %1377 = vmatprep.subr.mxu0 0.0
        %1378 = vmatpush1.msra.mxu0 0.0
        %1379 = vmatprep.subr.mxu0 0.0
        %1380 = vmatpush1.msra.mxu0 0.0
        %1381 = vmatprep.mubr.f32.mxu0 0.0
        %1382 = vmatmul.mubr.f32.gmra.mrb[0].mxu0 %v818
        %v1383 = vpop.f32.mrb[0].mxu0
        %v1384 = vadd.f32 %v1315, %v1383
        %v1385 = vpop.f32.mrb[0].mxu0
        %1386 = vdwg.mxu0
        %s1387 = scalar_lea.vmem %s7, 32
        %v1388 = vld [vmem:[%s1387] sm:$0xff]
        %v1389 = vld [vmem:[%s1387 + $0x8] sm:$0xff]
        %v1390 = vld [vmem:[%s1387 + $0x10] sm:$0xff]
        %v1391 = vld [vmem:[%s1387 + $0x18] sm:$0xff]
        %s1392 = scalar_lea.vmem %s10, 1
        %v1393 = vld [vmem:[%s1392] sm:$0x1]
        %v1395 = vlaneseq
        %v1396 = vshrl.u32 %v1395, 7
        %v1397 = vsub.s32 0, %v1396
        %v1398 = vrot.slane %v1393, %v1397
        %1400 = vmatprep.subr.mxu0 0.0
        %1401 = vmatpush1.msra.mxu0 %v1388
        %1402 = vmatprep.subr.mxu0 0.0
        %1403 = vmatpush1.msra.mxu0 %v1389
        %1404 = vmatprep.subr.mxu0 0.0
        %1405 = vmatpush1.msra.mxu0 %v1390
        %1406 = vmatprep.subr.mxu0 0.0
        %1407 = vmatpush1.msra.mxu0 %v1391
        %1408 = vmatprep.subr.mxu0 0.0
        %1409 = vmatpush1.msra.mxu0 0.0
        %1410 = vmatprep.subr.mxu0 0.0
        %1411 = vmatpush1.msra.mxu0 0.0
        %1412 = vmatprep.subr.mxu0 0.0
        %1413 = vmatpush1.msra.mxu0 0.0
        %1414 = vmatprep.subr.mxu0 0.0
        %1415 = vmatpush1.msra.mxu0 0.0
        %1416 = vmatprep.subr.mxu0 0.0
        %1417 = vmatpush1.msra.mxu0 0.0
        %1418 = vmatprep.subr.mxu0 0.0
        %1419 = vmatpush1.msra.mxu0 0.0
        %1420 = vmatprep.subr.mxu0 0.0
        %1421 = vmatpush1.msra.mxu0 0.0
        %1422 = vmatprep.subr.mxu0 0.0
        %1423 = vmatpush1.msra.mxu0 0.0
        %1424 = vmatprep.subr.mxu0 0.0
        %1425 = vmatpush1.msra.mxu0 0.0
        %1426 = vmatprep.subr.mxu0 0.0
        %1427 = vmatpush1.msra.mxu0 0.0
        %1428 = vmatprep.subr.mxu0 0.0
        %1429 = vmatpush1.msra.mxu0 0.0
        %1430 = vmatprep.subr.mxu0 0.0
        %1431 = vmatpush1.msra.mxu0 0.0
        %1432 = vmatprep.subr.mxu0 0.0
        %1433 = vmatpush1.msra.mxu0 0.0
        %1434 = vmatprep.subr.mxu0 0.0
        %1435 = vmatpush1.msra.mxu0 0.0
        %1436 = vmatprep.subr.mxu0 0.0
        %1437 = vmatpush1.msra.mxu0 0.0
        %1438 = vmatprep.subr.mxu0 0.0
        %1439 = vmatpush1.msra.mxu0 0.0
        %1440 = vmatprep.subr.mxu0 0.0
        %1441 = vmatpush1.msra.mxu0 0.0
        %1442 = vmatprep.subr.mxu0 0.0
        %1443 = vmatpush1.msra.mxu0 0.0
        %1444 = vmatprep.subr.mxu0 0.0
        %1445 = vmatpush1.msra.mxu0 0.0
        %1446 = vmatprep.subr.mxu0 0.0
        %1447 = vmatpush1.msra.mxu0 0.0
        %1448 = vmatprep.subr.mxu0 0.0
        %1449 = vmatpush1.msra.mxu0 0.0
        %1450 = vmatprep.subr.mxu0 0.0
        %1451 = vmatpush1.msra.mxu0 0.0
        %1452 = vmatprep.subr.mxu0 0.0
        %1453 = vmatpush1.msra.mxu0 0.0
        %1454 = vmatprep.subr.mxu0 0.0
        %1455 = vmatpush1.msra.mxu0 0.0
        %1456 = vmatprep.subr.mxu0 0.0
        %1457 = vmatpush1.msra.mxu0 0.0
        %1458 = vmatprep.subr.mxu0 0.0
        %1459 = vmatpush1.msra.mxu0 0.0
        %1460 = vmatprep.subr.mxu0 0.0
        %1461 = vmatpush1.msra.mxu0 0.0
        %1462 = vmatprep.subr.mxu0 0.0
        %1463 = vmatpush1.msra.mxu0 0.0
        %1464 = vmatprep.mubr.f32.mxu0 0.0
        %1465 = vmatmul.mubr.f32.gmra.mrb[0].mxu0 %v818
        %v1466 = vpop.f32.mrb[0].mxu0
        %v1467 = vadd.f32 %v1398, %v1466
        %v1468 = vpop.f32.mrb[0].mxu0
        %1469 = vdwg.mxu0
        %v1471 = vsel %vm1052, %v1301, 0
        %v1474 = vsel %vm1052, %v1384, 0
        %1476 = vmatprep.subr.mxu0 0.0
        %1477 = vmatpush1.xpose.msra.mxu0 %v1474
        %1478 = vmatprep.subr.mxu0 0.0
        %1479 = vmatpush1.xpose.msra.mxu0 0.0
        %1480 = vmatprep.subr.mxu0 0.0
        %1481 = vmatpush1.xpose.msra.mxu0 0.0
        %1482 = vmatprep.subr.mxu0 0.0
        %1483 = vmatpush1.xpose.msra.mxu0 0.0
        %1484 = vmatprep.subr.mxu0 0.0
        %1485 = vmatpush1.xpose.msra.mxu0 0.0
        %1486 = vmatprep.subr.mxu0 0.0
        %1487 = vmatpush1.xpose.msra.mxu0 0.0
        %1488 = vmatprep.subr.mxu0 0.0
        %1489 = vmatpush1.xpose.msra.mxu0 0.0
        %1490 = vmatprep.subr.mxu0 0.0
        %1491 = vmatpush1.xpose.msra.mxu0 0.0
        %1492 = vmatprep.subr.mxu0 0.0
        %1493 = vmatpush1.xpose.msra.mxu0 0.0
        %1494 = vmatprep.subr.mxu0 0.0
        %1495 = vmatpush1.xpose.msra.mxu0 0.0
        %1496 = vmatprep.subr.mxu0 0.0
        %1497 = vmatpush1.xpose.msra.mxu0 0.0
        %1498 = vmatprep.subr.mxu0 0.0
        %1499 = vmatpush1.xpose.msra.mxu0 0.0
        %1500 = vmatprep.subr.mxu0 0.0
        %1501 = vmatpush1.xpose.msra.mxu0 0.0
        %1502 = vmatprep.subr.mxu0 0.0
        %1503 = vmatpush1.xpose.msra.mxu0 0.0
        %1504 = vmatprep.subr.mxu0 0.0
        %1505 = vmatpush1.xpose.msra.mxu0 0.0
        %1506 = vmatprep.subr.mxu0 0.0
        %1507 = vmatpush1.xpose.msra.mxu0 0.0
        %1508 = vmatprep.subr.mxu0 0.0
        %1509 = vmatpush1.xpose.msra.mxu0 0.0
        %1510 = vmatprep.subr.mxu0 0.0
        %1511 = vmatpush1.xpose.msra.mxu0 0.0
        %1512 = vmatprep.subr.mxu0 0.0
        %1513 = vmatpush1.xpose.msra.mxu0 0.0
        %1514 = vmatprep.subr.mxu0 0.0
        %1515 = vmatpush1.xpose.msra.mxu0 0.0
        %1516 = vmatprep.subr.mxu0 0.0
        %1517 = vmatpush1.xpose.msra.mxu0 0.0
        %1518 = vmatprep.subr.mxu0 0.0
        %1519 = vmatpush1.xpose.msra.mxu0 0.0
        %1520 = vmatprep.subr.mxu0 0.0
        %1521 = vmatpush1.xpose.msra.mxu0 0.0
        %1522 = vmatprep.subr.mxu0 0.0
        %1523 = vmatpush1.xpose.msra.mxu0 0.0
        %1524 = vmatprep.subr.mxu0 0.0
        %1525 = vmatpush1.xpose.msra.mxu0 0.0
        %1526 = vmatprep.subr.mxu0 0.0
        %1527 = vmatpush1.xpose.msra.mxu0 0.0
        %1528 = vmatprep.subr.mxu0 0.0
        %1529 = vmatpush1.xpose.msra.mxu0 0.0
        %1530 = vmatprep.subr.mxu0 0.0
        %1531 = vmatpush1.xpose.msra.mxu0 0.0
        %1532 = vmatprep.subr.mxu0 0.0
        %1533 = vmatpush1.xpose.msra.mxu0 0.0
        %1534 = vmatprep.subr.mxu0 0.0
        %1535 = vmatpush1.xpose.msra.mxu0 0.0
        %1536 = vmatprep.subr.mxu0 0.0
        %1537 = vmatpush1.xpose.msra.mxu0 0.0
        %1538 = vmatprep.subr.mxu0 0.0
        %1539 = vmatpush1.xpose.msra.mxu0 0.0
        %1540 = vmatprep.mubr.f32.mxu0 0.0
        %1541 = vmatmul.mubr.f32.gmra.mrb[0].mxu0 %v1471
        %v1542 = vpop.f32.mrb[0].mxu0
        %v1543 = vadd.f32 0.0, %v1542
        %v1544 = vpop.f32.mrb[0].mxu0
        %1545 = vdwg.mxu0
        %v1546 = vmul.f32 %v1543, 0.35355338
        %v1547 = vsel %vm1130, %v1546, -inf
        %1548 = vmax.xlane.f32.xlu0 %v1547
        %v1549 = vpop.xlane.xlu0 %1548
        %v1550 = vsub.f32 %v1546, %v1549
        %v1551 = vmul.f32 %v1550, 1.442695
        %v1552 = vpow.pop %v1551
        %v1553 = vsel %vm1130, %v1552, 0.0
        %1554 = vadd.xlane.f32.xlu0 %v1553
        %v1555 = vpop.xlane.xlu0 %1554
        %v1556 = vrcp.pop %v1555
        %v1557 = vmul.f32 %v1552, %v1556
        %v1559 = vsel %vm1142, %v1557, 0
        %v1562 = vsel %vm1146, %v1467, 0
        %1564 = vmatprep.subr.mxu0 0.0
        %1565 = vmatpush1.msra.mxu0 %v1562
        %1566 = vmatprep.subr.mxu0 0.0
        %1567 = vmatpush1.msra.mxu0 0.0
        %1568 = vmatprep.subr.mxu0 0.0
        %1569 = vmatpush1.msra.mxu0 0.0
        %1570 = vmatprep.subr.mxu0 0.0
        %1571 = vmatpush1.msra.mxu0 0.0
        %1572 = vmatprep.subr.mxu0 0.0
        %1573 = vmatpush1.msra.mxu0 0.0
        %1574 = vmatprep.subr.mxu0 0.0
        %1575 = vmatpush1.msra.mxu0 0.0
        %1576 = vmatprep.subr.mxu0 0.0
        %1577 = vmatpush1.msra.mxu0 0.0
        %1578 = vmatprep.subr.mxu0 0.0
        %1579 = vmatpush1.msra.mxu0 0.0
        %1580 = vmatprep.subr.mxu0 0.0
        %1581 = vmatpush1.msra.mxu0 0.0
        %1582 = vmatprep.subr.mxu0 0.0
        %1583 = vmatpush1.msra.mxu0 0.0
        %1584 = vmatprep.subr.mxu0 0.0
        %1585 = vmatpush1.msra.mxu0 0.0
        %1586 = vmatprep.subr.mxu0 0.0
        %1587 = vmatpush1.msra.mxu0 0.0
        %1588 = vmatprep.subr.mxu0 0.0
        %1589 = vmatpush1.msra.mxu0 0.0
        %1590 = vmatprep.subr.mxu0 0.0
        %1591 = vmatpush1.msra.mxu0 0.0
        %1592 = vmatprep.subr.mxu0 0.0
        %1593 = vmatpush1.msra.mxu0 0.0
        %1594 = vmatprep.subr.mxu0 0.0
        %1595 = vmatpush1.msra.mxu0 0.0
        %1596 = vmatprep.subr.mxu0 0.0
        %1597 = vmatpush1.msra.mxu0 0.0
        %1598 = vmatprep.subr.mxu0 0.0
        %1599 = vmatpush1.msra.mxu0 0.0
        %1600 = vmatprep.subr.mxu0 0.0
        %1601 = vmatpush1.msra.mxu0 0.0
        %1602 = vmatprep.subr.mxu0 0.0
        %1603 = vmatpush1.msra.mxu0 0.0
        %1604 = vmatprep.subr.mxu0 0.0
        %1605 = vmatpush1.msra.mxu0 0.0
        %1606 = vmatprep.subr.mxu0 0.0
        %1607 = vmatpush1.msra.mxu0 0.0
        %1608 = vmatprep.subr.mxu0 0.0
        %1609 = vmatpush1.msra.mxu0 0.0
        %1610 = vmatprep.subr.mxu0 0.0
        %1611 = vmatpush1.msra.mxu0 0.0
        %1612 = vmatprep.subr.mxu0 0.0
        %1613 = vmatpush1.msra.mxu0 0.0
        %1614 = vmatprep.subr.mxu0 0.0
        %1615 = vmatpush1.msra.mxu0 0.0
        %1616 = vmatprep.subr.mxu0 0.0
        %1617 = vmatpush1.msra.mxu0 0.0
        %1618 = vmatprep.subr.mxu0 0.0
        %1619 = vmatpush1.msra.mxu0 0.0
        %1620 = vmatprep.subr.mxu0 0.0
        %1621 = vmatpush1.msra.mxu0 0.0
        %1622 = vmatprep.subr.mxu0 0.0
        %1623 = vmatpush1.msra.mxu0 0.0
        %1624 = vmatprep.subr.mxu0 0.0
        %1625 = vmatpush1.msra.mxu0 0.0
        %1626 = vmatprep.subr.mxu0 0.0
        %1627 = vmatpush1.msra.mxu0 0.0
        %1628 = vmatprep.mubr.f32.mxu0 0.0
        %1629 = vmatmul.mubr.f32.gmra.mrb[0].mxu0 %v1559
        %v1630 = vpop.f32.mrb[0].mxu0
        %v1631 = vadd.f32 0.0, %v1630
        %v1632 = vpop.f32.mrb[0].mxu0
        %1633 = vdwg.mxu0
        %s1634 = scalar_lea.vmem %s11, 8
        %v1635 = vld [vmem:[%s1634] sm:$0xff]
        %v1637 = vsel %vm1052, %v1631, 0
        %1639 = vmatprep.subr.mxu0 0.0
        %1640 = vmatpush1.msra.mxu0 %v1635
        %1641 = vmatprep.subr.mxu0 0.0
        %1642 = vmatpush1.msra.mxu0 0.0
        %1643 = vmatprep.subr.mxu0 0.0
        %1644 = vmatpush1.msra.mxu0 0.0
        %1645 = vmatprep.subr.mxu0 0.0
        %1646 = vmatpush1.msra.mxu0 0.0
        %1647 = vmatprep.subr.mxu0 0.0
        %1648 = vmatpush1.msra.mxu0 0.0
        %1649 = vmatprep.subr.mxu0 0.0
        %1650 = vmatpush1.msra.mxu0 0.0
        %1651 = vmatprep.subr.mxu0 0.0
        %1652 = vmatpush1.msra.mxu0 0.0
        %1653 = vmatprep.subr.mxu0 0.0
        %1654 = vmatpush1.msra.mxu0 0.0
        %1655 = vmatprep.subr.mxu0 0.0
        %1656 = vmatpush1.msra.mxu0 0.0
        %1657 = vmatprep.subr.mxu0 0.0
        %1658 = vmatpush1.msra.mxu0 0.0
        %1659 = vmatprep.subr.mxu0 0.0
        %1660 = vmatpush1.msra.mxu0 0.0
        %1661 = vmatprep.subr.mxu0 0.0
        %1662 = vmatpush1.msra.mxu0 0.0
        %1663 = vmatprep.subr.mxu0 0.0
        %1664 = vmatpush1.msra.mxu0 0.0
        %1665 = vmatprep.subr.mxu0 0.0
        %1666 = vmatpush1.msra.mxu0 0.0
        %1667 = vmatprep.subr.mxu0 0.0
        %1668 = vmatpush1.msra.mxu0 0.0
        %1669 = vmatprep.subr.mxu0 0.0
        %1670 = vmatpush1.msra.mxu0 0.0
        %1671 = vmatprep.subr.mxu0 0.0
        %1672 = vmatpush1.msra.mxu0 0.0
        %1673 = vmatprep.subr.mxu0 0.0
        %1674 = vmatpush1.msra.mxu0 0.0
        %1675 = vmatprep.subr.mxu0 0.0
        %1676 = vmatpush1.msra.mxu0 0.0
        %1677 = vmatprep.subr.mxu0 0.0
        %1678 = vmatpush1.msra.mxu0 0.0
        %1679 = vmatprep.subr.mxu0 0.0
        %1680 = vmatpush1.msra.mxu0 0.0
        %1681 = vmatprep.subr.mxu0 0.0
        %1682 = vmatpush1.msra.mxu0 0.0
        %1683 = vmatprep.subr.mxu0 0.0
        %1684 = vmatpush1.msra.mxu0 0.0
        %1685 = vmatprep.subr.mxu0 0.0
        %1686 = vmatpush1.msra.mxu0 0.0
        %1687 = vmatprep.subr.mxu0 0.0
        %1688 = vmatpush1.msra.mxu0 0.0
        %1689 = vmatprep.subr.mxu0 0.0
        %1690 = vmatpush1.msra.mxu0 0.0
        %1691 = vmatprep.subr.mxu0 0.0
        %1692 = vmatpush1.msra.mxu0 0.0
        %1693 = vmatprep.subr.mxu0 0.0
        %1694 = vmatpush1.msra.mxu0 0.0
        %1695 = vmatprep.subr.mxu0 0.0
        %1696 = vmatpush1.msra.mxu0 0.0
        %1697 = vmatprep.subr.mxu0 0.0
        %1698 = vmatpush1.msra.mxu0 0.0
        %1699 = vmatprep.subr.mxu0 0.0
        %1700 = vmatpush1.msra.mxu0 0.0
        %1701 = vmatprep.subr.mxu0 0.0
        %1702 = vmatpush1.msra.mxu0 0.0
        %1703 = vmatprep.mubr.f32.mxu0 0.0
        %1704 = vmatmul.mubr.f32.gmra.mrb[0].mxu0 %v1637
        %v1705 = vpop.f32.mrb[0].mxu0
        %v1706 = vadd.f32 0.0, %v1705
        %v1707 = vpop.f32.mrb[0].mxu0
        %1708 = vdwg.mxu0
        %v1710 = vsel %vm1052, %v1217, 0
        %1712 = vmatprep.subr.mxu0 0.0
        %1713 = vmatpush1.msra.mxu0 %v1220
        %1714 = vmatprep.subr.mxu0 0.0
        %1715 = vmatpush1.msra.mxu0 0.0
        %1716 = vmatprep.subr.mxu0 0.0
        %1717 = vmatpush1.msra.mxu0 0.0
        %1718 = vmatprep.subr.mxu0 0.0
        %1719 = vmatpush1.msra.mxu0 0.0
        %1720 = vmatprep.subr.mxu0 0.0
        %1721 = vmatpush1.msra.mxu0 0.0
        %1722 = vmatprep.subr.mxu0 0.0
        %1723 = vmatpush1.msra.mxu0 0.0
        %1724 = vmatprep.subr.mxu0 0.0
        %1725 = vmatpush1.msra.mxu0 0.0
        %1726 = vmatprep.subr.mxu0 0.0
        %1727 = vmatpush1.msra.mxu0 0.0
        %1728 = vmatprep.subr.mxu0 0.0
        %1729 = vmatpush1.msra.mxu0 0.0
        %1730 = vmatprep.subr.mxu0 0.0
        %1731 = vmatpush1.msra.mxu0 0.0
        %1732 = vmatprep.subr.mxu0 0.0
        %1733 = vmatpush1.msra.mxu0 0.0
        %1734 = vmatprep.subr.mxu0 0.0
        %1735 = vmatpush1.msra.mxu0 0.0
        %1736 = vmatprep.subr.mxu0 0.0
        %1737 = vmatpush1.msra.mxu0 0.0
        %1738 = vmatprep.subr.mxu0 0.0
        %1739 = vmatpush1.msra.mxu0 0.0
        %1740 = vmatprep.subr.mxu0 0.0
        %1741 = vmatpush1.msra.mxu0 0.0
        %1742 = vmatprep.subr.mxu0 0.0
        %1743 = vmatpush1.msra.mxu0 0.0
        %1744 = vmatprep.subr.mxu0 0.0
        %1745 = vmatpush1.msra.mxu0 0.0
        %1746 = vmatprep.subr.mxu0 0.0
        %1747 = vmatpush1.msra.mxu0 0.0
        %1748 = vmatprep.subr.mxu0 0.0
        %1749 = vmatpush1.msra.mxu0 0.0
        %1750 = vmatprep.subr.mxu0 0.0
        %1751 = vmatpush1.msra.mxu0 0.0
        %1752 = vmatprep.subr.mxu0 0.0
        %1753 = vmatpush1.msra.mxu0 0.0
        %1754 = vmatprep.subr.mxu0 0.0
        %1755 = vmatpush1.msra.mxu0 0.0
        %1756 = vmatprep.subr.mxu0 0.0
        %1757 = vmatpush1.msra.mxu0 0.0
        %1758 = vmatprep.subr.mxu0 0.0
        %1759 = vmatpush1.msra.mxu0 0.0
        %1760 = vmatprep.subr.mxu0 0.0
        %1761 = vmatpush1.msra.mxu0 0.0
        %1762 = vmatprep.subr.mxu0 0.0
        %1763 = vmatpush1.msra.mxu0 0.0
        %1764 = vmatprep.subr.mxu0 0.0
        %1765 = vmatpush1.msra.mxu0 0.0
        %1766 = vmatprep.subr.mxu0 0.0
        %1767 = vmatpush1.msra.mxu0 0.0
        %1768 = vmatprep.subr.mxu0 0.0
        %1769 = vmatpush1.msra.mxu0 0.0
        %1770 = vmatprep.subr.mxu0 0.0
        %1771 = vmatpush1.msra.mxu0 0.0
        %1772 = vmatprep.subr.mxu0 0.0
        %1773 = vmatpush1.msra.mxu0 0.0
        %1774 = vmatprep.subr.mxu0 0.0
        %1775 = vmatpush1.msra.mxu0 0.0
        %1776 = vmatprep.mubr.f32.mxu0 0.0
        %1777 = vmatmul.mubr.f32.gmra.mrb[0].mxu0 %v1710
        %v1778 = vpop.f32.mrb[0].mxu0
        %v1779 = vadd.f32 %v1706, %v1778
        %v1780 = vpop.f32.mrb[0].mxu0
        %1781 = vdwg.mxu0
        %s1782 = scalar_lea.vmem %s5, 64
        %v1783 = vld [vmem:[%s1782] sm:$0xff]
        %v1784 = vld [vmem:[%s1782 + $0x8] sm:$0xff]
        %v1785 = vld [vmem:[%s1782 + $0x10] sm:$0xff]
        %v1786 = vld [vmem:[%s1782 + $0x18] sm:$0xff]
        %s1787 = scalar_lea.vmem %s8, 2
        %v1788 = vld [vmem:[%s1787] sm:$0x1]
        %v1790 = vlaneseq
        %v1791 = vshrl.u32 %v1790, 7
        %v1792 = vsub.s32 0, %v1791
        %v1793 = vrot.slane %v1788, %v1792
        %1795 = vmatprep.subr.mxu0 0.0
        %1796 = vmatpush1.msra.mxu0 %v1783
        %1797 = vmatprep.subr.mxu0 0.0
        %1798 = vmatpush1.msra.mxu0 %v1784
        %1799 = vmatprep.subr.mxu0 0.0
        %1800 = vmatpush1.msra.mxu0 %v1785
        %1801 = vmatprep.subr.mxu0 0.0
        %1802 = vmatpush1.msra.mxu0 %v1786
        %1803 = vmatprep.subr.mxu0 0.0
        %1804 = vmatpush1.msra.mxu0 0.0
        %1805 = vmatprep.subr.mxu0 0.0
        %1806 = vmatpush1.msra.mxu0 0.0
        %1807 = vmatprep.subr.mxu0 0.0
        %1808 = vmatpush1.msra.mxu0 0.0
        %1809 = vmatprep.subr.mxu0 0.0
        %1810 = vmatpush1.msra.mxu0 0.0
        %1811 = vmatprep.subr.mxu0 0.0
        %1812 = vmatpush1.msra.mxu0 0.0
        %1813 = vmatprep.subr.mxu0 0.0
        %1814 = vmatpush1.msra.mxu0 0.0
        %1815 = vmatprep.subr.mxu0 0.0
        %1816 = vmatpush1.msra.mxu0 0.0
        %1817 = vmatprep.subr.mxu0 0.0
        %1818 = vmatpush1.msra.mxu0 0.0
        %1819 = vmatprep.subr.mxu0 0.0
        %1820 = vmatpush1.msra.mxu0 0.0
        %1821 = vmatprep.subr.mxu0 0.0
        %1822 = vmatpush1.msra.mxu0 0.0
        %1823 = vmatprep.subr.mxu0 0.0
        %1824 = vmatpush1.msra.mxu0 0.0
        %1825 = vmatprep.subr.mxu0 0.0
        %1826 = vmatpush1.msra.mxu0 0.0
        %1827 = vmatprep.subr.mxu0 0.0
        %1828 = vmatpush1.msra.mxu0 0.0
        %1829 = vmatprep.subr.mxu0 0.0
        %1830 = vmatpush1.msra.mxu0 0.0
        %1831 = vmatprep.subr.mxu0 0.0
        %1832 = vmatpush1.msra.mxu0 0.0
        %1833 = vmatprep.subr.mxu0 0.0
        %1834 = vmatpush1.msra.mxu0 0.0
        %1835 = vmatprep.subr.mxu0 0.0
        %1836 = vmatpush1.msra.mxu0 0.0
        %1837 = vmatprep.subr.mxu0 0.0
        %1838 = vmatpush1.msra.mxu0 0.0
        %1839 = vmatprep.subr.mxu0 0.0
        %1840 = vmatpush1.msra.mxu0 0.0
        %1841 = vmatprep.subr.mxu0 0.0
        %1842 = vmatpush1.msra.mxu0 0.0
        %1843 = vmatprep.subr.mxu0 0.0
        %1844 = vmatpush1.msra.mxu0 0.0
        %1845 = vmatprep.subr.mxu0 0.0
        %1846 = vmatpush1.msra.mxu0 0.0
        %1847 = vmatprep.subr.mxu0 0.0
        %1848 = vmatpush1.msra.mxu0 0.0
        %1849 = vmatprep.subr.mxu0 0.0
        %1850 = vmatpush1.msra.mxu0 0.0
        %1851 = vmatprep.subr.mxu0 0.0
        %1852 = vmatpush1.msra.mxu0 0.0
        %1853 = vmatprep.subr.mxu0 0.0
        %1854 = vmatpush1.msra.mxu0 0.0
        %1855 = vmatprep.subr.mxu0 0.0
        %1856 = vmatpush1.msra.mxu0 0.0
        %1857 = vmatprep.subr.mxu0 0.0
        %1858 = vmatpush1.msra.mxu0 0.0
        %1859 = vmatprep.mubr.f32.mxu0 0.0
        %1860 = vmatmul.mubr.f32.gmra.mrb[0].mxu0 %v818
        %v1861 = vpop.f32.mrb[0].mxu0
        %v1862 = vadd.f32 %v1793, %v1861
        %v1863 = vpop.f32.mrb[0].mxu0
        %1864 = vdwg.mxu0
        %s1865 = scalar_lea.vmem %s6, 64
        %v1866 = vld [vmem:[%s1865] sm:$0xff]
        %v1867 = vld [vmem:[%s1865 + $0x8] sm:$0xff]
        %v1868 = vld [vmem:[%s1865 + $0x10] sm:$0xff]
        %v1869 = vld [vmem:[%s1865 + $0x18] sm:$0xff]
        %s1870 = scalar_lea.vmem %s9, 2
        %v1871 = vld [vmem:[%s1870] sm:$0x1]
        %v1873 = vlaneseq
        %v1874 = vshrl.u32 %v1873, 7
        %v1875 = vsub.s32 0, %v1874
        %v1876 = vrot.slane %v1871, %v1875
        %1878 = vmatprep.subr.mxu0 0.0
        %1879 = vmatpush1.msra.mxu0 %v1866
        %1880 = vmatprep.subr.mxu0 0.0
        %1881 = vmatpush1.msra.mxu0 %v1867
        %1882 = vmatprep.subr.mxu0 0.0
        %1883 = vmatpush1.msra.mxu0 %v1868
        %1884 = vmatprep.subr.mxu0 0.0
        %1885 = vmatpush1.msra.mxu0 %v1869
        %1886 = vmatprep.subr.mxu0 0.0
        %1887 = vmatpush1.msra.mxu0 0.0
        %1888 = vmatprep.subr.mxu0 0.0
        %1889 = vmatpush1.msra.mxu0 0.0
        %1890 = vmatprep.subr.mxu0 0.0
        %1891 = vmatpush1.msra.mxu0 0.0
        %1892 = vmatprep.subr.mxu0 0.0
        %1893 = vmatpush1.msra.mxu0 0.0
        %1894 = vmatprep.subr.mxu0 0.0
        %1895 = vmatpush1.msra.mxu0 0.0
        %1896 = vmatprep.subr.mxu0 0.0
        %1897 = vmatpush1.msra.mxu0 0.0
        %1898 = vmatprep.subr.mxu0 0.0
        %1899 = vmatpush1.msra.mxu0 0.0
        %1900 = vmatprep.subr.mxu0 0.0
        %1901 = vmatpush1.msra.mxu0 0.0
        %1902 = vmatprep.subr.mxu0 0.0
        %1903 = vmatpush1.msra.mxu0 0.0
        %1904 = vmatprep.subr.mxu0 0.0
        %1905 = vmatpush1.msra.mxu0 0.0
        %1906 = vmatprep.subr.mxu0 0.0
        %1907 = vmatpush1.msra.mxu0 0.0
        %1908 = vmatprep.subr.mxu0 0.0
        %1909 = vmatpush1.msra.mxu0 0.0
        %1910 = vmatprep.subr.mxu0 0.0
        %1911 = vmatpush1.msra.mxu0 0.0
        %1912 = vmatprep.subr.mxu0 0.0
        %1913 = vmatpush1.msra.mxu0 0.0
        %1914 = vmatprep.subr.mxu0 0.0
        %1915 = vmatpush1.msra.mxu0 0.0
        %1916 = vmatprep.subr.mxu0 0.0
        %1917 = vmatpush1.msra.mxu0 0.0
        %1918 = vmatprep.subr.mxu0 0.0
        %1919 = vmatpush1.msra.mxu0 0.0
        %1920 = vmatprep.subr.mxu0 0.0
        %1921 = vmatpush1.msra.mxu0 0.0
        %1922 = vmatprep.subr.mxu0 0.0
        %1923 = vmatpush1.msra.mxu0 0.0
        %1924 = vmatprep.subr.mxu0 0.0
        %1925 = vmatpush1.msra.mxu0 0.0
        %1926 = vmatprep.subr.mxu0 0.0
        %1927 = vmatpush1.msra.mxu0 0.0
        %1928 = vmatprep.subr.mxu0 0.0
        %1929 = vmatpush1.msra.mxu0 0.0
        %1930 = vmatprep.subr.mxu0 0.0
        %1931 = vmatpush1.msra.mxu0 0.0
        %1932 = vmatprep.subr.mxu0 0.0
        %1933 = vmatpush1.msra.mxu0 0.0
        %1934 = vmatprep.subr.mxu0 0.0
        %1935 = vmatpush1.msra.mxu0 0.0
        %1936 = vmatprep.subr.mxu0 0.0
        %1937 = vmatpush1.msra.mxu0 0.0
        %1938 = vmatprep.subr.mxu0 0.0
        %1939 = vmatpush1.msra.mxu0 0.0
        %1940 = vmatprep.subr.mxu0 0.0
        %1941 = vmatpush1.msra.mxu0 0.0
        %1942 = vmatprep.mubr.f32.mxu0 0.0
        %1943 = vmatmul.mubr.f32.gmra.mrb[0].mxu0 %v818
        %v1944 = vpop.f32.mrb[0].mxu0
        %v1945 = vadd.f32 %v1876, %v1944
        %v1946 = vpop.f32.mrb[0].mxu0
        %1947 = vdwg.mxu0
        %s1948 = scalar_lea.vmem %s7, 64
        %v1949 = vld [vmem:[%s1948] sm:$0xff]
        %v1950 = vld [vmem:[%s1948 + $0x8] sm:$0xff]
        %v1951 = vld [vmem:[%s1948 + $0x10] sm:$0xff]
        %v1952 = vld [vmem:[%s1948 + $0x18] sm:$0xff]
        %s1953 = scalar_lea.vmem %s10, 2
        %v1954 = vld [vmem:[%s1953] sm:$0x1]
        %v1956 = vlaneseq
        %v1957 = vshrl.u32 %v1956, 7
        %v1958 = vsub.s32 0, %v1957
        %v1959 = vrot.slane %v1954, %v1958
        %1961 = vmatprep.subr.mxu0 0.0
        %1962 = vmatpush1.msra.mxu0 %v1949
        %1963 = vmatprep.subr.mxu0 0.0
        %1964 = vmatpush1.msra.mxu0 %v1950
        %1965 = vmatprep.subr.mxu0 0.0
        %1966 = vmatpush1.msra.mxu0 %v1951
        %1967 = vmatprep.subr.mxu0 0.0
        %1968 = vmatpush1.msra.mxu0 %v1952
        %1969 = vmatprep.subr.mxu0 0.0
        %1970 = vmatpush1.msra.mxu0 0.0
        %1971 = vmatprep.subr.mxu0 0.0
        %1972 = vmatpush1.msra.mxu0 0.0
        %1973 = vmatprep.subr.mxu0 0.0
        %1974 = vmatpush1.msra.mxu0 0.0
        %1975 = vmatprep.subr.mxu0 0.0
        %1976 = vmatpush1.msra.mxu0 0.0
        %1977 = vmatprep.subr.mxu0 0.0
        %1978 = vmatpush1.msra.mxu0 0.0
        %1979 = vmatprep.subr.mxu0 0.0
        %1980 = vmatpush1.msra.mxu0 0.0
        %1981 = vmatprep.subr.mxu0 0.0
        %1982 = vmatpush1.msra.mxu0 0.0
        %1983 = vmatprep.subr.mxu0 0.0
        %1984 = vmatpush1.msra.mxu0 0.0
        %1985 = vmatprep.subr.mxu0 0.0
        %1986 = vmatpush1.msra.mxu0 0.0
        %1987 = vmatprep.subr.mxu0 0.0
        %1988 = vmatpush1.msra.mxu0 0.0
        %1989 = vmatprep.subr.mxu0 0.0
        %1990 = vmatpush1.msra.mxu0 0.0
        %1991 = vmatprep.subr.mxu0 0.0
        %1992 = vmatpush1.msra.mxu0 0.0
        %1993 = vmatprep.subr.mxu0 0.0
        %1994 = vmatpush1.msra.mxu0 0.0
        %1995 = vmatprep.subr.mxu0 0.0
        %1996 = vmatpush1.msra.mxu0 0.0
        %1997 = vmatprep.subr.mxu0 0.0
        %1998 = vmatpush1.msra.mxu0 0.0
        %1999 = vmatprep.subr.mxu0 0.0
        %2000 = vmatpush1.msra.mxu0 0.0
        %2001 = vmatprep.subr.mxu0 0.0
        %2002 = vmatpush1.msra.mxu0 0.0
        %2003 = vmatprep.subr.mxu0 0.0
        %2004 = vmatpush1.msra.mxu0 0.0
        %2005 = vmatprep.subr.mxu0 0.0
        %2006 = vmatpush1.msra.mxu0 0.0
        %2007 = vmatprep.subr.mxu0 0.0
        %2008 = vmatpush1.msra.mxu0 0.0
        %2009 = vmatprep.subr.mxu0 0.0
        %2010 = vmatpush1.msra.mxu0 0.0
        %2011 = vmatprep.subr.mxu0 0.0
        %2012 = vmatpush1.msra.mxu0 0.0
        %2013 = vmatprep.subr.mxu0 0.0
        %2014 = vmatpush1.msra.mxu0 0.0
        %2015 = vmatprep.subr.mxu0 0.0
        %2016 = vmatpush1.msra.mxu0 0.0
        %2017 = vmatprep.subr.mxu0 0.0
        %2018 = vmatpush1.msra.mxu0 0.0
        %2019 = vmatprep.subr.mxu0 0.0
        %2020 = vmatpush1.msra.mxu0 0.0
        %2021 = vmatprep.subr.mxu0 0.0
        %2022 = vmatpush1.msra.mxu0 0.0
        %2023 = vmatprep.subr.mxu0 0.0
        %2024 = vmatpush1.msra.mxu0 0.0
        %2025 = vmatprep.mubr.f32.mxu0 0.0
        %2026 = vmatmul.mubr.f32.gmra.mrb[0].mxu0 %v818
        %v2027 = vpop.f32.mrb[0].mxu0
        %v2028 = vadd.f32 %v1959, %v2027
        %v2029 = vpop.f32.mrb[0].mxu0
        %2030 = vdwg.mxu0
        %v2032 = vsel %vm1052, %v1862, 0
        %v2035 = vsel %vm1052, %v1945, 0
        %2037 = vmatprep.subr.mxu0 0.0
        %2038 = vmatpush1.xpose.msra.mxu0 %v2035
        %2039 = vmatprep.subr.mxu0 0.0
        %2040 = vmatpush1.xpose.msra.mxu0 0.0
        %2041 = vmatprep.subr.mxu0 0.0
        %2042 = vmatpush1.xpose.msra.mxu0 0.0
        %2043 = vmatprep.subr.mxu0 0.0
        %2044 = vmatpush1.xpose.msra.mxu0 0.0
        %2045 = vmatprep.subr.mxu0 0.0
        %2046 = vmatpush1.xpose.msra.mxu0 0.0
        %2047 = vmatprep.subr.mxu0 0.0
        %2048 = vmatpush1.xpose.msra.mxu0 0.0
        %2049 = vmatprep.subr.mxu0 0.0
        %2050 = vmatpush1.xpose.msra.mxu0 0.0
        %2051 = vmatprep.subr.mxu0 0.0
        %2052 = vmatpush1.xpose.msra.mxu0 0.0
        %2053 = vmatprep.subr.mxu0 0.0
        %2054 = vmatpush1.xpose.msra.mxu0 0.0
        %2055 = vmatprep.subr.mxu0 0.0
        %2056 = vmatpush1.xpose.msra.mxu0 0.0
        %2057 = vmatprep.subr.mxu0 0.0
        %2058 = vmatpush1.xpose.msra.mxu0 0.0
        %2059 = vmatprep.subr.mxu0 0.0
        %2060 = vmatpush1.xpose.msra.mxu0 0.0
        %2061 = vmatprep.subr.mxu0 0.0
        %2062 = vmatpush1.xpose.msra.mxu0 0.0
        %2063 = vmatprep.subr.mxu0 0.0
        %2064 = vmatpush1.xpose.msra.mxu0 0.0
        %2065 = vmatprep.subr.mxu0 0.0
        %2066 = vmatpush1.xpose.msra.mxu0 0.0
        %2067 = vmatprep.subr.mxu0 0.0
        %2068 = vmatpush1.xpose.msra.mxu0 0.0
        %2069 = vmatprep.subr.mxu0 0.0
        %2070 = vmatpush1.xpose.msra.mxu0 0.0
        %2071 = vmatprep.subr.mxu0 0.0
        %2072 = vmatpush1.xpose.msra.mxu0 0.0
        %2073 = vmatprep.subr.mxu0 0.0
        %2074 = vmatpush1.xpose.msra.mxu0 0.0
        %2075 = vmatprep.subr.mxu0 0.0
        %2076 = vmatpush1.xpose.msra.mxu0 0.0
        %2077 = vmatprep.subr.mxu0 0.0
        %2078 = vmatpush1.xpose.msra.mxu0 0.0
        %2079 = vmatprep.subr.mxu0 0.0
        %2080 = vmatpush1.xpose.msra.mxu0 0.0
        %2081 = vmatprep.subr.mxu0 0.0
        %2082 = vmatpush1.xpose.msra.mxu0 0.0
        %2083 = vmatprep.subr.mxu0 0.0
        %2084 = vmatpush1.xpose.msra.mxu0 0.0
        %2085 = vmatprep.subr.mxu0 0.0
        %2086 = vmatpush1.xpose.msra.mxu0 0.0
        %2087 = vmatprep.subr.mxu0 0.0
        %2088 = vmatpush1.xpose.msra.mxu0 0.0
        %2089 = vmatprep.subr.mxu0 0.0
        %2090 = vmatpush1.xpose.msra.mxu0 0.0
        %2091 = vmatprep.subr.mxu0 0.0
        %2092 = vmatpush1.xpose.msra.mxu0 0.0
        %2093 = vmatprep.subr.mxu0 0.0
        %2094 = vmatpush1.xpose.msra.mxu0 0.0
        %2095 = vmatprep.subr.mxu0 0.0
        %2096 = vmatpush1.xpose.msra.mxu0 0.0
        %2097 = vmatprep.subr.mxu0 0.0
        %2098 = vmatpush1.xpose.msra.mxu0 0.0
        %2099 = vmatprep.subr.mxu0 0.0
        %2100 = vmatpush1.xpose.msra.mxu0 0.0
        %2101 = vmatprep.mubr.f32.mxu0 0.0
        %2102 = vmatmul.mubr.f32.gmra.mrb[0].mxu0 %v2032
        %v2103 = vpop.f32.mrb[0].mxu0
        %v2104 = vadd.f32 0.0, %v2103
        %v2105 = vpop.f32.mrb[0].mxu0
        %2106 = vdwg.mxu0
        %v2107 = vmul.f32 %v2104, 0.35355338
        %v2108 = vsel %vm1130, %v2107, -inf
        %2109 = vmax.xlane.f32.xlu0 %v2108
        %v2110 = vpop.xlane.xlu0 %2109
        %v2111 = vsub.f32 %v2107, %v2110
        %v2112 = vmul.f32 %v2111, 1.442695
        %v2113 = vpow.pop %v2112
        %v2114 = vsel %vm1130, %v2113, 0.0
        %2115 = vadd.xlane.f32.xlu0 %v2114
        %v2116 = vpop.xlane.xlu0 %2115
        %v2117 = vrcp.pop %v2116
        %v2118 = vmul.f32 %v2113, %v2117
        %v2120 = vsel %vm1142, %v2118, 0
        %v2123 = vsel %vm1146, %v2028, 0
        %2125 = vmatprep.subr.mxu0 0.0
        %2126 = vmatpush1.msra.mxu0 %v2123
        %2127 = vmatprep.subr.mxu0 0.0
        %2128 = vmatpush1.msra.mxu0 0.0
        %2129 = vmatprep.subr.mxu0 0.0
        %2130 = vmatpush1.msra.mxu0 0.0
        %2131 = vmatprep.subr.mxu0 0.0
        %2132 = vmatpush1.msra.mxu0 0.0
        %2133 = vmatprep.subr.mxu0 0.0
        %2134 = vmatpush1.msra.mxu0 0.0
        %2135 = vmatprep.subr.mxu0 0.0
        %2136 = vmatpush1.msra.mxu0 0.0
        %2137 = vmatprep.subr.mxu0 0.0
        %2138 = vmatpush1.msra.mxu0 0.0
        %2139 = vmatprep.subr.mxu0 0.0
        %2140 = vmatpush1.msra.mxu0 0.0
        %2141 = vmatprep.subr.mxu0 0.0
        %2142 = vmatpush1.msra.mxu0 0.0
        %2143 = vmatprep.subr.mxu0 0.0
        %2144 = vmatpush1.msra.mxu0 0.0
        %2145 = vmatprep.subr.mxu0 0.0
        %2146 = vmatpush1.msra.mxu0 0.0
        %2147 = vmatprep.subr.mxu0 0.0
        %2148 = vmatpush1.msra.mxu0 0.0
        %2149 = vmatprep.subr.mxu0 0.0
        %2150 = vmatpush1.msra.mxu0 0.0
        %2151 = vmatprep.subr.mxu0 0.0
        %2152 = vmatpush1.msra.mxu0 0.0
        %2153 = vmatprep.subr.mxu0 0.0
        %2154 = vmatpush1.msra.mxu0 0.0
        %2155 = vmatprep.subr.mxu0 0.0
        %2156 = vmatpush1.msra.mxu0 0.0
        %2157 = vmatprep.subr.mxu0 0.0
        %2158 = vmatpush1.msra.mxu0 0.0
        %2159 = vmatprep.subr.mxu0 0.0
        %2160 = vmatpush1.msra.mxu0 0.0
        %2161 = vmatprep.subr.mxu0 0.0
        %2162 = vmatpush1.msra.mxu0 0.0
        %2163 = vmatprep.subr.mxu0 0.0
        %2164 = vmatpush1.msra.mxu0 0.0
        %2165 = vmatprep.subr.mxu0 0.0
        %2166 = vmatpush1.msra.mxu0 0.0
        %2167 = vmatprep.subr.mxu0 0.0
        %2168 = vmatpush1.msra.mxu0 0.0
        %2169 = vmatprep.subr.mxu0 0.0
        %2170 = vmatpush1.msra.mxu0 0.0
        %2171 = vmatprep.subr.mxu0 0.0
        %2172 = vmatpush1.msra.mxu0 0.0
        %2173 = vmatprep.subr.mxu0 0.0
        %2174 = vmatpush1.msra.mxu0 0.0
        %2175 = vmatprep.subr.mxu0 0.0
        %2176 = vmatpush1.msra.mxu0 0.0
        %2177 = vmatprep.subr.mxu0 0.0
        %2178 = vmatpush1.msra.mxu0 0.0
        %2179 = vmatprep.subr.mxu0 0.0
        %2180 = vmatpush1.msra.mxu0 0.0
        %2181 = vmatprep.subr.mxu0 0.0
        %2182 = vmatpush1.msra.mxu0 0.0
        %2183 = vmatprep.subr.mxu0 0.0
        %2184 = vmatpush1.msra.mxu0 0.0
        %2185 = vmatprep.subr.mxu0 0.0
        %2186 = vmatpush1.msra.mxu0 0.0
        %2187 = vmatprep.subr.mxu0 0.0
        %2188 = vmatpush1.msra.mxu0 0.0
        %2189 = vmatprep.mubr.f32.mxu0 0.0
        %2190 = vmatmul.mubr.f32.gmra.mrb[0].mxu0 %v2120
        %v2191 = vpop.f32.mrb[0].mxu0
        %v2192 = vadd.f32 0.0, %v2191
        %v2193 = vpop.f32.mrb[0].mxu0
        %2194 = vdwg.mxu0
        %s2195 = scalar_lea.vmem %s11, 16
        %v2196 = vld [vmem:[%s2195] sm:$0xff]
        %v2198 = vsel %vm1052, %v2192, 0
        %2200 = vmatprep.subr.mxu0 0.0
        %2201 = vmatpush1.msra.mxu0 %v2196
        %2202 = vmatprep.subr.mxu0 0.0
        %2203 = vmatpush1.msra.mxu0 0.0
        %2204 = vmatprep.subr.mxu0 0.0
        %2205 = vmatpush1.msra.mxu0 0.0
        %2206 = vmatprep.subr.mxu0 0.0
        %2207 = vmatpush1.msra.mxu0 0.0
        %2208 = vmatprep.subr.mxu0 0.0
        %2209 = vmatpush1.msra.mxu0 0.0
        %2210 = vmatprep.subr.mxu0 0.0
        %2211 = vmatpush1.msra.mxu0 0.0
        %2212 = vmatprep.subr.mxu0 0.0
        %2213 = vmatpush1.msra.mxu0 0.0
        %2214 = vmatprep.subr.mxu0 0.0
        %2215 = vmatpush1.msra.mxu0 0.0
        %2216 = vmatprep.subr.mxu0 0.0
        %2217 = vmatpush1.msra.mxu0 0.0
        %2218 = vmatprep.subr.mxu0 0.0
        %2219 = vmatpush1.msra.mxu0 0.0
        %2220 = vmatprep.subr.mxu0 0.0
        %2221 = vmatpush1.msra.mxu0 0.0
        %2222 = vmatprep.subr.mxu0 0.0
        %2223 = vmatpush1.msra.mxu0 0.0
        %2224 = vmatprep.subr.mxu0 0.0
        %2225 = vmatpush1.msra.mxu0 0.0
        %2226 = vmatprep.subr.mxu0 0.0
        %2227 = vmatpush1.msra.mxu0 0.0
        %2228 = vmatprep.subr.mxu0 0.0
        %2229 = vmatpush1.msra.mxu0 0.0
        %2230 = vmatprep.subr.mxu0 0.0
        %2231 = vmatpush1.msra.mxu0 0.0
        %2232 = vmatprep.subr.mxu0 0.0
        %2233 = vmatpush1.msra.mxu0 0.0
        %2234 = vmatprep.subr.mxu0 0.0
        %2235 = vmatpush1.msra.mxu0 0.0
        %2236 = vmatprep.subr.mxu0 0.0
        %2237 = vmatpush1.msra.mxu0 0.0
        %2238 = vmatprep.subr.mxu0 0.0
        %2239 = vmatpush1.msra.mxu0 0.0
        %2240 = vmatprep.subr.mxu0 0.0
        %2241 = vmatpush1.msra.mxu0 0.0
        %2242 = vmatprep.subr.mxu0 0.0
        %2243 = vmatpush1.msra.mxu0 0.0
        %2244 = vmatprep.subr.mxu0 0.0
        %2245 = vmatpush1.msra.mxu0 0.0
        %2246 = vmatprep.subr.mxu0 0.0
        %2247 = vmatpush1.msra.mxu0 0.0
        %2248 = vmatprep.subr.mxu0 0.0
        %2249 = vmatpush1.msra.mxu0 0.0
        %2250 = vmatprep.subr.mxu0 0.0
        %2251 = vmatpush1.msra.mxu0 0.0
        %2252 = vmatprep.subr.mxu0 0.0
        %2253 = vmatpush1.msra.mxu0 0.0
        %2254 = vmatprep.subr.mxu0 0.0
        %2255 = vmatpush1.msra.mxu0 0.0
        %2256 = vmatprep.subr.mxu0 0.0
        %2257 = vmatpush1.msra.mxu0 0.0
        %2258 = vmatprep.subr.mxu0 0.0
        %2259 = vmatpush1.msra.mxu0 0.0
        %2260 = vmatprep.subr.mxu0 0.0
        %2261 = vmatpush1.msra.mxu0 0.0
        %2262 = vmatprep.subr.mxu0 0.0
        %2263 = vmatpush1.msra.mxu0 0.0
        %2264 = vmatprep.mubr.f32.mxu0 0.0
        %2265 = vmatmul.mubr.f32.gmra.mrb[0].mxu0 %v2198
        %v2266 = vpop.f32.mrb[0].mxu0
        %v2267 = vadd.f32 0.0, %v2266
        %v2268 = vpop.f32.mrb[0].mxu0
        %2269 = vdwg.mxu0
        %v2270 = vadd.f32 %v1779, %v2267
        %s2271 = scalar_lea.vmem %s5, 96
        %v2272 = vld [vmem:[%s2271] sm:$0xff]
        %v2273 = vld [vmem:[%s2271 + $0x8] sm:$0xff]
        %v2274 = vld [vmem:[%s2271 + $0x10] sm:$0xff]
        %v2275 = vld [vmem:[%s2271 + $0x18] sm:$0xff]
        %s2276 = scalar_lea.vmem %s8, 3
        %v2277 = vld [vmem:[%s2276] sm:$0x1]
        %v2279 = vlaneseq
        %v2280 = vshrl.u32 %v2279, 7
        %v2281 = vsub.s32 0, %v2280
        %v2282 = vrot.slane %v2277, %v2281
        %2284 = vmatprep.subr.mxu0 0.0
        %2285 = vmatpush1.msra.mxu0 %v2272
        %2286 = vmatprep.subr.mxu0 0.0
        %2287 = vmatpush1.msra.mxu0 %v2273
        %2288 = vmatprep.subr.mxu0 0.0
        %2289 = vmatpush1.msra.mxu0 %v2274
        %2290 = vmatprep.subr.mxu0 0.0
        %2291 = vmatpush1.msra.mxu0 %v2275
        %2292 = vmatprep.subr.mxu0 0.0
        %2293 = vmatpush1.msra.mxu0 0.0
        %2294 = vmatprep.subr.mxu0 0.0
        %2295 = vmatpush1.msra.mxu0 0.0
        %2296 = vmatprep.subr.mxu0 0.0
        %2297 = vmatpush1.msra.mxu0 0.0
        %2298 = vmatprep.subr.mxu0 0.0
        %2299 = vmatpush1.msra.mxu0 0.0
        %2300 = vmatprep.subr.mxu0 0.0
        %2301 = vmatpush1.msra.mxu0 0.0
        %2302 = vmatprep.subr.mxu0 0.0
        %2303 = vmatpush1.msra.mxu0 0.0
        %2304 = vmatprep.subr.mxu0 0.0
        %2305 = vmatpush1.msra.mxu0 0.0
        %2306 = vmatprep.subr.mxu0 0.0
        %2307 = vmatpush1.msra.mxu0 0.0
        %2308 = vmatprep.subr.mxu0 0.0
        %2309 = vmatpush1.msra.mxu0 0.0
        %2310 = vmatprep.subr.mxu0 0.0
        %2311 = vmatpush1.msra.mxu0 0.0
        %2312 = vmatprep.subr.mxu0 0.0
        %2313 = vmatpush1.msra.mxu0 0.0
        %2314 = vmatprep.subr.mxu0 0.0
        %2315 = vmatpush1.msra.mxu0 0.0
        %2316 = vmatprep.subr.mxu0 0.0
        %2317 = vmatpush1.msra.mxu0 0.0
        %2318 = vmatprep.subr.mxu0 0.0
        %2319 = vmatpush1.msra.mxu0 0.0
        %2320 = vmatprep.subr.mxu0 0.0
        %2321 = vmatpush1.msra.mxu0 0.0
        %2322 = vmatprep.subr.mxu0 0.0
        %2323 = vmatpush1.msra.mxu0 0.0
        %2324 = vmatprep.subr.mxu0 0.0
        %2325 = vmatpush1.msra.mxu0 0.0
        %2326 = vmatprep.subr.mxu0 0.0
        %2327 = vmatpush1.msra.mxu0 0.0
        %2328 = vmatprep.subr.mxu0 0.0
        %2329 = vmatpush1.msra.mxu0 0.0
        %2330 = vmatprep.subr.mxu0 0.0
        %2331 = vmatpush1.msra.mxu0 0.0
        %2332 = vmatprep.subr.mxu0 0.0
        %2333 = vmatpush1.msra.mxu0 0.0
        %2334 = vmatprep.subr.mxu0 0.0
        %2335 = vmatpush1.msra.mxu0 0.0
        %2336 = vmatprep.subr.mxu0 0.0
        %2337 = vmatpush1.msra.mxu0 0.0
        %2338 = vmatprep.subr.mxu0 0.0
        %2339 = vmatpush1.msra.mxu0 0.0
        %2340 = vmatprep.subr.mxu0 0.0
        %2341 = vmatpush1.msra.mxu0 0.0
        %2342 = vmatprep.subr.mxu0 0.0
        %2343 = vmatpush1.msra.mxu0 0.0
        %2344 = vmatprep.subr.mxu0 0.0
        %2345 = vmatpush1.msra.mxu0 0.0
        %2346 = vmatprep.subr.mxu0 0.0
        %2347 = vmatpush1.msra.mxu0 0.0
        %2348 = vmatprep.mubr.f32.mxu0 0.0
        %2349 = vmatmul.mubr.f32.gmra.mrb[0].mxu0 %v818
        %v2350 = vpop.f32.mrb[0].mxu0
        %v2351 = vadd.f32 %v2282, %v2350
        %v2352 = vpop.f32.mrb[0].mxu0
        %2353 = vdwg.mxu0
        %s2354 = scalar_lea.vmem %s6, 96
        %v2355 = vld [vmem:[%s2354] sm:$0xff]
        %v2356 = vld [vmem:[%s2354 + $0x8] sm:$0xff]
        %v2357 = vld [vmem:[%s2354 + $0x10] sm:$0xff]
        %v2358 = vld [vmem:[%s2354 + $0x18] sm:$0xff]
        %s2359 = scalar_lea.vmem %s9, 3
        %v2360 = vld [vmem:[%s2359] sm:$0x1]
        %v2362 = vlaneseq
        %v2363 = vshrl.u32 %v2362, 7
        %v2364 = vsub.s32 0, %v2363
        %v2365 = vrot.slane %v2360, %v2364
        %2367 = vmatprep.subr.mxu0 0.0
        %2368 = vmatpush1.msra.mxu0 %v2355
        %2369 = vmatprep.subr.mxu0 0.0
        %2370 = vmatpush1.msra.mxu0 %v2356
        %2371 = vmatprep.subr.mxu0 0.0
        %2372 = vmatpush1.msra.mxu0 %v2357
        %2373 = vmatprep.subr.mxu0 0.0
        %2374 = vmatpush1.msra.mxu0 %v2358
        %2375 = vmatprep.subr.mxu0 0.0
        %2376 = vmatpush1.msra.mxu0 0.0
        %2377 = vmatprep.subr.mxu0 0.0
        %2378 = vmatpush1.msra.mxu0 0.0
        %2379 = vmatprep.subr.mxu0 0.0
        %2380 = vmatpush1.msra.mxu0 0.0
        %2381 = vmatprep.subr.mxu0 0.0
        %2382 = vmatpush1.msra.mxu0 0.0
        %2383 = vmatprep.subr.mxu0 0.0
        %2384 = vmatpush1.msra.mxu0 0.0
        %2385 = vmatprep.subr.mxu0 0.0
        %2386 = vmatpush1.msra.mxu0 0.0
        %2387 = vmatprep.subr.mxu0 0.0
        %2388 = vmatpush1.msra.mxu0 0.0
        %2389 = vmatprep.subr.mxu0 0.0
        %2390 = vmatpush1.msra.mxu0 0.0
        %2391 = vmatprep.subr.mxu0 0.0
        %2392 = vmatpush1.msra.mxu0 0.0
        %2393 = vmatprep.subr.mxu0 0.0
        %2394 = vmatpush1.msra.mxu0 0.0
        %2395 = vmatprep.subr.mxu0 0.0
        %2396 = vmatpush1.msra.mxu0 0.0
        %2397 = vmatprep.subr.mxu0 0.0
        %2398 = vmatpush1.msra.mxu0 0.0
        %2399 = vmatprep.subr.mxu0 0.0
        %2400 = vmatpush1.msra.mxu0 0.0
        %2401 = vmatprep.subr.mxu0 0.0
        %2402 = vmatpush1.msra.mxu0 0.0
        %2403 = vmatprep.subr.mxu0 0.0
        %2404 = vmatpush1.msra.mxu0 0.0
        %2405 = vmatprep.subr.mxu0 0.0
        %2406 = vmatpush1.msra.mxu0 0.0
        %2407 = vmatprep.subr.mxu0 0.0
        %2408 = vmatpush1.msra.mxu0 0.0
        %2409 = vmatprep.subr.mxu0 0.0
        %2410 = vmatpush1.msra.mxu0 0.0
        %2411 = vmatprep.subr.mxu0 0.0
        %2412 = vmatpush1.msra.mxu0 0.0
        %2413 = vmatprep.subr.mxu0 0.0
        %2414 = vmatpush1.msra.mxu0 0.0
        %2415 = vmatprep.subr.mxu0 0.0
        %2416 = vmatpush1.msra.mxu0 0.0
        %2417 = vmatprep.subr.mxu0 0.0
        %2418 = vmatpush1.msra.mxu0 0.0
        %2419 = vmatprep.subr.mxu0 0.0
        %2420 = vmatpush1.msra.mxu0 0.0
        %2421 = vmatprep.subr.mxu0 0.0
        %2422 = vmatpush1.msra.mxu0 0.0
        %2423 = vmatprep.subr.mxu0 0.0
        %2424 = vmatpush1.msra.mxu0 0.0
        %2425 = vmatprep.subr.mxu0 0.0
        %2426 = vmatpush1.msra.mxu0 0.0
        %2427 = vmatprep.subr.mxu0 0.0
        %2428 = vmatpush1.msra.mxu0 0.0
        %2429 = vmatprep.subr.mxu0 0.0
        %2430 = vmatpush1.msra.mxu0 0.0
        %2431 = vmatprep.mubr.f32.mxu0 0.0
        %2432 = vmatmul.mubr.f32.gmra.mrb[0].mxu0 %v818
        %v2433 = vpop.f32.mrb[0].mxu0
        %v2434 = vadd.f32 %v2365, %v2433
        %v2435 = vpop.f32.mrb[0].mxu0
        %2436 = vdwg.mxu0
        %s2437 = scalar_lea.vmem %s7, 96
        %v2438 = vld [vmem:[%s2437] sm:$0xff]
        %v2439 = vld [vmem:[%s2437 + $0x8] sm:$0xff]
        %v2440 = vld [vmem:[%s2437 + $0x10] sm:$0xff]
        %v2441 = vld [vmem:[%s2437 + $0x18] sm:$0xff]
        %s2442 = scalar_lea.vmem %s10, 3
        %v2443 = vld [vmem:[%s2442] sm:$0x1]
        %v2445 = vlaneseq
        %v2446 = vshrl.u32 %v2445, 7
        %v2447 = vsub.s32 0, %v2446
        %v2448 = vrot.slane %v2443, %v2447
        %2450 = vmatprep.subr.mxu0 0.0
        %2451 = vmatpush1.msra.mxu0 %v2438
        %2452 = vmatprep.subr.mxu0 0.0
        %2453 = vmatpush1.msra.mxu0 %v2439
        %2454 = vmatprep.subr.mxu0 0.0
        %2455 = vmatpush1.msra.mxu0 %v2440
        %2456 = vmatprep.subr.mxu0 0.0
        %2457 = vmatpush1.msra.mxu0 %v2441
        %2458 = vmatprep.subr.mxu0 0.0
        %2459 = vmatpush1.msra.mxu0 0.0
        %2460 = vmatprep.subr.mxu0 0.0
        %2461 = vmatpush1.msra.mxu0 0.0
        %2462 = vmatprep.subr.mxu0 0.0
        %2463 = vmatpush1.msra.mxu0 0.0
        %2464 = vmatprep.subr.mxu0 0.0
        %2465 = vmatpush1.msra.mxu0 0.0
        %2466 = vmatprep.subr.mxu0 0.0
        %2467 = vmatpush1.msra.mxu0 0.0
        %2468 = vmatprep.subr.mxu0 0.0
        %2469 = vmatpush1.msra.mxu0 0.0
        %2470 = vmatprep.subr.mxu0 0.0
        %2471 = vmatpush1.msra.mxu0 0.0
        %2472 = vmatprep.subr.mxu0 0.0
        %2473 = vmatpush1.msra.mxu0 0.0
        %2474 = vmatprep.subr.mxu0 0.0
        %2475 = vmatpush1.msra.mxu0 0.0
        %2476 = vmatprep.subr.mxu0 0.0
        %2477 = vmatpush1.msra.mxu0 0.0
        %2478 = vmatprep.subr.mxu0 0.0
        %2479 = vmatpush1.msra.mxu0 0.0
        %2480 = vmatprep.subr.mxu0 0.0
        %2481 = vmatpush1.msra.mxu0 0.0
        %2482 = vmatprep.subr.mxu0 0.0
        %2483 = vmatpush1.msra.mxu0 0.0
        %2484 = vmatprep.subr.mxu0 0.0
        %2485 = vmatpush1.msra.mxu0 0.0
        %2486 = vmatprep.subr.mxu0 0.0
        %2487 = vmatpush1.msra.mxu0 0.0
        %2488 = vmatprep.subr.mxu0 0.0
        %2489 = vmatpush1.msra.mxu0 0.0
        %2490 = vmatprep.subr.mxu0 0.0
        %2491 = vmatpush1.msra.mxu0 0.0
        %2492 = vmatprep.subr.mxu0 0.0
        %2493 = vmatpush1.msra.mxu0 0.0
        %2494 = vmatprep.subr.mxu0 0.0
        %2495 = vmatpush1.msra.mxu0 0.0
        %2496 = vmatprep.subr.mxu0 0.0
        %2497 = vmatpush1.msra.mxu0 0.0
        %2498 = vmatprep.subr.mxu0 0.0
        %2499 = vmatpush1.msra.mxu0 0.0
        %2500 = vmatprep.subr.mxu0 0.0
        %2501 = vmatpush1.msra.mxu0 0.0
        %2502 = vmatprep.subr.mxu0 0.0
        %2503 = vmatpush1.msra.mxu0 0.0
        %2504 = vmatprep.subr.mxu0 0.0
        %2505 = vmatpush1.msra.mxu0 0.0
        %2506 = vmatprep.subr.mxu0 0.0
        %2507 = vmatpush1.msra.mxu0 0.0
        %2508 = vmatprep.subr.mxu0 0.0
        %2509 = vmatpush1.msra.mxu0 0.0
        %2510 = vmatprep.subr.mxu0 0.0
        %2511 = vmatpush1.msra.mxu0 0.0
        %2512 = vmatprep.subr.mxu0 0.0
        %2513 = vmatpush1.msra.mxu0 0.0
        %2514 = vmatprep.mubr.f32.mxu0 0.0
        %2515 = vmatmul.mubr.f32.gmra.mrb[0].mxu0 %v818
        %v2516 = vpop.f32.mrb[0].mxu0
        %v2517 = vadd.f32 %v2448, %v2516
        %v2518 = vpop.f32.mrb[0].mxu0
        %2519 = vdwg.mxu0
        %v2521 = vsel %vm1052, %v2351, 0
        %v2524 = vsel %vm1052, %v2434, 0
        %2526 = vmatprep.subr.mxu0 0.0
        %2527 = vmatpush1.xpose.msra.mxu0 %v2524
        %2528 = vmatprep.subr.mxu0 0.0
        %2529 = vmatpush1.xpose.msra.mxu0 0.0
        %2530 = vmatprep.subr.mxu0 0.0
        %2531 = vmatpush1.xpose.msra.mxu0 0.0
        %2532 = vmatprep.subr.mxu0 0.0
        %2533 = vmatpush1.xpose.msra.mxu0 0.0
        %2534 = vmatprep.subr.mxu0 0.0
        %2535 = vmatpush1.xpose.msra.mxu0 0.0
        %2536 = vmatprep.subr.mxu0 0.0
        %2537 = vmatpush1.xpose.msra.mxu0 0.0
        %2538 = vmatprep.subr.mxu0 0.0
        %2539 = vmatpush1.xpose.msra.mxu0 0.0
        %2540 = vmatprep.subr.mxu0 0.0
        %2541 = vmatpush1.xpose.msra.mxu0 0.0
        %2542 = vmatprep.subr.mxu0 0.0
        %2543 = vmatpush1.xpose.msra.mxu0 0.0
        %2544 = vmatprep.subr.mxu0 0.0
        %2545 = vmatpush1.xpose.msra.mxu0 0.0
        %2546 = vmatprep.subr.mxu0 0.0
        %2547 = vmatpush1.xpose.msra.mxu0 0.0
        %2548 = vmatprep.subr.mxu0 0.0
        %2549 = vmatpush1.xpose.msra.mxu0 0.0
        %2550 = vmatprep.subr.mxu0 0.0
        %2551 = vmatpush1.xpose.msra.mxu0 0.0
        %2552 = vmatprep.subr.mxu0 0.0
        %2553 = vmatpush1.xpose.msra.mxu0 0.0
        %2554 = vmatprep.subr.mxu0 0.0
        %2555 = vmatpush1.xpose.msra.mxu0 0.0
        %2556 = vmatprep.subr.mxu0 0.0
        %2557 = vmatpush1.xpose.msra.mxu0 0.0
        %2558 = vmatprep.subr.mxu0 0.0
        %2559 = vmatpush1.xpose.msra.mxu0 0.0
        %2560 = vmatprep.subr.mxu0 0.0
        %2561 = vmatpush1.xpose.msra.mxu0 0.0
        %2562 = vmatprep.subr.mxu0 0.0
        %2563 = vmatpush1.xpose.msra.mxu0 0.0
        %2564 = vmatprep.subr.mxu0 0.0
        %2565 = vmatpush1.xpose.msra.mxu0 0.0
        %2566 = vmatprep.subr.mxu0 0.0
        %2567 = vmatpush1.xpose.msra.mxu0 0.0
        %2568 = vmatprep.subr.mxu0 0.0
        %2569 = vmatpush1.xpose.msra.mxu0 0.0
        %2570 = vmatprep.subr.mxu0 0.0
        %2571 = vmatpush1.xpose.msra.mxu0 0.0
        %2572 = vmatprep.subr.mxu0 0.0
        %2573 = vmatpush1.xpose.msra.mxu0 0.0
        %2574 = vmatprep.subr.mxu0 0.0
        %2575 = vmatpush1.xpose.msra.mxu0 0.0
        %2576 = vmatprep.subr.mxu0 0.0
        %2577 = vmatpush1.xpose.msra.mxu0 0.0
        %2578 = vmatprep.subr.mxu0 0.0
        %2579 = vmatpush1.xpose.msra.mxu0 0.0
        %2580 = vmatprep.subr.mxu0 0.0
        %2581 = vmatpush1.xpose.msra.mxu0 0.0
        %2582 = vmatprep.subr.mxu0 0.0
        %2583 = vmatpush1.xpose.msra.mxu0 0.0
        %2584 = vmatprep.subr.mxu0 0.0
        %2585 = vmatpush1.xpose.msra.mxu0 0.0
        %2586 = vmatprep.subr.mxu0 0.0
        %2587 = vmatpush1.xpose.msra.mxu0 0.0
        %2588 = vmatprep.subr.mxu0 0.0
        %2589 = vmatpush1.xpose.msra.mxu0 0.0
        %2590 = vmatprep.mubr.f32.mxu0 0.0
        %2591 = vmatmul.mubr.f32.gmra.mrb[0].mxu0 %v2521
        %v2592 = vpop.f32.mrb[0].mxu0
        %v2593 = vadd.f32 0.0, %v2592
        %v2594 = vpop.f32.mrb[0].mxu0
        %2595 = vdwg.mxu0
        %v2596 = vmul.f32 %v2593, 0.35355338
        %v2597 = vsel %vm1130, %v2596, -inf
        %2598 = vmax.xlane.f32.xlu0 %v2597
        %v2599 = vpop.xlane.xlu0 %2598
        %v2600 = vsub.f32 %v2596, %v2599
        %v2601 = vmul.f32 %v2600, 1.442695
        %v2602 = vpow.pop %v2601
        %v2603 = vsel %vm1130, %v2602, 0.0
        %2604 = vadd.xlane.f32.xlu0 %v2603
        %v2605 = vpop.xlane.xlu0 %2604
        %v2606 = vrcp.pop %v2605
        %v2607 = vmul.f32 %v2602, %v2606
        %v2609 = vsel %vm1142, %v2607, 0
        %v2612 = vsel %vm1146, %v2517, 0
        %2614 = vmatprep.subr.mxu0 0.0
        %2615 = vmatpush1.msra.mxu0 %v2612
        %2616 = vmatprep.subr.mxu0 0.0
        %2617 = vmatpush1.msra.mxu0 0.0
        %2618 = vmatprep.subr.mxu0 0.0
        %2619 = vmatpush1.msra.mxu0 0.0
        %2620 = vmatprep.subr.mxu0 0.0
        %2621 = vmatpush1.msra.mxu0 0.0
        %2622 = vmatprep.subr.mxu0 0.0
        %2623 = vmatpush1.msra.mxu0 0.0
        %2624 = vmatprep.subr.mxu0 0.0
        %2625 = vmatpush1.msra.mxu0 0.0
        %2626 = vmatprep.subr.mxu0 0.0
        %2627 = vmatpush1.msra.mxu0 0.0
        %2628 = vmatprep.subr.mxu0 0.0
        %2629 = vmatpush1.msra.mxu0 0.0
        %2630 = vmatprep.subr.mxu0 0.0
        %2631 = vmatpush1.msra.mxu0 0.0
        %2632 = vmatprep.subr.mxu0 0.0
        %2633 = vmatpush1.msra.mxu0 0.0
        %2634 = vmatprep.subr.mxu0 0.0
        %2635 = vmatpush1.msra.mxu0 0.0
        %2636 = vmatprep.subr.mxu0 0.0
        %2637 = vmatpush1.msra.mxu0 0.0
        %2638 = vmatprep.subr.mxu0 0.0
        %2639 = vmatpush1.msra.mxu0 0.0
        %2640 = vmatprep.subr.mxu0 0.0
        %2641 = vmatpush1.msra.mxu0 0.0
        %2642 = vmatprep.subr.mxu0 0.0
        %2643 = vmatpush1.msra.mxu0 0.0
        %2644 = vmatprep.subr.mxu0 0.0
        %2645 = vmatpush1.msra.mxu0 0.0
        %2646 = vmatprep.subr.mxu0 0.0
        %2647 = vmatpush1.msra.mxu0 0.0
        %2648 = vmatprep.subr.mxu0 0.0
        %2649 = vmatpush1.msra.mxu0 0.0
        %2650 = vmatprep.subr.mxu0 0.0
        %2651 = vmatpush1.msra.mxu0 0.0
        %2652 = vmatprep.subr.mxu0 0.0
        %2653 = vmatpush1.msra.mxu0 0.0
        %2654 = vmatprep.subr.mxu0 0.0
        %2655 = vmatpush1.msra.mxu0 0.0
        %2656 = vmatprep.subr.mxu0 0.0
        %2657 = vmatpush1.msra.mxu0 0.0
        %2658 = vmatprep.subr.mxu0 0.0
        %2659 = vmatpush1.msra.mxu0 0.0
        %2660 = vmatprep.subr.mxu0 0.0
        %2661 = vmatpush1.msra.mxu0 0.0
        %2662 = vmatprep.subr.mxu0 0.0
        %2663 = vmatpush1.msra.mxu0 0.0
        %2664 = vmatprep.subr.mxu0 0.0
        %2665 = vmatpush1.msra.mxu0 0.0
        %2666 = vmatprep.subr.mxu0 0.0
        %2667 = vmatpush1.msra.mxu0 0.0
        %2668 = vmatprep.subr.mxu0 0.0
        %2669 = vmatpush1.msra.mxu0 0.0
        %2670 = vmatprep.subr.mxu0 0.0
        %2671 = vmatpush1.msra.mxu0 0.0
        %2672 = vmatprep.subr.mxu0 0.0
        %2673 = vmatpush1.msra.mxu0 0.0
        %2674 = vmatprep.subr.mxu0 0.0
        %2675 = vmatpush1.msra.mxu0 0.0
        %2676 = vmatprep.subr.mxu0 0.0
        %2677 = vmatpush1.msra.mxu0 0.0
        %2678 = vmatprep.mubr.f32.mxu0 0.0
        %2679 = vmatmul.mubr.f32.gmra.mrb[0].mxu0 %v2609
        %v2680 = vpop.f32.mrb[0].mxu0
        %v2681 = vadd.f32 0.0, %v2680
        %v2682 = vpop.f32.mrb[0].mxu0
        %2683 = vdwg.mxu0
        %s2684 = scalar_lea.vmem %s11, 24
        %v2685 = vld [vmem:[%s2684] sm:$0xff]
        %v2687 = vsel %vm1052, %v2681, 0
        %2689 = vmatprep.subr.mxu0 0.0
        %2690 = vmatpush1.msra.mxu0 %v2685
        %2691 = vmatprep.subr.mxu0 0.0
        %2692 = vmatpush1.msra.mxu0 0.0
        %2693 = vmatprep.subr.mxu0 0.0
        %2694 = vmatpush1.msra.mxu0 0.0
        %2695 = vmatprep.subr.mxu0 0.0
        %2696 = vmatpush1.msra.mxu0 0.0
        %2697 = vmatprep.subr.mxu0 0.0
        %2698 = vmatpush1.msra.mxu0 0.0
        %2699 = vmatprep.subr.mxu0 0.0
        %2700 = vmatpush1.msra.mxu0 0.0
        %2701 = vmatprep.subr.mxu0 0.0
        %2702 = vmatpush1.msra.mxu0 0.0
        %2703 = vmatprep.subr.mxu0 0.0
        %2704 = vmatpush1.msra.mxu0 0.0
        %2705 = vmatprep.subr.mxu0 0.0
        %2706 = vmatpush1.msra.mxu0 0.0
        %2707 = vmatprep.subr.mxu0 0.0
        %2708 = vmatpush1.msra.mxu0 0.0
        %2709 = vmatprep.subr.mxu0 0.0
        %2710 = vmatpush1.msra.mxu0 0.0
        %2711 = vmatprep.subr.mxu0 0.0
        %2712 = vmatpush1.msra.mxu0 0.0
        %2713 = vmatprep.subr.mxu0 0.0
        %2714 = vmatpush1.msra.mxu0 0.0
        %2715 = vmatprep.subr.mxu0 0.0
        %2716 = vmatpush1.msra.mxu0 0.0
        %2717 = vmatprep.subr.mxu0 0.0
        %2718 = vmatpush1.msra.mxu0 0.0
        %2719 = vmatprep.subr.mxu0 0.0
        %2720 = vmatpush1.msra.mxu0 0.0
        %2721 = vmatprep.subr.mxu0 0.0
        %2722 = vmatpush1.msra.mxu0 0.0
        %2723 = vmatprep.subr.mxu0 0.0
        %2724 = vmatpush1.msra.mxu0 0.0
        %2725 = vmatprep.subr.mxu0 0.0
        %2726 = vmatpush1.msra.mxu0 0.0
        %2727 = vmatprep.subr.mxu0 0.0
        %2728 = vmatpush1.msra.mxu0 0.0
        %2729 = vmatprep.subr.mxu0 0.0
        %2730 = vmatpush1.msra.mxu0 0.0
        %2731 = vmatprep.subr.mxu0 0.0
        %2732 = vmatpush1.msra.mxu0 0.0
        %2733 = vmatprep.subr.mxu0 0.0
        %2734 = vmatpush1.msra.mxu0 0.0
        %2735 = vmatprep.subr.mxu0 0.0
        %2736 = vmatpush1.msra.mxu0 0.0
        %2737 = vmatprep.subr.mxu0 0.0
        %2738 = vmatpush1.msra.mxu0 0.0
        %2739 = vmatprep.subr.mxu0 0.0
        %2740 = vmatpush1.msra.mxu0 0.0
        %2741 = vmatprep.subr.mxu0 0.0
        %2742 = vmatpush1.msra.mxu0 0.0
        %2743 = vmatprep.subr.mxu0 0.0
        %2744 = vmatpush1.msra.mxu0 0.0
        %2745 = vmatprep.subr.mxu0 0.0
        %2746 = vmatpush1.msra.mxu0 0.0
        %2747 = vmatprep.subr.mxu0 0.0
        %2748 = vmatpush1.msra.mxu0 0.0
        %2749 = vmatprep.subr.mxu0 0.0
        %2750 = vmatpush1.msra.mxu0 0.0
        %2751 = vmatprep.subr.mxu0 0.0
        %2752 = vmatpush1.msra.mxu0 0.0
        %2753 = vmatprep.mubr.f32.mxu0 0.0
        %2754 = vmatmul.mubr.f32.gmra.mrb[0].mxu0 %v2687
        %v2755 = vpop.f32.mrb[0].mxu0
        %v2756 = vadd.f32 0.0, %v2755
        %v2757 = vpop.f32.mrb[0].mxu0
        %2758 = vdwg.mxu0
        %v2759 = vadd.f32 %v2270, %v2756
        %v2760 = vadd.f32 %v780, %v2759
        %v2761 = vld [vmem:[%s12] sm:$0x1]
        %v2763 = vlaneseq
        %v2764 = vshrl.u32 %v2763, 7
        %v2765 = vsub.s32 0, %v2764
        %v2766 = vrot.slane %v2761, %v2765
        %v2768 = vadd.f32 %v2760, %v2766
        %v2769 = vld [vmem:[%s13] sm:$0x3]
        %v2770 = vsel %vm756, %v2768, 0.0
        %2771 = vadd.xlane.f32.xlu0 %v2770
        %v2772 = vpop.xlane.xlu0 %2771
        %v2773 = vmul.f32 %v2772, %v760
        %v2774 = vsub.f32 %v2768, %v2773
        %v2775 = vmul.f32 %v2774, %v2774
        %v2776 = vsel %vm756, %v2775, 0.0
        %2777 = vadd.xlane.f32.xlu0 %v2776
        %v2778 = vpop.xlane.xlu0 %2777
        %v2779 = vmul.f32 %v2778, %v760
        %v2780 = vadd.f32 %v2779, 1e-05
        %v2781 = vrsqrt.pop %v2780
        %v2782 = vmul.f32 %v2774, %v2781
        %v2783 = vlaneseq
        %v2784 = vshrl.u32 %v2783, 7
        %v2785 = vsub.s32 0, %v2784
        %v2786 = vrot.slane %v2769, %v2785
        %v2787 = vmul.f32 %v2782, %v2786
        %v2788 = vlaneseq
        %v2789 = vshrl.u32 %v2788, 7
        %v2790 = vsub.s32 1, %v2789
        %v2791 = vrot.slane %v2769, %v2790
        %v2792 = vadd.f32 %v2787, %v2791
        %v2793 = vld [vmem:[%s14] sm:$0xff]
        %v2794 = vld [vmem:[%s14 + $0x8] sm:$0xff]
        %v2795 = vld [vmem:[%s14 + $0x10] sm:$0xff]
        %v2796 = vld [vmem:[%s14 + $0x18] sm:$0xff]
        %v2797 = vld [vmem:[%s15] sm:$0x1]
        %v2799 = vlaneseq
        %v2800 = vshrl.u32 %v2799, 7
        %v2801 = vsub.s32 0, %v2800
        %v2802 = vrot.slane %v2797, %v2801
        %v2805 = vsel %vm816, %v2792, 0
        %2807 = vmatprep.subr.mxu0 0.0
        %2808 = vmatpush1.msra.mxu0 %v2793
        %2809 = vmatprep.subr.mxu0 0.0
        %2810 = vmatpush1.msra.mxu0 %v2794
        %2811 = vmatprep.subr.mxu0 0.0
        %2812 = vmatpush1.msra.mxu0 %v2795
        %2813 = vmatprep.subr.mxu0 0.0
        %2814 = vmatpush1.msra.mxu0 %v2796
        %2815 = vmatprep.subr.mxu0 0.0
        %2816 = vmatpush1.msra.mxu0 0.0
        %2817 = vmatprep.subr.mxu0 0.0
        %2818 = vmatpush1.msra.mxu0 0.0
        %2819 = vmatprep.subr.mxu0 0.0
        %2820 = vmatpush1.msra.mxu0 0.0
        %2821 = vmatprep.subr.mxu0 0.0
        %2822 = vmatpush1.msra.mxu0 0.0
        %2823 = vmatprep.subr.mxu0 0.0
        %2824 = vmatpush1.msra.mxu0 0.0
        %2825 = vmatprep.subr.mxu0 0.0
        %2826 = vmatpush1.msra.mxu0 0.0
        %2827 = vmatprep.subr.mxu0 0.0
        %2828 = vmatpush1.msra.mxu0 0.0
        %2829 = vmatprep.subr.mxu0 0.0
        %2830 = vmatpush1.msra.mxu0 0.0
        %2831 = vmatprep.subr.mxu0 0.0
        %2832 = vmatpush1.msra.mxu0 0.0
        %2833 = vmatprep.subr.mxu0 0.0
        %2834 = vmatpush1.msra.mxu0 0.0
        %2835 = vmatprep.subr.mxu0 0.0
        %2836 = vmatpush1.msra.mxu0 0.0
        %2837 = vmatprep.subr.mxu0 0.0
        %2838 = vmatpush1.msra.mxu0 0.0
        %2839 = vmatprep.subr.mxu0 0.0
        %2840 = vmatpush1.msra.mxu0 0.0
        %2841 = vmatprep.subr.mxu0 0.0
        %2842 = vmatpush1.msra.mxu0 0.0
        %2843 = vmatprep.subr.mxu0 0.0
        %2844 = vmatpush1.msra.mxu0 0.0
        %2845 = vmatprep.subr.mxu0 0.0
        %2846 = vmatpush1.msra.mxu0 0.0
        %2847 = vmatprep.subr.mxu0 0.0
        %2848 = vmatpush1.msra.mxu0 0.0
        %2849 = vmatprep.subr.mxu0 0.0
        %2850 = vmatpush1.msra.mxu0 0.0
        %2851 = vmatprep.subr.mxu0 0.0
        %2852 = vmatpush1.msra.mxu0 0.0
        %2853 = vmatprep.subr.mxu0 0.0
        %2854 = vmatpush1.msra.mxu0 0.0
        %2855 = vmatprep.subr.mxu0 0.0
        %2856 = vmatpush1.msra.mxu0 0.0
        %2857 = vmatprep.subr.mxu0 0.0
        %2858 = vmatpush1.msra.mxu0 0.0
        %2859 = vmatprep.subr.mxu0 0.0
        %2860 = vmatpush1.msra.mxu0 0.0
        %2861 = vmatprep.subr.mxu0 0.0
        %2862 = vmatpush1.msra.mxu0 0.0
        %2863 = vmatprep.subr.mxu0 0.0
        %2864 = vmatpush1.msra.mxu0 0.0
        %2865 = vmatprep.subr.mxu0 0.0
        %2866 = vmatpush1.msra.mxu0 0.0
        %2867 = vmatprep.subr.mxu0 0.0
        %2868 = vmatpush1.msra.mxu0 0.0
        %2869 = vmatprep.subr.mxu0 0.0
        %2870 = vmatpush1.msra.mxu0 0.0
        %2871 = vmatprep.mubr.f32.mxu0 0.0
        %2872 = vmatmul.mubr.f32.gmra.mrb[0].mxu0 %v2805
        %v2873 = vpop.f32.mrb[0].mxu0
        %v2874 = vadd.f32 %v2802, %v2873
        %v2875 = vpop.f32.mrb[0].mxu0
        %2876 = vdwg.mxu0
        %v2877 = vmul.f32 %v2874, 1.702
        %v2878 = vxor.u32 %v2877, 2147483648
        %v2879 = vmul.f32 %v2878, 1.442695
        %v2880 = vpow.pop %v2879
        %v2881 = vadd.f32 %v2880, 1.0
        %v2882 = vrcp.pop %v2881
        %v2883 = vmul.f32 1.0, %v2882
        %v2884 = vmul.f32 %v2874, %v2883
        %v2885 = vld [vmem:[%s16] sm:$0xff]
        %v2886 = vld [vmem:[%s16 + $0x8] sm:$0xff]
        %v2887 = vld [vmem:[%s16 + $0x10] sm:$0xff]
        %v2888 = vld [vmem:[%s16 + $0x18] sm:$0xff]
        %v2889 = vld [vmem:[%s16 + $0x20] sm:$0xff]
        %v2890 = vld [vmem:[%s16 + $0x28] sm:$0xff]
        %v2891 = vld [vmem:[%s16 + $0x30] sm:$0xff]
        %v2892 = vld [vmem:[%s16 + $0x38] sm:$0xff]
        %v2893 = vld [vmem:[%s16 + $0x40] sm:$0xff]
        %v2894 = vld [vmem:[%s16 + $0x48] sm:$0xff]
        %v2895 = vld [vmem:[%s16 + $0x50] sm:$0xff]
        %v2896 = vld [vmem:[%s16 + $0x58] sm:$0xff]
        %v2897 = vld [vmem:[%s16 + $0x60] sm:$0xff]
        %v2898 = vld [vmem:[%s16 + $0x68] sm:$0xff]
        %v2899 = vld [vmem:[%s16 + $0x70] sm:$0xff]
        %v2900 = vld [vmem:[%s16 + $0x78] sm:$0xff]
        %v2901 = vld [vmem:[%s17] sm:$0x1]
        %v2903 = vlaneseq
        %v2904 = vshrl.u32 %v2903, 7
        %v2905 = vsub.s32 0, %v2904
        %v2906 = vrot.slane %v2901, %v2905
        %2908 = vmatprep.subr.mxu0 0.0
        %2909 = vmatpush1.msra.mxu0 %v2885
        %2910 = vmatprep.subr.mxu0 0.0
        %2911 = vmatpush1.msra.mxu0 %v2886
        %2912 = vmatprep.subr.mxu0 0.0
        %2913 = vmatpush1.msra.mxu0 %v2887
        %2914 = vmatprep.subr.mxu0 0.0
        %2915 = vmatpush1.msra.mxu0 %v2888
        %2916 = vmatprep.subr.mxu0 0.0
        %2917 = vmatpush1.msra.mxu0 %v2889
        %2918 = vmatprep.subr.mxu0 0.0
        %2919 = vmatpush1.msra.mxu0 %v2890
        %2920 = vmatprep.subr.mxu0 0.0
        %2921 = vmatpush1.msra.mxu0 %v2891
        %2922 = vmatprep.subr.mxu0 0.0
        %2923 = vmatpush1.msra.mxu0 %v2892
        %2924 = vmatprep.subr.mxu0 0.0
        %2925 = vmatpush1.msra.mxu0 %v2893
        %2926 = vmatprep.subr.mxu0 0.0
        %2927 = vmatpush1.msra.mxu0 %v2894
        %2928 = vmatprep.subr.mxu0 0.0
        %2929 = vmatpush1.msra.mxu0 %v2895
        %2930 = vmatprep.subr.mxu0 0.0
        %2931 = vmatpush1.msra.mxu0 %v2896
        %2932 = vmatprep.subr.mxu0 0.0
        %2933 = vmatpush1.msra.mxu0 %v2897
        %2934 = vmatprep.subr.mxu0 0.0
        %2935 = vmatpush1.msra.mxu0 %v2898
        %2936 = vmatprep.subr.mxu0 0.0
        %2937 = vmatpush1.msra.mxu0 %v2899
        %2938 = vmatprep.subr.mxu0 0.0
        %2939 = vmatpush1.msra.mxu0 %v2900
        %2940 = vmatprep.subr.mxu0 0.0
        %2941 = vmatpush1.msra.mxu0 0.0
        %2942 = vmatprep.subr.mxu0 0.0
        %2943 = vmatpush1.msra.mxu0 0.0
        %2944 = vmatprep.subr.mxu0 0.0
        %2945 = vmatpush1.msra.mxu0 0.0
        %2946 = vmatprep.subr.mxu0 0.0
        %2947 = vmatpush1.msra.mxu0 0.0
        %2948 = vmatprep.subr.mxu0 0.0
        %2949 = vmatpush1.msra.mxu0 0.0
        %2950 = vmatprep.subr.mxu0 0.0
        %2951 = vmatpush1.msra.mxu0 0.0
        %2952 = vmatprep.subr.mxu0 0.0
        %2953 = vmatpush1.msra.mxu0 0.0
        %2954 = vmatprep.subr.mxu0 0.0
        %2955 = vmatpush1.msra.mxu0 0.0
        %2956 = vmatprep.subr.mxu0 0.0
        %2957 = vmatpush1.msra.mxu0 0.0
        %2958 = vmatprep.subr.mxu0 0.0
        %2959 = vmatpush1.msra.mxu0 0.0
        %2960 = vmatprep.subr.mxu0 0.0
        %2961 = vmatpush1.msra.mxu0 0.0
        %2962 = vmatprep.subr.mxu0 0.0
        %2963 = vmatpush1.msra.mxu0 0.0
        %2964 = vmatprep.subr.mxu0 0.0
        %2965 = vmatpush1.msra.mxu0 0.0
        %2966 = vmatprep.subr.mxu0 0.0
        %2967 = vmatpush1.msra.mxu0 0.0
        %2968 = vmatprep.subr.mxu0 0.0
        %2969 = vmatpush1.msra.mxu0 0.0
        %2970 = vmatprep.subr.mxu0 0.0
        %2971 = vmatpush1.msra.mxu0 0.0
        %2972 = vmatprep.mubr.f32.mxu0 0.0
        %2973 = vmatmul.mubr.f32.gmra.mrb[0].mxu0 %v2884
        %v2974 = vpop.f32.mrb[0].mxu0
        %v2975 = vadd.f32 %v2906, %v2974
        %v2976 = vpop.f32.mrb[0].mxu0
        %2977 = vdwg.mxu0
        %v2978 = vadd.f32 %v2768, %v2975
        %s2979 = scalar_lea.vmem %s4, 2
        %v2980 = vld [vmem:[%s2979] sm:$0x3]
        %v2981 = vsel %vm756, %v2978, 0.0
        %2982 = vadd.xlane.f32.xlu0 %v2981
        %v2983 = vpop.xlane.xlu0 %2982
        %v2984 = vmul.f32 %v2983, %v760
        %v2985 = vsub.f32 %v2978, %v2984
        %v2986 = vmul.f32 %v2985, %v2985
        %v2987 = vsel %vm756, %v2986, 0.0
        %2988 = vadd.xlane.f32.xlu0 %v2987
        %v2989 = vpop.xlane.xlu0 %2988
        %v2990 = vmul.f32 %v2989, %v760
        %v2991 = vadd.f32 %v2990, 1e-05
        %v2992 = vrsqrt.pop %v2991
        %v2993 = vmul.f32 %v2985, %v2992
        %v2994 = vlaneseq
        %v2995 = vshrl.u32 %v2994, 7
        %v2996 = vsub.s32 0, %v2995
        %v2997 = vrot.slane %v2980, %v2996
        %v2998 = vmul.f32 %v2993, %v2997
        %v2999 = vlaneseq
        %v3000 = vshrl.u32 %v2999, 7
        %v3001 = vsub.s32 1, %v3000
        %v3002 = vrot.slane %v2980, %v3001
        %v3003 = vadd.f32 %v2998, %v3002
        %s3004 = scalar_lea.vmem %s5, 128
        %v3005 = vld [vmem:[%s3004] sm:$0xff]
        %v3006 = vld [vmem:[%s3004 + $0x8] sm:$0xff]
        %v3007 = vld [vmem:[%s3004 + $0x10] sm:$0xff]
        %v3008 = vld [vmem:[%s3004 + $0x18] sm:$0xff]
        %s3009 = scalar_lea.vmem %s8, 4
        %v3010 = vld [vmem:[%s3009] sm:$0x1]
        %v3012 = vlaneseq
        %v3013 = vshrl.u32 %v3012, 7
        %v3014 = vsub.s32 0, %v3013
        %v3015 = vrot.slane %v3010, %v3014
        %v3018 = vsel %vm816, %v3003, 0
        %3020 = vmatprep.subr.mxu0 0.0
        %3021 = vmatpush1.msra.mxu0 %v3005
        %3022 = vmatprep.subr.mxu0 0.0
        %3023 = vmatpush1.msra.mxu0 %v3006
        %3024 = vmatprep.subr.mxu0 0.0
        %3025 = vmatpush1.msra.mxu0 %v3007
        %3026 = vmatprep.subr.mxu0 0.0
        %3027 = vmatpush1.msra.mxu0 %v3008
        %3028 = vmatprep.subr.mxu0 0.0
        %3029 = vmatpush1.msra.mxu0 0.0
        %3030 = vmatprep.subr.mxu0 0.0
        %3031 = vmatpush1.msra.mxu0 0.0
        %3032 = vmatprep.subr.mxu0 0.0
        %3033 = vmatpush1.msra.mxu0 0.0
        %3034 = vmatprep.subr.mxu0 0.0
        %3035 = vmatpush1.msra.mxu0 0.0
        %3036 = vmatprep.subr.mxu0 0.0
        %3037 = vmatpush1.msra.mxu0 0.0
        %3038 = vmatprep.subr.mxu0 0.0
        %3039 = vmatpush1.msra.mxu0 0.0
        %3040 = vmatprep.subr.mxu0 0.0
        %3041 = vmatpush1.msra.mxu0 0.0
        %3042 = vmatprep.subr.mxu0 0.0
        %3043 = vmatpush1.msra.mxu0 0.0
        %3044 = vmatprep.subr.mxu0 0.0
        %3045 = vmatpush1.msra.mxu0 0.0
        %3046 = vmatprep.subr.mxu0 0.0
        %3047 = vmatpush1.msra.mxu0 0.0
        %3048 = vmatprep.subr.mxu0 0.0
        %3049 = vmatpush1.msra.mxu0 0.0
        %3050 = vmatprep.subr.mxu0 0.0
        %3051 = vmatpush1.msra.mxu0 0.0
        %3052 = vmatprep.subr.mxu0 0.0
        %3053 = vmatpush1.msra.mxu0 0.0
        %3054 = vmatprep.subr.mxu0 0.0
        %3055 = vmatpush1.msra.mxu0 0.0
        %3056 = vmatprep.subr.mxu0 0.0
        %3057 = vmatpush1.msra.mxu0 0.0
        %3058 = vmatprep.subr.mxu0 0.0
        %3059 = vmatpush1.msra.mxu0 0.0
        %3060 = vmatprep.subr.mxu0 0.0
        %3061 = vmatpush1.msra.mxu0 0.0
        %3062 = vmatprep.subr.mxu0 0.0
        %3063 = vmatpush1.msra.mxu0 0.0
        %3064 = vmatprep.subr.mxu0 0.0
        %3065 = vmatpush1.msra.mxu0 0.0
        %3066 = vmatprep.subr.mxu0 0.0
        %3067 = vmatpush1.msra.mxu0 0.0
        %3068 = vmatprep.subr.mxu0 0.0
        %3069 = vmatpush1.msra.mxu0 0.0
        %3070 = vmatprep.subr.mxu0 0.0
        %3071 = vmatpush1.msra.mxu0 0.0
        %3072 = vmatprep.subr.mxu0 0.0
        %3073 = vmatpush1.msra.mxu0 0.0
        %3074 = vmatprep.subr.mxu0 0.0
        %3075 = vmatpush1.msra.mxu0 0.0
        %3076 = vmatprep.subr.mxu0 0.0
        %3077 = vmatpush1.msra.mxu0 0.0
        %3078 = vmatprep.subr.mxu0 0.0
        %3079 = vmatpush1.msra.mxu0 0.0
        %3080 = vmatprep.subr.mxu0 0.0
        %3081 = vmatpush1.msra.mxu0 0.0
        %3082 = vmatprep.subr.mxu0 0.0
        %3083 = vmatpush1.msra.mxu0 0.0
        %3084 = vmatprep.mubr.f32.mxu0 0.0
        %3085 = vmatmul.mubr.f32.gmra.mrb[0].mxu0 %v3018
        %v3086 = vpop.f32.mrb[0].mxu0
        %v3087 = vadd.f32 %v3015, %v3086
        %v3088 = vpop.f32.mrb[0].mxu0
        %3089 = vdwg.mxu0
        %s3090 = scalar_lea.vmem %s6, 128
        %v3091 = vld [vmem:[%s3090] sm:$0xff]
        %v3092 = vld [vmem:[%s3090 + $0x8] sm:$0xff]
        %v3093 = vld [vmem:[%s3090 + $0x10] sm:$0xff]
        %v3094 = vld [vmem:[%s3090 + $0x18] sm:$0xff]
        %s3095 = scalar_lea.vmem %s9, 4
        %v3096 = vld [vmem:[%s3095] sm:$0x1]
        %v3098 = vlaneseq
        %v3099 = vshrl.u32 %v3098, 7
        %v3100 = vsub.s32 0, %v3099
        %v3101 = vrot.slane %v3096, %v3100
        %3103 = vmatprep.subr.mxu0 0.0
        %3104 = vmatpush1.msra.mxu0 %v3091
        %3105 = vmatprep.subr.mxu0 0.0
        %3106 = vmatpush1.msra.mxu0 %v3092
        %3107 = vmatprep.subr.mxu0 0.0
        %3108 = vmatpush1.msra.mxu0 %v3093
        %3109 = vmatprep.subr.mxu0 0.0
        %3110 = vmatpush1.msra.mxu0 %v3094
        %3111 = vmatprep.subr.mxu0 0.0
        %3112 = vmatpush1.msra.mxu0 0.0
        %3113 = vmatprep.subr.mxu0 0.0
        %3114 = vmatpush1.msra.mxu0 0.0
        %3115 = vmatprep.subr.mxu0 0.0
        %3116 = vmatpush1.msra.mxu0 0.0
        %3117 = vmatprep.subr.mxu0 0.0
        %3118 = vmatpush1.msra.mxu0 0.0
        %3119 = vmatprep.subr.mxu0 0.0
        %3120 = vmatpush1.msra.mxu0 0.0
        %3121 = vmatprep.subr.mxu0 0.0
        %3122 = vmatpush1.msra.mxu0 0.0
        %3123 = vmatprep.subr.mxu0 0.0
        %3124 = vmatpush1.msra.mxu0 0.0
        %3125 = vmatprep.subr.mxu0 0.0
        %3126 = vmatpush1.msra.mxu0 0.0
        %3127 = vmatprep.subr.mxu0 0.0
        %3128 = vmatpush1.msra.mxu0 0.0
        %3129 = vmatprep.subr.mxu0 0.0
        %3130 = vmatpush1.msra.mxu0 0.0
        %3131 = vmatprep.subr.mxu0 0.0
        %3132 = vmatpush1.msra.mxu0 0.0
        %3133 = vmatprep.subr.mxu0 0.0
        %3134 = vmatpush1.msra.mxu0 0.0
        %3135 = vmatprep.subr.mxu0 0.0
        %3136 = vmatpush1.msra.mxu0 0.0
        %3137 = vmatprep.subr.mxu0 0.0
        %3138 = vmatpush1.msra.mxu0 0.0
        %3139 = vmatprep.subr.mxu0 0.0
        %3140 = vmatpush1.msra.mxu0 0.0
        %3141 = vmatprep.subr.mxu0 0.0
        %3142 = vmatpush1.msra.mxu0 0.0
        %3143 = vmatprep.subr.mxu0 0.0
        %3144 = vmatpush1.msra.mxu0 0.0
        %3145 = vmatprep.subr.mxu0 0.0
        %3146 = vmatpush1.msra.mxu0 0.0
        %3147 = vmatprep.subr.mxu0 0.0
        %3148 = vmatpush1.msra.mxu0 0.0
        %3149 = vmatprep.subr.mxu0 0.0
        %3150 = vmatpush1.msra.mxu0 0.0
        %3151 = vmatprep.subr.mxu0 0.0
        %3152 = vmatpush1.msra.mxu0 0.0
        %3153 = vmatprep.subr.mxu0 0.0
        %3154 = vmatpush1.msra.mxu0 0.0
        %3155 = vmatprep.subr.mxu0 0.0
        %3156 = vmatpush1.msra.mxu0 0.0
        %3157 = vmatprep.subr.mxu0 0.0
        %3158 = vmatpush1.msra.mxu0 0.0
        %3159 = vmatprep.subr.mxu0 0.0
        %3160 = vmatpush1.msra.mxu0 0.0
        %3161 = vmatprep.subr.mxu0 0.0
        %3162 = vmatpush1.msra.mxu0 0.0
        %3163 = vmatprep.subr.mxu0 0.0
        %3164 = vmatpush1.msra.mxu0 0.0
        %3165 = vmatprep.subr.mxu0 0.0
        %3166 = vmatpush1.msra.mxu0 0.0
        %3167 = vmatprep.mubr.f32.mxu0 0.0
        %3168 = vmatmul.mubr.f32.gmra.mrb[0].mxu0 %v3018
        %v3169 = vpop.f32.mrb[0].mxu0
        %v3170 = vadd.f32 %v3101, %v3169
        %v3171 = vpop.f32.mrb[0].mxu0
        %3172 = vdwg.mxu0
        %s3173 = scalar_lea.vmem %s7, 128
        %v3174 = vld [vmem:[%s3173] sm:$0xff]
        %v3175 = vld [vmem:[%s3173 + $0x8] sm:$0xff]
        %v3176 = vld [vmem:[%s3173 + $0x10] sm:$0xff]
        %v3177 = vld [vmem:[%s3173 + $0x18] sm:$0xff]
        %s3178 = scalar_lea.vmem %s10, 4
        %v3179 = vld [vmem:[%s3178] sm:$0x1]
        %v3181 = vlaneseq
        %v3182 = vshrl.u32 %v3181, 7
        %v3183 = vsub.s32 0, %v3182
        %v3184 = vrot.slane %v3179, %v3183
        %3186 = vmatprep.subr.mxu0 0.0
        %3187 = vmatpush1.msra.mxu0 %v3174
        %3188 = vmatprep.subr.mxu0 0.0
        %3189 = vmatpush1.msra.mxu0 %v3175
        %3190 = vmatprep.subr.mxu0 0.0
        %3191 = vmatpush1.msra.mxu0 %v3176
        %3192 = vmatprep.subr.mxu0 0.0
        %3193 = vmatpush1.msra.mxu0 %v3177
        %3194 = vmatprep.subr.mxu0 0.0
        %3195 = vmatpush1.msra.mxu0 0.0
        %3196 = vmatprep.subr.mxu0 0.0
        %3197 = vmatpush1.msra.mxu0 0.0
        %3198 = vmatprep.subr.mxu0 0.0
        %3199 = vmatpush1.msra.mxu0 0.0
        %3200 = vmatprep.subr.mxu0 0.0
        %3201 = vmatpush1.msra.mxu0 0.0
        %3202 = vmatprep.subr.mxu0 0.0
        %3203 = vmatpush1.msra.mxu0 0.0
        %3204 = vmatprep.subr.mxu0 0.0
        %3205 = vmatpush1.msra.mxu0 0.0
        %3206 = vmatprep.subr.mxu0 0.0
        %3207 = vmatpush1.msra.mxu0 0.0
        %3208 = vmatprep.subr.mxu0 0.0
        %3209 = vmatpush1.msra.mxu0 0.0
        %3210 = vmatprep.subr.mxu0 0.0
        %3211 = vmatpush1.msra.mxu0 0.0
        %3212 = vmatprep.subr.mxu0 0.0
        %3213 = vmatpush1.msra.mxu0 0.0
        %3214 = vmatprep.subr.mxu0 0.0
        %3215 = vmatpush1.msra.mxu0 0.0
        %3216 = vmatprep.subr.mxu0 0.0
        %3217 = vmatpush1.msra.mxu0 0.0
        %3218 = vmatprep.subr.mxu0 0.0
        %3219 = vmatpush1.msra.mxu0 0.0
        %3220 = vmatprep.subr.mxu0 0.0
        %3221 = vmatpush1.msra.mxu0 0.0
        %3222 = vmatprep.subr.mxu0 0.0
        %3223 = vmatpush1.msra.mxu0 0.0
        %3224 = vmatprep.subr.mxu0 0.0
        %3225 = vmatpush1.msra.mxu0 0.0
        %3226 = vmatprep.subr.mxu0 0.0
        %3227 = vmatpush1.msra.mxu0 0.0
        %3228 = vmatprep.subr.mxu0 0.0
        %3229 = vmatpush1.msra.mxu0 0.0
        %3230 = vmatprep.subr.mxu0 0.0
        %3231 = vmatpush1.msra.mxu0 0.0
        %3232 = vmatprep.subr.mxu0 0.0
        %3233 = vmatpush1.msra.mxu0 0.0
        %3234 = vmatprep.subr.mxu0 0.0
        %3235 = vmatpush1.msra.mxu0 0.0
        %3236 = vmatprep.subr.mxu0 0.0
        %3237 = vmatpush1.msra.mxu0 0.0
        %3238 = vmatprep.subr.mxu0 0.0
        %3239 = vmatpush1.msra.mxu0 0.0
        %3240 = vmatprep.subr.mxu0 0.0
        %3241 = vmatpush1.msra.mxu0 0.0
        %3242 = vmatprep.subr.mxu0 0.0
        %3243 = vmatpush1.msra.mxu0 0.0
        %3244 = vmatprep.subr.mxu0 0.0
        %3245 = vmatpush1.msra.mxu0 0.0
        %3246 = vmatprep.subr.mxu0 0.0
        %3247 = vmatpush1.msra.mxu0 0.0
        %3248 = vmatprep.subr.mxu0 0.0
        %3249 = vmatpush1.msra.mxu0 0.0
        %3250 = vmatprep.mubr.f32.mxu0 0.0
        %3251 = vmatmul.mubr.f32.gmra.mrb[0].mxu0 %v3018
        %v3252 = vpop.f32.mrb[0].mxu0
        %v3253 = vadd.f32 %v3184, %v3252
        %v3254 = vpop.f32.mrb[0].mxu0
        %3255 = vdwg.mxu0
        %v3257 = vsel %vm1052, %v3087, 0
        %v3260 = vsel %vm1052, %v3170, 0
        %3262 = vmatprep.subr.mxu0 0.0
        %3263 = vmatpush1.xpose.msra.mxu0 %v3260
        %3264 = vmatprep.subr.mxu0 0.0
        %3265 = vmatpush1.xpose.msra.mxu0 0.0
        %3266 = vmatprep.subr.mxu0 0.0
        %3267 = vmatpush1.xpose.msra.mxu0 0.0
        %3268 = vmatprep.subr.mxu0 0.0
        %3269 = vmatpush1.xpose.msra.mxu0 0.0
        %3270 = vmatprep.subr.mxu0 0.0
        %3271 = vmatpush1.xpose.msra.mxu0 0.0
        %3272 = vmatprep.subr.mxu0 0.0
        %3273 = vmatpush1.xpose.msra.mxu0 0.0
        %3274 = vmatprep.subr.mxu0 0.0
        %3275 = vmatpush1.xpose.msra.mxu0 0.0
        %3276 = vmatprep.subr.mxu0 0.0
        %3277 = vmatpush1.xpose.msra.mxu0 0.0
        %3278 = vmatprep.subr.mxu0 0.0
        %3279 = vmatpush1.xpose.msra.mxu0 0.0
        %3280 = vmatprep.subr.mxu0 0.0
        %3281 = vmatpush1.xpose.msra.mxu0 0.0
        %3282 = vmatprep.subr.mxu0 0.0
        %3283 = vmatpush1.xpose.msra.mxu0 0.0
        %3284 = vmatprep.subr.mxu0 0.0
        %3285 = vmatpush1.xpose.msra.mxu0 0.0
        %3286 = vmatprep.subr.mxu0 0.0
        %3287 = vmatpush1.xpose.msra.mxu0 0.0
        %3288 = vmatprep.subr.mxu0 0.0
        %3289 = vmatpush1.xpose.msra.mxu0 0.0
        %3290 = vmatprep.subr.mxu0 0.0
        %3291 = vmatpush1.xpose.msra.mxu0 0.0
        %3292 = vmatprep.subr.mxu0 0.0
        %3293 = vmatpush1.xpose.msra.mxu0 0.0
        %3294 = vmatprep.subr.mxu0 0.0
        %3295 = vmatpush1.xpose.msra.mxu0 0.0
        %3296 = vmatprep.subr.mxu0 0.0
        %3297 = vmatpush1.xpose.msra.mxu0 0.0
        %3298 = vmatprep.subr.mxu0 0.0
        %3299 = vmatpush1.xpose.msra.mxu0 0.0
        %3300 = vmatprep.subr.mxu0 0.0
        %3301 = vmatpush1.xpose.msra.mxu0 0.0
        %3302 = vmatprep.subr.mxu0 0.0
        %3303 = vmatpush1.xpose.msra.mxu0 0.0
        %3304 = vmatprep.subr.mxu0 0.0
        %3305 = vmatpush1.xpose.msra.mxu0 0.0
        %3306 = vmatprep.subr.mxu0 0.0
        %3307 = vmatpush1.xpose.msra.mxu0 0.0
        %3308 = vmatprep.subr.mxu0 0.0
        %3309 = vmatpush1.xpose.msra.mxu0 0.0
        %3310 = vmatprep.subr.mxu0 0.0
        %3311 = vmatpush1.xpose.msra.mxu0 0.0
        %3312 = vmatprep.subr.mxu0 0.0
        %3313 = vmatpush1.xpose.msra.mxu0 0.0
        %3314 = vmatprep.subr.mxu0 0.0
        %3315 = vmatpush1.xpose.msra.mxu0 0.0
        %3316 = vmatprep.subr.mxu0 0.0
        %3317 = vmatpush1.xpose.msra.mxu0 0.0
        %3318 = vmatprep.subr.mxu0 0.0
        %3319 = vmatpush1.xpose.msra.mxu0 0.0
        %3320 = vmatprep.subr.mxu0 0.0
        %3321 = vmatpush1.xpose.msra.mxu0 0.0
        %3322 = vmatprep.subr.mxu0 0.0
        %3323 = vmatpush1.xpose.msra.mxu0 0.0
        %3324 = vmatprep.subr.mxu0 0.0
        %3325 = vmatpush1.xpose.msra.mxu0 0.0
        %3326 = vmatprep.mubr.f32.mxu0 0.0
        %3327 = vmatmul.mubr.f32.gmra.mrb[0].mxu0 %v3257
        %v3328 = vpop.f32.mrb[0].mxu0
        %v3329 = vadd.f32 0.0, %v3328
        %v3330 = vpop.f32.mrb[0].mxu0
        %3331 = vdwg.mxu0
        %v3332 = vmul.f32 %v3329, 0.35355338
        %v3333 = vsel %vm1130, %v3332, -inf
        %3334 = vmax.xlane.f32.xlu0 %v3333
        %v3335 = vpop.xlane.xlu0 %3334
        %v3336 = vsub.f32 %v3332, %v3335
        %v3337 = vmul.f32 %v3336, 1.442695
        %v3338 = vpow.pop %v3337
        %v3339 = vsel %vm1130, %v3338, 0.0
        %3340 = vadd.xlane.f32.xlu0 %v3339
        %v3341 = vpop.xlane.xlu0 %3340
        %v3342 = vrcp.pop %v3341
        %v3343 = vmul.f32 %v3338, %v3342
        %v3345 = vsel %vm1142, %v3343, 0
        %v3348 = vsel %vm1146, %v3253, 0
        %3350 = vmatprep.subr.mxu0 0.0
        %3351 = vmatpush1.msra.mxu0 %v3348
        %3352 = vmatprep.subr.mxu0 0.0
        %3353 = vmatpush1.msra.mxu0 0.0
        %3354 = vmatprep.subr.mxu0 0.0
        %3355 = vmatpush1.msra.mxu0 0.0
        %3356 = vmatprep.subr.mxu0 0.0
        %3357 = vmatpush1.msra.mxu0 0.0
        %3358 = vmatprep.subr.mxu0 0.0
        %3359 = vmatpush1.msra.mxu0 0.0
        %3360 = vmatprep.subr.mxu0 0.0
        %3361 = vmatpush1.msra.mxu0 0.0
        %3362 = vmatprep.subr.mxu0 0.0
        %3363 = vmatpush1.msra.mxu0 0.0
        %3364 = vmatprep.subr.mxu0 0.0
        %3365 = vmatpush1.msra.mxu0 0.0
        %3366 = vmatprep.subr.mxu0 0.0
        %3367 = vmatpush1.msra.mxu0 0.0
        %3368 = vmatprep.subr.mxu0 0.0
        %3369 = vmatpush1.msra.mxu0 0.0
        %3370 = vmatprep.subr.mxu0 0.0
        %3371 = vmatpush1.msra.mxu0 0.0
        %3372 = vmatprep.subr.mxu0 0.0
        %3373 = vmatpush1.msra.mxu0 0.0
        %3374 = vmatprep.subr.mxu0 0.0
        %3375 = vmatpush1.msra.mxu0 0.0
        %3376 = vmatprep.subr.mxu0 0.0
        %3377 = vmatpush1.msra.mxu0 0.0
        %3378 = vmatprep.subr.mxu0 0.0
        %3379 = vmatpush1.msra.mxu0 0.0
        %3380 = vmatprep.subr.mxu0 0.0
        %3381 = vmatpush1.msra.mxu0 0.0
        %3382 = vmatprep.subr.mxu0 0.0
        %3383 = vmatpush1.msra.mxu0 0.0
        %3384 = vmatprep.subr.mxu0 0.0
        %3385 = vmatpush1.msra.mxu0 0.0
        %3386 = vmatprep.subr.mxu0 0.0
        %3387 = vmatpush1.msra.mxu0 0.0
        %3388 = vmatprep.subr.mxu0 0.0
        %3389 = vmatpush1.msra.mxu0 0.0
        %3390 = vmatprep.subr.mxu0 0.0
        %3391 = vmatpush1.msra.mxu0 0.0
        %3392 = vmatprep.subr.mxu0 0.0
        %3393 = vmatpush1.msra.mxu0 0.0
        %3394 = vmatprep.subr.mxu0 0.0
        %3395 = vmatpush1.msra.mxu0 0.0
        %3396 = vmatprep.subr.mxu0 0.0
        %3397 = vmatpush1.msra.mxu0 0.0
        %3398 = vmatprep.subr.mxu0 0.0
        %3399 = vmatpush1.msra.mxu0 0.0
        %3400 = vmatprep.subr.mxu0 0.0
        %3401 = vmatpush1.msra.mxu0 0.0
        %3402 = vmatprep.subr.mxu0 0.0
        %3403 = vmatpush1.msra.mxu0 0.0
        %3404 = vmatprep.subr.mxu0 0.0
        %3405 = vmatpush1.msra.mxu0 0.0
        %3406 = vmatprep.subr.mxu0 0.0
        %3407 = vmatpush1.msra.mxu0 0.0
        %3408 = vmatprep.subr.mxu0 0.0
        %3409 = vmatpush1.msra.mxu0 0.0
        %3410 = vmatprep.subr.mxu0 0.0
        %3411 = vmatpush1.msra.mxu0 0.0
        %3412 = vmatprep.subr.mxu0 0.0
        %3413 = vmatpush1.msra.mxu0 0.0
        %3414 = vmatprep.mubr.f32.mxu0 0.0
        %3415 = vmatmul.mubr.f32.gmra.mrb[0].mxu0 %v3345
        %v3416 = vpop.f32.mrb[0].mxu0
        %v3417 = vadd.f32 0.0, %v3416
        %v3418 = vpop.f32.mrb[0].mxu0
        %3419 = vdwg.mxu0
        %s3420 = scalar_lea.vmem %s11, 32
        %v3421 = vld [vmem:[%s3420] sm:$0xff]
        %s3422 = scalar_lea.vmem %s5, 160
        %v3423 = vld [vmem:[%s3422] sm:$0xff]
        %v3424 = vld [vmem:[%s3422 + $0x8] sm:$0xff]
        %v3425 = vld [vmem:[%s3422 + $0x10] sm:$0xff]
        %v3426 = vld [vmem:[%s3422 + $0x18] sm:$0xff]
        %s3427 = scalar_lea.vmem %s8, 5
        %v3428 = vld [vmem:[%s3427] sm:$0x1]
        %v3430 = vlaneseq
        %v3431 = vshrl.u32 %v3430, 7
        %v3432 = vsub.s32 0, %v3431
        %v3433 = vrot.slane %v3428, %v3432
        %3435 = vmatprep.subr.mxu0 0.0
        %3436 = vmatpush1.msra.mxu0 %v3423
        %3437 = vmatprep.subr.mxu0 0.0
        %3438 = vmatpush1.msra.mxu0 %v3424
        %3439 = vmatprep.subr.mxu0 0.0
        %3440 = vmatpush1.msra.mxu0 %v3425
        %3441 = vmatprep.subr.mxu0 0.0
        %3442 = vmatpush1.msra.mxu0 %v3426
        %3443 = vmatprep.subr.mxu0 0.0
        %3444 = vmatpush1.msra.mxu0 0.0
        %3445 = vmatprep.subr.mxu0 0.0
        %3446 = vmatpush1.msra.mxu0 0.0
        %3447 = vmatprep.subr.mxu0 0.0
        %3448 = vmatpush1.msra.mxu0 0.0
        %3449 = vmatprep.subr.mxu0 0.0
        %3450 = vmatpush1.msra.mxu0 0.0
        %3451 = vmatprep.subr.mxu0 0.0
        %3452 = vmatpush1.msra.mxu0 0.0
        %3453 = vmatprep.subr.mxu0 0.0
        %3454 = vmatpush1.msra.mxu0 0.0
        %3455 = vmatprep.subr.mxu0 0.0
        %3456 = vmatpush1.msra.mxu0 0.0
        %3457 = vmatprep.subr.mxu0 0.0
        %3458 = vmatpush1.msra.mxu0 0.0
        %3459 = vmatprep.subr.mxu0 0.0
        %3460 = vmatpush1.msra.mxu0 0.0
        %3461 = vmatprep.subr.mxu0 0.0
        %3462 = vmatpush1.msra.mxu0 0.0
        %3463 = vmatprep.subr.mxu0 0.0
        %3464 = vmatpush1.msra.mxu0 0.0
        %3465 = vmatprep.subr.mxu0 0.0
        %3466 = vmatpush1.msra.mxu0 0.0
        %3467 = vmatprep.subr.mxu0 0.0
        %3468 = vmatpush1.msra.mxu0 0.0
        %3469 = vmatprep.subr.mxu0 0.0
        %3470 = vmatpush1.msra.mxu0 0.0
        %3471 = vmatprep.subr.mxu0 0.0
        %3472 = vmatpush1.msra.mxu0 0.0
        %3473 = vmatprep.subr.mxu0 0.0
        %3474 = vmatpush1.msra.mxu0 0.0
        %3475 = vmatprep.subr.mxu0 0.0
        %3476 = vmatpush1.msra.mxu0 0.0
        %3477 = vmatprep.subr.mxu0 0.0
        %3478 = vmatpush1.msra.mxu0 0.0
        %3479 = vmatprep.subr.mxu0 0.0
        %3480 = vmatpush1.msra.mxu0 0.0
        %3481 = vmatprep.subr.mxu0 0.0
        %3482 = vmatpush1.msra.mxu0 0.0
        %3483 = vmatprep.subr.mxu0 0.0
        %3484 = vmatpush1.msra.mxu0 0.0
        %3485 = vmatprep.subr.mxu0 0.0
        %3486 = vmatpush1.msra.mxu0 0.0
        %3487 = vmatprep.subr.mxu0 0.0
        %3488 = vmatpush1.msra.mxu0 0.0
        %3489 = vmatprep.subr.mxu0 0.0
        %3490 = vmatpush1.msra.mxu0 0.0
        %3491 = vmatprep.subr.mxu0 0.0
        %3492 = vmatpush1.msra.mxu0 0.0
        %3493 = vmatprep.subr.mxu0 0.0
        %3494 = vmatpush1.msra.mxu0 0.0
        %3495 = vmatprep.subr.mxu0 0.0
        %3496 = vmatpush1.msra.mxu0 0.0
        %3497 = vmatprep.subr.mxu0 0.0
        %3498 = vmatpush1.msra.mxu0 0.0
        %3499 = vmatprep.mubr.f32.mxu0 0.0
        %3500 = vmatmul.mubr.f32.gmra.mrb[0].mxu0 %v3018
        %v3501 = vpop.f32.mrb[0].mxu0
        %v3502 = vadd.f32 %v3433, %v3501
        %v3503 = vpop.f32.mrb[0].mxu0
        %3504 = vdwg.mxu0
        %s3505 = scalar_lea.vmem %s6, 160
        %v3506 = vld [vmem:[%s3505] sm:$0xff]
        %v3507 = vld [vmem:[%s3505 + $0x8] sm:$0xff]
        %v3508 = vld [vmem:[%s3505 + $0x10] sm:$0xff]
        %v3509 = vld [vmem:[%s3505 + $0x18] sm:$0xff]
        %s3510 = scalar_lea.vmem %s9, 5
        %v3511 = vld [vmem:[%s3510] sm:$0x1]
        %v3513 = vlaneseq
        %v3514 = vshrl.u32 %v3513, 7
        %v3515 = vsub.s32 0, %v3514
        %v3516 = vrot.slane %v3511, %v3515
        %3518 = vmatprep.subr.mxu0 0.0
        %3519 = vmatpush1.msra.mxu0 %v3506
        %3520 = vmatprep.subr.mxu0 0.0
        %3521 = vmatpush1.msra.mxu0 %v3507
        %3522 = vmatprep.subr.mxu0 0.0
        %3523 = vmatpush1.msra.mxu0 %v3508
        %3524 = vmatprep.subr.mxu0 0.0
        %3525 = vmatpush1.msra.mxu0 %v3509
        %3526 = vmatprep.subr.mxu0 0.0
        %3527 = vmatpush1.msra.mxu0 0.0
        %3528 = vmatprep.subr.mxu0 0.0
        %3529 = vmatpush1.msra.mxu0 0.0
        %3530 = vmatprep.subr.mxu0 0.0
        %3531 = vmatpush1.msra.mxu0 0.0
        %3532 = vmatprep.subr.mxu0 0.0
        %3533 = vmatpush1.msra.mxu0 0.0
        %3534 = vmatprep.subr.mxu0 0.0
        %3535 = vmatpush1.msra.mxu0 0.0
        %3536 = vmatprep.subr.mxu0 0.0
        %3537 = vmatpush1.msra.mxu0 0.0
        %3538 = vmatprep.subr.mxu0 0.0
        %3539 = vmatpush1.msra.mxu0 0.0
        %3540 = vmatprep.subr.mxu0 0.0
        %3541 = vmatpush1.msra.mxu0 0.0
        %3542 = vmatprep.subr.mxu0 0.0
        %3543 = vmatpush1.msra.mxu0 0.0
        %3544 = vmatprep.subr.mxu0 0.0
        %3545 = vmatpush1.msra.mxu0 0.0
        %3546 = vmatprep.subr.mxu0 0.0
        %3547 = vmatpush1.msra.mxu0 0.0
        %3548 = vmatprep.subr.mxu0 0.0
        %3549 = vmatpush1.msra.mxu0 0.0
        %3550 = vmatprep.subr.mxu0 0.0
        %3551 = vmatpush1.msra.mxu0 0.0
        %3552 = vmatprep.subr.mxu0 0.0
        %3553 = vmatpush1.msra.mxu0 0.0
        %3554 = vmatprep.subr.mxu0 0.0
        %3555 = vmatpush1.msra.mxu0 0.0
        %3556 = vmatprep.subr.mxu0 0.0
        %3557 = vmatpush1.msra.mxu0 0.0
        %3558 = vmatprep.subr.mxu0 0.0
        %3559 = vmatpush1.msra.mxu0 0.0
        %3560 = vmatprep.subr.mxu0 0.0
        %3561 = vmatpush1.msra.mxu0 0.0
        %3562 = vmatprep.subr.mxu0 0.0
        %3563 = vmatpush1.msra.mxu0 0.0
        %3564 = vmatprep.subr.mxu0 0.0
        %3565 = vmatpush1.msra.mxu0 0.0
        %3566 = vmatprep.subr.mxu0 0.0
        %3567 = vmatpush1.msra.mxu0 0.0
        %3568 = vmatprep.subr.mxu0 0.0
        %3569 = vmatpush1.msra.mxu0 0.0
        %3570 = vmatprep.subr.mxu0 0.0
        %3571 = vmatpush1.msra.mxu0 0.0
        %3572 = vmatprep.subr.mxu0 0.0
        %3573 = vmatpush1.msra.mxu0 0.0
        %3574 = vmatprep.subr.mxu0 0.0
        %3575 = vmatpush1.msra.mxu0 0.0
        %3576 = vmatprep.subr.mxu0 0.0
        %3577 = vmatpush1.msra.mxu0 0.0
        %3578 = vmatprep.subr.mxu0 0.0
        %3579 = vmatpush1.msra.mxu0 0.0
        %3580 = vmatprep.subr.mxu0 0.0
        %3581 = vmatpush1.msra.mxu0 0.0
        %3582 = vmatprep.mubr.f32.mxu0 0.0
        %3583 = vmatmul.mubr.f32.gmra.mrb[0].mxu0 %v3018
        %v3584 = vpop.f32.mrb[0].mxu0
        %v3585 = vadd.f32 %v3516, %v3584
        %v3586 = vpop.f32.mrb[0].mxu0
        %3587 = vdwg.mxu0
        %s3588 = scalar_lea.vmem %s7, 160
        %v3589 = vld [vmem:[%s3588] sm:$0xff]
        %v3590 = vld [vmem:[%s3588 + $0x8] sm:$0xff]
        %v3591 = vld [vmem:[%s3588 + $0x10] sm:$0xff]
        %v3592 = vld [vmem:[%s3588 + $0x18] sm:$0xff]
        %s3593 = scalar_lea.vmem %s10, 5
        %v3594 = vld [vmem:[%s3593] sm:$0x1]
        %v3596 = vlaneseq
        %v3597 = vshrl.u32 %v3596, 7
        %v3598 = vsub.s32 0, %v3597
        %v3599 = vrot.slane %v3594, %v3598
        %3601 = vmatprep.subr.mxu0 0.0
        %3602 = vmatpush1.msra.mxu0 %v3589
        %3603 = vmatprep.subr.mxu0 0.0
        %3604 = vmatpush1.msra.mxu0 %v3590
        %3605 = vmatprep.subr.mxu0 0.0
        %3606 = vmatpush1.msra.mxu0 %v3591
        %3607 = vmatprep.subr.mxu0 0.0
        %3608 = vmatpush1.msra.mxu0 %v3592
        %3609 = vmatprep.subr.mxu0 0.0
        %3610 = vmatpush1.msra.mxu0 0.0
        %3611 = vmatprep.subr.mxu0 0.0
        %3612 = vmatpush1.msra.mxu0 0.0
        %3613 = vmatprep.subr.mxu0 0.0
        %3614 = vmatpush1.msra.mxu0 0.0
        %3615 = vmatprep.subr.mxu0 0.0
        %3616 = vmatpush1.msra.mxu0 0.0
        %3617 = vmatprep.subr.mxu0 0.0
        %3618 = vmatpush1.msra.mxu0 0.0
        %3619 = vmatprep.subr.mxu0 0.0
        %3620 = vmatpush1.msra.mxu0 0.0
        %3621 = vmatprep.subr.mxu0 0.0
        %3622 = vmatpush1.msra.mxu0 0.0
        %3623 = vmatprep.subr.mxu0 0.0
        %3624 = vmatpush1.msra.mxu0 0.0
        %3625 = vmatprep.subr.mxu0 0.0
        %3626 = vmatpush1.msra.mxu0 0.0
        %3627 = vmatprep.subr.mxu0 0.0
        %3628 = vmatpush1.msra.mxu0 0.0
        %3629 = vmatprep.subr.mxu0 0.0
        %3630 = vmatpush1.msra.mxu0 0.0
        %3631 = vmatprep.subr.mxu0 0.0
        %3632 = vmatpush1.msra.mxu0 0.0
        %3633 = vmatprep.subr.mxu0 0.0
        %3634 = vmatpush1.msra.mxu0 0.0
        %3635 = vmatprep.subr.mxu0 0.0
        %3636 = vmatpush1.msra.mxu0 0.0
        %3637 = vmatprep.subr.mxu0 0.0
        %3638 = vmatpush1.msra.mxu0 0.0
        %3639 = vmatprep.subr.mxu0 0.0
        %3640 = vmatpush1.msra.mxu0 0.0
        %3641 = vmatprep.subr.mxu0 0.0
        %3642 = vmatpush1.msra.mxu0 0.0
        %3643 = vmatprep.subr.mxu0 0.0
        %3644 = vmatpush1.msra.mxu0 0.0
        %3645 = vmatprep.subr.mxu0 0.0
        %3646 = vmatpush1.msra.mxu0 0.0
        %3647 = vmatprep.subr.mxu0 0.0
        %3648 = vmatpush1.msra.mxu0 0.0
        %3649 = vmatprep.subr.mxu0 0.0
        %3650 = vmatpush1.msra.mxu0 0.0
        %3651 = vmatprep.subr.mxu0 0.0
        %3652 = vmatpush1.msra.mxu0 0.0
        %3653 = vmatprep.subr.mxu0 0.0
        %3654 = vmatpush1.msra.mxu0 0.0
        %3655 = vmatprep.subr.mxu0 0.0
        %3656 = vmatpush1.msra.mxu0 0.0
        %3657 = vmatprep.subr.mxu0 0.0
        %3658 = vmatpush1.msra.mxu0 0.0
        %3659 = vmatprep.subr.mxu0 0.0
        %3660 = vmatpush1.msra.mxu0 0.0
        %3661 = vmatprep.subr.mxu0 0.0
        %3662 = vmatpush1.msra.mxu0 0.0
        %3663 = vmatprep.subr.mxu0 0.0
        %3664 = vmatpush1.msra.mxu0 0.0
        %3665 = vmatprep.mubr.f32.mxu0 0.0
        %3666 = vmatmul.mubr.f32.gmra.mrb[0].mxu0 %v3018
        %v3667 = vpop.f32.mrb[0].mxu0
        %v3668 = vadd.f32 %v3599, %v3667
        %v3669 = vpop.f32.mrb[0].mxu0
        %3670 = vdwg.mxu0
        %v3672 = vsel %vm1052, %v3502, 0
        %v3675 = vsel %vm1052, %v3585, 0
        %3677 = vmatprep.subr.mxu0 0.0
        %3678 = vmatpush1.xpose.msra.mxu0 %v3675
        %3679 = vmatprep.subr.mxu0 0.0
        %3680 = vmatpush1.xpose.msra.mxu0 0.0
        %3681 = vmatprep.subr.mxu0 0.0
        %3682 = vmatpush1.xpose.msra.mxu0 0.0
        %3683 = vmatprep.subr.mxu0 0.0
        %3684 = vmatpush1.xpose.msra.mxu0 0.0
        %3685 = vmatprep.subr.mxu0 0.0
        %3686 = vmatpush1.xpose.msra.mxu0 0.0
        %3687 = vmatprep.subr.mxu0 0.0
        %3688 = vmatpush1.xpose.msra.mxu0 0.0
        %3689 = vmatprep.subr.mxu0 0.0
        %3690 = vmatpush1.xpose.msra.mxu0 0.0
        %3691 = vmatprep.subr.mxu0 0.0
        %3692 = vmatpush1.xpose.msra.mxu0 0.0
        %3693 = vmatprep.subr.mxu0 0.0
        %3694 = vmatpush1.xpose.msra.mxu0 0.0
        %3695 = vmatprep.subr.mxu0 0.0
        %3696 = vmatpush1.xpose.msra.mxu0 0.0
        %3697 = vmatprep.subr.mxu0 0.0
        %3698 = vmatpush1.xpose.msra.mxu0 0.0
        %3699 = vmatprep.subr.mxu0 0.0
        %3700 = vmatpush1.xpose.msra.mxu0 0.0
        %3701 = vmatprep.subr.mxu0 0.0
        %3702 = vmatpush1.xpose.msra.mxu0 0.0
        %3703 = vmatprep.subr.mxu0 0.0
        %3704 = vmatpush1.xpose.msra.mxu0 0.0
        %3705 = vmatprep.subr.mxu0 0.0
        %3706 = vmatpush1.xpose.msra.mxu0 0.0
        %3707 = vmatprep.subr.mxu0 0.0
        %3708 = vmatpush1.xpose.msra.mxu0 0.0
        %3709 = vmatprep.subr.mxu0 0.0
        %3710 = vmatpush1.xpose.msra.mxu0 0.0
        %3711 = vmatprep.subr.mxu0 0.0
        %3712 = vmatpush1.xpose.msra.mxu0 0.0
        %3713 = vmatprep.subr.mxu0 0.0
        %3714 = vmatpush1.xpose.msra.mxu0 0.0
        %3715 = vmatprep.subr.mxu0 0.0
        %3716 = vmatpush1.xpose.msra.mxu0 0.0
        %3717 = vmatprep.subr.mxu0 0.0
        %3718 = vmatpush1.xpose.msra.mxu0 0.0
        %3719 = vmatprep.subr.mxu0 0.0
        %3720 = vmatpush1.xpose.msra.mxu0 0.0
        %3721 = vmatprep.subr.mxu0 0.0
        %3722 = vmatpush1.xpose.msra.mxu0 0.0
        %3723 = vmatprep.subr.mxu0 0.0
        %3724 = vmatpush1.xpose.msra.mxu0 0.0
        %3725 = vmatprep.subr.mxu0 0.0
        %3726 = vmatpush1.xpose.msra.mxu0 0.0
        %3727 = vmatprep.subr.mxu0 0.0
        %3728 = vmatpush1.xpose.msra.mxu0 0.0
        %3729 = vmatprep.subr.mxu0 0.0
        %3730 = vmatpush1.xpose.msra.mxu0 0.0
        %3731 = vmatprep.subr.mxu0 0.0
        %3732 = vmatpush1.xpose.msra.mxu0 0.0
        %3733 = vmatprep.subr.mxu0 0.0
        %3734 = vmatpush1.xpose.msra.mxu0 0.0
        %3735 = vmatprep.subr.mxu0 0.0
        %3736 = vmatpush1.xpose.msra.mxu0 0.0
        %3737 = vmatprep.subr.mxu0 0.0
        %3738 = vmatpush1.xpose.msra.mxu0 0.0
        %3739 = vmatprep.subr.mxu0 0.0
        %3740 = vmatpush1.xpose.msra.mxu0 0.0
        %3741 = vmatprep.mubr.f32.mxu0 0.0
        %3742 = vmatmul.mubr.f32.gmra.mrb[0].mxu0 %v3672
        %v3743 = vpop.f32.mrb[0].mxu0
        %v3744 = vadd.f32 0.0, %v3743
        %v3745 = vpop.f32.mrb[0].mxu0
        %3746 = vdwg.mxu0
        %v3747 = vmul.f32 %v3744, 0.35355338
        %v3748 = vsel %vm1130, %v3747, -inf
        %3749 = vmax.xlane.f32.xlu0 %v3748
        %v3750 = vpop.xlane.xlu0 %3749
        %v3751 = vsub.f32 %v3747, %v3750
        %v3752 = vmul.f32 %v3751, 1.442695
        %v3753 = vpow.pop %v3752
        %v3754 = vsel %vm1130, %v3753, 0.0
        %3755 = vadd.xlane.f32.xlu0 %v3754
        %v3756 = vpop.xlane.xlu0 %3755
        %v3757 = vrcp.pop %v3756
        %v3758 = vmul.f32 %v3753, %v3757
        %v3760 = vsel %vm1142, %v3758, 0
        %v3763 = vsel %vm1146, %v3668, 0
        %3765 = vmatprep.subr.mxu0 0.0
        %3766 = vmatpush1.msra.mxu0 %v3763
        %3767 = vmatprep.subr.mxu0 0.0
        %3768 = vmatpush1.msra.mxu0 0.0
        %3769 = vmatprep.subr.mxu0 0.0
        %3770 = vmatpush1.msra.mxu0 0.0
        %3771 = vmatprep.subr.mxu0 0.0
        %3772 = vmatpush1.msra.mxu0 0.0
        %3773 = vmatprep.subr.mxu0 0.0
        %3774 = vmatpush1.msra.mxu0 0.0
        %3775 = vmatprep.subr.mxu0 0.0
        %3776 = vmatpush1.msra.mxu0 0.0
        %3777 = vmatprep.subr.mxu0 0.0
        %3778 = vmatpush1.msra.mxu0 0.0
        %3779 = vmatprep.subr.mxu0 0.0
        %3780 = vmatpush1.msra.mxu0 0.0
        %3781 = vmatprep.subr.mxu0 0.0
        %3782 = vmatpush1.msra.mxu0 0.0
        %3783 = vmatprep.subr.mxu0 0.0
        %3784 = vmatpush1.msra.mxu0 0.0
        %3785 = vmatprep.subr.mxu0 0.0
        %3786 = vmatpush1.msra.mxu0 0.0
        %3787 = vmatprep.subr.mxu0 0.0
        %3788 = vmatpush1.msra.mxu0 0.0
        %3789 = vmatprep.subr.mxu0 0.0
        %3790 = vmatpush1.msra.mxu0 0.0
        %3791 = vmatprep.subr.mxu0 0.0
        %3792 = vmatpush1.msra.mxu0 0.0
        %3793 = vmatprep.subr.mxu0 0.0
        %3794 = vmatpush1.msra.mxu0 0.0
        %3795 = vmatprep.subr.mxu0 0.0
        %3796 = vmatpush1.msra.mxu0 0.0
        %3797 = vmatprep.subr.mxu0 0.0
        %3798 = vmatpush1.msra.mxu0 0.0
        %3799 = vmatprep.subr.mxu0 0.0
        %3800 = vmatpush1.msra.mxu0 0.0
        %3801 = vmatprep.subr.mxu0 0.0
        %3802 = vmatpush1.msra.mxu0 0.0
        %3803 = vmatprep.subr.mxu0 0.0
        %3804 = vmatpush1.msra.mxu0 0.0
        %3805 = vmatprep.subr.mxu0 0.0
        %3806 = vmatpush1.msra.mxu0 0.0
        %3807 = vmatprep.subr.mxu0 0.0
        %3808 = vmatpush1.msra.mxu0 0.0
        %3809 = vmatprep.subr.mxu0 0.0
        %3810 = vmatpush1.msra.mxu0 0.0
        %3811 = vmatprep.subr.mxu0 0.0
        %3812 = vmatpush1.msra.mxu0 0.0
        %3813 = vmatprep.subr.mxu0 0.0
        %3814 = vmatpush1.msra.mxu0 0.0
        %3815 = vmatprep.subr.mxu0 0.0
        %3816 = vmatpush1.msra.mxu0 0.0
        %3817 = vmatprep.subr.mxu0 0.0
        %3818 = vmatpush1.msra.mxu0 0.0
        %3819 = vmatprep.subr.mxu0 0.0
        %3820 = vmatpush1.msra.mxu0 0.0
        %3821 = vmatprep.subr.mxu0 0.0
        %3822 = vmatpush1.msra.mxu0 0.0
        %3823 = vmatprep.subr.mxu0 0.0
        %3824 = vmatpush1.msra.mxu0 0.0
        %3825 = vmatprep.subr.mxu0 0.0
        %3826 = vmatpush1.msra.mxu0 0.0
        %3827 = vmatprep.subr.mxu0 0.0
        %3828 = vmatpush1.msra.mxu0 0.0
        %3829 = vmatprep.mubr.f32.mxu0 0.0
        %3830 = vmatmul.mubr.f32.gmra.mrb[0].mxu0 %v3760
        %v3831 = vpop.f32.mrb[0].mxu0
        %v3832 = vadd.f32 0.0, %v3831
        %v3833 = vpop.f32.mrb[0].mxu0
        %3834 = vdwg.mxu0
        %s3835 = scalar_lea.vmem %s11, 40
        %v3836 = vld [vmem:[%s3835] sm:$0xff]
        %v3838 = vsel %vm1052, %v3832, 0
        %3840 = vmatprep.subr.mxu0 0.0
        %3841 = vmatpush1.msra.mxu0 %v3836
        %3842 = vmatprep.subr.mxu0 0.0
        %3843 = vmatpush1.msra.mxu0 0.0
        %3844 = vmatprep.subr.mxu0 0.0
        %3845 = vmatpush1.msra.mxu0 0.0
        %3846 = vmatprep.subr.mxu0 0.0
        %3847 = vmatpush1.msra.mxu0 0.0
        %3848 = vmatprep.subr.mxu0 0.0
        %3849 = vmatpush1.msra.mxu0 0.0
        %3850 = vmatprep.subr.mxu0 0.0
        %3851 = vmatpush1.msra.mxu0 0.0
        %3852 = vmatprep.subr.mxu0 0.0
        %3853 = vmatpush1.msra.mxu0 0.0
        %3854 = vmatprep.subr.mxu0 0.0
        %3855 = vmatpush1.msra.mxu0 0.0
        %3856 = vmatprep.subr.mxu0 0.0
        %3857 = vmatpush1.msra.mxu0 0.0
        %3858 = vmatprep.subr.mxu0 0.0
        %3859 = vmatpush1.msra.mxu0 0.0
        %3860 = vmatprep.subr.mxu0 0.0
        %3861 = vmatpush1.msra.mxu0 0.0
        %3862 = vmatprep.subr.mxu0 0.0
        %3863 = vmatpush1.msra.mxu0 0.0
        %3864 = vmatprep.subr.mxu0 0.0
        %3865 = vmatpush1.msra.mxu0 0.0
        %3866 = vmatprep.subr.mxu0 0.0
        %3867 = vmatpush1.msra.mxu0 0.0
        %3868 = vmatprep.subr.mxu0 0.0
        %3869 = vmatpush1.msra.mxu0 0.0
        %3870 = vmatprep.subr.mxu0 0.0
        %3871 = vmatpush1.msra.mxu0 0.0
        %3872 = vmatprep.subr.mxu0 0.0
        %3873 = vmatpush1.msra.mxu0 0.0
        %3874 = vmatprep.subr.mxu0 0.0
        %3875 = vmatpush1.msra.mxu0 0.0
        %3876 = vmatprep.subr.mxu0 0.0
        %3877 = vmatpush1.msra.mxu0 0.0
        %3878 = vmatprep.subr.mxu0 0.0
        %3879 = vmatpush1.msra.mxu0 0.0
        %3880 = vmatprep.subr.mxu0 0.0
        %3881 = vmatpush1.msra.mxu0 0.0
        %3882 = vmatprep.subr.mxu0 0.0
        %3883 = vmatpush1.msra.mxu0 0.0
        %3884 = vmatprep.subr.mxu0 0.0
        %3885 = vmatpush1.msra.mxu0 0.0
        %3886 = vmatprep.subr.mxu0 0.0
        %3887 = vmatpush1.msra.mxu0 0.0
        %3888 = vmatprep.subr.mxu0 0.0
        %3889 = vmatpush1.msra.mxu0 0.0
        %3890 = vmatprep.subr.mxu0 0.0
        %3891 = vmatpush1.msra.mxu0 0.0
        %3892 = vmatprep.subr.mxu0 0.0
        %3893 = vmatpush1.msra.mxu0 0.0
        %3894 = vmatprep.subr.mxu0 0.0
        %3895 = vmatpush1.msra.mxu0 0.0
        %3896 = vmatprep.subr.mxu0 0.0
        %3897 = vmatpush1.msra.mxu0 0.0
        %3898 = vmatprep.subr.mxu0 0.0
        %3899 = vmatpush1.msra.mxu0 0.0
        %3900 = vmatprep.subr.mxu0 0.0
        %3901 = vmatpush1.msra.mxu0 0.0
        %3902 = vmatprep.subr.mxu0 0.0
        %3903 = vmatpush1.msra.mxu0 0.0
        %3904 = vmatprep.mubr.f32.mxu0 0.0
        %3905 = vmatmul.mubr.f32.gmra.mrb[0].mxu0 %v3838
        %v3906 = vpop.f32.mrb[0].mxu0
        %v3907 = vadd.f32 0.0, %v3906
        %v3908 = vpop.f32.mrb[0].mxu0
        %3909 = vdwg.mxu0
        %v3911 = vsel %vm1052, %v3417, 0
        %3913 = vmatprep.subr.mxu0 0.0
        %3914 = vmatpush1.msra.mxu0 %v3421
        %3915 = vmatprep.subr.mxu0 0.0
        %3916 = vmatpush1.msra.mxu0 0.0
        %3917 = vmatprep.subr.mxu0 0.0
        %3918 = vmatpush1.msra.mxu0 0.0
        %3919 = vmatprep.subr.mxu0 0.0
        %3920 = vmatpush1.msra.mxu0 0.0
        %3921 = vmatprep.subr.mxu0 0.0
        %3922 = vmatpush1.msra.mxu0 0.0
        %3923 = vmatprep.subr.mxu0 0.0
        %3924 = vmatpush1.msra.mxu0 0.0
        %3925 = vmatprep.subr.mxu0 0.0
        %3926 = vmatpush1.msra.mxu0 0.0
        %3927 = vmatprep.subr.mxu0 0.0
        %3928 = vmatpush1.msra.mxu0 0.0
        %3929 = vmatprep.subr.mxu0 0.0
        %3930 = vmatpush1.msra.mxu0 0.0
        %3931 = vmatprep.subr.mxu0 0.0
        %3932 = vmatpush1.msra.mxu0 0.0
        %3933 = vmatprep.subr.mxu0 0.0
        %3934 = vmatpush1.msra.mxu0 0.0
        %3935 = vmatprep.subr.mxu0 0.0
        %3936 = vmatpush1.msra.mxu0 0.0
        %3937 = vmatprep.subr.mxu0 0.0
        %3938 = vmatpush1.msra.mxu0 0.0
        %3939 = vmatprep.subr.mxu0 0.0
        %3940 = vmatpush1.msra.mxu0 0.0
        %3941 = vmatprep.subr.mxu0 0.0
        %3942 = vmatpush1.msra.mxu0 0.0
        %3943 = vmatprep.subr.mxu0 0.0
        %3944 = vmatpush1.msra.mxu0 0.0
        %3945 = vmatprep.subr.mxu0 0.0
        %3946 = vmatpush1.msra.mxu0 0.0
        %3947 = vmatprep.subr.mxu0 0.0
        %3948 = vmatpush1.msra.mxu0 0.0
        %3949 = vmatprep.subr.mxu0 0.0
        %3950 = vmatpush1.msra.mxu0 0.0
        %3951 = vmatprep.subr.mxu0 0.0
        %3952 = vmatpush1.msra.mxu0 0.0
        %3953 = vmatprep.subr.mxu0 0.0
        %3954 = vmatpush1.msra.mxu0 0.0
        %3955 = vmatprep.subr.mxu0 0.0
        %3956 = vmatpush1.msra.mxu0 0.0
        %3957 = vmatprep.subr.mxu0 0.0
        %3958 = vmatpush1.msra.mxu0 0.0
        %3959 = vmatprep.subr.mxu0 0.0
        %3960 = vmatpush1.msra.mxu0 0.0
        %3961 = vmatprep.subr.mxu0 0.0
        %3962 = vmatpush1.msra.mxu0 0.0
        %3963 = vmatprep.subr.mxu0 0.0
        %3964 = vmatpush1.msra.mxu0 0.0
        %3965 = vmatprep.subr.mxu0 0.0
        %3966 = vmatpush1.msra.mxu0 0.0
        %3967 = vmatprep.subr.mxu0 0.0
        %3968 = vmatpush1.msra.mxu0 0.0
        %3969 = vmatprep.subr.mxu0 0.0
        %3970 = vmatpush1.msra.mxu0 0.0
        %3971 = vmatprep.subr.mxu0 0.0
        %3972 = vmatpush1.msra.mxu0 0.0
        %3973 = vmatprep.subr.mxu0 0.0
        %3974 = vmatpush1.msra.mxu0 0.0
        %3975 = vmatprep.subr.mxu0 0.0
        %3976 = vmatpush1.msra.mxu0 0.0
        %3977 = vmatprep.mubr.f32.mxu0 0.0
        %3978 = vmatmul.mubr.f32.gmra.mrb[0].mxu0 %v3911
        %v3979 = vpop.f32.mrb[0].mxu0
        %v3980 = vadd.f32 %v3907, %v3979
        %v3981 = vpop.f32.mrb[0].mxu0
        %3982 = vdwg.mxu0
        %s3983 = scalar_lea.vmem %s5, 192
        %v3984 = vld [vmem:[%s3983] sm:$0xff]
        %v3985 = vld [vmem:[%s3983 + $0x8] sm:$0xff]
        %v3986 = vld [vmem:[%s3983 + $0x10] sm:$0xff]
        %v3987 = vld [vmem:[%s3983 + $0x18] sm:$0xff]
        %s3988 = scalar_lea.vmem %s8, 6
        %v3989 = vld [vmem:[%s3988] sm:$0x1]
        %v3991 = vlaneseq
        %v3992 = vshrl.u32 %v3991, 7
        %v3993 = vsub.s32 0, %v3992
        %v3994 = vrot.slane %v3989, %v3993
        %3996 = vmatprep.subr.mxu0 0.0
        %3997 = vmatpush1.msra.mxu0 %v3984
        %3998 = vmatprep.subr.mxu0 0.0
        %3999 = vmatpush1.msra.mxu0 %v3985
        %4000 = vmatprep.subr.mxu0 0.0
        %4001 = vmatpush1.msra.mxu0 %v3986
        %4002 = vmatprep.subr.mxu0 0.0
        %4003 = vmatpush1.msra.mxu0 %v3987
        %4004 = vmatprep.subr.mxu0 0.0
        %4005 = vmatpush1.msra.mxu0 0.0
        %4006 = vmatprep.subr.mxu0 0.0
        %4007 = vmatpush1.msra.mxu0 0.0
        %4008 = vmatprep.subr.mxu0 0.0
        %4009 = vmatpush1.msra.mxu0 0.0
        %4010 = vmatprep.subr.mxu0 0.0
        %4011 = vmatpush1.msra.mxu0 0.0
        %4012 = vmatprep.subr.mxu0 0.0
        %4013 = vmatpush1.msra.mxu0 0.0
        %4014 = vmatprep.subr.mxu0 0.0
        %4015 = vmatpush1.msra.mxu0 0.0
        %4016 = vmatprep.subr.mxu0 0.0
        %4017 = vmatpush1.msra.mxu0 0.0
        %4018 = vmatprep.subr.mxu0 0.0
        %4019 = vmatpush1.msra.mxu0 0.0
        %4020 = vmatprep.subr.mxu0 0.0
        %4021 = vmatpush1.msra.mxu0 0.0
        %4022 = vmatprep.subr.mxu0 0.0
        %4023 = vmatpush1.msra.mxu0 0.0
        %4024 = vmatprep.subr.mxu0 0.0
        %4025 = vmatpush1.msra.mxu0 0.0
        %4026 = vmatprep.subr.mxu0 0.0
        %4027 = vmatpush1.msra.mxu0 0.0
        %4028 = vmatprep.subr.mxu0 0.0
        %4029 = vmatpush1.msra.mxu0 0.0
        %4030 = vmatprep.subr.mxu0 0.0
        %4031 = vmatpush1.msra.mxu0 0.0
        %4032 = vmatprep.subr.mxu0 0.0
        %4033 = vmatpush1.msra.mxu0 0.0
        %4034 = vmatprep.subr.mxu0 0.0
        %4035 = vmatpush1.msra.mxu0 0.0
        %4036 = vmatprep.subr.mxu0 0.0
        %4037 = vmatpush1.msra.mxu0 0.0
        %4038 = vmatprep.subr.mxu0 0.0
        %4039 = vmatpush1.msra.mxu0 0.0
        %4040 = vmatprep.subr.mxu0 0.0
        %4041 = vmatpush1.msra.mxu0 0.0
        %4042 = vmatprep.subr.mxu0 0.0
        %4043 = vmatpush1.msra.mxu0 0.0
        %4044 = vmatprep.subr.mxu0 0.0
        %4045 = vmatpush1.msra.mxu0 0.0
        %4046 = vmatprep.subr.mxu0 0.0
        %4047 = vmatpush1.msra.mxu0 0.0
        %4048 = vmatprep.subr.mxu0 0.0
        %4049 = vmatpush1.msra.mxu0 0.0
        %4050 = vmatprep.subr.mxu0 0.0
        %4051 = vmatpush1.msra.mxu0 0.0
        %4052 = vmatprep.subr.mxu0 0.0
        %4053 = vmatpush1.msra.mxu0 0.0
        %4054 = vmatprep.subr.mxu0 0.0
        %4055 = vmatpush1.msra.mxu0 0.0
        %4056 = vmatprep.subr.mxu0 0.0
        %4057 = vmatpush1.msra.mxu0 0.0
        %4058 = vmatprep.subr.mxu0 0.0
        %4059 = vmatpush1.msra.mxu0 0.0
        %4060 = vmatprep.mubr.f32.mxu0 0.0
        %4061 = vmatmul.mubr.f32.gmra.mrb[0].mxu0 %v3018
        %v4062 = vpop.f32.mrb[0].mxu0
        %v4063 = vadd.f32 %v3994, %v4062
        %v4064 = vpop.f32.mrb[0].mxu0
        %4065 = vdwg.mxu0
        %s4066 = scalar_lea.vmem %s6, 192
        %v4067 = vld [vmem:[%s4066] sm:$0xff]
        %v4068 = vld [vmem:[%s4066 + $0x8] sm:$0xff]
        %v4069 = vld [vmem:[%s4066 + $0x10] sm:$0xff]
        %v4070 = vld [vmem:[%s4066 + $0x18] sm:$0xff]
        %s4071 = scalar_lea.vmem %s9, 6
        %v4072 = vld [vmem:[%s4071] sm:$0x1]
        %v4074 = vlaneseq
        %v4075 = vshrl.u32 %v4074, 7
        %v4076 = vsub.s32 0, %v4075
        %v4077 = vrot.slane %v4072, %v4076
        %4079 = vmatprep.subr.mxu0 0.0
        %4080 = vmatpush1.msra.mxu0 %v4067
        %4081 = vmatprep.subr.mxu0 0.0
        %4082 = vmatpush1.msra.mxu0 %v4068
        %4083 = vmatprep.subr.mxu0 0.0
        %4084 = vmatpush1.msra.mxu0 %v4069
        %4085 = vmatprep.subr.mxu0 0.0
        %4086 = vmatpush1.msra.mxu0 %v4070
        %4087 = vmatprep.subr.mxu0 0.0
        %4088 = vmatpush1.msra.mxu0 0.0
        %4089 = vmatprep.subr.mxu0 0.0
        %4090 = vmatpush1.msra.mxu0 0.0
        %4091 = vmatprep.subr.mxu0 0.0
        %4092 = vmatpush1.msra.mxu0 0.0
        %4093 = vmatprep.subr.mxu0 0.0
        %4094 = vmatpush1.msra.mxu0 0.0
        %4095 = vmatprep.subr.mxu0 0.0
        %4096 = vmatpush1.msra.mxu0 0.0
        %4097 = vmatprep.subr.mxu0 0.0
        %4098 = vmatpush1.msra.mxu0 0.0
        %4099 = vmatprep.subr.mxu0 0.0
        %4100 = vmatpush1.msra.mxu0 0.0
        %4101 = vmatprep.subr.mxu0 0.0
        %4102 = vmatpush1.msra.mxu0 0.0
        %4103 = vmatprep.subr.mxu0 0.0
        %4104 = vmatpush1.msra.mxu0 0.0
        %4105 = vmatprep.subr.mxu0 0.0
        %4106 = vmatpush1.msra.mxu0 0.0
        %4107 = vmatprep.subr.mxu0 0.0
        %4108 = vmatpush1.msra.mxu0 0.0
        %4109 = vmatprep.subr.mxu0 0.0
        %4110 = vmatpush1.msra.mxu0 0.0
        %4111 = vmatprep.subr.mxu0 0.0
        %4112 = vmatpush1.msra.mxu0 0.0
        %4113 = vmatprep.subr.mxu0 0.0
        %4114 = vmatpush1.msra.mxu0 0.0
        %4115 = vmatprep.subr.mxu0 0.0
        %4116 = vmatpush1.msra.mxu0 0.0
        %4117 = vmatprep.subr.mxu0 0.0
        %4118 = vmatpush1.msra.mxu0 0.0
        %4119 = vmatprep.subr.mxu0 0.0
        %4120 = vmatpush1.msra.mxu0 0.0
        %4121 = vmatprep.subr.mxu0 0.0
        %4122 = vmatpush1.msra.mxu0 0.0
        %4123 = vmatprep.subr.mxu0 0.0
        %4124 = vmatpush1.msra.mxu0 0.0
        %4125 = vmatprep.subr.mxu0 0.0
        %4126 = vmatpush1.msra.mxu0 0.0
        %4127 = vmatprep.subr.mxu0 0.0
        %4128 = vmatpush1.msra.mxu0 0.0
        %4129 = vmatprep.subr.mxu0 0.0
        %4130 = vmatpush1.msra.mxu0 0.0
        %4131 = vmatprep.subr.mxu0 0.0
        %4132 = vmatpush1.msra.mxu0 0.0
        %4133 = vmatprep.subr.mxu0 0.0
        %4134 = vmatpush1.msra.mxu0 0.0
        %4135 = vmatprep.subr.mxu0 0.0
        %4136 = vmatpush1.msra.mxu0 0.0
        %4137 = vmatprep.subr.mxu0 0.0
        %4138 = vmatpush1.msra.mxu0 0.0
        %4139 = vmatprep.subr.mxu0 0.0
        %4140 = vmatpush1.msra.mxu0 0.0
        %4141 = vmatprep.subr.mxu0 0.0
        %4142 = vmatpush1.msra.mxu0 0.0
        %4143 = vmatprep.mubr.f32.mxu0 0.0
        %4144 = vmatmul.mubr.f32.gmra.mrb[0].mxu0 %v3018
        %v4145 = vpop.f32.mrb[0].mxu0
        %v4146 = vadd.f32 %v4077, %v4145
        %v4147 = vpop.f32.mrb[0].mxu0
        %4148 = vdwg.mxu0
        %s4149 = scalar_lea.vmem %s7, 192
        %v4150 = vld [vmem:[%s4149] sm:$0xff]
        %v4151 = vld [vmem:[%s4149 + $0x8] sm:$0xff]
        %v4152 = vld [vmem:[%s4149 + $0x10] sm:$0xff]
        %v4153 = vld [vmem:[%s4149 + $0x18] sm:$0xff]
        %s4154 = scalar_lea.vmem %s10, 6
        %v4155 = vld [vmem:[%s4154] sm:$0x1]
        %v4157 = vlaneseq
        %v4158 = vshrl.u32 %v4157, 7
        %v4159 = vsub.s32 0, %v4158
        %v4160 = vrot.slane %v4155, %v4159
        %4162 = vmatprep.subr.mxu0 0.0
        %4163 = vmatpush1.msra.mxu0 %v4150
        %4164 = vmatprep.subr.mxu0 0.0
        %4165 = vmatpush1.msra.mxu0 %v4151
        %4166 = vmatprep.subr.mxu0 0.0
        %4167 = vmatpush1.msra.mxu0 %v4152
        %4168 = vmatprep.subr.mxu0 0.0
        %4169 = vmatpush1.msra.mxu0 %v4153
        %4170 = vmatprep.subr.mxu0 0.0
        %4171 = vmatpush1.msra.mxu0 0.0
        %4172 = vmatprep.subr.mxu0 0.0
        %4173 = vmatpush1.msra.mxu0 0.0
        %4174 = vmatprep.subr.mxu0 0.0
        %4175 = vmatpush1.msra.mxu0 0.0
        %4176 = vmatprep.subr.mxu0 0.0
        %4177 = vmatpush1.msra.mxu0 0.0
        %4178 = vmatprep.subr.mxu0 0.0
        %4179 = vmatpush1.msra.mxu0 0.0
        %4180 = vmatprep.subr.mxu0 0.0
        %4181 = vmatpush1.msra.mxu0 0.0
        %4182 = vmatprep.subr.mxu0 0.0
        %4183 = vmatpush1.msra.mxu0 0.0
        %4184 = vmatprep.subr.mxu0 0.0
        %4185 = vmatpush1.msra.mxu0 0.0
        %4186 = vmatprep.subr.mxu0 0.0
        %4187 = vmatpush1.msra.mxu0 0.0
        %4188 = vmatprep.subr.mxu0 0.0
        %4189 = vmatpush1.msra.mxu0 0.0
        %4190 = vmatprep.subr.mxu0 0.0
        %4191 = vmatpush1.msra.mxu0 0.0
        %4192 = vmatprep.subr.mxu0 0.0
        %4193 = vmatpush1.msra.mxu0 0.0
        %4194 = vmatprep.subr.mxu0 0.0
        %4195 = vmatpush1.msra.mxu0 0.0
        %4196 = vmatprep.subr.mxu0 0.0
        %4197 = vmatpush1.msra.mxu0 0.0
        %4198 = vmatprep.subr.mxu0 0.0
        %4199 = vmatpush1.msra.mxu0 0.0
        %4200 = vmatprep.subr.mxu0 0.0
        %4201 = vmatpush1.msra.mxu0 0.0
        %4202 = vmatprep.subr.mxu0 0.0
        %4203 = vmatpush1.msra.mxu0 0.0
        %4204 = vmatprep.subr.mxu0 0.0
        %4205 = vmatpush1.msra.mxu0 0.0
        %4206 = vmatprep.subr.mxu0 0.0
        %4207 = vmatpush1.msra.mxu0 0.0
        %4208 = vmatprep.subr.mxu0 0.0
        %4209 = vmatpush1.msra.mxu0 0.0
        %4210 = vmatprep.subr.mxu0 0.0
        %4211 = vmatpush1.msra.mxu0 0.0
        %4212 = vmatprep.subr.mxu0 0.0
        %4213 = vmatpush1.msra.mxu0 0.0
        %4214 = vmatprep.subr.mxu0 0.0
        %4215 = vmatpush1.msra.mxu0 0.0
        %4216 = vmatprep.subr.mxu0 0.0
        %4217 = vmatpush1.msra.mxu0 0.0
        %4218 = vmatprep.subr.mxu0 0.0
        %4219 = vmatpush1.msra.mxu0 0.0
        %4220 = vmatprep.subr.mxu0 0.0
        %4221 = vmatpush1.msra.mxu0 0.0
        %4222 = vmatprep.subr.mxu0 0.0
        %4223 = vmatpush1.msra.mxu0 0.0
        %4224 = vmatprep.subr.mxu0 0.0
        %4225 = vmatpush1.msra.mxu0 0.0
        %4226 = vmatprep.mubr.f32.mxu0 0.0
        %4227 = vmatmul.mubr.f32.gmra.mrb[0].mxu0 %v3018
        %v4228 = vpop.f32.mrb[0].mxu0
        %v4229 = vadd.f32 %v4160, %v4228
        %v4230 = vpop.f32.mrb[0].mxu0
        %4231 = vdwg.mxu0
        %v4233 = vsel %vm1052, %v4063, 0
        %v4236 = vsel %vm1052, %v4146, 0
        %4238 = vmatprep.subr.mxu0 0.0
        %4239 = vmatpush1.xpose.msra.mxu0 %v4236
        %4240 = vmatprep.subr.mxu0 0.0
        %4241 = vmatpush1.xpose.msra.mxu0 0.0
        %4242 = vmatprep.subr.mxu0 0.0
        %4243 = vmatpush1.xpose.msra.mxu0 0.0
        %4244 = vmatprep.subr.mxu0 0.0
        %4245 = vmatpush1.xpose.msra.mxu0 0.0
        %4246 = vmatprep.subr.mxu0 0.0
        %4247 = vmatpush1.xpose.msra.mxu0 0.0
        %4248 = vmatprep.subr.mxu0 0.0
        %4249 = vmatpush1.xpose.msra.mxu0 0.0
        %4250 = vmatprep.subr.mxu0 0.0
        %4251 = vmatpush1.xpose.msra.mxu0 0.0
        %4252 = vmatprep.subr.mxu0 0.0
        %4253 = vmatpush1.xpose.msra.mxu0 0.0
        %4254 = vmatprep.subr.mxu0 0.0
        %4255 = vmatpush1.xpose.msra.mxu0 0.0
        %4256 = vmatprep.subr.mxu0 0.0
        %4257 = vmatpush1.xpose.msra.mxu0 0.0
        %4258 = vmatprep.subr.mxu0 0.0
        %4259 = vmatpush1.xpose.msra.mxu0 0.0
        %4260 = vmatprep.subr.mxu0 0.0
        %4261 = vmatpush1.xpose.msra.mxu0 0.0
        %4262 = vmatprep.subr.mxu0 0.0
        %4263 = vmatpush1.xpose.msra.mxu0 0.0
        %4264 = vmatprep.subr.mxu0 0.0
        %4265 = vmatpush1.xpose.msra.mxu0 0.0
        %4266 = vmatprep.subr.mxu0 0.0
        %4267 = vmatpush1.xpose.msra.mxu0 0.0
        %4268 = vmatprep.subr.mxu0 0.0
        %4269 = vmatpush1.xpose.msra.mxu0 0.0
        %4270 = vmatprep.subr.mxu0 0.0
        %4271 = vmatpush1.xpose.msra.mxu0 0.0
        %4272 = vmatprep.subr.mxu0 0.0
        %4273 = vmatpush1.xpose.msra.mxu0 0.0
        %4274 = vmatprep.subr.mxu0 0.0
        %4275 = vmatpush1.xpose.msra.mxu0 0.0
        %4276 = vmatprep.subr.mxu0 0.0
        %4277 = vmatpush1.xpose.msra.mxu0 0.0
        %4278 = vmatprep.subr.mxu0 0.0
        %4279 = vmatpush1.xpose.msra.mxu0 0.0
        %4280 = vmatprep.subr.mxu0 0.0
        %4281 = vmatpush1.xpose.msra.mxu0 0.0
        %4282 = vmatprep.subr.mxu0 0.0
        %4283 = vmatpush1.xpose.msra.mxu0 0.0
        %4284 = vmatprep.subr.mxu0 0.0
        %4285 = vmatpush1.xpose.msra.mxu0 0.0
        %4286 = vmatprep.subr.mxu0 0.0
        %4287 = vmatpush1.xpose.msra.mxu0 0.0
        %4288 = vmatprep.subr.mxu0 0.0
        %4289 = vmatpush1.xpose.msra.mxu0 0.0
        %4290 = vmatprep.subr.mxu0 0.0
        %4291 = vmatpush1.xpose.msra.mxu0 0.0
        %4292 = vmatprep.subr.mxu0 0.0
        %4293 = vmatpush1.xpose.msra.mxu0 0.0
        %4294 = vmatprep.subr.mxu0 0.0
        %4295 = vmatpush1.xpose.msra.mxu0 0.0
        %4296 = vmatprep.subr.mxu0 0.0
        %4297 = vmatpush1.xpose.msra.mxu0 0.0
        %4298 = vmatprep.subr.mxu0 0.0
        %4299 = vmatpush1.xpose.msra.mxu0 0.0
        %4300 = vmatprep.subr.mxu0 0.0
        %4301 = vmatpush1.xpose.msra.mxu0 0.0
        %4302 = vmatprep.mubr.f32.mxu0 0.0
        %4303 = vmatmul.mubr.f32.gmra.mrb[0].mxu0 %v4233
        %v4304 = vpop.f32.mrb[0].mxu0
        %v4305 = vadd.f32 0.0, %v4304
        %v4306 = vpop.f32.mrb[0].mxu0
        %4307 = vdwg.mxu0
        %v4308 = vmul.f32 %v4305, 0.35355338
        %v4309 = vsel %vm1130, %v4308, -inf
        %4310 = vmax.xlane.f32.xlu0 %v4309
        %v4311 = vpop.xlane.xlu0 %4310
        %v4312 = vsub.f32 %v4308, %v4311
        %v4313 = vmul.f32 %v4312, 1.442695
        %v4314 = vpow.pop %v4313
        %v4315 = vsel %vm1130, %v4314, 0.0
        %4316 = vadd.xlane.f32.xlu0 %v4315
        %v4317 = vpop.xlane.xlu0 %4316
        %v4318 = vrcp.pop %v4317
        %v4319 = vmul.f32 %v4314, %v4318
        %v4321 = vsel %vm1142, %v4319, 0
        %v4324 = vsel %vm1146, %v4229, 0
        %4326 = vmatprep.subr.mxu0 0.0
        %4327 = vmatpush1.msra.mxu0 %v4324
        %4328 = vmatprep.subr.mxu0 0.0
        %4329 = vmatpush1.msra.mxu0 0.0
        %4330 = vmatprep.subr.mxu0 0.0
        %4331 = vmatpush1.msra.mxu0 0.0
        %4332 = vmatprep.subr.mxu0 0.0
        %4333 = vmatpush1.msra.mxu0 0.0
        %4334 = vmatprep.subr.mxu0 0.0
        %4335 = vmatpush1.msra.mxu0 0.0
        %4336 = vmatprep.subr.mxu0 0.0
        %4337 = vmatpush1.msra.mxu0 0.0
        %4338 = vmatprep.subr.mxu0 0.0
        %4339 = vmatpush1.msra.mxu0 0.0
        %4340 = vmatprep.subr.mxu0 0.0
        %4341 = vmatpush1.msra.mxu0 0.0
        %4342 = vmatprep.subr.mxu0 0.0
        %4343 = vmatpush1.msra.mxu0 0.0
        %4344 = vmatprep.subr.mxu0 0.0
        %4345 = vmatpush1.msra.mxu0 0.0
        %4346 = vmatprep.subr.mxu0 0.0
        %4347 = vmatpush1.msra.mxu0 0.0
        %4348 = vmatprep.subr.mxu0 0.0
        %4349 = vmatpush1.msra.mxu0 0.0
        %4350 = vmatprep.subr.mxu0 0.0
        %4351 = vmatpush1.msra.mxu0 0.0
        %4352 = vmatprep.subr.mxu0 0.0
        %4353 = vmatpush1.msra.mxu0 0.0
        %4354 = vmatprep.subr.mxu0 0.0
        %4355 = vmatpush1.msra.mxu0 0.0
        %4356 = vmatprep.subr.mxu0 0.0
        %4357 = vmatpush1.msra.mxu0 0.0
        %4358 = vmatprep.subr.mxu0 0.0
        %4359 = vmatpush1.msra.mxu0 0.0
        %4360 = vmatprep.subr.mxu0 0.0
        %4361 = vmatpush1.msra.mxu0 0.0
        %4362 = vmatprep.subr.mxu0 0.0
        %4363 = vmatpush1.msra.mxu0 0.0
        %4364 = vmatprep.subr.mxu0 0.0
        %4365 = vmatpush1.msra.mxu0 0.0
        %4366 = vmatprep.subr.mxu0 0.0
        %4367 = vmatpush1.msra.mxu0 0.0
        %4368 = vmatprep.subr.mxu0 0.0
        %4369 = vmatpush1.msra.mxu0 0.0
        %4370 = vmatprep.subr.mxu0 0.0
        %4371 = vmatpush1.msra.mxu0 0.0
        %4372 = vmatprep.subr.mxu0 0.0
        %4373 = vmatpush1.msra.mxu0 0.0
        %4374 = vmatprep.subr.mxu0 0.0
        %4375 = vmatpush1.msra.mxu0 0.0
        %4376 = vmatprep.subr.mxu0 0.0
        %4377 = vmatpush1.msra.mxu0 0.0
        %4378 = vmatprep.subr.mxu0 0.0
        %4379 = vmatpush1.msra.mxu0 0.0
        %4380 = vmatprep.subr.mxu0 0.0
        %4381 = vmatpush1.msra.mxu0 0.0
        %4382 = vmatprep.subr.mxu0 0.0
        %4383 = vmatpush1.msra.mxu0 0.0
        %4384 = vmatprep.subr.mxu0 0.0
        %4385 = vmatpush1.msra.mxu0 0.0
        %4386 = vmatprep.subr.mxu0 0.0
        %4387 = vmatpush1.msra.mxu0 0.0
        %4388 = vmatprep.subr.mxu0 0.0
        %4389 = vmatpush1.msra.mxu0 0.0
        %4390 = vmatprep.mubr.f32.mxu0 0.0
        %4391 = vmatmul.mubr.f32.gmra.mrb[0].mxu0 %v4321
        %v4392 = vpop.f32.mrb[0].mxu0
        %v4393 = vadd.f32 0.0, %v4392
        %v4394 = vpop.f32.mrb[0].mxu0
        %4395 = vdwg.mxu0
        %s4396 = scalar_lea.vmem %s11, 48
        %v4397 = vld [vmem:[%s4396] sm:$0xff]
        %v4399 = vsel %vm1052, %v4393, 0
        %4401 = vmatprep.subr.mxu0 0.0
        %4402 = vmatpush1.msra.mxu0 %v4397
        %4403 = vmatprep.subr.mxu0 0.0
        %4404 = vmatpush1.msra.mxu0 0.0
        %4405 = vmatprep.subr.mxu0 0.0
        %4406 = vmatpush1.msra.mxu0 0.0
        %4407 = vmatprep.subr.mxu0 0.0
        %4408 = vmatpush1.msra.mxu0 0.0
        %4409 = vmatprep.subr.mxu0 0.0
        %4410 = vmatpush1.msra.mxu0 0.0
        %4411 = vmatprep.subr.mxu0 0.0
        %4412 = vmatpush1.msra.mxu0 0.0
        %4413 = vmatprep.subr.mxu0 0.0
        %4414 = vmatpush1.msra.mxu0 0.0
        %4415 = vmatprep.subr.mxu0 0.0
        %4416 = vmatpush1.msra.mxu0 0.0
        %4417 = vmatprep.subr.mxu0 0.0
        %4418 = vmatpush1.msra.mxu0 0.0
        %4419 = vmatprep.subr.mxu0 0.0
        %4420 = vmatpush1.msra.mxu0 0.0
        %4421 = vmatprep.subr.mxu0 0.0
        %4422 = vmatpush1.msra.mxu0 0.0
        %4423 = vmatprep.subr.mxu0 0.0
        %4424 = vmatpush1.msra.mxu0 0.0
        %4425 = vmatprep.subr.mxu0 0.0
        %4426 = vmatpush1.msra.mxu0 0.0
        %4427 = vmatprep.subr.mxu0 0.0
        %4428 = vmatpush1.msra.mxu0 0.0
        %4429 = vmatprep.subr.mxu0 0.0
        %4430 = vmatpush1.msra.mxu0 0.0
        %4431 = vmatprep.subr.mxu0 0.0
        %4432 = vmatpush1.msra.mxu0 0.0
        %4433 = vmatprep.subr.mxu0 0.0
        %4434 = vmatpush1.msra.mxu0 0.0
        %4435 = vmatprep.subr.mxu0 0.0
        %4436 = vmatpush1.msra.mxu0 0.0
        %4437 = vmatprep.subr.mxu0 0.0
        %4438 = vmatpush1.msra.mxu0 0.0
        %4439 = vmatprep.subr.mxu0 0.0
        %4440 = vmatpush1.msra.mxu0 0.0
        %4441 = vmatprep.subr.mxu0 0.0
        %4442 = vmatpush1.msra.mxu0 0.0
        %4443 = vmatprep.subr.mxu0 0.0
        %4444 = vmatpush1.msra.mxu0 0.0
        %4445 = vmatprep.subr.mxu0 0.0
        %4446 = vmatpush1.msra.mxu0 0.0
        %4447 = vmatprep.subr.mxu0 0.0
        %4448 = vmatpush1.msra.mxu0 0.0
        %4449 = vmatprep.subr.mxu0 0.0
        %4450 = vmatpush1.msra.mxu0 0.0
        %4451 = vmatprep.subr.mxu0 0.0
        %4452 = vmatpush1.msra.mxu0 0.0
        %4453 = vmatprep.subr.mxu0 0.0
        %4454 = vmatpush1.msra.mxu0 0.0
        %4455 = vmatprep.subr.mxu0 0.0
        %4456 = vmatpush1.msra.mxu0 0.0
        %4457 = vmatprep.subr.mxu0 0.0
        %4458 = vmatpush1.msra.mxu0 0.0
        %4459 = vmatprep.subr.mxu0 0.0
        %4460 = vmatpush1.msra.mxu0 0.0
        %4461 = vmatprep.subr.mxu0 0.0
        %4462 = vmatpush1.msra.mxu0 0.0
        %4463 = vmatprep.subr.mxu0 0.0
        %4464 = vmatpush1.msra.mxu0 0.0
        %4465 = vmatprep.mubr.f32.mxu0 0.0
        %4466 = vmatmul.mubr.f32.gmra.mrb[0].mxu0 %v4399
        %v4467 = vpop.f32.mrb[0].mxu0
        %v4468 = vadd.f32 0.0, %v4467
        %v4469 = vpop.f32.mrb[0].mxu0
        %4470 = vdwg.mxu0
        %v4471 = vadd.f32 %v3980, %v4468
        %s4472 = scalar_lea.vmem %s5, 224
        %v4473 = vld [vmem:[%s4472] sm:$0xff]
        %v4474 = vld [vmem:[%s4472 + $0x8] sm:$0xff]
        %v4475 = vld [vmem:[%s4472 + $0x10] sm:$0xff]
        %v4476 = vld [vmem:[%s4472 + $0x18] sm:$0xff]
        %s4477 = scalar_lea.vmem %s8, 7
        %v4478 = vld [vmem:[%s4477] sm:$0x1]
        %v4480 = vlaneseq
        %v4481 = vshrl.u32 %v4480, 7
        %v4482 = vsub.s32 0, %v4481
        %v4483 = vrot.slane %v4478, %v4482
        %4485 = vmatprep.subr.mxu0 0.0
        %4486 = vmatpush1.msra.mxu0 %v4473
        %4487 = vmatprep.subr.mxu0 0.0
        %4488 = vmatpush1.msra.mxu0 %v4474
        %4489 = vmatprep.subr.mxu0 0.0
        %4490 = vmatpush1.msra.mxu0 %v4475
        %4491 = vmatprep.subr.mxu0 0.0
        %4492 = vmatpush1.msra.mxu0 %v4476
        %4493 = vmatprep.subr.mxu0 0.0
        %4494 = vmatpush1.msra.mxu0 0.0
        %4495 = vmatprep.subr.mxu0 0.0
        %4496 = vmatpush1.msra.mxu0 0.0
        %4497 = vmatprep.subr.mxu0 0.0
        %4498 = vmatpush1.msra.mxu0 0.0
        %4499 = vmatprep.subr.mxu0 0.0
        %4500 = vmatpush1.msra.mxu0 0.0
        %4501 = vmatprep.subr.mxu0 0.0
        %4502 = vmatpush1.msra.mxu0 0.0
        %4503 = vmatprep.subr.mxu0 0.0
        %4504 = vmatpush1.msra.mxu0 0.0
        %4505 = vmatprep.subr.mxu0 0.0
        %4506 = vmatpush1.msra.mxu0 0.0
        %4507 = vmatprep.subr.mxu0 0.0
        %4508 = vmatpush1.msra.mxu0 0.0
        %4509 = vmatprep.subr.mxu0 0.0
        %4510 = vmatpush1.msra.mxu0 0.0
        %4511 = vmatprep.subr.mxu0 0.0
        %4512 = vmatpush1.msra.mxu0 0.0
        %4513 = vmatprep.subr.mxu0 0.0
        %4514 = vmatpush1.msra.mxu0 0.0
        %4515 = vmatprep.subr.mxu0 0.0
        %4516 = vmatpush1.msra.mxu0 0.0
        %4517 = vmatprep.subr.mxu0 0.0
        %4518 = vmatpush1.msra.mxu0 0.0
        %4519 = vmatprep.subr.mxu0 0.0
        %4520 = vmatpush1.msra.mxu0 0.0
        %4521 = vmatprep.subr.mxu0 0.0
        %4522 = vmatpush1.msra.mxu0 0.0
        %4523 = vmatprep.subr.mxu0 0.0
        %4524 = vmatpush1.msra.mxu0 0.0
        %4525 = vmatprep.subr.mxu0 0.0
        %4526 = vmatpush1.msra.mxu0 0.0
        %4527 = vmatprep.subr.mxu0 0.0
        %4528 = vmatpush1.msra.mxu0 0.0
        %4529 = vmatprep.subr.mxu0 0.0
        %4530 = vmatpush1.msra.mxu0 0.0
        %4531 = vmatprep.subr.mxu0 0.0
        %4532 = vmatpush1.msra.mxu0 0.0
        %4533 = vmatprep.subr.mxu0 0.0
        %4534 = vmatpush1.msra.mxu0 0.0
        %4535 = vmatprep.subr.mxu0 0.0
        %4536 = vmatpush1.msra.mxu0 0.0
        %4537 = vmatprep.subr.mxu0 0.0
        %4538 = vmatpush1.msra.mxu0 0.0
        %4539 = vmatprep.subr.mxu0 0.0
        %4540 = vmatpush1.msra.mxu0 0.0
        %4541 = vmatprep.subr.mxu0 0.0
        %4542 = vmatpush1.msra.mxu0 0.0
        %4543 = vmatprep.subr.mxu0 0.0
        %4544 = vmatpush1.msra.mxu0 0.0
        %4545 = vmatprep.subr.mxu0 0.0
        %4546 = vmatpush1.msra.mxu0 0.0
        %4547 = vmatprep.subr.mxu0 0.0
        %4548 = vmatpush1.msra.mxu0 0.0
        %4549 = vmatprep.mubr.f32.mxu0 0.0
        %4550 = vmatmul.mubr.f32.gmra.mrb[0].mxu0 %v3018
        %v4551 = vpop.f32.mrb[0].mxu0
        %v4552 = vadd.f32 %v4483, %v4551
        %v4553 = vpop.f32.mrb[0].mxu0
        %4554 = vdwg.mxu0
        %s4555 = scalar_lea.vmem %s6, 224
        %v4556 = vld [vmem:[%s4555] sm:$0xff]
        %v4557 = vld [vmem:[%s4555 + $0x8] sm:$0xff]
        %v4558 = vld [vmem:[%s4555 + $0x10] sm:$0xff]
        %v4559 = vld [vmem:[%s4555 + $0x18] sm:$0xff]
        %s4560 = scalar_lea.vmem %s9, 7
        %v4561 = vld [vmem:[%s4560] sm:$0x1]
        %v4563 = vlaneseq
        %v4564 = vshrl.u32 %v4563, 7
        %v4565 = vsub.s32 0, %v4564
        %v4566 = vrot.slane %v4561, %v4565
        %4568 = vmatprep.subr.mxu0 0.0
        %4569 = vmatpush1.msra.mxu0 %v4556
        %4570 = vmatprep.subr.mxu0 0.0
        %4571 = vmatpush1.msra.mxu0 %v4557
        %4572 = vmatprep.subr.mxu0 0.0
        %4573 = vmatpush1.msra.mxu0 %v4558
        %4574 = vmatprep.subr.mxu0 0.0
        %4575 = vmatpush1.msra.mxu0 %v4559
        %4576 = vmatprep.subr.mxu0 0.0
        %4577 = vmatpush1.msra.mxu0 0.0
        %4578 = vmatprep.subr.mxu0 0.0
        %4579 = vmatpush1.msra.mxu0 0.0
        %4580 = vmatprep.subr.mxu0 0.0
        %4581 = vmatpush1.msra.mxu0 0.0
        %4582 = vmatprep.subr.mxu0 0.0
        %4583 = vmatpush1.msra.mxu0 0.0
        %4584 = vmatprep.subr.mxu0 0.0
        %4585 = vmatpush1.msra.mxu0 0.0
        %4586 = vmatprep.subr.mxu0 0.0
        %4587 = vmatpush1.msra.mxu0 0.0
        %4588 = vmatprep.subr.mxu0 0.0
        %4589 = vmatpush1.msra.mxu0 0.0
        %4590 = vmatprep.subr.mxu0 0.0
        %4591 = vmatpush1.msra.mxu0 0.0
        %4592 = vmatprep.subr.mxu0 0.0
        %4593 = vmatpush1.msra.mxu0 0.0
        %4594 = vmatprep.subr.mxu0 0.0
        %4595 = vmatpush1.msra.mxu0 0.0
        %4596 = vmatprep.subr.mxu0 0.0
        %4597 = vmatpush1.msra.mxu0 0.0
        %4598 = vmatprep.subr.mxu0 0.0
        %4599 = vmatpush1.msra.mxu0 0.0
        %4600 = vmatprep.subr.mxu0 0.0
        %4601 = vmatpush1.msra.mxu0 0.0
        %4602 = vmatprep.subr.mxu0 0.0
        %4603 = vmatpush1.msra.mxu0 0.0
        %4604 = vmatprep.subr.mxu0 0.0
        %4605 = vmatpush1.msra.mxu0 0.0
        %4606 = vmatprep.subr.mxu0 0.0
        %4607 = vmatpush1.msra.mxu0 0.0
        %4608 = vmatprep.subr.mxu0 0.0
        %4609 = vmatpush1.msra.mxu0 0.0
        %4610 = vmatprep.subr.mxu0 0.0
        %4611 = vmatpush1.msra.mxu0 0.0
        %4612 = vmatprep.subr.mxu0 0.0
        %4613 = vmatpush1.msra.mxu0 0.0
        %4614 = vmatprep.subr.mxu0 0.0
        %4615 = vmatpush1.msra.mxu0 0.0
        %4616 = vmatprep.subr.mxu0 0.0
        %4617 = vmatpush1.msra.mxu0 0.0
        %4618 = vmatprep.subr.mxu0 0.0
        %4619 = vmatpush1.msra.mxu0 0.0
        %4620 = vmatprep.subr.mxu0 0.0
        %4621 = vmatpush1.msra.mxu0 0.0
        %4622 = vmatprep.subr.mxu0 0.0
        %4623 = vmatpush1.msra.mxu0 0.0
        %4624 = vmatprep.subr.mxu0 0.0
        %4625 = vmatpush1.msra.mxu0 0.0
        %4626 = vmatprep.subr.mxu0 0.0
        %4627 = vmatpush1.msra.mxu0 0.0
        %4628 = vmatprep.subr.mxu0 0.0
        %4629 = vmatpush1.msra.mxu0 0.0
        %4630 = vmatprep.subr.mxu0 0.0
        %4631 = vmatpush1.msra.mxu0 0.0
        %4632 = vmatprep.mubr.f32.mxu0 0.0
        %4633 = vmatmul.mubr.f32.gmra.mrb[0].mxu0 %v3018
        %v4634 = vpop.f32.mrb[0].mxu0
        %v4635 = vadd.f32 %v4566, %v4634
        %v4636 = vpop.f32.mrb[0].mxu0
        %4637 = vdwg.mxu0
        %s4638 = scalar_lea.vmem %s7, 224
        %v4639 = vld [vmem:[%s4638] sm:$0xff]
        %v4640 = vld [vmem:[%s4638 + $0x8] sm:$0xff]
        %v4641 = vld [vmem:[%s4638 + $0x10] sm:$0xff]
        %v4642 = vld [vmem:[%s4638 + $0x18] sm:$0xff]
        %s4643 = scalar_lea.vmem %s10, 7
        %v4644 = vld [vmem:[%s4643] sm:$0x1]
        %v4646 = vlaneseq
        %v4647 = vshrl.u32 %v4646, 7
        %v4648 = vsub.s32 0, %v4647
        %v4649 = vrot.slane %v4644, %v4648
        %4651 = vmatprep.subr.mxu0 0.0
        %4652 = vmatpush1.msra.mxu0 %v4639
        %4653 = vmatprep.subr.mxu0 0.0
        %4654 = vmatpush1.msra.mxu0 %v4640
        %4655 = vmatprep.subr.mxu0 0.0
        %4656 = vmatpush1.msra.mxu0 %v4641
        %4657 = vmatprep.subr.mxu0 0.0
        %4658 = vmatpush1.msra.mxu0 %v4642
        %4659 = vmatprep.subr.mxu0 0.0
        %4660 = vmatpush1.msra.mxu0 0.0
        %4661 = vmatprep.subr.mxu0 0.0
        %4662 = vmatpush1.msra.mxu0 0.0
        %4663 = vmatprep.subr.mxu0 0.0
        %4664 = vmatpush1.msra.mxu0 0.0
        %4665 = vmatprep.subr.mxu0 0.0
        %4666 = vmatpush1.msra.mxu0 0.0
        %4667 = vmatprep.subr.mxu0 0.0
        %4668 = vmatpush1.msra.mxu0 0.0
        %4669 = vmatprep.subr.mxu0 0.0
        %4670 = vmatpush1.msra.mxu0 0.0
        %4671 = vmatprep.subr.mxu0 0.0
        %4672 = vmatpush1.msra.mxu0 0.0
        %4673 = vmatprep.subr.mxu0 0.0
        %4674 = vmatpush1.msra.mxu0 0.0
        %4675 = vmatprep.subr.mxu0 0.0
        %4676 = vmatpush1.msra.mxu0 0.0
        %4677 = vmatprep.subr.mxu0 0.0
        %4678 = vmatpush1.msra.mxu0 0.0
        %4679 = vmatprep.subr.mxu0 0.0
        %4680 = vmatpush1.msra.mxu0 0.0
        %4681 = vmatprep.subr.mxu0 0.0
        %4682 = vmatpush1.msra.mxu0 0.0
        %4683 = vmatprep.subr.mxu0 0.0
        %4684 = vmatpush1.msra.mxu0 0.0
        %4685 = vmatprep.subr.mxu0 0.0
        %4686 = vmatpush1.msra.mxu0 0.0
        %4687 = vmatprep.subr.mxu0 0.0
        %4688 = vmatpush1.msra.mxu0 0.0
        %4689 = vmatprep.subr.mxu0 0.0
        %4690 = vmatpush1.msra.mxu0 0.0
        %4691 = vmatprep.subr.mxu0 0.0
        %4692 = vmatpush1.msra.mxu0 0.0
        %4693 = vmatprep.subr.mxu0 0.0
        %4694 = vmatpush1.msra.mxu0 0.0
        %4695 = vmatprep.subr.mxu0 0.0
        %4696 = vmatpush1.msra.mxu0 0.0
        %4697 = vmatprep.subr.mxu0 0.0
        %4698 = vmatpush1.msra.mxu0 0.0
        %4699 = vmatprep.subr.mxu0 0.0
        %4700 = vmatpush1.msra.mxu0 0.0
        %4701 = vmatprep.subr.mxu0 0.0
        %4702 = vmatpush1.msra.mxu0 0.0
        %4703 = vmatprep.subr.mxu0 0.0
        %4704 = vmatpush1.msra.mxu0 0.0
        %4705 = vmatprep.subr.mxu0 0.0
        %4706 = vmatpush1.msra.mxu0 0.0
        %4707 = vmatprep.subr.mxu0 0.0
        %4708 = vmatpush1.msra.mxu0 0.0
        %4709 = vmatprep.subr.mxu0 0.0
        %4710 = vmatpush1.msra.mxu0 0.0
        %4711 = vmatprep.subr.mxu0 0.0
        %4712 = vmatpush1.msra.mxu0 0.0
        %4713 = vmatprep.subr.mxu0 0.0
        %4714 = vmatpush1.msra.mxu0 0.0
        %4715 = vmatprep.mubr.f32.mxu0 0.0
        %4716 = vmatmul.mubr.f32.gmra.mrb[0].mxu0 %v3018
        %v4717 = vpop.f32.mrb[0].mxu0
        %v4718 = vadd.f32 %v4649, %v4717
        %v4719 = vpop.f32.mrb[0].mxu0
        %4720 = vdwg.mxu0
        %v4722 = vsel %vm1052, %v4552, 0
        %v4725 = vsel %vm1052, %v4635, 0
        %4727 = vmatprep.subr.mxu0 0.0
        %4728 = vmatpush1.xpose.msra.mxu0 %v4725
        %4729 = vmatprep.subr.mxu0 0.0
        %4730 = vmatpush1.xpose.msra.mxu0 0.0
        %4731 = vmatprep.subr.mxu0 0.0
        %4732 = vmatpush1.xpose.msra.mxu0 0.0
        %4733 = vmatprep.subr.mxu0 0.0
        %4734 = vmatpush1.xpose.msra.mxu0 0.0
        %4735 = vmatprep.subr.mxu0 0.0
        %4736 = vmatpush1.xpose.msra.mxu0 0.0
        %4737 = vmatprep.subr.mxu0 0.0
        %4738 = vmatpush1.xpose.msra.mxu0 0.0
        %4739 = vmatprep.subr.mxu0 0.0
        %4740 = vmatpush1.xpose.msra.mxu0 0.0
        %4741 = vmatprep.subr.mxu0 0.0
        %4742 = vmatpush1.xpose.msra.mxu0 0.0
        %4743 = vmatprep.subr.mxu0 0.0
        %4744 = vmatpush1.xpose.msra.mxu0 0.0
        %4745 = vmatprep.subr.mxu0 0.0
        %4746 = vmatpush1.xpose.msra.mxu0 0.0
        %4747 = vmatprep.subr.mxu0 0.0
        %4748 = vmatpush1.xpose.msra.mxu0 0.0
        %4749 = vmatprep.subr.mxu0 0.0
        %4750 = vmatpush1.xpose.msra.mxu0 0.0
        %4751 = vmatprep.subr.mxu0 0.0
        %4752 = vmatpush1.xpose.msra.mxu0 0.0
        %4753 = vmatprep.subr.mxu0 0.0
        %4754 = vmatpush1.xpose.msra.mxu0 0.0
        %4755 = vmatprep.subr.mxu0 0.0
        %4756 = vmatpush1.xpose.msra.mxu0 0.0
        %4757 = vmatprep.subr.mxu0 0.0
        %4758 = vmatpush1.xpose.msra.mxu0 0.0
        %4759 = vmatprep.subr.mxu0 0.0
        %4760 = vmatpush1.xpose.msra.mxu0 0.0
        %4761 = vmatprep.subr.mxu0 0.0
        %4762 = vmatpush1.xpose.msra.mxu0 0.0
        %4763 = vmatprep.subr.mxu0 0.0
        %4764 = vmatpush1.xpose.msra.mxu0 0.0
        %4765 = vmatprep.subr.mxu0 0.0
        %4766 = vmatpush1.xpose.msra.mxu0 0.0
        %4767 = vmatprep.subr.mxu0 0.0
        %4768 = vmatpush1.xpose.msra.mxu0 0.0
        %4769 = vmatprep.subr.mxu0 0.0
        %4770 = vmatpush1.xpose.msra.mxu0 0.0
        %4771 = vmatprep.subr.mxu0 0.0
        %4772 = vmatpush1.xpose.msra.mxu0 0.0
        %4773 = vmatprep.subr.mxu0 0.0
        %4774 = vmatpush1.xpose.msra.mxu0 0.0
        %4775 = vmatprep.subr.mxu0 0.0
        %4776 = vmatpush1.xpose.msra.mxu0 0.0
        %4777 = vmatprep.subr.mxu0 0.0
        %4778 = vmatpush1.xpose.msra.mxu0 0.0
        %4779 = vmatprep.subr.mxu0 0.0
        %4780 = vmatpush1.xpose.msra.mxu0 0.0
        %4781 = vmatprep.subr.mxu0 0.0
        %4782 = vmatpush1.xpose.msra.mxu0 0.0
        %4783 = vmatprep.subr.mxu0 0.0
        %4784 = vmatpush1.xpose.msra.mxu0 0.0
        %4785 = vmatprep.subr.mxu0 0.0
        %4786 = vmatpush1.xpose.msra.mxu0 0.0
        %4787 = vmatprep.subr.mxu0 0.0
        %4788 = vmatpush1.xpose.msra.mxu0 0.0
        %4789 = vmatprep.subr.mxu0 0.0
        %4790 = vmatpush1.xpose.msra.mxu0 0.0
        %4791 = vmatprep.mubr.f32.mxu0 0.0
        %4792 = vmatmul.mubr.f32.gmra.mrb[0].mxu0 %v4722
        %v4793 = vpop.f32.mrb[0].mxu0
        %v4794 = vadd.f32 0.0, %v4793
        %v4795 = vpop.f32.mrb[0].mxu0
        %4796 = vdwg.mxu0
        %v4797 = vmul.f32 %v4794, 0.35355338
        %v4798 = vsel %vm1130, %v4797, -inf
        %4799 = vmax.xlane.f32.xlu0 %v4798
        %v4800 = vpop.xlane.xlu0 %4799
        %v4801 = vsub.f32 %v4797, %v4800
        %v4802 = vmul.f32 %v4801, 1.442695
        %v4803 = vpow.pop %v4802
        %v4804 = vsel %vm1130, %v4803, 0.0
        %4805 = vadd.xlane.f32.xlu0 %v4804
        %v4806 = vpop.xlane.xlu0 %4805
        %v4807 = vrcp.pop %v4806
        %v4808 = vmul.f32 %v4803, %v4807
        %v4810 = vsel %vm1142, %v4808, 0
        %v4813 = vsel %vm1146, %v4718, 0
        %4815 = vmatprep.subr.mxu0 0.0
        %4816 = vmatpush1.msra.mxu0 %v4813
        %4817 = vmatprep.subr.mxu0 0.0
        %4818 = vmatpush1.msra.mxu0 0.0
        %4819 = vmatprep.subr.mxu0 0.0
        %4820 = vmatpush1.msra.mxu0 0.0
        %4821 = vmatprep.subr.mxu0 0.0
        %4822 = vmatpush1.msra.mxu0 0.0
        %4823 = vmatprep.subr.mxu0 0.0
        %4824 = vmatpush1.msra.mxu0 0.0
        %4825 = vmatprep.subr.mxu0 0.0
        %4826 = vmatpush1.msra.mxu0 0.0
        %4827 = vmatprep.subr.mxu0 0.0
        %4828 = vmatpush1.msra.mxu0 0.0
        %4829 = vmatprep.subr.mxu0 0.0
        %4830 = vmatpush1.msra.mxu0 0.0
        %4831 = vmatprep.subr.mxu0 0.0
        %4832 = vmatpush1.msra.mxu0 0.0
        %4833 = vmatprep.subr.mxu0 0.0
        %4834 = vmatpush1.msra.mxu0 0.0
        %4835 = vmatprep.subr.mxu0 0.0
        %4836 = vmatpush1.msra.mxu0 0.0
        %4837 = vmatprep.subr.mxu0 0.0
        %4838 = vmatpush1.msra.mxu0 0.0
        %4839 = vmatprep.subr.mxu0 0.0
        %4840 = vmatpush1.msra.mxu0 0.0
        %4841 = vmatprep.subr.mxu0 0.0
        %4842 = vmatpush1.msra.mxu0 0.0
        %4843 = vmatprep.subr.mxu0 0.0
        %4844 = vmatpush1.msra.mxu0 0.0
        %4845 = vmatprep.subr.mxu0 0.0
        %4846 = vmatpush1.msra.mxu0 0.0
        %4847 = vmatprep.subr.mxu0 0.0
        %4848 = vmatpush1.msra.mxu0 0.0
        %4849 = vmatprep.subr.mxu0 0.0
        %4850 = vmatpush1.msra.mxu0 0.0
        %4851 = vmatprep.subr.mxu0 0.0
        %4852 = vmatpush1.msra.mxu0 0.0
        %4853 = vmatprep.subr.mxu0 0.0
        %4854 = vmatpush1.msra.mxu0 0.0
        %4855 = vmatprep.subr.mxu0 0.0
        %4856 = vmatpush1.msra.mxu0 0.0
        %4857 = vmatprep.subr.mxu0 0.0
        %4858 = vmatpush1.msra.mxu0 0.0
        %4859 = vmatprep.subr.mxu0 0.0
        %4860 = vmatpush1.msra.mxu0 0.0
        %4861 = vmatprep.subr.mxu0 0.0
        %4862 = vmatpush1.msra.mxu0 0.0
        %4863 = vmatprep.subr.mxu0 0.0
        %4864 = vmatpush1.msra.mxu0 0.0
        %4865 = vmatprep.subr.mxu0 0.0
        %4866 = vmatpush1.msra.mxu0 0.0
        %4867 = vmatprep.subr.mxu0 0.0
        %4868 = vmatpush1.msra.mxu0 0.0
        %4869 = vmatprep.subr.mxu0 0.0
        %4870 = vmatpush1.msra.mxu0 0.0
        %4871 = vmatprep.subr.mxu0 0.0
        %4872 = vmatpush1.msra.mxu0 0.0
        %4873 = vmatprep.subr.mxu0 0.0
        %4874 = vmatpush1.msra.mxu0 0.0
        %4875 = vmatprep.subr.mxu0 0.0
        %4876 = vmatpush1.msra.mxu0 0.0
        %4877 = vmatprep.subr.mxu0 0.0
        %4878 = vmatpush1.msra.mxu0 0.0
        %4879 = vmatprep.mubr.f32.mxu0 0.0
        %4880 = vmatmul.mubr.f32.gmra.mrb[0].mxu0 %v4810
        %v4881 = vpop.f32.mrb[0].mxu0
        %v4882 = vadd.f32 0.0, %v4881
        %v4883 = vpop.f32.mrb[0].mxu0
        %4884 = vdwg.mxu0
        %s4885 = scalar_lea.vmem %s11, 56
        %v4886 = vld [vmem:[%s4885] sm:$0xff]
        %v4888 = vsel %vm1052, %v4882, 0
        %4890 = vmatprep.subr.mxu0 0.0
        %4891 = vmatpush1.msra.mxu0 %v4886
        %4892 = vmatprep.subr.mxu0 0.0
        %4893 = vmatpush1.msra.mxu0 0.0
        %4894 = vmatprep.subr.mxu0 0.0
        %4895 = vmatpush1.msra.mxu0 0.0
        %4896 = vmatprep.subr.mxu0 0.0
        %4897 = vmatpush1.msra.mxu0 0.0
        %4898 = vmatprep.subr.mxu0 0.0
        %4899 = vmatpush1.msra.mxu0 0.0
        %4900 = vmatprep.subr.mxu0 0.0
        %4901 = vmatpush1.msra.mxu0 0.0
        %4902 = vmatprep.subr.mxu0 0.0
        %4903 = vmatpush1.msra.mxu0 0.0
        %4904 = vmatprep.subr.mxu0 0.0
        %4905 = vmatpush1.msra.mxu0 0.0
        %4906 = vmatprep.subr.mxu0 0.0
        %4907 = vmatpush1.msra.mxu0 0.0
        %4908 = vmatprep.subr.mxu0 0.0
        %4909 = vmatpush1.msra.mxu0 0.0
        %4910 = vmatprep.subr.mxu0 0.0
        %4911 = vmatpush1.msra.mxu0 0.0
        %4912 = vmatprep.subr.mxu0 0.0
        %4913 = vmatpush1.msra.mxu0 0.0
        %4914 = vmatprep.subr.mxu0 0.0
        %4915 = vmatpush1.msra.mxu0 0.0
        %4916 = vmatprep.subr.mxu0 0.0
        %4917 = vmatpush1.msra.mxu0 0.0
        %4918 = vmatprep.subr.mxu0 0.0
        %4919 = vmatpush1.msra.mxu0 0.0
        %4920 = vmatprep.subr.mxu0 0.0
        %4921 = vmatpush1.msra.mxu0 0.0
        %4922 = vmatprep.subr.mxu0 0.0
        %4923 = vmatpush1.msra.mxu0 0.0
        %4924 = vmatprep.subr.mxu0 0.0
        %4925 = vmatpush1.msra.mxu0 0.0
        %4926 = vmatprep.subr.mxu0 0.0
        %4927 = vmatpush1.msra.mxu0 0.0
        %4928 = vmatprep.subr.mxu0 0.0
        %4929 = vmatpush1.msra.mxu0 0.0
        %4930 = vmatprep.subr.mxu0 0.0
        %4931 = vmatpush1.msra.mxu0 0.0
        %4932 = vmatprep.subr.mxu0 0.0
        %4933 = vmatpush1.msra.mxu0 0.0
        %4934 = vmatprep.subr.mxu0 0.0
        %4935 = vmatpush1.msra.mxu0 0.0
        %4936 = vmatprep.subr.mxu0 0.0
        %4937 = vmatpush1.msra.mxu0 0.0
        %4938 = vmatprep.subr.mxu0 0.0
        %4939 = vmatpush1.msra.mxu0 0.0
        %4940 = vmatprep.subr.mxu0 0.0
        %4941 = vmatpush1.msra.mxu0 0.0
        %4942 = vmatprep.subr.mxu0 0.0
        %4943 = vmatpush1.msra.mxu0 0.0
        %4944 = vmatprep.subr.mxu0 0.0
        %4945 = vmatpush1.msra.mxu0 0.0
        %4946 = vmatprep.subr.mxu0 0.0
        %4947 = vmatpush1.msra.mxu0 0.0
        %4948 = vmatprep.subr.mxu0 0.0
        %4949 = vmatpush1.msra.mxu0 0.0
        %4950 = vmatprep.subr.mxu0 0.0
        %4951 = vmatpush1.msra.mxu0 0.0
        %4952 = vmatprep.subr.mxu0 0.0
        %4953 = vmatpush1.msra.mxu0 0.0
        %4954 = vmatprep.mubr.f32.mxu0 0.0
        %4955 = vmatmul.mubr.f32.gmra.mrb[0].mxu0 %v4888
        %v4956 = vpop.f32.mrb[0].mxu0
        %v4957 = vadd.f32 0.0, %v4956
        %v4958 = vpop.f32.mrb[0].mxu0
        %4959 = vdwg.mxu0
        %v4960 = vadd.f32 %v4471, %v4957
        %v4961 = vadd.f32 %v2978, %v4960
        %s4962 = scalar_lea.vmem %s12, 1
        %v4963 = vld [vmem:[%s4962] sm:$0x1]
        %v4965 = vlaneseq
        %v4966 = vshrl.u32 %v4965, 7
        %v4967 = vsub.s32 0, %v4966
        %v4968 = vrot.slane %v4963, %v4967
        %v4970 = vadd.f32 %v4961, %v4968
        %s4971 = scalar_lea.vmem %s13, 2
        %v4972 = vld [vmem:[%s4971] sm:$0x3]
        %v4973 = vsel %vm756, %v4970, 0.0
        %4974 = vadd.xlane.f32.xlu0 %v4973
        %v4975 = vpop.xlane.xlu0 %4974
        %v4976 = vmul.f32 %v4975, %v760
        %v4977 = vsub.f32 %v4970, %v4976
        %v4978 = vmul.f32 %v4977, %v4977
        %v4979 = vsel %vm756, %v4978, 0.0
        %4980 = vadd.xlane.f32.xlu0 %v4979
        %v4981 = vpop.xlane.xlu0 %4980
        %v4982 = vmul.f32 %v4981, %v760
        %v4983 = vadd.f32 %v4982, 1e-05
        %v4984 = vrsqrt.pop %v4983
        %v4985 = vmul.f32 %v4977, %v4984
        %v4986 = vlaneseq
        %v4987 = vshrl.u32 %v4986, 7
        %v4988 = vsub.s32 0, %v4987
        %v4989 = vrot.slane %v4972, %v4988
        %v4990 = vmul.f32 %v4985, %v4989
        %v4991 = vlaneseq
        %v4992 = vshrl.u32 %v4991, 7
        %v4993 = vsub.s32 1, %v4992
        %v4994 = vrot.slane %v4972, %v4993
        %v4995 = vadd.f32 %v4990, %v4994
        %s4996 = scalar_lea.vmem %s14, 32
        %v4997 = vld [vmem:[%s4996] sm:$0xff]
        %v4998 = vld [vmem:[%s4996 + $0x8] sm:$0xff]
        %v4999 = vld [vmem:[%s4996 + $0x10] sm:$0xff]
        %v5000 = vld [vmem:[%s4996 + $0x18] sm:$0xff]
        %s5001 = scalar_lea.vmem %s15, 1
        %v5002 = vld [vmem:[%s5001] sm:$0x1]
        %v5004 = vlaneseq
        %v5005 = vshrl.u32 %v5004, 7
        %v5006 = vsub.s32 0, %v5005
        %v5007 = vrot.slane %v5002, %v5006
        %v5010 = vsel %vm816, %v4995, 0
        %5012 = vmatprep.subr.mxu0 0.0
        %5013 = vmatpush1.msra.mxu0 %v4997
        %5014 = vmatprep.subr.mxu0 0.0
        %5015 = vmatpush1.msra.mxu0 %v4998
        %5016 = vmatprep.subr.mxu0 0.0
        %5017 = vmatpush1.msra.mxu0 %v4999
        %5018 = vmatprep.subr.mxu0 0.0
        %5019 = vmatpush1.msra.mxu0 %v5000
        %5020 = vmatprep.subr.mxu0 0.0
        %5021 = vmatpush1.msra.mxu0 0.0
        %5022 = vmatprep.subr.mxu0 0.0
        %5023 = vmatpush1.msra.mxu0 0.0
        %5024 = vmatprep.subr.mxu0 0.0
        %5025 = vmatpush1.msra.mxu0 0.0
        %5026 = vmatprep.subr.mxu0 0.0
        %5027 = vmatpush1.msra.mxu0 0.0
        %5028 = vmatprep.subr.mxu0 0.0
        %5029 = vmatpush1.msra.mxu0 0.0
        %5030 = vmatprep.subr.mxu0 0.0
        %5031 = vmatpush1.msra.mxu0 0.0
        %5032 = vmatprep.subr.mxu0 0.0
        %5033 = vmatpush1.msra.mxu0 0.0
        %5034 = vmatprep.subr.mxu0 0.0
        %5035 = vmatpush1.msra.mxu0 0.0
        %5036 = vmatprep.subr.mxu0 0.0
        %5037 = vmatpush1.msra.mxu0 0.0
        %5038 = vmatprep.subr.mxu0 0.0
        %5039 = vmatpush1.msra.mxu0 0.0
        %5040 = vmatprep.subr.mxu0 0.0
        %5041 = vmatpush1.msra.mxu0 0.0
        %5042 = vmatprep.subr.mxu0 0.0
        %5043 = vmatpush1.msra.mxu0 0.0
        %5044 = vmatprep.subr.mxu0 0.0
        %5045 = vmatpush1.msra.mxu0 0.0
        %5046 = vmatprep.subr.mxu0 0.0
        %5047 = vmatpush1.msra.mxu0 0.0
        %5048 = vmatprep.subr.mxu0 0.0
        %5049 = vmatpush1.msra.mxu0 0.0
        %5050 = vmatprep.subr.mxu0 0.0
        %5051 = vmatpush1.msra.mxu0 0.0
        %5052 = vmatprep.subr.mxu0 0.0
        %5053 = vmatpush1.msra.mxu0 0.0
        %5054 = vmatprep.subr.mxu0 0.0
        %5055 = vmatpush1.msra.mxu0 0.0
        %5056 = vmatprep.subr.mxu0 0.0
        %5057 = vmatpush1.msra.mxu0 0.0
        %5058 = vmatprep.subr.mxu0 0.0
        %5059 = vmatpush1.msra.mxu0 0.0
        %5060 = vmatprep.subr.mxu0 0.0
        %5061 = vmatpush1.msra.mxu0 0.0
        %5062 = vmatprep.subr.mxu0 0.0
        %5063 = vmatpush1.msra.mxu0 0.0
        %5064 = vmatprep.subr.mxu0 0.0
        %5065 = vmatpush1.msra.mxu0 0.0
        %5066 = vmatprep.subr.mxu0 0.0
        %5067 = vmatpush1.msra.mxu0 0.0
        %5068 = vmatprep.subr.mxu0 0.0
        %5069 = vmatpush1.msra.mxu0 0.0
        %5070 = vmatprep.subr.mxu0 0.0
        %5071 = vmatpush1.msra.mxu0 0.0
        %5072 = vmatprep.subr.mxu0 0.0
        %5073 = vmatpush1.msra.mxu0 0.0
        %5074 = vmatprep.subr.mxu0 0.0
        %5075 = vmatpush1.msra.mxu0 0.0
        %5076 = vmatprep.mubr.f32.mxu0 0.0
        %5077 = vmatmul.mubr.f32.gmra.mrb[0].mxu0 %v5010
        %v5078 = vpop.f32.mrb[0].mxu0
        %v5079 = vadd.f32 %v5007, %v5078
        %v5080 = vpop.f32.mrb[0].mxu0
        %5081 = vdwg.mxu0
        %v5082 = vmul.f32 %v5079, 1.702
        %v5083 = vxor.u32 %v5082, 2147483648
        %v5084 = vmul.f32 %v5083, 1.442695
        %v5085 = vpow.pop %v5084
        %v5086 = vadd.f32 %v5085, 1.0
        %v5087 = vrcp.pop %v5086
        %v5088 = vmul.f32 1.0, %v5087
        %v5089 = vmul.f32 %v5079, %v5088
        %s5090 = scalar_lea.vmem %s16, 128
        %v5091 = vld [vmem:[%s5090] sm:$0xff]
        %v5092 = vld [vmem:[%s5090 + $0x8] sm:$0xff]
        %v5093 = vld [vmem:[%s5090 + $0x10] sm:$0xff]
        %v5094 = vld [vmem:[%s5090 + $0x18] sm:$0xff]
        %v5095 = vld [vmem:[%s5090 + $0x20] sm:$0xff]
        %v5096 = vld [vmem:[%s5090 + $0x28] sm:$0xff]
        %v5097 = vld [vmem:[%s5090 + $0x30] sm:$0xff]
        %v5098 = vld [vmem:[%s5090 + $0x38] sm:$0xff]
        %v5099 = vld [vmem:[%s5090 + $0x40] sm:$0xff]
        %v5100 = vld [vmem:[%s5090 + $0x48] sm:$0xff]
        %v5101 = vld [vmem:[%s5090 + $0x50] sm:$0xff]
        %v5102 = vld [vmem:[%s5090 + $0x58] sm:$0xff]
        %v5103 = vld [vmem:[%s5090 + $0x60] sm:$0xff]
        %v5104 = vld [vmem:[%s5090 + $0x68] sm:$0xff]
        %v5105 = vld [vmem:[%s5090 + $0x70] sm:$0xff]
        %v5106 = vld [vmem:[%s5090 + $0x78] sm:$0xff]
        %s5107 = scalar_lea.vmem %s17, 1
        %v5108 = vld [vmem:[%s5107] sm:$0x1]
        %v5110 = vlaneseq
        %v5111 = vshrl.u32 %v5110, 7
        %v5112 = vsub.s32 0, %v5111
        %v5113 = vrot.slane %v5108, %v5112
        %5115 = vmatprep.subr.mxu0 0.0
        %5116 = vmatpush1.msra.mxu0 %v5091
        %5117 = vmatprep.subr.mxu0 0.0
        %5118 = vmatpush1.msra.mxu0 %v5092
        %5119 = vmatprep.subr.mxu0 0.0
        %5120 = vmatpush1.msra.mxu0 %v5093
        %5121 = vmatprep.subr.mxu0 0.0
        %5122 = vmatpush1.msra.mxu0 %v5094
        %5123 = vmatprep.subr.mxu0 0.0
        %5124 = vmatpush1.msra.mxu0 %v5095
        %5125 = vmatprep.subr.mxu0 0.0
        %5126 = vmatpush1.msra.mxu0 %v5096
        %5127 = vmatprep.subr.mxu0 0.0
        %5128 = vmatpush1.msra.mxu0 %v5097
        %5129 = vmatprep.subr.mxu0 0.0
        %5130 = vmatpush1.msra.mxu0 %v5098
        %5131 = vmatprep.subr.mxu0 0.0
        %5132 = vmatpush1.msra.mxu0 %v5099
        %5133 = vmatprep.subr.mxu0 0.0
        %5134 = vmatpush1.msra.mxu0 %v5100
        %5135 = vmatprep.subr.mxu0 0.0
        %5136 = vmatpush1.msra.mxu0 %v5101
        %5137 = vmatprep.subr.mxu0 0.0
        %5138 = vmatpush1.msra.mxu0 %v5102
        %5139 = vmatprep.subr.mxu0 0.0
        %5140 = vmatpush1.msra.mxu0 %v5103
        %5141 = vmatprep.subr.mxu0 0.0
        %5142 = vmatpush1.msra.mxu0 %v5104
        %5143 = vmatprep.subr.mxu0 0.0
        %5144 = vmatpush1.msra.mxu0 %v5105
        %5145 = vmatprep.subr.mxu0 0.0
        %5146 = vmatpush1.msra.mxu0 %v5106
        %5147 = vmatprep.subr.mxu0 0.0
        %5148 = vmatpush1.msra.mxu0 0.0
        %5149 = vmatprep.subr.mxu0 0.0
        %5150 = vmatpush1.msra.mxu0 0.0
        %5151 = vmatprep.subr.mxu0 0.0
        %5152 = vmatpush1.msra.mxu0 0.0
        %5153 = vmatprep.subr.mxu0 0.0
        %5154 = vmatpush1.msra.mxu0 0.0
        %5155 = vmatprep.subr.mxu0 0.0
        %5156 = vmatpush1.msra.mxu0 0.0
        %5157 = vmatprep.subr.mxu0 0.0
        %5158 = vmatpush1.msra.mxu0 0.0
        %5159 = vmatprep.subr.mxu0 0.0
        %5160 = vmatpush1.msra.mxu0 0.0
        %5161 = vmatprep.subr.mxu0 0.0
        %5162 = vmatpush1.msra.mxu0 0.0
        %5163 = vmatprep.subr.mxu0 0.0
        %5164 = vmatpush1.msra.mxu0 0.0
        %5165 = vmatprep.subr.mxu0 0.0
        %5166 = vmatpush1.msra.mxu0 0.0
        %5167 = vmatprep.subr.mxu0 0.0
        %5168 = vmatpush1.msra.mxu0 0.0
        %5169 = vmatprep.subr.mxu0 0.0
        %5170 = vmatpush1.msra.mxu0 0.0
        %5171 = vmatprep.subr.mxu0 0.0
        %5172 = vmatpush1.msra.mxu0 0.0
        %5173 = vmatprep.subr.mxu0 0.0
        %5174 = vmatpush1.msra.mxu0 0.0
        %5175 = vmatprep.subr.mxu0 0.0
        %5176 = vmatpush1.msra.mxu0 0.0
        %5177 = vmatprep.subr.mxu0 0.0
        %5178 = vmatpush1.msra.mxu0 0.0
        %5179 = vmatprep.mubr.f32.mxu0 0.0
        %5180 = vmatmul.mubr.f32.gmra.mrb[0].mxu0 %v5089
        %v5181 = vpop.f32.mrb[0].mxu0
        %v5182 = vadd.f32 %v5113, %v5181
        %v5183 = vpop.f32.mrb[0].mxu0
        %5184 = vdwg.mxu0
        %v5185 = vadd.f32 %v4970, %v5182
        %v5186 = vld [vmem:[%s18] sm:$0x3]
        %vm5187 = vcmask 253952
        %v5188 = vsel %vm5187, %v5185, 0.0
        %5189 = vadd.xlane.f32.xlu0 %v5188
        %v5190 = vpop.xlane.xlu0 %5189
        %v5191 = vmul.f32 %v5190, %v760
        %v5192 = vsub.f32 %v5185, %v5191
        %v5193 = vmul.f32 %v5192, %v5192
        %v5194 = vsel %vm5187, %v5193, 0.0
        %5195 = vadd.xlane.f32.xlu0 %v5194
        %v5196 = vpop.xlane.xlu0 %5195
        %v5197 = vmul.f32 %v5196, %v760
        %v5198 = vadd.f32 %v5197, 1e-05
        %v5199 = vrsqrt.pop %v5198
        %v5200 = vmul.f32 %v5192, %v5199
        %v5201 = vmul.f32 %v5200, %v5186
        %v5203 = vrot.slane %v5186, 1
        %v5205 = vadd.f32 %v5201, %v5203
        %v5206 = vld [vmem:[%s19] sm:$0xff]
        %v5207 = vld [vmem:[%s19 + $0x8] sm:$0xff]
        %v5208 = vld [vmem:[%s19 + $0x10] sm:$0xff]
        %v5209 = vld [vmem:[%s19 + $0x18] sm:$0xff]
        %v5211 = vsel %vm816, %v5205, 0
        %5213 = vmatprep.subr.mxu0 0.0
        %5214 = vmatpush1.msra.mxu0 %v5206
        %5215 = vmatprep.subr.mxu0 0.0
        %5216 = vmatpush1.msra.mxu0 %v5207
        %5217 = vmatprep.subr.mxu0 0.0
        %5218 = vmatpush1.msra.mxu0 %v5208
        %5219 = vmatprep.subr.mxu0 0.0
        %5220 = vmatpush1.msra.mxu0 %v5209
        %5221 = vmatprep.subr.mxu0 0.0
        %5222 = vmatpush1.msra.mxu0 0.0
        %5223 = vmatprep.subr.mxu0 0.0
        %5224 = vmatpush1.msra.mxu0 0.0
        %5225 = vmatprep.subr.mxu0 0.0
        %5226 = vmatpush1.msra.mxu0 0.0
        %5227 = vmatprep.subr.mxu0 0.0
        %5228 = vmatpush1.msra.mxu0 0.0
        %5229 = vmatprep.subr.mxu0 0.0
        %5230 = vmatpush1.msra.mxu0 0.0
        %5231 = vmatprep.subr.mxu0 0.0
        %5232 = vmatpush1.msra.mxu0 0.0
        %5233 = vmatprep.subr.mxu0 0.0
        %5234 = vmatpush1.msra.mxu0 0.0
        %5235 = vmatprep.subr.mxu0 0.0
        %5236 = vmatpush1.msra.mxu0 0.0
        %5237 = vmatprep.subr.mxu0 0.0
        %5238 = vmatpush1.msra.mxu0 0.0
        %5239 = vmatprep.subr.mxu0 0.0
        %5240 = vmatpush1.msra.mxu0 0.0
        %5241 = vmatprep.subr.mxu0 0.0
        %5242 = vmatpush1.msra.mxu0 0.0
        %5243 = vmatprep.subr.mxu0 0.0
        %5244 = vmatpush1.msra.mxu0 0.0
        %5245 = vmatprep.subr.mxu0 0.0
        %5246 = vmatpush1.msra.mxu0 0.0
        %5247 = vmatprep.subr.mxu0 0.0
        %5248 = vmatpush1.msra.mxu0 0.0
        %5249 = vmatprep.subr.mxu0 0.0
        %5250 = vmatpush1.msra.mxu0 0.0
        %5251 = vmatprep.subr.mxu0 0.0
        %5252 = vmatpush1.msra.mxu0 0.0
        %5253 = vmatprep.subr.mxu0 0.0
        %5254 = vmatpush1.msra.mxu0 0.0
        %5255 = vmatprep.subr.mxu0 0.0
        %5256 = vmatpush1.msra.mxu0 0.0
        %5257 = vmatprep.subr.mxu0 0.0
        %5258 = vmatpush1.msra.mxu0 0.0
        %5259 = vmatprep.subr.mxu0 0.0
        %5260 = vmatpush1.msra.mxu0 0.0
        %5261 = vmatprep.subr.mxu0 0.0
        %5262 = vmatpush1.msra.mxu0 0.0
        %5263 = vmatprep.subr.mxu0 0.0
        %5264 = vmatpush1.msra.mxu0 0.0
        %5265 = vmatprep.subr.mxu0 0.0
        %5266 = vmatpush1.msra.mxu0 0.0
        %5267 = vmatprep.subr.mxu0 0.0
        %5268 = vmatpush1.msra.mxu0 0.0
        %5269 = vmatprep.subr.mxu0 0.0
        %5270 = vmatpush1.msra.mxu0 0.0
        %5271 = vmatprep.subr.mxu0 0.0
        %5272 = vmatpush1.msra.mxu0 0.0
        %5273 = vmatprep.subr.mxu0 0.0
        %5274 = vmatpush1.msra.mxu0 0.0
        %5275 = vmatprep.subr.mxu0 0.0
        %5276 = vmatpush1.msra.mxu0 0.0
        %5277 = vmatprep.mubr.f32.mxu0 0.0
        %5278 = vmatmul.mubr.f32.gmra.mrb[0].mxu0 %v5211
        %v5279 = vpop.f32.mrb[0].mxu0
        %v5280 = vadd.f32 0.0, %v5279
        %v5281 = vpop.f32.mrb[0].mxu0
        %5282 = vdwg.mxu0
        %v5283 = vmul.f32 %v5280, %v5280
        %vm5284 = vcmask 122880
        %v5285 = vsel %vm5284, %v5283, 0.0
        %5286 = vadd.xlane.f32.xlu0 %v5285
        %v5287 = vpop.xlane.xlu0 %5286
        %v5288 = vadd.f32 %v5287, 1e-12
        %v5289 = vrsqrt.pop %v5288
        %v5290 = vmul.f32 %v5280, %v5289
        %v5291 = vld [vmem:[%s20] sm:$0xff]
        %v5292 = vld [vmem:[%s20 + $0x8] sm:$0xff]
        %vm5293 = vcmask 130048
        %v5295 = vsel %vm5293, %v5290, 0
        %5297 = vmatprep.subr.mxu0 0.0
        %5298 = vmatpush1.msra.mxu0 %v5291
        %5299 = vmatprep.subr.mxu0 0.0
        %5300 = vmatpush1.msra.mxu0 %v5292
        %5301 = vmatprep.subr.mxu0 0.0
        %5302 = vmatpush1.msra.mxu0 0.0
        %5303 = vmatprep.subr.mxu0 0.0
        %5304 = vmatpush1.msra.mxu0 0.0
        %5305 = vmatprep.subr.mxu0 0.0
        %5306 = vmatpush1.msra.mxu0 0.0
        %5307 = vmatprep.subr.mxu0 0.0
        %5308 = vmatpush1.msra.mxu0 0.0
        %5309 = vmatprep.subr.mxu0 0.0
        %5310 = vmatpush1.msra.mxu0 0.0
        %5311 = vmatprep.subr.mxu0 0.0
        %5312 = vmatpush1.msra.mxu0 0.0
        %5313 = vmatprep.subr.mxu0 0.0
        %5314 = vmatpush1.msra.mxu0 0.0
        %5315 = vmatprep.subr.mxu0 0.0
        %5316 = vmatpush1.msra.mxu0 0.0
        %5317 = vmatprep.subr.mxu0 0.0
        %5318 = vmatpush1.msra.mxu0 0.0
        %5319 = vmatprep.subr.mxu0 0.0
        %5320 = vmatpush1.msra.mxu0 0.0
        %5321 = vmatprep.subr.mxu0 0.0
        %5322 = vmatpush1.msra.mxu0 0.0
        %5323 = vmatprep.subr.mxu0 0.0
        %5324 = vmatpush1.msra.mxu0 0.0
        %5325 = vmatprep.subr.mxu0 0.0
        %5326 = vmatpush1.msra.mxu0 0.0
        %5327 = vmatprep.subr.mxu0 0.0
        %5328 = vmatpush1.msra.mxu0 0.0
        %5329 = vmatprep.subr.mxu0 0.0
        %5330 = vmatpush1.msra.mxu0 0.0
        %5331 = vmatprep.subr.mxu0 0.0
        %5332 = vmatpush1.msra.mxu0 0.0
        %5333 = vmatprep.subr.mxu0 0.0
        %5334 = vmatpush1.msra.mxu0 0.0
        %5335 = vmatprep.subr.mxu0 0.0
        %5336 = vmatpush1.msra.mxu0 0.0
        %5337 = vmatprep.subr.mxu0 0.0
        %5338 = vmatpush1.msra.mxu0 0.0
        %5339 = vmatprep.subr.mxu0 0.0
        %5340 = vmatpush1.msra.mxu0 0.0
        %5341 = vmatprep.subr.mxu0 0.0
        %5342 = vmatpush1.msra.mxu0 0.0
        %5343 = vmatprep.subr.mxu0 0.0
        %5344 = vmatpush1.msra.mxu0 0.0
        %5345 = vmatprep.subr.mxu0 0.0
        %5346 = vmatpush1.msra.mxu0 0.0
        %5347 = vmatprep.subr.mxu0 0.0
        %5348 = vmatpush1.msra.mxu0 0.0
        %5349 = vmatprep.subr.mxu0 0.0
        %5350 = vmatpush1.msra.mxu0 0.0
        %5351 = vmatprep.subr.mxu0 0.0
        %5352 = vmatpush1.msra.mxu0 0.0
        %5353 = vmatprep.subr.mxu0 0.0
        %5354 = vmatpush1.msra.mxu0 0.0
        %5355 = vmatprep.subr.mxu0 0.0
        %5356 = vmatpush1.msra.mxu0 0.0
        %5357 = vmatprep.subr.mxu0 0.0
        %5358 = vmatpush1.msra.mxu0 0.0
        %5359 = vmatprep.subr.mxu0 0.0
        %5360 = vmatpush1.msra.mxu0 0.0
        %5361 = vmatprep.mubr.f32.mxu0 0.0
        %5362 = vmatmul.mubr.f32.gmra.mrb[0].mxu0 %v5295
        %v5363 = vpop.f32.mrb[0].mxu0
        %v5364 = vadd.f32 0.0, %v5363
        %v5365 = vpop.f32.mrb[0].mxu0
        %5366 = vdwg.mxu0
        %5367 = vst [vmem:[%s648] sm:$0x1] %v5364
        %s5368 = sand.u32 %s489, 1
        %s5369 = scalar_lea.sflag [#allocation3], %s5368
        %s5370 = sand.u32 %s489, 1
        %s5371 = scalar_lea.vmem [#allocation2], %s5370
        // Predicated region
        $region105: #{clip_forward.1} parent=103 // pred_check
          %p5372 = pneg %p499
        $region106: #{clip_forward.1} parent=103 // pred_check_branch
          %5374 = sbr.rel (%p5372) target = $region108
        $region107: #{clip_forward.1} parent=103 // pred_region
          %s5376 = ssub.s32 16, 16
          %5377 = vsyncadd %s5369, %s5376
          %s5378 = smul.addr %s35, 16
          %s5379 = scalar_lea.hbm %s21, %s5378
          %s5381 = sshll.u32 %s5371, 4
          %s5382 = int_to_ptr.vmem [resolvable:$true] %s5381
          %5384 = dma.vmem_to_hbm [thread:$0]  %s5382, 16, %s5379, %s5369
        $region108: #{clip_forward.1} parent=103 // pred_fallthru
          _
      $region104: #{clip_forward.1} parent=5 // pred_fallthru
        _
      %p5385 = scmp.le.s32.totalorder 2, %s30
      // Predicated region
      $region109: #{clip_forward.1} parent=5 // pred_check
        %p5386 = pneg %p5385
      $region110: #{clip_forward.1} parent=5 // pred_check_branch
        %5388 = sbr.rel (%p5386) target = $region112
      $region111: #{clip_forward.1} parent=5 // pred_region
        %s5389 = ssub.s32 %s30, 2
        // Predicated region
        $region113: #{clip_forward.1} parent=111 // pred_check
          %p5390 = pneg %p505
        $region114: #{clip_forward.1} parent=111 // pred_check_branch
          %5392 = sbr.rel (%p5390) target = $region116
        $region115: #{clip_forward.1} parent=111 // pred_region
          %s5393 = sand.u32 %s490, 1
          %s5394 = scalar_lea.sflag [#allocation3], %s5393
          %s5395 = sand.u32 %s490, 1
          %s5396 = scalar_lea.vmem [#allocation2], %s5395
          %5397 = dma.done %s5394, 16
        $region116: #{clip_forward.1} parent=111 // pred_fallthru
          _
      $region112: #{clip_forward.1} parent=5 // pred_fallthru
        _
    $region6: #{clip_forward.1} parent=1 // loop_footer
      %s34 = sadd.s32 1, %s30
    $region7: #{clip_forward.1} parent=1 // loop_footer_branch
      %29 = sbr.rel target = $region3
    $region8: #{clip_forward.1} parent=1 // loop_exit
      _
    %5398 = vsyncpa [#allocation3], 1
    %s5399 = scalar_lea.sflag [#allocation3], 1
    %5400 = vsyncpa %s5399, 1

</llo_original>
